<compile_context>
chip_gen: v7x
topology: tpu7x:2x2x1
jax: 0.10.0
libtpu: 0.0.40
codegen_flags: <defaults>
</compile_context>

<pallas_src>
import functools

import jax
import jax.numpy as jnp
from jax.experimental import pallas as pl
from jax.experimental.pallas import tpu as pltpu

DILATION = 3
PAD = 3
KSIZE = 3
LANE = 128  # lane width: channel dims of mid/out are padded to this


def _round_up(x, m):
    return ((x + m - 1) // m) * m


def _vgg_block_kernel(x_ref, w1_ref, b1_ref, w2_ref, b2_ref, o_ref,
                      xpad_ref, midpad_ref):
    """Fused (conv3x3 dil=3 pad=3 -> folded-BN bias -> ReLU) x 2, one batch elem.

    x_ref:      (1, H, W, Cin)            unpadded input tile (NHWC)
    w1_ref:     (9, Cin, Cmid_pad)        per-tap layer-1 weights (BN scale folded)
    b1_ref:     (1, Cmid_pad)             folded BN bias (f32, padded lanes = 0)
    w2_ref:     (9, Cmid_pad, Cout_pad)   per-tap layer-2 weights (BN scale folded)
    b2_ref:     (1, Cout_pad)
    o_ref:      (1, H*W, Cout_pad)        lane-dense output tile
    xpad_ref:   (Hp, Wp, Cin)             compute-dtype scratch (zero halo)
    midpad_ref: (Hp, Wp, Cmid_pad)        compute-dtype scratch (zero halo)
    """
    _, H, W, Cin = x_ref.shape
    HW = H * W
    Hp, Wp, _ = xpad_ref.shape
    cmid_pad = midpad_ref.shape[-1]
    cout_pad = o_ref.shape[-1]
    cdtype = xpad_ref.dtype  # matmul compute dtype (f32 or bf16)

    # ------------ layer 1: conv(3x3, dil=3, pad=3) + bias + ReLU ------------
    # Halo-only zeroing (interior fully overwritten right below).  Re-done
    # every grid step: scratch persists across iterations and the grid axis
    # is "parallel" (a program_id==0-only init would run on one core only).
    zr = jnp.zeros((PAD, Wp, Cin), cdtype)
    xpad_ref[0:PAD, :, :] = zr
    xpad_ref[PAD + H:Hp, :, :] = zr
    zc = jnp.zeros((H, PAD, Cin), cdtype)
    xpad_ref[PAD:PAD + H, 0:PAD, :] = zc
    xpad_ref[PAD:PAD + H, PAD + W:Wp, :] = zc
    # Single cast-on-store of the input into the compute dtype.
    xpad_ref[PAD:PAD + H, PAD:PAD + W, :] = x_ref[0].astype(cdtype)

    # 9 accumulating matmuls over the dilated taps (no im2col slab, no extra
    # activation stores); accumulation stays f32.
    mid = jnp.zeros((HW, cmid_pad), jnp.float32)
    for kh in range(KSIZE):
        for kw in range(KSIZE):
            t = kh * KSIZE + kw
            tap = xpad_ref[kh * DILATION:kh * DILATION + H,
                           kw * DILATION:kw * DILATION + W, :].reshape(HW, Cin)
            mid = mid + jnp.dot(tap, w1_ref[t],
                                preferred_element_type=jnp.float32)
    # BN scale already folded into w1; f32 epilogue (VPU).
    mid = jnp.maximum(mid + b1_ref[...], 0.0)

    # ------------ layer 2 (fused; mid never leaves VMEM) ------------
    # Padded mid channels are exactly zero (zero weight columns + zero bias),
    # so the padded contraction below is exact.
    zr2 = jnp.zeros((PAD, Wp, cmid_pad), cdtype)
    midpad_ref[0:PAD, :, :] = zr2
    midpad_ref[PAD + H:Hp, :, :] = zr2
    zc2 = jnp.zeros((H, PAD, cmid_pad), cdtype)
    midpad_ref[PAD:PAD + H, 0:PAD, :] = zc2
    midpad_ref[PAD:PAD + H, PAD + W:Wp, :] = zc2
    midpad_ref[PAD:PAD + H, PAD:PAD + W, :] = (
        mid.reshape(H, W, cmid_pad).astype(cdtype))

    out = jnp.zeros((HW, cout_pad), jnp.float32)
    for kh in range(KSIZE):
        for kw in range(KSIZE):
            t = kh * KSIZE + kw
            tap = midpad_ref[kh * DILATION:kh * DILATION + H,
                             kw * DILATION:kw * DILATION + W, :].reshape(
                                 HW, cmid_pad)
            out = out + jnp.dot(tap, w2_ref[t],
                                preferred_element_type=jnp.float32)
    out = jnp.maximum(out + b2_ref[...], 0.0)

    # (H*W, Cout_pad=128): lane-dense, unmasked stores.
    o_ref[0] = out.astype(o_ref.dtype)


def _fused_vgg_block_call(x_nhwc, w1t, b1, w2t, b2):
    N, H, W, Cin = x_nhwc.shape
    cmid_pad = w1t.shape[-1]
    cout_pad = w2t.shape[-1]
    HW = H * W
    Hp, Wp = H + 2 * PAD, W + 2 * PAD
    cdtype = w1t.dtype

    # Explicit VMEM budget: per-step scratch + double-buffered pipeline blocks
    # with generous headroom, capped at 64 MiB (valid physical size on
    # v5e/v6e/v7x).  Avoids relying on the 16/32 MiB scoped defaults.
    cbytes = jnp.dtype(cdtype).itemsize
    obytes = jnp.dtype(x_nhwc.dtype).itemsize
    scratch_bytes = (Hp * Wp * Cin + Hp * Wp * cmid_pad) * cbytes
    block_bytes = (H * W * Cin * obytes + HW * cout_pad * obytes
                   + (w1t.size + w2t.size) * cbytes + (b1.size + b2.size) * 4)
    vmem_limit = int(min(max(2 * (scratch_bytes + 2 * block_bytes),
                             32 * 1024 * 1024), 64 * 1024 * 1024))

    return pl.pallas_call(
        _vgg_block_kernel,
        out_shape=jax.ShapeDtypeStruct((N, HW, cout_pad), x_nhwc.dtype),
        grid_spec=pltpu.PrefetchScalarGridSpec(
            num_scalar_prefetch=0,
            grid=(N,),
            in_specs=[
                pl.BlockSpec((1, H, W, Cin), lambda n: (n, 0, 0, 0)),
                # TODO(synk): at real VGG widths mark these constant weight
                # blocks single-buffered (pipeline_mode=pl.Buffered(1)).
                pl.BlockSpec(w1t.shape, lambda n: (0, 0, 0)),
                pl.BlockSpec(b1.shape, lambda n: (0, 0)),
                pl.BlockSpec(w2t.shape, lambda n: (0, 0, 0)),
                pl.BlockSpec(b2.shape, lambda n: (0, 0)),
            ],
            out_specs=pl.BlockSpec((1, HW, cout_pad), lambda n: (n, 0, 0)),
            scratch_shapes=[
                pltpu.VMEM((Hp, Wp, Cin), cdtype),
                pltpu.VMEM((Hp, Wp, cmid_pad), cdtype),
            ],
        ),
        compiler_params=pltpu.CompilerParams(
            dimension_semantics=("parallel",),
            vmem_limit_bytes=vmem_limit),
    )(x_nhwc, w1t, b1, w2t, b2)


def _prepare_kernel_params(params, cmid_pad, cout_pad, compute_dtype):
    """Fold BN scale into the conv weights, split into 9 per-tap matrices,
    pad channel dims to 128 lanes, cast to the matmul compute dtype.

    In a real model this is done once at parameter-load time, not per step.
    """
    w1 = params["w1"]  # (3, 3, Cin, Cmid)  HWIO
    w2 = params["w2"]  # (3, 3, Cmid, Cout) HWIO
    _, _, cin, cmid = w1.shape
    cout = w2.shape[-1]

    # Fold BN scale (f32, before the compute-dtype cast).  Padded channels get
    # zero weight columns and zero bias so padded lanes stay exactly zero.
    w1s = w1 * params["s1"][None, None, None, :]
    w2s = w2 * params["s2"][None, None, None, :]

    w1p = jnp.pad(w1s, ((0, 0), (0, 0), (0, 0), (0, cmid_pad - cmid)))
    w1t = w1p.reshape(KSIZE * KSIZE, cin, cmid_pad).astype(compute_dtype)

    w2p = jnp.pad(w2s, ((0, 0), (0, 0),
                        (0, cmid_pad - cmid), (0, cout_pad - cout)))
    w2t = w2p.reshape(KSIZE * KSIZE, cmid_pad, cout_pad).astype(compute_dtype)

    def pad_bias(v, c, cp):
        return jnp.pad(v, (0, cp - c)).reshape(1, cp).astype(jnp.float32)

    return (w1t, pad_bias(params["b1"], cmid, cmid_pad),
            w2t, pad_bias(params["b2"], cout, cout_pad))


@functools.partial(jax.jit, static_argnames=("compute_dtype",))
def vgg_block(x_nchw, params, compute_dtype=jnp.float32):
    """NCHW in, NCHW out (matches the PyTorch module)."""
    N, Cin, H, W = x_nchw.shape
    cmid = params["w1"].shape[-1]
    cout = params["w2"].shape[-1]
    cmid_pad = _round_up(cmid, LANE)
    cout_pad = _round_up(cout, LANE)

    w1t, b1, w2t, b2 = _prepare_kernel_params(
        params, cmid_pad, cout_pad, compute_dtype)

    x_nhwc = jnp.transpose(x_nchw, (0, 2, 3, 1))
    out = _fused_vgg_block_call(x_nhwc, w1t, b1, w2t, b2)
    # (N, H*W, Cout_pad) -> strip channel padding -> NCHW
    out = out.reshape(N, H, W, cout_pad)[..., :cout]
    return jnp.transpose(out, (0, 3, 1, 2))


def make_vgg_block_params(key, in_channels, middle_channels, out_channels):
    """Deterministic synthetic parameters (conv weights + folded BN affine)."""
    ks = jax.random.split(key, 10)
    eps = 1e-5

    def conv_w(k, cin, cout):
        # PyTorch layout (Cout, Cin, kh, kw) -> HWIO (kh, kw, Cin, Cout)
        w = jax.random.normal(k, (cout, cin, KSIZE, KSIZE), jnp.float32) * 0.1
        return jnp.transpose(w, (2, 3, 1, 0))

    def bn_fold(kg, kb, km, kv, c):
        gamma = 1.0 + 0.1 * jax.random.normal(kg, (c,), jnp.float32)
        beta = 0.1 * jax.random.normal(kb, (c,), jnp.float32)
        mean = 0.1 * jax.random.normal(km, (c,), jnp.float32)
        var = jnp.abs(jax.random.normal(kv, (c,), jnp.float32)) + 0.5
        scale = gamma / jnp.sqrt(var + eps)
        bias = beta - mean * scale
        return scale, bias

    w1 = conv_w(ks[0], in_channels, middle_channels)
    s1, b1 = bn_fold(ks[1], ks[2], ks[3], ks[4], middle_channels)
    w2 = conv_w(ks[5], middle_channels, out_channels)
    s2, b2 = bn_fold(ks[6], ks[7], ks[8], ks[9], out_channels)
    return dict(w1=w1, s1=s1, b1=b1, w2=w2, s2=s2, b2=b2)


def _reference(x_nchw, params, compute_dtype=jnp.float32, fold_scale=False):
    """Pure-JAX reference (lax.conv).  With fold_scale=True the BN scale is
    folded into the weights before the compute-dtype cast (mirrors the
    kernel's bf16 rounding points); fold_scale=False is the module-faithful
    conv -> scale -> bias -> relu form used for the f32 check."""
    def conv(x, w):
        return jax.lax.conv_general_dilated(
            x.astype(compute_dtype), w.astype(compute_dtype),
            window_strides=(1, 1), padding=((PAD, PAD), (PAD, PAD)),
            rhs_dilation=(DILATION, DILATION),
            dimension_numbers=("NCHW", "HWIO", "NCHW"),
            preferred_element_type=jnp.float32)

    w1, w2 = params["w1"], params["w2"]
    s1, b1 = params["s1"], params["b1"]
    s2, b2 = params["s2"], params["b2"]
    if fold_scale:
        w1 = w1 * s1[None, None, None, :]
        w2 = w2 * s2[None, None, None, :]
        s1 = jnp.ones_like(s1)
        s2 = jnp.ones_like(s2)

    def bn_relu(y, s, b):
        return jnp.maximum(y * s[None, :, None, None] + b[None, :, None, None],
                           0.0)

    y = bn_relu(conv(x_nchw, w1), s1, b1)
    y = bn_relu(conv(y, w2), s2, b2)
    return y


if __name__ == "__main__":
    key = jax.random.PRNGKey(0)
    k_x, k_p = jax.random.split(key)

    N, Cin, H, W = 2, 4, 16, 16
    Cmid, Cout = 8, 4

    x = jax.random.normal(k_x, (N, Cin, H, W), jnp.float32)
    params = make_vgg_block_params(k_p, Cin, Cmid, Cout)

    # f32 matmul path, checked against the module-faithful f32 reference
    # (only ulp-level reassociation from the folded BN scale).
    out = jax.block_until_ready(vgg_block(x, params, compute_dtype=jnp.float32))
    ref = _reference(x, params, compute_dtype=jnp.float32)
    assert out.shape == (N, Cout, H, W), out.shape
    assert jnp.allclose(out, ref, atol=1e-4, rtol=1e-4), (
        float(jnp.max(jnp.abs(out - ref))))

    # bf16 matmul path (native MXU input dtype; f32 accumulation + f32 bias/
    # ReLU epilogue), checked against a reference with matching rounding.
    out_bf = jax.block_until_ready(
        vgg_block(x, params, compute_dtype=jnp.bfloat16))
    ref_bf = _reference(x, params, compute_dtype=jnp.bfloat16, fold_scale=True)
    assert jnp.allclose(out_bf, ref_bf, atol=1e-2, rtol=1e-2), (
        float(jnp.max(jnp.abs(out_bf - ref_bf))))

    print("KERNEL_OK")
</pallas_src>

<mosaic_0001>
module attributes {stable_mosaic.version = 11 : i64} {
  func.func @_vgg_block_kernel(%arg0: i32, %arg1: memref<1x16x16x4xf32, #tpu.memory_space<vmem>>, %arg2: memref<9x4x128xf32, #tpu.memory_space<vmem>>, %arg3: memref<1x128xf32, #tpu.memory_space<vmem>>, %arg4: memref<9x128x128xf32, #tpu.memory_space<vmem>>, %arg5: memref<1x128xf32, #tpu.memory_space<vmem>>, %arg6: memref<1x256x128xf32, #tpu.memory_space<vmem>>, %arg7: memref<22x22x4xf32, #tpu.memory_space<vmem>>, %arg8: memref<22x22x128xf32, #tpu.memory_space<vmem>>) attributes {dimension_semantics = [#tpu.dimension_semantics<parallel>], iteration_bounds = array<i64: 2>, scalar_prefetch = 0 : i64, scratch_operands = 2 : i64, tpu.core_type = #tpu.core_type<tc>, window_params = [{transform_indices = @transform_0, window_bounds = array<i64: 1, 16, 16, 4>}, {pipeline_mode = #tpu.pipeline_mode<synchronous>, transform_indices = @transform_1, window_bounds = array<i64: 9, 4, 128>}, {pipeline_mode = #tpu.pipeline_mode<synchronous>, transform_indices = @transform_2, window_bounds = array<i64: 1, 128>}, {pipeline_mode = #tpu.pipeline_mode<synchronous>, transform_indices = @transform_3, window_bounds = array<i64: 9, 128, 128>}, {pipeline_mode = #tpu.pipeline_mode<synchronous>, transform_indices = @transform_4, window_bounds = array<i64: 1, 128>}, {transform_indices = @transform_5, window_bounds = array<i64: 1, 256, 128>}]} {
    %cst = arith.constant 0.000000e+00 : f32
    %0 = vector.broadcast %cst : f32 to vector<3x22x4xf32>
    %c0 = arith.constant 0 : index
    %c0_0 = arith.constant 0 : index
    %c0_1 = arith.constant 0 : index
    %1 = vector.load %arg7[%c0, %c0_0, %c0_1] : memref<22x22x4xf32, #tpu.memory_space<vmem>>, vector<3x22x4xf32>
    tpu.vector_store %arg7[%c0, %c0_0, %c0_1], %0 {strides = array<i32>} : memref<22x22x4xf32, #tpu.memory_space<vmem>>, vector<3x22x4xf32>,
    %c19 = arith.constant 19 : index
    %c0_2 = arith.constant 0 : index
    %c0_3 = arith.constant 0 : index
    %2 = vector.load %arg7[%c19, %c0_2, %c0_3] : memref<22x22x4xf32, #tpu.memory_space<vmem>>, vector<3x22x4xf32>
    tpu.vector_store %arg7[%c19, %c0_2, %c0_3], %0 {strides = array<i32>} : memref<22x22x4xf32, #tpu.memory_space<vmem>>, vector<3x22x4xf32>,
    %cst_4 = arith.constant 0.000000e+00 : f32
    %3 = vector.broadcast %cst_4 : f32 to vector<16x3x4xf32>
    %c3 = arith.constant 3 : index
    %c0_5 = arith.constant 0 : index
    %c0_6 = arith.constant 0 : index
    %4 = vector.load %arg7[%c3, %c0_5, %c0_6] : memref<22x22x4xf32, #tpu.memory_space<vmem>>, vector<16x3x4xf32>
    tpu.vector_store %arg7[%c3, %c0_5, %c0_6], %3 {strides = array<i32>} : memref<22x22x4xf32, #tpu.memory_space<vmem>>, vector<16x3x4xf32>,
    %c3_7 = arith.constant 3 : index
    %c19_8 = arith.constant 19 : index
    %c0_9 = arith.constant 0 : index
    %5 = vector.load %arg7[%c3_7, %c19_8, %c0_9] : memref<22x22x4xf32, #tpu.memory_space<vmem>>, vector<16x3x4xf32>
    tpu.vector_store %arg7[%c3_7, %c19_8, %c0_9], %3 {strides = array<i32>} : memref<22x22x4xf32, #tpu.memory_space<vmem>>, vector<16x3x4xf32>,
    %c0_10 = arith.constant 0 : index
    %c0_11 = arith.constant 0 : index
    %c0_12 = arith.constant 0 : index
    %c0_13 = arith.constant 0 : index
    %6 = vector.load %arg1[%c0_10, %c0_11, %c0_12, %c0_13] : memref<1x16x16x4xf32, #tpu.memory_space<vmem>>, vector<1x16x16x4xf32>
    %7 = vector.shape_cast %6 : vector<1x16x16x4xf32> to vector<16x16x4xf32>
    %c3_14 = arith.constant 3 : index
    %c3_15 = arith.constant 3 : index
    %c0_16 = arith.constant 0 : index
    %8 = vector.load %arg7[%c3_14, %c3_15, %c0_16] : memref<22x22x4xf32, #tpu.memory_space<vmem>>, vector<16x16x4xf32>
    tpu.vector_store %arg7[%c3_14, %c3_15, %c0_16], %7 {strides = array<i32>} : memref<22x22x4xf32, #tpu.memory_space<vmem>>, vector<16x16x4xf32>,
    %cst_17 = arith.constant 0.000000e+00 : f32
    %9 = vector.broadcast %cst_17 : f32 to vector<256x128xf32>
    %c0_18 = arith.constant 0 : index
    %c0_19 = arith.constant 0 : index
    %c0_20 = arith.constant 0 : index
    %10 = vector.load %arg7[%c0_18, %c0_19, %c0_20] : memref<22x22x4xf32, #tpu.memory_space<vmem>>, vector<16x16x4xf32>
    %11 = vector.shape_cast %10 : vector<16x16x4xf32> to vector<256x4xf32>
    %c0_21 = arith.constant 0 : index
    %c0_22 = arith.constant 0 : index
    %c0_23 = arith.constant 0 : index
    %12 = vector.load %arg2[%c0_21, %c0_22, %c0_23] : memref<9x4x128xf32, #tpu.memory_space<vmem>>, vector<1x4x128xf32>
    %13 = vector.shape_cast %12 : vector<1x4x128xf32> to vector<4x128xf32>
    %cst_24 = arith.constant dense<0.000000e+00> : vector<256x128xf32>
    %14 = tpu.matmul %11, %13, %cst_24 {dimension_numbers = #tpu.dot_dimension_numbers<[1], [0], [0], [1], [0, 0, 1, 1], [], []>} : vector<256x4xf32>, vector<4x128xf32>, vector<256x128xf32> -> vector<256x128xf32>
    %15 = arith.addf %9, %14 : vector<256x128xf32>
    %c0_25 = arith.constant 0 : index
    %c3_26 = arith.constant 3 : index
    %c0_27 = arith.constant 0 : index
    %16 = vector.load %arg7[%c0_25, %c3_26, %c0_27] : memref<22x22x4xf32, #tpu.memory_space<vmem>>, vector<16x16x4xf32>
    %17 = vector.shape_cast %16 : vector<16x16x4xf32> to vector<256x4xf32>
    %c1 = arith.constant 1 : index
    %c0_28 = arith.constant 0 : index
    %c0_29 = arith.constant 0 : index
    %18 = vector.load %arg2[%c1, %c0_28, %c0_29] : memref<9x4x128xf32, #tpu.memory_space<vmem>>, vector<1x4x128xf32>
    %19 = vector.shape_cast %18 : vector<1x4x128xf32> to vector<4x128xf32>
    %cst_30 = arith.constant dense<0.000000e+00> : vector<256x128xf32>
    %20 = tpu.matmul %17, %19, %cst_30 {dimension_numbers = #tpu.dot_dimension_numbers<[1], [0], [0], [1], [0, 0, 1, 1], [], []>} : vector<256x4xf32>, vector<4x128xf32>, vector<256x128xf32> -> vector<256x128xf32>
    %21 = arith.addf %15, %20 : vector<256x128xf32>
    %c0_31 = arith.constant 0 : index
    %c6 = arith.constant 6 : index
    %c0_32 = arith.constant 0 : index
    %22 = vector.load %arg7[%c0_31, %c6, %c0_32] : memref<22x22x4xf32, #tpu.memory_space<vmem>>, vector<16x16x4xf32>
    %23 = vector.shape_cast %22 : vector<16x16x4xf32> to vector<256x4xf32>
    %c2 = arith.constant 2 : index
    %c0_33 = arith.constant 0 : index
    %c0_34 = arith.constant 0 : index
    %24 = vector.load %arg2[%c2, %c0_33, %c0_34] : memref<9x4x128xf32, #tpu.memory_space<vmem>>, vector<1x4x128xf32>
    %25 = vector.shape_cast %24 : vector<1x4x128xf32> to vector<4x128xf32>
    %cst_35 = arith.constant dense<0.000000e+00> : vector<256x128xf32>
    %26 = tpu.matmul %23, %25, %cst_35 {dimension_numbers = #tpu.dot_dimension_numbers<[1], [0], [0], [1], [0, 0, 1, 1], [], []>} : vector<256x4xf32>, vector<4x128xf32>, vector<256x128xf32> -> vector<256x128xf32>
    %27 = arith.addf %21, %26 : vector<256x128xf32>
    %c3_36 = arith.constant 3 : index
    %c0_37 = arith.constant 0 : index
    %c0_38 = arith.constant 0 : index
    %28 = vector.load %arg7[%c3_36, %c0_37, %c0_38] : memref<22x22x4xf32, #tpu.memory_space<vmem>>, vector<16x16x4xf32>
    %29 = vector.shape_cast %28 : vector<16x16x4xf32> to vector<256x4xf32>
    %c3_39 = arith.constant 3 : index
    %c0_40 = arith.constant 0 : index
    %c0_41 = arith.constant 0 : index
    %30 = vector.load %arg2[%c3_39, %c0_40, %c0_41] : memref<9x4x128xf32, #tpu.memory_space<vmem>>, vector<1x4x128xf32>
    %31 = vector.shape_cast %30 : vector<1x4x128xf32> to vector<4x128xf32>
    %cst_42 = arith.constant dense<0.000000e+00> : vector<256x128xf32>
    %32 = tpu.matmul %29, %31, %cst_42 {dimension_numbers = #tpu.dot_dimension_numbers<[1], [0], [0], [1], [0, 0, 1, 1], [], []>} : vector<256x4xf32>, vector<4x128xf32>, vector<256x128xf32> -> vector<256x128xf32>
    %33 = arith.addf %27, %32 : vector<256x128xf32>
    %c3_43 = arith.constant 3 : index
    %c3_44 = arith.constant 3 : index
    %c0_45 = arith.constant 0 : index
    %34 = vector.load %arg7[%c3_43, %c3_44, %c0_45] : memref<22x22x4xf32, #tpu.memory_space<vmem>>, vector<16x16x4xf32>
    %35 = vector.shape_cast %34 : vector<16x16x4xf32> to vector<256x4xf32>
    %c4 = arith.constant 4 : index
    %c0_46 = arith.constant 0 : index
    %c0_47 = arith.constant 0 : index
    %36 = vector.load %arg2[%c4, %c0_46, %c0_47] : memref<9x4x128xf32, #tpu.memory_space<vmem>>, vector<1x4x128xf32>
    %37 = vector.shape_cast %36 : vector<1x4x128xf32> to vector<4x128xf32>
    %cst_48 = arith.constant dense<0.000000e+00> : vector<256x128xf32>
    %38 = tpu.matmul %35, %37, %cst_48 {dimension_numbers = #tpu.dot_dimension_numbers<[1], [0], [0], [1], [0, 0, 1, 1], [], []>} : vector<256x4xf32>, vector<4x128xf32>, vector<256x128xf32> -> vector<256x128xf32>
    %39 = arith.addf %33, %38 : vector<256x128xf32>
    %c3_49 = arith.constant 3 : index
    %c6_50 = arith.constant 6 : index
    %c0_51 = arith.constant 0 : index
    %40 = vector.load %arg7[%c3_49, %c6_50, %c0_51] : memref<22x22x4xf32, #tpu.memory_space<vmem>>, vector<16x16x4xf32>
    %41 = vector.shape_cast %40 : vector<16x16x4xf32> to vector<256x4xf32>
    %c5 = arith.constant 5 : index
    %c0_52 = arith.constant 0 : index
    %c0_53 = arith.constant 0 : index
    %42 = vector.load %arg2[%c5, %c0_52, %c0_53] : memref<9x4x128xf32, #tpu.memory_space<vmem>>, vector<1x4x128xf32>
    %43 = vector.shape_cast %42 : vector<1x4x128xf32> to vector<4x128xf32>
    %cst_54 = arith.constant dense<0.000000e+00> : vector<256x128xf32>
    %44 = tpu.matmul %41, %43, %cst_54 {dimension_numbers = #tpu.dot_dimension_numbers<[1], [0], [0], [1], [0, 0, 1, 1], [], []>} : vector<256x4xf32>, vector<4x128xf32>, vector<256x128xf32> -> vector<256x128xf32>
    %45 = arith.addf %39, %44 : vector<256x128xf32>
    %c6_55 = arith.constant 6 : index
    %c0_56 = arith.constant 0 : index
    %c0_57 = arith.constant 0 : index
    %46 = vector.load %arg7[%c6_55, %c0_56, %c0_57] : memref<22x22x4xf32, #tpu.memory_space<vmem>>, vector<16x16x4xf32>
    %47 = vector.shape_cast %46 : vector<16x16x4xf32> to vector<256x4xf32>
    %c6_58 = arith.constant 6 : index
    %c0_59 = arith.constant 0 : index
    %c0_60 = arith.constant 0 : index
    %48 = vector.load %arg2[%c6_58, %c0_59, %c0_60] : memref<9x4x128xf32, #tpu.memory_space<vmem>>, vector<1x4x128xf32>
    %49 = vector.shape_cast %48 : vector<1x4x128xf32> to vector<4x128xf32>
    %cst_61 = arith.constant dense<0.000000e+00> : vector<256x128xf32>
    %50 = tpu.matmul %47, %49, %cst_61 {dimension_numbers = #tpu.dot_dimension_numbers<[1], [0], [0], [1], [0, 0, 1, 1], [], []>} : vector<256x4xf32>, vector<4x128xf32>, vector<256x128xf32> -> vector<256x128xf32>
    %51 = arith.addf %45, %50 : vector<256x128xf32>
    %c6_62 = arith.constant 6 : index
    %c3_63 = arith.constant 3 : index
    %c0_64 = arith.constant 0 : index
    %52 = vector.load %arg7[%c6_62, %c3_63, %c0_64] : memref<22x22x4xf32, #tpu.memory_space<vmem>>, vector<16x16x4xf32>
    %53 = vector.shape_cast %52 : vector<16x16x4xf32> to vector<256x4xf32>
    %c7 = arith.constant 7 : index
    %c0_65 = arith.constant 0 : index
    %c0_66 = arith.constant 0 : index
    %54 = vector.load %arg2[%c7, %c0_65, %c0_66] : memref<9x4x128xf32, #tpu.memory_space<vmem>>, vector<1x4x128xf32>
    %55 = vector.shape_cast %54 : vector<1x4x128xf32> to vector<4x128xf32>
    %cst_67 = arith.constant dense<0.000000e+00> : vector<256x128xf32>
    %56 = tpu.matmul %53, %55, %cst_67 {dimension_numbers = #tpu.dot_dimension_numbers<[1], [0], [0], [1], [0, 0, 1, 1], [], []>} : vector<256x4xf32>, vector<4x128xf32>, vector<256x128xf32> -> vector<256x128xf32>
    %57 = arith.addf %51, %56 : vector<256x128xf32>
    %c6_68 = arith.constant 6 : index
    %c6_69 = arith.constant 6 : index
    %c0_70 = arith.constant 0 : index
    %58 = vector.load %arg7[%c6_68, %c6_69, %c0_70] : memref<22x22x4xf32, #tpu.memory_space<vmem>>, vector<16x16x4xf32>
    %59 = vector.shape_cast %58 : vector<16x16x4xf32> to vector<256x4xf32>
    %c8 = arith.constant 8 : index
    %c0_71 = arith.constant 0 : index
    %c0_72 = arith.constant 0 : index
    %60 = vector.load %arg2[%c8, %c0_71, %c0_72] : memref<9x4x128xf32, #tpu.memory_space<vmem>>, vector<1x4x128xf32>
    %61 = vector.shape_cast %60 : vector<1x4x128xf32> to vector<4x128xf32>
    %cst_73 = arith.constant dense<0.000000e+00> : vector<256x128xf32>
    %62 = tpu.matmul %59, %61, %cst_73 {dimension_numbers = #tpu.dot_dimension_numbers<[1], [0], [0], [1], [0, 0, 1, 1], [], []>} : vector<256x4xf32>, vector<4x128xf32>, vector<256x128xf32> -> vector<256x128xf32>
    %63 = arith.addf %57, %62 : vector<256x128xf32>
    %c0_74 = arith.constant 0 : index
    %c0_75 = arith.constant 0 : index
    %64 = vector.load %arg3[%c0_74, %c0_75] : memref<1x128xf32, #tpu.memory_space<vmem>>, vector<1x128xf32>
    %65 = vector.broadcast %64 : vector<1x128xf32> to vector<256x128xf32>
    %66 = arith.addf %63, %65 : vector<256x128xf32>
    %cst_76 = arith.constant 0.000000e+00 : f32
    %67 = vector.broadcast %cst_76 : f32 to vector<256x128xf32>
    %68 = arith.maximumf %66, %67 : vector<256x128xf32>
    %cst_77 = arith.constant 0.000000e+00 : f32
    %69 = vector.broadcast %cst_77 : f32 to vector<3x22x128xf32>
    %c0_78 = arith.constant 0 : index
    %c0_79 = arith.constant 0 : index
    %c0_80 = arith.constant 0 : index
    %70 = vector.load %arg8[%c0_78, %c0_79, %c0_80] : memref<22x22x128xf32, #tpu.memory_space<vmem>>, vector<3x22x128xf32>
    tpu.vector_store %arg8[%c0_78, %c0_79, %c0_80], %69 {strides = array<i32>} : memref<22x22x128xf32, #tpu.memory_space<vmem>>, vector<3x22x128xf32>,
    %c19_81 = arith.constant 19 : index
    %c0_82 = arith.constant 0 : index
    %c0_83 = arith.constant 0 : index
    %71 = vector.load %arg8[%c19_81, %c0_82, %c0_83] : memref<22x22x128xf32, #tpu.memory_space<vmem>>, vector<3x22x128xf32>
    tpu.vector_store %arg8[%c19_81, %c0_82, %c0_83], %69 {strides = array<i32>} : memref<22x22x128xf32, #tpu.memory_space<vmem>>, vector<3x22x128xf32>,
    %cst_84 = arith.constant 0.000000e+00 : f32
    %72 = vector.broadcast %cst_84 : f32 to vector<16x3x128xf32>
    %c3_85 = arith.constant 3 : index
    %c0_86 = arith.constant 0 : index
    %c0_87 = arith.constant 0 : index
    %73 = vector.load %arg8[%c3_85, %c0_86, %c0_87] : memref<22x22x128xf32, #tpu.memory_space<vmem>>, vector<16x3x128xf32>
    tpu.vector_store %arg8[%c3_85, %c0_86, %c0_87], %72 {strides = array<i32>} : memref<22x22x128xf32, #tpu.memory_space<vmem>>, vector<16x3x128xf32>,
    %c3_88 = arith.constant 3 : index
    %c19_89 = arith.constant 19 : index
    %c0_90 = arith.constant 0 : index
    %74 = vector.load %arg8[%c3_88, %c19_89, %c0_90] : memref<22x22x128xf32, #tpu.memory_space<vmem>>, vector<16x3x128xf32>
    tpu.vector_store %arg8[%c3_88, %c19_89, %c0_90], %72 {strides = array<i32>} : memref<22x22x128xf32, #tpu.memory_space<vmem>>, vector<16x3x128xf32>,
    %75 = vector.shape_cast %68 : vector<256x128xf32> to vector<16x16x128xf32>
    %c3_91 = arith.constant 3 : index
    %c3_92 = arith.constant 3 : index
    %c0_93 = arith.constant 0 : index
    %76 = vector.load %arg8[%c3_91, %c3_92, %c0_93] : memref<22x22x128xf32, #tpu.memory_space<vmem>>, vector<16x16x128xf32>
    tpu.vector_store %arg8[%c3_91, %c3_92, %c0_93], %75 {strides = array<i32>} : memref<22x22x128xf32, #tpu.memory_space<vmem>>, vector<16x16x128xf32>,
    %cst_94 = arith.constant 0.000000e+00 : f32
    %77 = vector.broadcast %cst_94 : f32 to vector<256x128xf32>
    %c0_95 = arith.constant 0 : index
    %c0_96 = arith.constant 0 : index
    %c0_97 = arith.constant 0 : index
    %78 = vector.load %arg8[%c0_95, %c0_96, %c0_97] : memref<22x22x128xf32, #tpu.memory_space<vmem>>, vector<16x16x128xf32>
    %79 = vector.shape_cast %78 : vector<16x16x128xf32> to vector<256x128xf32>
    %c0_98 = arith.constant 0 : index
    %c0_99 = arith.constant 0 : index
    %c0_100 = arith.constant 0 : index
    %80 = vector.load %arg4[%c0_98, %c0_99, %c0_100] : memref<9x128x128xf32, #tpu.memory_space<vmem>>, vector<1x128x128xf32>
    %81 = vector.shape_cast %80 : vector<1x128x128xf32> to vector<128x128xf32>
    %cst_101 = arith.constant dense<0.000000e+00> : vector<256x128xf32>
    %82 = tpu.matmul %79, %81, %cst_101 {dimension_numbers = #tpu.dot_dimension_numbers<[1], [0], [0], [1], [0, 0, 1, 1], [], []>} : vector<256x128xf32>, vector<128x128xf32>, vector<256x128xf32> -> vector<256x128xf32>
    %83 = arith.addf %77, %82 : vector<256x128xf32>
    %c0_102 = arith.constant 0 : index
    %c3_103 = arith.constant 3 : index
    %c0_104 = arith.constant 0 : index
    %84 = vector.load %arg8[%c0_102, %c3_103, %c0_104] : memref<22x22x128xf32, #tpu.memory_space<vmem>>, vector<16x16x128xf32>
    %85 = vector.shape_cast %84 : vector<16x16x128xf32> to vector<256x128xf32>
    %c1_105 = arith.constant 1 : index
    %c0_106 = arith.constant 0 : index
    %c0_107 = arith.constant 0 : index
    %86 = vector.load %arg4[%c1_105, %c0_106, %c0_107] : memref<9x128x128xf32, #tpu.memory_space<vmem>>, vector<1x128x128xf32>
    %87 = vector.shape_cast %86 : vector<1x128x128xf32> to vector<128x128xf32>
    %cst_108 = arith.constant dense<0.000000e+00> : vector<256x128xf32>
    %88 = tpu.matmul %85, %87, %cst_108 {dimension_numbers = #tpu.dot_dimension_numbers<[1], [0], [0], [1], [0, 0, 1, 1], [], []>} : vector<256x128xf32>, vector<128x128xf32>, vector<256x128xf32> -> vector<256x128xf32>
    %89 = arith.addf %83, %88 : vector<256x128xf32>
    %c0_109 = arith.constant 0 : index
    %c6_110 = arith.constant 6 : index
    %c0_111 = arith.constant 0 : index
    %90 = vector.load %arg8[%c0_109, %c6_110, %c0_111] : memref<22x22x128xf32, #tpu.memory_space<vmem>>, vector<16x16x128xf32>
    %91 = vector.shape_cast %90 : vector<16x16x128xf32> to vector<256x128xf32>
    %c2_112 = arith.constant 2 : index
    %c0_113 = arith.constant 0 : index
    %c0_114 = arith.constant 0 : index
    %92 = vector.load %arg4[%c2_112, %c0_113, %c0_114] : memref<9x128x128xf32, #tpu.memory_space<vmem>>, vector<1x128x128xf32>
    %93 = vector.shape_cast %92 : vector<1x128x128xf32> to vector<128x128xf32>
    %cst_115 = arith.constant dense<0.000000e+00> : vector<256x128xf32>
    %94 = tpu.matmul %91, %93, %cst_115 {dimension_numbers = #tpu.dot_dimension_numbers<[1], [0], [0], [1], [0, 0, 1, 1], [], []>} : vector<256x128xf32>, vector<128x128xf32>, vector<256x128xf32> -> vector<256x128xf32>
    %95 = arith.addf %89, %94 : vector<256x128xf32>
    %c3_116 = arith.constant 3 : index
    %c0_117 = arith.constant 0 : index
    %c0_118 = arith.constant 0 : index
    %96 = vector.load %arg8[%c3_116, %c0_117, %c0_118] : memref<22x22x128xf32, #tpu.memory_space<vmem>>, vector<16x16x128xf32>
    %97 = vector.shape_cast %96 : vector<16x16x128xf32> to vector<256x128xf32>
    %c3_119 = arith.constant 3 : index
    %c0_120 = arith.constant 0 : index
    %c0_121 = arith.constant 0 : index
    %98 = vector.load %arg4[%c3_119, %c0_120, %c0_121] : memref<9x128x128xf32, #tpu.memory_space<vmem>>, vector<1x128x128xf32>
    %99 = vector.shape_cast %98 : vector<1x128x128xf32> to vector<128x128xf32>
    %cst_122 = arith.constant dense<0.000000e+00> : vector<256x128xf32>
    %100 = tpu.matmul %97, %99, %cst_122 {dimension_numbers = #tpu.dot_dimension_numbers<[1], [0], [0], [1], [0, 0, 1, 1], [], []>} : vector<256x128xf32>, vector<128x128xf32>, vector<256x128xf32> -> vector<256x128xf32>
    %101 = arith.addf %95, %100 : vector<256x128xf32>
    %c3_123 = arith.constant 3 : index
    %c3_124 = arith.constant 3 : index
    %c0_125 = arith.constant 0 : index
    %102 = vector.load %arg8[%c3_123, %c3_124, %c0_125] : memref<22x22x128xf32, #tpu.memory_space<vmem>>, vector<16x16x128xf32>
    %103 = vector.shape_cast %102 : vector<16x16x128xf32> to vector<256x128xf32>
    %c4_126 = arith.constant 4 : index
    %c0_127 = arith.constant 0 : index
    %c0_128 = arith.constant 0 : index
    %104 = vector.load %arg4[%c4_126, %c0_127, %c0_128] : memref<9x128x128xf32, #tpu.memory_space<vmem>>, vector<1x128x128xf32>
    %105 = vector.shape_cast %104 : vector<1x128x128xf32> to vector<128x128xf32>
    %cst_129 = arith.constant dense<0.000000e+00> : vector<256x128xf32>
    %106 = tpu.matmul %103, %105, %cst_129 {dimension_numbers = #tpu.dot_dimension_numbers<[1], [0], [0], [1], [0, 0, 1, 1], [], []>} : vector<256x128xf32>, vector<128x128xf32>, vector<256x128xf32> -> vector<256x128xf32>
    %107 = arith.addf %101, %106 : vector<256x128xf32>
    %c3_130 = arith.constant 3 : index
    %c6_131 = arith.constant 6 : index
    %c0_132 = arith.constant 0 : index
    %108 = vector.load %arg8[%c3_130, %c6_131, %c0_132] : memref<22x22x128xf32, #tpu.memory_space<vmem>>, vector<16x16x128xf32>
    %109 = vector.shape_cast %108 : vector<16x16x128xf32> to vector<256x128xf32>
    %c5_133 = arith.constant 5 : index
    %c0_134 = arith.constant 0 : index
    %c0_135 = arith.constant 0 : index
    %110 = vector.load %arg4[%c5_133, %c0_134, %c0_135] : memref<9x128x128xf32, #tpu.memory_space<vmem>>, vector<1x128x128xf32>
    %111 = vector.shape_cast %110 : vector<1x128x128xf32> to vector<128x128xf32>
    %cst_136 = arith.constant dense<0.000000e+00> : vector<256x128xf32>
    %112 = tpu.matmul %109, %111, %cst_136 {dimension_numbers = #tpu.dot_dimension_numbers<[1], [0], [0], [1], [0, 0, 1, 1], [], []>} : vector<256x128xf32>, vector<128x128xf32>, vector<256x128xf32> -> vector<256x128xf32>
    %113 = arith.addf %107, %112 : vector<256x128xf32>
    %c6_137 = arith.constant 6 : index
    %c0_138 = arith.constant 0 : index
    %c0_139 = arith.constant 0 : index
    %114 = vector.load %arg8[%c6_137, %c0_138, %c0_139] : memref<22x22x128xf32, #tpu.memory_space<vmem>>, vector<16x16x128xf32>
    %115 = vector.shape_cast %114 : vector<16x16x128xf32> to vector<256x128xf32>
    %c6_140 = arith.constant 6 : index
    %c0_141 = arith.constant 0 : index
    %c0_142 = arith.constant 0 : index
    %116 = vector.load %arg4[%c6_140, %c0_141, %c0_142] : memref<9x128x128xf32, #tpu.memory_space<vmem>>, vector<1x128x128xf32>
    %117 = vector.shape_cast %116 : vector<1x128x128xf32> to vector<128x128xf32>
    %cst_143 = arith.constant dense<0.000000e+00> : vector<256x128xf32>
    %118 = tpu.matmul %115, %117, %cst_143 {dimension_numbers = #tpu.dot_dimension_numbers<[1], [0], [0], [1], [0, 0, 1, 1], [], []>} : vector<256x128xf32>, vector<128x128xf32>, vector<256x128xf32> -> vector<256x128xf32>
    %119 = arith.addf %113, %118 : vector<256x128xf32>
    %c6_144 = arith.constant 6 : index
    %c3_145 = arith.constant 3 : index
    %c0_146 = arith.constant 0 : index
    %120 = vector.load %arg8[%c6_144, %c3_145, %c0_146] : memref<22x22x128xf32, #tpu.memory_space<vmem>>, vector<16x16x128xf32>
    %121 = vector.shape_cast %120 : vector<16x16x128xf32> to vector<256x128xf32>
    %c7_147 = arith.constant 7 : index
    %c0_148 = arith.constant 0 : index
    %c0_149 = arith.constant 0 : index
    %122 = vector.load %arg4[%c7_147, %c0_148, %c0_149] : memref<9x128x128xf32, #tpu.memory_space<vmem>>, vector<1x128x128xf32>
    %123 = vector.shape_cast %122 : vector<1x128x128xf32> to vector<128x128xf32>
    %cst_150 = arith.constant dense<0.000000e+00> : vector<256x128xf32>
    %124 = tpu.matmul %121, %123, %cst_150 {dimension_numbers = #tpu.dot_dimension_numbers<[1], [0], [0], [1], [0, 0, 1, 1], [], []>} : vector<256x128xf32>, vector<128x128xf32>, vector<256x128xf32> -> vector<256x128xf32>
    %125 = arith.addf %119, %124 : vector<256x128xf32>
    %c6_151 = arith.constant 6 : index
    %c6_152 = arith.constant 6 : index
    %c0_153 = arith.constant 0 : index
    %126 = vector.load %arg8[%c6_151, %c6_152, %c0_153] : memref<22x22x128xf32, #tpu.memory_space<vmem>>, vector<16x16x128xf32>
    %127 = vector.shape_cast %126 : vector<16x16x128xf32> to vector<256x128xf32>
    %c8_154 = arith.constant 8 : index
    %c0_155 = arith.constant 0 : index
    %c0_156 = arith.constant 0 : index
    %128 = vector.load %arg4[%c8_154, %c0_155, %c0_156] : memref<9x128x128xf32, #tpu.memory_space<vmem>>, vector<1x128x128xf32>
    %129 = vector.shape_cast %128 : vector<1x128x128xf32> to vector<128x128xf32>
    %cst_157 = arith.constant dense<0.000000e+00> : vector<256x128xf32>
    %130 = tpu.matmul %127, %129, %cst_157 {dimension_numbers = #tpu.dot_dimension_numbers<[1], [0], [0], [1], [0, 0, 1, 1], [], []>} : vector<256x128xf32>, vector<128x128xf32>, vector<256x128xf32> -> vector<256x128xf32>
    %131 = arith.addf %125, %130 : vector<256x128xf32>
    %c0_158 = arith.constant 0 : index
    %c0_159 = arith.constant 0 : index
    %132 = vector.load %arg5[%c0_158, %c0_159] : memref<1x128xf32, #tpu.memory_space<vmem>>, vector<1x128xf32>
    %133 = vector.broadcast %132 : vector<1x128xf32> to vector<256x128xf32>
    %134 = arith.addf %131, %133 : vector<256x128xf32>
    %cst_160 = arith.constant 0.000000e+00 : f32
    %135 = vector.broadcast %cst_160 : f32 to vector<256x128xf32>
    %136 = arith.maximumf %134, %135 : vector<256x128xf32>
    %c0_161 = arith.constant 0 : index
    %c0_162 = arith.constant 0 : index
    %c0_163 = arith.constant 0 : index
    %137 = vector.load %arg6[%c0_161, %c0_162, %c0_163] : memref<1x256x128xf32, #tpu.memory_space<vmem>>, vector<1x256x128xf32>
    %138 = vector.shape_cast %137 : vector<1x256x128xf32> to vector<256x128xf32>
    %139 = vector.shape_cast %136 : vector<256x128xf32> to vector<1x256x128xf32>
    tpu.vector_store %arg6[%c0_161, %c0_162, %c0_163], %139 {strides = array<i32>} : memref<1x256x128xf32, #tpu.memory_space<vmem>>, vector<1x256x128xf32>,
    return
  }
  func.func @transform_0(%arg0: i32) -> (i32, i32, i32, i32) {
    %c0_i32 = arith.constant 0 : i32
    %c0_i32_0 = arith.constant 0 : i32
    %c0_i32_1 = arith.constant 0 : i32
    %c0_i32_2 = arith.constant 0 : i32
    return %arg0, %c0_i32, %c0_i32_0, %c0_i32_1 : i32, i32, i32, i32
  }
  func.func @transform_1(%arg0: i32) -> (i32, i32, i32) {
    %c0_i32 = arith.constant 0 : i32
    %c0_i32_0 = arith.constant 0 : i32
    %c0_i32_1 = arith.constant 0 : i32
    %c0_i32_2 = arith.constant 0 : i32
    return %c0_i32, %c0_i32_0, %c0_i32_1 : i32, i32, i32
  }
  func.func @transform_2(%arg0: i32) -> (i32, i32) {
    %c0_i32 = arith.constant 0 : i32
    %c0_i32_0 = arith.constant 0 : i32
    %c0_i32_1 = arith.constant 0 : i32
    return %c0_i32, %c0_i32_0 : i32, i32
  }
  func.func @transform_3(%arg0: i32) -> (i32, i32, i32) {
    %c0_i32 = arith.constant 0 : i32
    %c0_i32_0 = arith.constant 0 : i32
    %c0_i32_1 = arith.constant 0 : i32
    %c0_i32_2 = arith.constant 0 : i32
    return %c0_i32, %c0_i32_0, %c0_i32_1 : i32, i32, i32
  }
  func.func @transform_4(%arg0: i32) -> (i32, i32) {
    %c0_i32 = arith.constant 0 : i32
    %c0_i32_0 = arith.constant 0 : i32
    %c0_i32_1 = arith.constant 0 : i32
    return %c0_i32, %c0_i32_0 : i32, i32
  }
  func.func @transform_5(%arg0: i32) -> (i32, i32, i32) {
    %c0_i32 = arith.constant 0 : i32
    %c0_i32_0 = arith.constant 0 : i32
    %c0_i32_1 = arith.constant 0 : i32
    return %arg0, %c0_i32, %c0_i32_0 : i32, i32, i32
  }
}

</mosaic_0001>

<llo_original>
// kernel: vgg_block.1
$region0: #{vgg_block.1}
  #allocation0 [shape = 'u32[]', space=smem, size = 0x4, offset = 0x4, fixed_abs, tag = 'smem constant byte address 0x4 - core index']
  #allocation1 [shape = 'u32[144,128]{1,0:T(1,128)}', space=vmem, size = 0x12000, scoped, tag = 'internal scratch']
  #allocation2 [shape = 'f32[22,22,4]{2,1,0:T(8,128)}', space=vmem, size = 0x42000, scoped, tag = 'scratch operand']
  #allocation3 [shape = 'f32[22,22,128]{2,1,0:T(8,128)}', space=vmem, size = 0x42000, scoped, tag = 'scratch operand']
  %s0 = inlined_call_operand.vmem [shape: f32[2,16,16,4], index: 0, kind: input, shape index: {}]
  %s1 = inlined_call_operand.vmem [shape: f32[9,4,128], index: 1, kind: input, shape index: {}]
  %s2 = inlined_call_operand.vmem [shape: f32[1,128], index: 2, kind: input, shape index: {}]
  %s3 = inlined_call_operand.vmem [shape: f32[9,128,128], index: 3, kind: input, shape index: {}]
  %s4 = inlined_call_operand.vmem [shape: f32[1,128], index: 4, kind: input, shape index: {}]
  %s5 = inlined_call_operand.vmem [shape: f32[2,256,128], index: 5, kind: output, shape index: {}]
  %s6 = sld [smem:[#allocation0]]
  $region53: #{vgg_block.1} parent=0
    _
  %s8 = ssub.s32 1, %s6
  %s9 = scalar_select 0, %s8, %s6
  loop: start=0, step=1, limit=4
  $region2: #{vgg_block.1} parent=0 // loop_pre_header
    _
  $region3: #{vgg_block.1} parent=0 // loop_header
    %s11 = sphi 0, %s15
    %p12 = scmp.ge.s32.totalorder %s11, 4
    %s21 = sphi 0, %s23
    %s24 = sphi 0, %s21
    %s25 = sphi 0, %s24
    %s41 = sphi 0, %s25
    %s45 = sphi 0, %s45
    %s47 = sphi 0, %s45
    %s48 = sphi 0, %s47
    %s62 = sphi 0, %s48
    %s66 = sphi 0, %s66
    %s68 = sphi 0, %s66
    %s69 = sphi 0, %s68
    %s83 = sphi 0, %s69
    %s87 = sphi 0, %s87
    %s89 = sphi 0, %s87
    %s90 = sphi 0, %s89
    %s104 = sphi 0, %s90
    %s108 = sphi 0, %s108
    %s110 = sphi 0, %s108
    %s111 = sphi 0, %s110
    %s125 = sphi 0, %s111
    %s131 = sphi 0, %s133
    %s134 = sphi 0, %s131
    %s135 = sphi 0, %s134
    %s151 = sphi 0, %s135
  $region4: #{vgg_block.1} parent=0 // loop_header_branch
    %14 = sbr.rel (%p12) target = $region8
  $region5: #{vgg_block.1} parent=0 // loop_body
    %s16 = ssub.s32 %s11, 1
    %s17 = ssub.s32 %s11, 2
    %s18 = sadd.s32 %s11, 1
    %s19 = ssub.s32 %s11, %s18
    %p20 = scmp.eq.s32.totalorder %s19, 0
    %s22 = sadd.s32 %s21, 1
    %s23 = scalar_select %p20, %s21, %s22
    %p26 = pneg %p20
    %p27 = scmp.eq.s32.totalorder %s11, 1
    %p28 = por %p26, %p27
    %p29 = scmp.ne.s32.totalorder %s21, %s24
    %p30 = scmp.eq.s32.totalorder %s11, 0
    %p31 = por %p29, %p30
    %p32 = scmp.ne.s32.totalorder %s21, %s24
    %p33 = scmp.eq.s32.totalorder %s16, 1
    %p34 = por %p32, %p33
    %p35 = scmp.ne.s32.totalorder %s24, %s25
    %p36 = scmp.eq.s32.totalorder %s16, 0
    %p37 = por %p35, %p36
    %p38 = scmp.ne.s32.totalorder %s24, %s25
    %p39 = scmp.eq.s32.totalorder %s17, 1
    %p40 = por %p38, %p39
    %p42 = scmp.ne.s32.totalorder %s25, %s41
    %p43 = scmp.eq.s32.totalorder %s17, 0
    %p44 = por %p42, %p43
    %s46 = sadd.s32 %s45, 1
    %p49 = scmp.eq.s32.totalorder %s11, 1
    %p50 = scmp.ne.s32.totalorder %s45, %s47
    %p51 = scmp.eq.s32.totalorder %s11, 0
    %p52 = por %p50, %p51
    %p53 = scmp.ne.s32.totalorder %s45, %s47
    %p54 = scmp.eq.s32.totalorder %s16, 1
    %p55 = por %p53, %p54
    %p56 = scmp.ne.s32.totalorder %s47, %s48
    %p57 = scmp.eq.s32.totalorder %s16, 0
    %p58 = por %p56, %p57
    %p59 = scmp.ne.s32.totalorder %s47, %s48
    %p60 = scmp.eq.s32.totalorder %s17, 1
    %p61 = por %p59, %p60
    %p63 = scmp.ne.s32.totalorder %s48, %s62
    %p64 = scmp.eq.s32.totalorder %s17, 0
    %p65 = por %p63, %p64
    %s67 = sadd.s32 %s66, 1
    %p70 = scmp.eq.s32.totalorder %s11, 1
    %p71 = scmp.ne.s32.totalorder %s66, %s68
    %p72 = scmp.eq.s32.totalorder %s11, 0
    %p73 = por %p71, %p72
    %p74 = scmp.ne.s32.totalorder %s66, %s68
    %p75 = scmp.eq.s32.totalorder %s16, 1
    %p76 = por %p74, %p75
    %p77 = scmp.ne.s32.totalorder %s68, %s69
    %p78 = scmp.eq.s32.totalorder %s16, 0
    %p79 = por %p77, %p78
    %p80 = scmp.ne.s32.totalorder %s68, %s69
    %p81 = scmp.eq.s32.totalorder %s17, 1
    %p82 = por %p80, %p81
    %p84 = scmp.ne.s32.totalorder %s69, %s83
    %p85 = scmp.eq.s32.totalorder %s17, 0
    %p86 = por %p84, %p85
    %s88 = sadd.s32 %s87, 1
    %p91 = scmp.eq.s32.totalorder %s11, 1
    %p92 = scmp.ne.s32.totalorder %s87, %s89
    %p93 = scmp.eq.s32.totalorder %s11, 0
    %p94 = por %p92, %p93
    %p95 = scmp.ne.s32.totalorder %s87, %s89
    %p96 = scmp.eq.s32.totalorder %s16, 1
    %p97 = por %p95, %p96
    %p98 = scmp.ne.s32.totalorder %s89, %s90
    %p99 = scmp.eq.s32.totalorder %s16, 0
    %p100 = por %p98, %p99
    %p101 = scmp.ne.s32.totalorder %s89, %s90
    %p102 = scmp.eq.s32.totalorder %s17, 1
    %p103 = por %p101, %p102
    %p105 = scmp.ne.s32.totalorder %s90, %s104
    %p106 = scmp.eq.s32.totalorder %s17, 0
    %p107 = por %p105, %p106
    %s109 = sadd.s32 %s108, 1
    %p112 = scmp.eq.s32.totalorder %s11, 1
    %p113 = scmp.ne.s32.totalorder %s108, %s110
    %p114 = scmp.eq.s32.totalorder %s11, 0
    %p115 = por %p113, %p114
    %p116 = scmp.ne.s32.totalorder %s108, %s110
    %p117 = scmp.eq.s32.totalorder %s16, 1
    %p118 = por %p116, %p117
    %p119 = scmp.ne.s32.totalorder %s110, %s111
    %p120 = scmp.eq.s32.totalorder %s16, 0
    %p121 = por %p119, %p120
    %p122 = scmp.ne.s32.totalorder %s110, %s111
    %p123 = scmp.eq.s32.totalorder %s17, 1
    %p124 = por %p122, %p123
    %p126 = scmp.ne.s32.totalorder %s111, %s125
    %p127 = scmp.eq.s32.totalorder %s17, 0
    %p128 = por %p126, %p127
    %s129 = ssub.s32 %s11, %s18
    %p130 = scmp.eq.s32.totalorder %s129, 0
    %s132 = sadd.s32 %s131, 1
    %s133 = scalar_select %p130, %s131, %s132
    %p136 = pneg %p130
    %p137 = scmp.eq.s32.totalorder %s11, 1
    %p138 = por %p136, %p137
    %p139 = scmp.ne.s32.totalorder %s131, %s134
    %p140 = scmp.eq.s32.totalorder %s11, 0
    %p141 = por %p139, %p140
    %p142 = scmp.ne.s32.totalorder %s131, %s134
    %p143 = scmp.eq.s32.totalorder %s16, 1
    %p144 = por %p142, %p143
    %p145 = scmp.ne.s32.totalorder %s134, %s135
    %p146 = scmp.eq.s32.totalorder %s16, 0
    %p147 = por %p145, %p146
    %p148 = scmp.ne.s32.totalorder %s134, %s135
    %p149 = scmp.eq.s32.totalorder %s17, 1
    %p150 = por %p148, %p149
    %p152 = scmp.ne.s32.totalorder %s135, %s151
    %p153 = scmp.eq.s32.totalorder %s17, 0
    %p154 = por %p152, %p153
    %p155 = scmp.le.s32.totalorder 1, %s11
    %p156 = scmp.lt.s32.totalorder %s11, 3
    %p157 = pnand %p155, %p156
    %p158 = pneg %p157
    // Predicated region
    $region9: #{vgg_block.1} parent=5 // pred_check
      _
    $region10: #{vgg_block.1} parent=5 // pred_check_branch
      %160 = sbr.rel (%p157) target = $region12
    $region11: #{vgg_block.1} parent=5 // pred_region
      %s161 = ssub.s32 %s11, 1
      // Predicated region
      $region13: #{vgg_block.1} parent=11 // pred_check
        %p162 = pneg %p58
      $region14: #{vgg_block.1} parent=11 // pred_check_branch
        %164 = sbr.rel (%p162) target = $region16
      $region15: #{vgg_block.1} parent=11 // pred_region
        _
      $region16: #{vgg_block.1} parent=11 // pred_fallthru
        _
      // Predicated region
      $region17: #{vgg_block.1} parent=11 // pred_check
        %p165 = pneg %p79
      $region18: #{vgg_block.1} parent=11 // pred_check_branch
        %167 = sbr.rel (%p165) target = $region20
      $region19: #{vgg_block.1} parent=11 // pred_region
        _
      $region20: #{vgg_block.1} parent=11 // pred_fallthru
        _
      // Predicated region
      $region21: #{vgg_block.1} parent=11 // pred_check
        %p168 = pneg %p100
      $region22: #{vgg_block.1} parent=11 // pred_check_branch
        %170 = sbr.rel (%p168) target = $region24
      $region23: #{vgg_block.1} parent=11 // pred_region
        _
      $region24: #{vgg_block.1} parent=11 // pred_fallthru
        _
      // Predicated region
      $region25: #{vgg_block.1} parent=11 // pred_check
        %p171 = pneg %p121
      $region26: #{vgg_block.1} parent=11 // pred_check_branch
        %173 = sbr.rel (%p171) target = $region28
      $region27: #{vgg_block.1} parent=11 // pred_region
        _
      $region28: #{vgg_block.1} parent=11 // pred_fallthru
        _
    $region12: #{vgg_block.1} parent=5 // pred_fallthru
      _
    %p174 = scmp.lt.s32.totalorder %s11, 2
    // Predicated region
    $region29: #{vgg_block.1} parent=5 // pred_check
      %p175 = pneg %p174
    $region30: #{vgg_block.1} parent=5 // pred_check_branch
      %177 = sbr.rel (%p175) target = $region32
    $region31: #{vgg_block.1} parent=5 // pred_region
      // Predicated region
      $region33: #{vgg_block.1} parent=31 // pred_check
        %p178 = pneg %p31
      $region34: #{vgg_block.1} parent=31 // pred_check_branch
        %180 = sbr.rel (%p178) target = $region36
      $region35: #{vgg_block.1} parent=31 // pred_region
        %p181 = scmp.lt.s32.totalorder %s11, 1
        %s182 = scalar_select %p181, %s11, 1
        %s183 = smul.addr %s182, 32
        %s184 = smul.addr %s183, 8
        %s185 = scalar_lea.vmem %s0, %s184
      $region36: #{vgg_block.1} parent=31 // pred_fallthru
        _
    $region32: #{vgg_block.1} parent=5 // pred_fallthru
      _
    %p186 = scmp.le.s32.totalorder 1, %s11
    %p187 = scmp.lt.s32.totalorder %s11, 3
    %p188 = pnand %p186, %p187
    %p189 = pneg %p188
    // Predicated region
    $region37: #{vgg_block.1} parent=5 // pred_check
      _
    $region38: #{vgg_block.1} parent=5 // pred_check_branch
      %191 = sbr.rel (%p188) target = $region40
    $region39: #{vgg_block.1} parent=5 // pred_region
      %s192 = ssub.s32 %s11, 1
      %p193 = scmp.lt.s32.totalorder %s16, 1
      %s194 = scalar_select %p193, %s16, 1
      %s195 = smul.addr %s194, 32
      %s196 = smul.addr %s195, 8
      %s197 = scalar_lea.vmem %s0, %s196
      %p198 = pneg %p37
      %p199 = pneg %p34
      %p200 = pneg %p58
      %p201 = pneg %p55
      %p202 = pneg %p79
      %p203 = pneg %p76
      %p204 = pneg %p100
      %p205 = pneg %p97
      %p206 = pneg %p121
      %p207 = pneg %p118
      %p208 = pneg %p147
      %p209 = pneg %p144
      %p210 = scmp.lt.s32.totalorder %s16, 1
      %s211 = scalar_select %p210, %s16, 1
      %s212 = smul.addr %s211, 32
      %s213 = smul.addr %s212, 8
      %s214 = scalar_lea.vmem %s5, %s213
      %p215 = scmp.lt.s32.totalorder %s16, 1
      %s216 = scalar_select %p215, %s16, 1
      %s217 = smul.addr %s216, 32
      %s218 = smul.addr %s217, 8
      %s219 = scalar_lea.vmem %s0, %s218
      %p220 = scmp.lt.s32.totalorder %s16, 1
      %s221 = scalar_select %p220, %s16, 1
      %s222 = smul.addr %s221, 32
      %s223 = smul.addr %s222, 8
      %s224 = scalar_lea.vmem %s5, %s223
      %vm225 = vcmask 31744
      %226 = vst.msk [vmem:[#allocation2] sm:$0xff] %vm225, 0.0
      %227 = vst.msk [vmem:[#allocation2 + $0x8] sm:$0xff] %vm225, 0.0
      %vm228 = vcmask 29696
      %229 = vst.msk [vmem:[#allocation2 + $0x10] sm:$0x3f] %vm228, 0.0
      %230 = vst.msk [vmem:[#allocation2 + $0x18] sm:$0xff] %vm225, 0.0
      %231 = vst.msk [vmem:[#allocation2 + $0x20] sm:$0xff] %vm225, 0.0
      %232 = vst.msk [vmem:[#allocation2 + $0x28] sm:$0x3f] %vm228, 0.0
      %233 = vst.msk [vmem:[#allocation2 + $0x30] sm:$0xff] %vm225, 0.0
      %234 = vst.msk [vmem:[#allocation2 + $0x38] sm:$0xff] %vm225, 0.0
      %235 = vst.msk [vmem:[#allocation2 + $0x40] sm:$0x3f] %vm228, 0.0
      %s236 = scalar_lea.vmem [#allocation2], 456
      %237 = vst.msk [vmem:[%s236] sm:$0xff] %vm225, 0.0
      %238 = vst.msk [vmem:[%s236 + $0x8] sm:$0xff] %vm225, 0.0
      %239 = vst.msk [vmem:[%s236 + $0x10] sm:$0x3f] %vm228, 0.0
      %240 = vst.msk [vmem:[%s236 + $0x18] sm:$0xff] %vm225, 0.0
      %241 = vst.msk [vmem:[%s236 + $0x20] sm:$0xff] %vm225, 0.0
      %242 = vst.msk [vmem:[%s236 + $0x28] sm:$0x3f] %vm228, 0.0
      %243 = vst.msk [vmem:[%s236 + $0x30] sm:$0xff] %vm225, 0.0
      %244 = vst.msk [vmem:[%s236 + $0x38] sm:$0xff] %vm225, 0.0
      %245 = vst.msk [vmem:[%s236 + $0x40] sm:$0x3f] %vm228, 0.0
      %s246 = scalar_lea.vmem [#allocation2], 72
      %vm247 = vcmask 26624
      %248 = vst.msk [vmem:[%s246] sm:$0x7] %vm247, 0.0
      %249 = vst.msk [vmem:[%s246 + $0x18] sm:$0x7] %vm247, 0.0
      %250 = vst.msk [vmem:[%s246 + $0x30] sm:$0x7] %vm247, 0.0
      %251 = vst.msk [vmem:[%s246 + $0x48] sm:$0x7] %vm247, 0.0
      %252 = vst.msk [vmem:[%s246 + $0x60] sm:$0x7] %vm247, 0.0
      %253 = vst.msk [vmem:[%s246 + $0x78] sm:$0x7] %vm247, 0.0
      %254 = vst.msk [vmem:[%s246 + $0x90] sm:$0x7] %vm247, 0.0
      %255 = vst.msk [vmem:[%s246 + $0xa8] sm:$0x7] %vm247, 0.0
      %256 = vst.msk [vmem:[%s246 + $0xc0] sm:$0x7] %vm247, 0.0
      %257 = vst.msk [vmem:[%s246 + $0xd8] sm:$0x7] %vm247, 0.0
      %258 = vst.msk [vmem:[%s246 + $0xf0] sm:$0x7] %vm247, 0.0
      %259 = vst.msk [vmem:[%s246 + $0x108] sm:$0x7] %vm247, 0.0
      %260 = vst.msk [vmem:[%s246 + $0x120] sm:$0x7] %vm247, 0.0
      %261 = vst.msk [vmem:[%s246 + $0x138] sm:$0x7] %vm247, 0.0
      %262 = vst.msk [vmem:[%s246 + $0x150] sm:$0x7] %vm247, 0.0
      %263 = vst.msk [vmem:[%s246 + $0x168] sm:$0x7] %vm247, 0.0
      %264 = vst.msk [vmem:[%s246 + $0x13] sm:$0x7] %vm247, 0.0
      %265 = vst.msk [vmem:[%s246 + $0x2b] sm:$0x7] %vm247, 0.0
      %266 = vst.msk [vmem:[%s246 + $0x43] sm:$0x7] %vm247, 0.0
      %267 = vst.msk [vmem:[%s246 + $0x5b] sm:$0x7] %vm247, 0.0
      %268 = vst.msk [vmem:[%s246 + $0x73] sm:$0x7] %vm247, 0.0
      %269 = vst.msk [vmem:[%s246 + $0x8b] sm:$0x7] %vm247, 0.0
      %270 = vst.msk [vmem:[%s246 + $0xa3] sm:$0x7] %vm247, 0.0
      %271 = vst.msk [vmem:[%s246 + $0xbb] sm:$0x7] %vm247, 0.0
      %272 = vst.msk [vmem:[%s246 + $0xd3] sm:$0x7] %vm247, 0.0
      %273 = vst.msk [vmem:[%s246 + $0xeb] sm:$0x7] %vm247, 0.0
      %274 = vst.msk [vmem:[%s246 + $0x103] sm:$0x7] %vm247, 0.0
      %275 = vst.msk [vmem:[%s246 + $0x11b] sm:$0x7] %vm247, 0.0
      %276 = vst.msk [vmem:[%s246 + $0x133] sm:$0x7] %vm247, 0.0
      %277 = vst.msk [vmem:[%s246 + $0x14b] sm:$0x7] %vm247, 0.0
      %278 = vst.msk [vmem:[%s246 + $0x163] sm:$0x7] %vm247, 0.0
      %279 = vst.msk [vmem:[%s246 + $0x17b] sm:$0x7] %vm247, 0.0
      %v280 = vld [vmem:[%s219] sm:$0xff]
      %v281 = vld [vmem:[%s219 + $0x8] sm:$0xff]
      %v282 = vld [vmem:[%s219 + $0x10] sm:$0xff]
      %v283 = vld [vmem:[%s219 + $0x18] sm:$0xff]
      %v284 = vld [vmem:[%s219 + $0x20] sm:$0xff]
      %v285 = vld [vmem:[%s219 + $0x28] sm:$0xff]
      %v286 = vld [vmem:[%s219 + $0x30] sm:$0xff]
      %v287 = vld [vmem:[%s219 + $0x38] sm:$0xff]
      %v288 = vld [vmem:[%s219 + $0x40] sm:$0xff]
      %v289 = vld [vmem:[%s219 + $0x48] sm:$0xff]
      %v290 = vld [vmem:[%s219 + $0x50] sm:$0xff]
      %v291 = vld [vmem:[%s219 + $0x58] sm:$0xff]
      %v292 = vld [vmem:[%s219 + $0x60] sm:$0xff]
      %v293 = vld [vmem:[%s219 + $0x68] sm:$0xff]
      %v294 = vld [vmem:[%s219 + $0x70] sm:$0xff]
      %v295 = vld [vmem:[%s219 + $0x78] sm:$0xff]
      %v296 = vld [vmem:[%s219 + $0x80] sm:$0xff]
      %v297 = vld [vmem:[%s219 + $0x88] sm:$0xff]
      %v298 = vld [vmem:[%s219 + $0x90] sm:$0xff]
      %v299 = vld [vmem:[%s219 + $0x98] sm:$0xff]
      %v300 = vld [vmem:[%s219 + $0xa0] sm:$0xff]
      %v301 = vld [vmem:[%s219 + $0xa8] sm:$0xff]
      %v302 = vld [vmem:[%s219 + $0xb0] sm:$0xff]
      %v303 = vld [vmem:[%s219 + $0xb8] sm:$0xff]
      %v304 = vld [vmem:[%s219 + $0xc0] sm:$0xff]
      %v305 = vld [vmem:[%s219 + $0xc8] sm:$0xff]
      %v306 = vld [vmem:[%s219 + $0xd0] sm:$0xff]
      %v307 = vld [vmem:[%s219 + $0xd8] sm:$0xff]
      %v308 = vld [vmem:[%s219 + $0xe0] sm:$0xff]
      %v309 = vld [vmem:[%s219 + $0xe8] sm:$0xff]
      %v310 = vld [vmem:[%s219 + $0xf0] sm:$0xff]
      %v311 = vld [vmem:[%s219 + $0xf8] sm:$0xff]
      %312 = vst.msk [vmem:[%s246 + $0x3] sm:$0xff] %vm225, %v280
      %313 = vst.msk [vmem:[%s246 + $0xb] sm:$0xff] %vm225, %v281
      %314 = vst.msk [vmem:[%s246 + $0x1b] sm:$0xff] %vm225, %v282
      %315 = vst.msk [vmem:[%s246 + $0x23] sm:$0xff] %vm225, %v283
      %316 = vst.msk [vmem:[%s246 + $0x33] sm:$0xff] %vm225, %v284
      %317 = vst.msk [vmem:[%s246 + $0x3b] sm:$0xff] %vm225, %v285
      %318 = vst.msk [vmem:[%s246 + $0x4b] sm:$0xff] %vm225, %v286
      %319 = vst.msk [vmem:[%s246 + $0x53] sm:$0xff] %vm225, %v287
      %320 = vst.msk [vmem:[%s246 + $0x63] sm:$0xff] %vm225, %v288
      %321 = vst.msk [vmem:[%s246 + $0x6b] sm:$0xff] %vm225, %v289
      %322 = vst.msk [vmem:[%s246 + $0x7b] sm:$0xff] %vm225, %v290
      %323 = vst.msk [vmem:[%s246 + $0x83] sm:$0xff] %vm225, %v291
      %324 = vst.msk [vmem:[%s246 + $0x93] sm:$0xff] %vm225, %v292
      %325 = vst.msk [vmem:[%s246 + $0x9b] sm:$0xff] %vm225, %v293
      %326 = vst.msk [vmem:[%s246 + $0xab] sm:$0xff] %vm225, %v294
      %327 = vst.msk [vmem:[%s246 + $0xb3] sm:$0xff] %vm225, %v295
      %328 = vst.msk [vmem:[%s246 + $0xc3] sm:$0xff] %vm225, %v296
      %329 = vst.msk [vmem:[%s246 + $0xcb] sm:$0xff] %vm225, %v297
      %330 = vst.msk [vmem:[%s246 + $0xdb] sm:$0xff] %vm225, %v298
      %331 = vst.msk [vmem:[%s246 + $0xe3] sm:$0xff] %vm225, %v299
      %332 = vst.msk [vmem:[%s246 + $0xf3] sm:$0xff] %vm225, %v300
      %333 = vst.msk [vmem:[%s246 + $0xfb] sm:$0xff] %vm225, %v301
      %334 = vst.msk [vmem:[%s246 + $0x10b] sm:$0xff] %vm225, %v302
      %335 = vst.msk [vmem:[%s246 + $0x113] sm:$0xff] %vm225, %v303
      %336 = vst.msk [vmem:[%s246 + $0x123] sm:$0xff] %vm225, %v304
      %337 = vst.msk [vmem:[%s246 + $0x12b] sm:$0xff] %vm225, %v305
      %338 = vst.msk [vmem:[%s246 + $0x13b] sm:$0xff] %vm225, %v306
      %339 = vst.msk [vmem:[%s246 + $0x143] sm:$0xff] %vm225, %v307
      %340 = vst.msk [vmem:[%s246 + $0x153] sm:$0xff] %vm225, %v308
      %341 = vst.msk [vmem:[%s246 + $0x15b] sm:$0xff] %vm225, %v309
      %342 = vst.msk [vmem:[%s246 + $0x16b] sm:$0xff] %vm225, %v310
      %343 = vst.msk [vmem:[%s246 + $0x173] sm:$0xff] %vm225, %v311
      %v344 = vld [vmem:[#allocation2] sm:$0xff]
      %v345 = vld [vmem:[#allocation2 + $0x8] sm:$0xff]
      %v346 = vld [vmem:[#allocation2 + $0x18] sm:$0xff]
      %v347 = vld [vmem:[#allocation2 + $0x20] sm:$0xff]
      %v348 = vld [vmem:[#allocation2 + $0x30] sm:$0xff]
      %v349 = vld [vmem:[#allocation2 + $0x38] sm:$0xff]
      %v350 = vld [vmem:[#allocation2 + $0x48] sm:$0xff]
      %v351 = vld [vmem:[#allocation2 + $0x50] sm:$0xff]
      %v352 = vld [vmem:[#allocation2 + $0x60] sm:$0xff]
      %v353 = vld [vmem:[#allocation2 + $0x68] sm:$0xff]
      %v354 = vld [vmem:[#allocation2 + $0x78] sm:$0xff]
      %v355 = vld [vmem:[#allocation2 + $0x80] sm:$0xff]
      %v356 = vld [vmem:[#allocation2 + $0x90] sm:$0xff]
      %v357 = vld [vmem:[#allocation2 + $0x98] sm:$0xff]
      %v358 = vld [vmem:[#allocation2 + $0xa8] sm:$0xff]
      %v359 = vld [vmem:[#allocation2 + $0xb0] sm:$0xff]
      %v360 = vld [vmem:[#allocation2 + $0xc0] sm:$0xff]
      %v361 = vld [vmem:[#allocation2 + $0xc8] sm:$0xff]
      %v362 = vld [vmem:[#allocation2 + $0xd8] sm:$0xff]
      %v363 = vld [vmem:[#allocation2 + $0xe0] sm:$0xff]
      %v364 = vld [vmem:[#allocation2 + $0xf0] sm:$0xff]
      %v365 = vld [vmem:[#allocation2 + $0xf8] sm:$0xff]
      %v366 = vld [vmem:[#allocation2 + $0x108] sm:$0xff]
      %v367 = vld [vmem:[#allocation2 + $0x110] sm:$0xff]
      %v368 = vld [vmem:[#allocation2 + $0x120] sm:$0xff]
      %v369 = vld [vmem:[#allocation2 + $0x128] sm:$0xff]
      %v370 = vld [vmem:[#allocation2 + $0x138] sm:$0xff]
      %v371 = vld [vmem:[#allocation2 + $0x140] sm:$0xff]
      %v372 = vld [vmem:[#allocation2 + $0x150] sm:$0xff]
      %v373 = vld [vmem:[#allocation2 + $0x158] sm:$0xff]
      %v374 = vld [vmem:[#allocation2 + $0x168] sm:$0xff]
      %v375 = vld [vmem:[#allocation2 + $0x170] sm:$0xff]
      %v376 = vld [vmem:[%s1] sm:$0xf]
      %v377 = vld [vmem:[#allocation2 + $0x3] sm:$0xff]
      %v378 = vld [vmem:[#allocation2 + $0xb] sm:$0xff]
      %v379 = vld [vmem:[#allocation2 + $0x1b] sm:$0xff]
      %v380 = vld [vmem:[#allocation2 + $0x23] sm:$0xff]
      %v381 = vld [vmem:[#allocation2 + $0x33] sm:$0xff]
      %v382 = vld [vmem:[#allocation2 + $0x3b] sm:$0xff]
      %v383 = vld [vmem:[#allocation2 + $0x4b] sm:$0xff]
      %v384 = vld [vmem:[#allocation2 + $0x53] sm:$0xff]
      %v385 = vld [vmem:[#allocation2 + $0x63] sm:$0xff]
      %v386 = vld [vmem:[#allocation2 + $0x6b] sm:$0xff]
      %v387 = vld [vmem:[#allocation2 + $0x7b] sm:$0xff]
      %v388 = vld [vmem:[#allocation2 + $0x83] sm:$0xff]
      %v389 = vld [vmem:[#allocation2 + $0x93] sm:$0xff]
      %v390 = vld [vmem:[#allocation2 + $0x9b] sm:$0xff]
      %v391 = vld [vmem:[#allocation2 + $0xab] sm:$0xff]
      %v392 = vld [vmem:[#allocation2 + $0xb3] sm:$0xff]
      %v393 = vld [vmem:[#allocation2 + $0xc3] sm:$0xff]
      %v394 = vld [vmem:[#allocation2 + $0xcb] sm:$0xff]
      %v395 = vld [vmem:[#allocation2 + $0xdb] sm:$0xff]
      %v396 = vld [vmem:[#allocation2 + $0xe3] sm:$0xff]
      %v397 = vld [vmem:[#allocation2 + $0xf3] sm:$0xff]
      %v398 = vld [vmem:[#allocation2 + $0xfb] sm:$0xff]
      %v399 = vld [vmem:[#allocation2 + $0x10b] sm:$0xff]
      %v400 = vld [vmem:[#allocation2 + $0x113] sm:$0xff]
      %v401 = vld [vmem:[#allocation2 + $0x123] sm:$0xff]
      %v402 = vld [vmem:[#allocation2 + $0x12b] sm:$0xff]
      %v403 = vld [vmem:[#allocation2 + $0x13b] sm:$0xff]
      %v404 = vld [vmem:[#allocation2 + $0x143] sm:$0xff]
      %v405 = vld [vmem:[#allocation2 + $0x153] sm:$0xff]
      %v406 = vld [vmem:[#allocation2 + $0x15b] sm:$0xff]
      %v407 = vld [vmem:[#allocation2 + $0x16b] sm:$0xff]
      %v408 = vld [vmem:[#allocation2 + $0x173] sm:$0xff]
      %s409 = scalar_lea.vmem %s1, 4
      %v410 = vld [vmem:[%s409] sm:$0xf]
      %v412 = vsel %vm225, %v377, 0
      %v415 = vsel %vm225, %v378, 0
      %v418 = vsel %vm225, %v379, 0
      %v421 = vsel %vm225, %v380, 0
      %v424 = vsel %vm225, %v381, 0
      %v427 = vsel %vm225, %v382, 0
      %v430 = vsel %vm225, %v383, 0
      %v433 = vsel %vm225, %v384, 0
      %v436 = vsel %vm225, %v385, 0
      %v439 = vsel %vm225, %v386, 0
      %v442 = vsel %vm225, %v387, 0
      %v445 = vsel %vm225, %v388, 0
      %v448 = vsel %vm225, %v389, 0
      %v451 = vsel %vm225, %v390, 0
      %v454 = vsel %vm225, %v391, 0
      %v457 = vsel %vm225, %v392, 0
      %v460 = vsel %vm225, %v393, 0
      %v463 = vsel %vm225, %v394, 0
      %v466 = vsel %vm225, %v395, 0
      %v469 = vsel %vm225, %v396, 0
      %v472 = vsel %vm225, %v397, 0
      %v475 = vsel %vm225, %v398, 0
      %v478 = vsel %vm225, %v399, 0
      %v481 = vsel %vm225, %v400, 0
      %v484 = vsel %vm225, %v401, 0
      %v487 = vsel %vm225, %v402, 0
      %v490 = vsel %vm225, %v403, 0
      %v493 = vsel %vm225, %v404, 0
      %v496 = vsel %vm225, %v405, 0
      %v499 = vsel %vm225, %v406, 0
      %v502 = vsel %vm225, %v407, 0
      %v505 = vsel %vm225, %v408, 0
      %vm507 = vcmask 1043456
      %v509 = vsel %vm507, %v410, 0
      %511 = vmatprep.subr.mxu0 0.0
      %512 = vmatpush1.msra.mxu0 %v509
      %513 = vmatprep.subr.mxu0 0.0
      %514 = vmatpush1.msra.mxu0 0.0
      %515 = vmatprep.subr.mxu0 0.0
      %516 = vmatpush1.msra.mxu0 0.0
      %517 = vmatprep.subr.mxu0 0.0
      %518 = vmatpush1.msra.mxu0 0.0
      %519 = vmatprep.subr.mxu0 0.0
      %520 = vmatpush1.msra.mxu0 0.0
      %521 = vmatprep.subr.mxu0 0.0
      %522 = vmatpush1.msra.mxu0 0.0
      %523 = vmatprep.subr.mxu0 0.0
      %524 = vmatpush1.msra.mxu0 0.0
      %525 = vmatprep.subr.mxu0 0.0
      %526 = vmatpush1.msra.mxu0 0.0
      %527 = vmatprep.subr.mxu0 0.0
      %528 = vmatpush1.msra.mxu0 0.0
      %529 = vmatprep.subr.mxu0 0.0
      %530 = vmatpush1.msra.mxu0 0.0
      %531 = vmatprep.subr.mxu0 0.0
      %532 = vmatpush1.msra.mxu0 0.0
      %533 = vmatprep.subr.mxu0 0.0
      %534 = vmatpush1.msra.mxu0 0.0
      %535 = vmatprep.subr.mxu0 0.0
      %536 = vmatpush1.msra.mxu0 0.0
      %537 = vmatprep.subr.mxu0 0.0
      %538 = vmatpush1.msra.mxu0 0.0
      %539 = vmatprep.subr.mxu0 0.0
      %540 = vmatpush1.msra.mxu0 0.0
      %541 = vmatprep.subr.mxu0 0.0
      %542 = vmatpush1.msra.mxu0 0.0
      %543 = vmatprep.subr.mxu0 0.0
      %544 = vmatpush1.msra.mxu0 0.0
      %545 = vmatprep.subr.mxu0 0.0
      %546 = vmatpush1.msra.mxu0 0.0
      %547 = vmatprep.subr.mxu0 0.0
      %548 = vmatpush1.msra.mxu0 0.0
      %549 = vmatprep.subr.mxu0 0.0
      %550 = vmatpush1.msra.mxu0 0.0
      %551 = vmatprep.subr.mxu0 0.0
      %552 = vmatpush1.msra.mxu0 0.0
      %553 = vmatprep.subr.mxu0 0.0
      %554 = vmatpush1.msra.mxu0 0.0
      %555 = vmatprep.subr.mxu0 0.0
      %556 = vmatpush1.msra.mxu0 0.0
      %557 = vmatprep.subr.mxu0 0.0
      %558 = vmatpush1.msra.mxu0 0.0
      %559 = vmatprep.subr.mxu0 0.0
      %560 = vmatpush1.msra.mxu0 0.0
      %561 = vmatprep.subr.mxu0 0.0
      %562 = vmatpush1.msra.mxu0 0.0
      %563 = vmatprep.subr.mxu0 0.0
      %564 = vmatpush1.msra.mxu0 0.0
      %565 = vmatprep.subr.mxu0 0.0
      %566 = vmatpush1.msra.mxu0 0.0
      %567 = vmatprep.subr.mxu0 0.0
      %568 = vmatpush1.msra.mxu0 0.0
      %569 = vmatprep.subr.mxu0 0.0
      %570 = vmatpush1.msra.mxu0 0.0
      %571 = vmatprep.subr.mxu0 0.0
      %572 = vmatpush1.msra.mxu0 0.0
      %573 = vmatprep.subr.mxu0 0.0
      %574 = vmatpush1.msra.mxu0 0.0
      %575 = vmatprep.mubr.f32.mxu0 0.0
      %576 = vmatmul.mubr.f32.gmra.mrb[0].mxu0 %v412
      %v577 = vpop.f32.mrb[0].mxu0
      %v578 = vadd.f32 0.0, %v577
      %v579 = vpop.f32.mrb[0].mxu0
      %580 = vmatprep.mubr.f32.mxu0 0.0
      %581 = vmatmul.mubr.f32.gmra.mrb[0].mxu0 %v415
      %v582 = vpop.f32.mrb[0].mxu0
      %v583 = vadd.f32 0.0, %v582
      %v584 = vpop.f32.mrb[0].mxu0
      %585 = vmatprep.mubr.f32.mxu0 0.0
      %586 = vmatmul.mubr.f32.gmra.mrb[0].mxu0 %v418
      %v587 = vpop.f32.mrb[0].mxu0
      %v588 = vadd.f32 0.0, %v587
      %v589 = vpop.f32.mrb[0].mxu0
      %590 = vmatprep.mubr.f32.mxu0 0.0
      %591 = vmatmul.mubr.f32.gmra.mrb[0].mxu0 %v421
      %v592 = vpop.f32.mrb[0].mxu0
      %v593 = vadd.f32 0.0, %v592
      %v594 = vpop.f32.mrb[0].mxu0
      %595 = vmatprep.mubr.f32.mxu0 0.0
      %596 = vmatmul.mubr.f32.gmra.mrb[0].mxu0 %v424
      %v597 = vpop.f32.mrb[0].mxu0
      %v598 = vadd.f32 0.0, %v597
      %v599 = vpop.f32.mrb[0].mxu0
      %600 = vmatprep.mubr.f32.mxu0 0.0
      %601 = vmatmul.mubr.f32.gmra.mrb[0].mxu0 %v427
      %v602 = vpop.f32.mrb[0].mxu0
      %v603 = vadd.f32 0.0, %v602
      %v604 = vpop.f32.mrb[0].mxu0
      %605 = vmatprep.mubr.f32.mxu0 0.0
      %606 = vmatmul.mubr.f32.gmra.mrb[0].mxu0 %v430
      %v607 = vpop.f32.mrb[0].mxu0
      %v608 = vadd.f32 0.0, %v607
      %v609 = vpop.f32.mrb[0].mxu0
      %610 = vmatprep.mubr.f32.mxu0 0.0
      %611 = vmatmul.mubr.f32.gmra.mrb[0].mxu0 %v433
      %v612 = vpop.f32.mrb[0].mxu0
      %v613 = vadd.f32 0.0, %v612
      %v614 = vpop.f32.mrb[0].mxu0
      %615 = vmatprep.mubr.f32.mxu0 0.0
      %616 = vmatmul.mubr.f32.gmra.mrb[0].mxu0 %v436
      %v617 = vpop.f32.mrb[0].mxu0
      %v618 = vadd.f32 0.0, %v617
      %v619 = vpop.f32.mrb[0].mxu0
      %620 = vmatprep.mubr.f32.mxu0 0.0
      %621 = vmatmul.mubr.f32.gmra.mrb[0].mxu0 %v439
      %v622 = vpop.f32.mrb[0].mxu0
      %v623 = vadd.f32 0.0, %v622
      %v624 = vpop.f32.mrb[0].mxu0
      %625 = vmatprep.mubr.f32.mxu0 0.0
      %626 = vmatmul.mubr.f32.gmra.mrb[0].mxu0 %v442
      %v627 = vpop.f32.mrb[0].mxu0
      %v628 = vadd.f32 0.0, %v627
      %v629 = vpop.f32.mrb[0].mxu0
      %630 = vmatprep.mubr.f32.mxu0 0.0
      %631 = vmatmul.mubr.f32.gmra.mrb[0].mxu0 %v445
      %v632 = vpop.f32.mrb[0].mxu0
      %v633 = vadd.f32 0.0, %v632
      %v634 = vpop.f32.mrb[0].mxu0
      %635 = vmatprep.mubr.f32.mxu0 0.0
      %636 = vmatmul.mubr.f32.gmra.mrb[0].mxu0 %v448
      %v637 = vpop.f32.mrb[0].mxu0
      %v638 = vadd.f32 0.0, %v637
      %v639 = vpop.f32.mrb[0].mxu0
      %640 = vmatprep.mubr.f32.mxu0 0.0
      %641 = vmatmul.mubr.f32.gmra.mrb[0].mxu0 %v451
      %v642 = vpop.f32.mrb[0].mxu0
      %v643 = vadd.f32 0.0, %v642
      %v644 = vpop.f32.mrb[0].mxu0
      %645 = vmatprep.mubr.f32.mxu0 0.0
      %646 = vmatmul.mubr.f32.gmra.mrb[0].mxu0 %v454
      %v647 = vpop.f32.mrb[0].mxu0
      %v648 = vadd.f32 0.0, %v647
      %v649 = vpop.f32.mrb[0].mxu0
      %650 = vmatprep.mubr.f32.mxu0 0.0
      %651 = vmatmul.mubr.f32.gmra.mrb[0].mxu0 %v457
      %v652 = vpop.f32.mrb[0].mxu0
      %v653 = vadd.f32 0.0, %v652
      %v654 = vpop.f32.mrb[0].mxu0
      %655 = vmatprep.mubr.f32.mxu0 0.0
      %656 = vmatmul.mubr.f32.gmra.mrb[0].mxu0 %v460
      %v657 = vpop.f32.mrb[0].mxu0
      %v658 = vadd.f32 0.0, %v657
      %v659 = vpop.f32.mrb[0].mxu0
      %660 = vmatprep.mubr.f32.mxu0 0.0
      %661 = vmatmul.mubr.f32.gmra.mrb[0].mxu0 %v463
      %v662 = vpop.f32.mrb[0].mxu0
      %v663 = vadd.f32 0.0, %v662
      %v664 = vpop.f32.mrb[0].mxu0
      %665 = vmatprep.mubr.f32.mxu0 0.0
      %666 = vmatmul.mubr.f32.gmra.mrb[0].mxu0 %v466
      %v667 = vpop.f32.mrb[0].mxu0
      %v668 = vadd.f32 0.0, %v667
      %v669 = vpop.f32.mrb[0].mxu0
      %670 = vmatprep.mubr.f32.mxu0 0.0
      %671 = vmatmul.mubr.f32.gmra.mrb[0].mxu0 %v469
      %v672 = vpop.f32.mrb[0].mxu0
      %v673 = vadd.f32 0.0, %v672
      %v674 = vpop.f32.mrb[0].mxu0
      %675 = vmatprep.mubr.f32.mxu0 0.0
      %676 = vmatmul.mubr.f32.gmra.mrb[0].mxu0 %v472
      %v677 = vpop.f32.mrb[0].mxu0
      %v678 = vadd.f32 0.0, %v677
      %v679 = vpop.f32.mrb[0].mxu0
      %680 = vmatprep.mubr.f32.mxu0 0.0
      %681 = vmatmul.mubr.f32.gmra.mrb[0].mxu0 %v475
      %v682 = vpop.f32.mrb[0].mxu0
      %v683 = vadd.f32 0.0, %v682
      %v684 = vpop.f32.mrb[0].mxu0
      %685 = vmatprep.mubr.f32.mxu0 0.0
      %686 = vmatmul.mubr.f32.gmra.mrb[0].mxu0 %v478
      %v687 = vpop.f32.mrb[0].mxu0
      %v688 = vadd.f32 0.0, %v687
      %v689 = vpop.f32.mrb[0].mxu0
      %690 = vmatprep.mubr.f32.mxu0 0.0
      %691 = vmatmul.mubr.f32.gmra.mrb[0].mxu0 %v481
      %v692 = vpop.f32.mrb[0].mxu0
      %v693 = vadd.f32 0.0, %v692
      %v694 = vpop.f32.mrb[0].mxu0
      %695 = vmatprep.mubr.f32.mxu0 0.0
      %696 = vmatmul.mubr.f32.gmra.mrb[0].mxu0 %v484
      %v697 = vpop.f32.mrb[0].mxu0
      %v698 = vadd.f32 0.0, %v697
      %v699 = vpop.f32.mrb[0].mxu0
      %700 = vmatprep.mubr.f32.mxu0 0.0
      %701 = vmatmul.mubr.f32.gmra.mrb[0].mxu0 %v487
      %v702 = vpop.f32.mrb[0].mxu0
      %v703 = vadd.f32 0.0, %v702
      %v704 = vpop.f32.mrb[0].mxu0
      %705 = vmatprep.mubr.f32.mxu0 0.0
      %706 = vmatmul.mubr.f32.gmra.mrb[0].mxu0 %v490
      %v707 = vpop.f32.mrb[0].mxu0
      %v708 = vadd.f32 0.0, %v707
      %v709 = vpop.f32.mrb[0].mxu0
      %710 = vmatprep.mubr.f32.mxu0 0.0
      %711 = vmatmul.mubr.f32.gmra.mrb[0].mxu0 %v493
      %v712 = vpop.f32.mrb[0].mxu0
      %v713 = vadd.f32 0.0, %v712
      %v714 = vpop.f32.mrb[0].mxu0
      %715 = vmatprep.mubr.f32.mxu0 0.0
      %716 = vmatmul.mubr.f32.gmra.mrb[0].mxu0 %v496
      %v717 = vpop.f32.mrb[0].mxu0
      %v718 = vadd.f32 0.0, %v717
      %v719 = vpop.f32.mrb[0].mxu0
      %720 = vmatprep.mubr.f32.mxu0 0.0
      %721 = vmatmul.mubr.f32.gmra.mrb[0].mxu0 %v499
      %v722 = vpop.f32.mrb[0].mxu0
      %v723 = vadd.f32 0.0, %v722
      %v724 = vpop.f32.mrb[0].mxu0
      %725 = vmatprep.mubr.f32.mxu0 0.0
      %726 = vmatmul.mubr.f32.gmra.mrb[0].mxu0 %v502
      %v727 = vpop.f32.mrb[0].mxu0
      %v728 = vadd.f32 0.0, %v727
      %v729 = vpop.f32.mrb[0].mxu0
      %730 = vmatprep.mubr.f32.mxu0 0.0
      %731 = vmatmul.mubr.f32.gmra.mrb[0].mxu0 %v505
      %v732 = vpop.f32.mrb[0].mxu0
      %v733 = vadd.f32 0.0, %v732
      %v734 = vpop.f32.mrb[0].mxu0
      %735 = vdwg.mxu0
      %v737 = vsel %vm225, %v344, 0
      %v740 = vsel %vm225, %v345, 0
      %v743 = vsel %vm225, %v346, 0
      %v746 = vsel %vm225, %v347, 0
      %v749 = vsel %vm225, %v348, 0
      %v752 = vsel %vm225, %v349, 0
      %v755 = vsel %vm225, %v350, 0
      %v758 = vsel %vm225, %v351, 0
      %v761 = vsel %vm225, %v352, 0
      %v764 = vsel %vm225, %v353, 0
      %v767 = vsel %vm225, %v354, 0
      %v770 = vsel %vm225, %v355, 0
      %v773 = vsel %vm225, %v356, 0
      %v776 = vsel %vm225, %v357, 0
      %v779 = vsel %vm225, %v358, 0
      %v782 = vsel %vm225, %v359, 0
      %v785 = vsel %vm225, %v360, 0
      %v788 = vsel %vm225, %v361, 0
      %v791 = vsel %vm225, %v362, 0
      %v794 = vsel %vm225, %v363, 0
      %v797 = vsel %vm225, %v364, 0
      %v800 = vsel %vm225, %v365, 0
      %v803 = vsel %vm225, %v366, 0
      %v806 = vsel %vm225, %v367, 0
      %v809 = vsel %vm225, %v368, 0
      %v812 = vsel %vm225, %v369, 0
      %v815 = vsel %vm225, %v370, 0
      %v818 = vsel %vm225, %v371, 0
      %v821 = vsel %vm225, %v372, 0
      %v824 = vsel %vm225, %v373, 0
      %v827 = vsel %vm225, %v374, 0
      %v830 = vsel %vm225, %v375, 0
      %v833 = vsel %vm507, %v376, 0
      %835 = vmatprep.subr.mxu0 0.0
      %836 = vmatpush1.msra.mxu0 %v833
      %837 = vmatprep.subr.mxu0 0.0
      %838 = vmatpush1.msra.mxu0 0.0
      %839 = vmatprep.subr.mxu0 0.0
      %840 = vmatpush1.msra.mxu0 0.0
      %841 = vmatprep.subr.mxu0 0.0
      %842 = vmatpush1.msra.mxu0 0.0
      %843 = vmatprep.subr.mxu0 0.0
      %844 = vmatpush1.msra.mxu0 0.0
      %845 = vmatprep.subr.mxu0 0.0
      %846 = vmatpush1.msra.mxu0 0.0
      %847 = vmatprep.subr.mxu0 0.0
      %848 = vmatpush1.msra.mxu0 0.0
      %849 = vmatprep.subr.mxu0 0.0
      %850 = vmatpush1.msra.mxu0 0.0
      %851 = vmatprep.subr.mxu0 0.0
      %852 = vmatpush1.msra.mxu0 0.0
      %853 = vmatprep.subr.mxu0 0.0
      %854 = vmatpush1.msra.mxu0 0.0
      %855 = vmatprep.subr.mxu0 0.0
      %856 = vmatpush1.msra.mxu0 0.0
      %857 = vmatprep.subr.mxu0 0.0
      %858 = vmatpush1.msra.mxu0 0.0
      %859 = vmatprep.subr.mxu0 0.0
      %860 = vmatpush1.msra.mxu0 0.0
      %861 = vmatprep.subr.mxu0 0.0
      %862 = vmatpush1.msra.mxu0 0.0
      %863 = vmatprep.subr.mxu0 0.0
      %864 = vmatpush1.msra.mxu0 0.0
      %865 = vmatprep.subr.mxu0 0.0
      %866 = vmatpush1.msra.mxu0 0.0
      %867 = vmatprep.subr.mxu0 0.0
      %868 = vmatpush1.msra.mxu0 0.0
      %869 = vmatprep.subr.mxu0 0.0
      %870 = vmatpush1.msra.mxu0 0.0
      %871 = vmatprep.subr.mxu0 0.0
      %872 = vmatpush1.msra.mxu0 0.0
      %873 = vmatprep.subr.mxu0 0.0
      %874 = vmatpush1.msra.mxu0 0.0
      %875 = vmatprep.subr.mxu0 0.0
      %876 = vmatpush1.msra.mxu0 0.0
      %877 = vmatprep.subr.mxu0 0.0
      %878 = vmatpush1.msra.mxu0 0.0
      %879 = vmatprep.subr.mxu0 0.0
      %880 = vmatpush1.msra.mxu0 0.0
      %881 = vmatprep.subr.mxu0 0.0
      %882 = vmatpush1.msra.mxu0 0.0
      %883 = vmatprep.subr.mxu0 0.0
      %884 = vmatpush1.msra.mxu0 0.0
      %885 = vmatprep.subr.mxu0 0.0
      %886 = vmatpush1.msra.mxu0 0.0
      %887 = vmatprep.subr.mxu0 0.0
      %888 = vmatpush1.msra.mxu0 0.0
      %889 = vmatprep.subr.mxu0 0.0
      %890 = vmatpush1.msra.mxu0 0.0
      %891 = vmatprep.subr.mxu0 0.0
      %892 = vmatpush1.msra.mxu0 0.0
      %893 = vmatprep.subr.mxu0 0.0
      %894 = vmatpush1.msra.mxu0 0.0
      %895 = vmatprep.subr.mxu0 0.0
      %896 = vmatpush1.msra.mxu0 0.0
      %897 = vmatprep.subr.mxu0 0.0
      %898 = vmatpush1.msra.mxu0 0.0
      %899 = vmatprep.mubr.f32.mxu0 0.0
      %900 = vmatmul.mubr.f32.gmra.mrb[0].mxu0 %v737
      %v901 = vpop.f32.mrb[0].mxu0
      %v902 = vadd.f32 %v578, %v901
      %v903 = vpop.f32.mrb[0].mxu0
      %904 = vmatprep.mubr.f32.mxu0 0.0
      %905 = vmatmul.mubr.f32.gmra.mrb[0].mxu0 %v740
      %v906 = vpop.f32.mrb[0].mxu0
      %v907 = vadd.f32 %v583, %v906
      %v908 = vpop.f32.mrb[0].mxu0
      %909 = vmatprep.mubr.f32.mxu0 0.0
      %910 = vmatmul.mubr.f32.gmra.mrb[0].mxu0 %v743
      %v911 = vpop.f32.mrb[0].mxu0
      %v912 = vadd.f32 %v588, %v911
      %v913 = vpop.f32.mrb[0].mxu0
      %914 = vmatprep.mubr.f32.mxu0 0.0
      %915 = vmatmul.mubr.f32.gmra.mrb[0].mxu0 %v746
      %v916 = vpop.f32.mrb[0].mxu0
      %v917 = vadd.f32 %v593, %v916
      %v918 = vpop.f32.mrb[0].mxu0
      %919 = vmatprep.mubr.f32.mxu0 0.0
      %920 = vmatmul.mubr.f32.gmra.mrb[0].mxu0 %v749
      %v921 = vpop.f32.mrb[0].mxu0
      %v922 = vadd.f32 %v598, %v921
      %v923 = vpop.f32.mrb[0].mxu0
      %924 = vmatprep.mubr.f32.mxu0 0.0
      %925 = vmatmul.mubr.f32.gmra.mrb[0].mxu0 %v752
      %v926 = vpop.f32.mrb[0].mxu0
      %v927 = vadd.f32 %v603, %v926
      %v928 = vpop.f32.mrb[0].mxu0
      %929 = vmatprep.mubr.f32.mxu0 0.0
      %930 = vmatmul.mubr.f32.gmra.mrb[0].mxu0 %v755
      %v931 = vpop.f32.mrb[0].mxu0
      %v932 = vadd.f32 %v608, %v931
      %v933 = vpop.f32.mrb[0].mxu0
      %934 = vmatprep.mubr.f32.mxu0 0.0
      %935 = vmatmul.mubr.f32.gmra.mrb[0].mxu0 %v758
      %v936 = vpop.f32.mrb[0].mxu0
      %v937 = vadd.f32 %v613, %v936
      %v938 = vpop.f32.mrb[0].mxu0
      %939 = vmatprep.mubr.f32.mxu0 0.0
      %940 = vmatmul.mubr.f32.gmra.mrb[0].mxu0 %v761
      %v941 = vpop.f32.mrb[0].mxu0
      %v942 = vadd.f32 %v618, %v941
      %v943 = vpop.f32.mrb[0].mxu0
      %944 = vmatprep.mubr.f32.mxu0 0.0
      %945 = vmatmul.mubr.f32.gmra.mrb[0].mxu0 %v764
      %v946 = vpop.f32.mrb[0].mxu0
      %v947 = vadd.f32 %v623, %v946
      %v948 = vpop.f32.mrb[0].mxu0
      %949 = vmatprep.mubr.f32.mxu0 0.0
      %950 = vmatmul.mubr.f32.gmra.mrb[0].mxu0 %v767
      %v951 = vpop.f32.mrb[0].mxu0
      %v952 = vadd.f32 %v628, %v951
      %v953 = vpop.f32.mrb[0].mxu0
      %954 = vmatprep.mubr.f32.mxu0 0.0
      %955 = vmatmul.mubr.f32.gmra.mrb[0].mxu0 %v770
      %v956 = vpop.f32.mrb[0].mxu0
      %v957 = vadd.f32 %v633, %v956
      %v958 = vpop.f32.mrb[0].mxu0
      %959 = vmatprep.mubr.f32.mxu0 0.0
      %960 = vmatmul.mubr.f32.gmra.mrb[0].mxu0 %v773
      %v961 = vpop.f32.mrb[0].mxu0
      %v962 = vadd.f32 %v638, %v961
      %v963 = vpop.f32.mrb[0].mxu0
      %964 = vmatprep.mubr.f32.mxu0 0.0
      %965 = vmatmul.mubr.f32.gmra.mrb[0].mxu0 %v776
      %v966 = vpop.f32.mrb[0].mxu0
      %v967 = vadd.f32 %v643, %v966
      %v968 = vpop.f32.mrb[0].mxu0
      %969 = vmatprep.mubr.f32.mxu0 0.0
      %970 = vmatmul.mubr.f32.gmra.mrb[0].mxu0 %v779
      %v971 = vpop.f32.mrb[0].mxu0
      %v972 = vadd.f32 %v648, %v971
      %v973 = vpop.f32.mrb[0].mxu0
      %974 = vmatprep.mubr.f32.mxu0 0.0
      %975 = vmatmul.mubr.f32.gmra.mrb[0].mxu0 %v782
      %v976 = vpop.f32.mrb[0].mxu0
      %v977 = vadd.f32 %v653, %v976
      %v978 = vpop.f32.mrb[0].mxu0
      %979 = vmatprep.mubr.f32.mxu0 0.0
      %980 = vmatmul.mubr.f32.gmra.mrb[0].mxu0 %v785
      %v981 = vpop.f32.mrb[0].mxu0
      %v982 = vadd.f32 %v658, %v981
      %v983 = vpop.f32.mrb[0].mxu0
      %984 = vmatprep.mubr.f32.mxu0 0.0
      %985 = vmatmul.mubr.f32.gmra.mrb[0].mxu0 %v788
      %v986 = vpop.f32.mrb[0].mxu0
      %v987 = vadd.f32 %v663, %v986
      %v988 = vpop.f32.mrb[0].mxu0
      %989 = vmatprep.mubr.f32.mxu0 0.0
      %990 = vmatmul.mubr.f32.gmra.mrb[0].mxu0 %v791
      %v991 = vpop.f32.mrb[0].mxu0
      %v992 = vadd.f32 %v668, %v991
      %v993 = vpop.f32.mrb[0].mxu0
      %994 = vmatprep.mubr.f32.mxu0 0.0
      %995 = vmatmul.mubr.f32.gmra.mrb[0].mxu0 %v794
      %v996 = vpop.f32.mrb[0].mxu0
      %v997 = vadd.f32 %v673, %v996
      %v998 = vpop.f32.mrb[0].mxu0
      %999 = vmatprep.mubr.f32.mxu0 0.0
      %1000 = vmatmul.mubr.f32.gmra.mrb[0].mxu0 %v797
      %v1001 = vpop.f32.mrb[0].mxu0
      %v1002 = vadd.f32 %v678, %v1001
      %v1003 = vpop.f32.mrb[0].mxu0
      %1004 = vmatprep.mubr.f32.mxu0 0.0
      %1005 = vmatmul.mubr.f32.gmra.mrb[0].mxu0 %v800
      %v1006 = vpop.f32.mrb[0].mxu0
      %v1007 = vadd.f32 %v683, %v1006
      %v1008 = vpop.f32.mrb[0].mxu0
      %1009 = vmatprep.mubr.f32.mxu0 0.0
      %1010 = vmatmul.mubr.f32.gmra.mrb[0].mxu0 %v803
      %v1011 = vpop.f32.mrb[0].mxu0
      %v1012 = vadd.f32 %v688, %v1011
      %v1013 = vpop.f32.mrb[0].mxu0
      %1014 = vmatprep.mubr.f32.mxu0 0.0
      %1015 = vmatmul.mubr.f32.gmra.mrb[0].mxu0 %v806
      %v1016 = vpop.f32.mrb[0].mxu0
      %v1017 = vadd.f32 %v693, %v1016
      %v1018 = vpop.f32.mrb[0].mxu0
      %1019 = vmatprep.mubr.f32.mxu0 0.0
      %1020 = vmatmul.mubr.f32.gmra.mrb[0].mxu0 %v809
      %v1021 = vpop.f32.mrb[0].mxu0
      %v1022 = vadd.f32 %v698, %v1021
      %v1023 = vpop.f32.mrb[0].mxu0
      %1024 = vmatprep.mubr.f32.mxu0 0.0
      %1025 = vmatmul.mubr.f32.gmra.mrb[0].mxu0 %v812
      %v1026 = vpop.f32.mrb[0].mxu0
      %v1027 = vadd.f32 %v703, %v1026
      %v1028 = vpop.f32.mrb[0].mxu0
      %1029 = vmatprep.mubr.f32.mxu0 0.0
      %1030 = vmatmul.mubr.f32.gmra.mrb[0].mxu0 %v815
      %v1031 = vpop.f32.mrb[0].mxu0
      %v1032 = vadd.f32 %v708, %v1031
      %v1033 = vpop.f32.mrb[0].mxu0
      %1034 = vmatprep.mubr.f32.mxu0 0.0
      %1035 = vmatmul.mubr.f32.gmra.mrb[0].mxu0 %v818
      %v1036 = vpop.f32.mrb[0].mxu0
      %v1037 = vadd.f32 %v713, %v1036
      %v1038 = vpop.f32.mrb[0].mxu0
      %1039 = vmatprep.mubr.f32.mxu0 0.0
      %1040 = vmatmul.mubr.f32.gmra.mrb[0].mxu0 %v821
      %v1041 = vpop.f32.mrb[0].mxu0
      %v1042 = vadd.f32 %v718, %v1041
      %v1043 = vpop.f32.mrb[0].mxu0
      %1044 = vmatprep.mubr.f32.mxu0 0.0
      %1045 = vmatmul.mubr.f32.gmra.mrb[0].mxu0 %v824
      %v1046 = vpop.f32.mrb[0].mxu0
      %v1047 = vadd.f32 %v723, %v1046
      %v1048 = vpop.f32.mrb[0].mxu0
      %1049 = vmatprep.mubr.f32.mxu0 0.0
      %1050 = vmatmul.mubr.f32.gmra.mrb[0].mxu0 %v827
      %v1051 = vpop.f32.mrb[0].mxu0
      %v1052 = vadd.f32 %v728, %v1051
      %v1053 = vpop.f32.mrb[0].mxu0
      %1054 = vmatprep.mubr.f32.mxu0 0.0
      %1055 = vmatmul.mubr.f32.gmra.mrb[0].mxu0 %v830
      %v1056 = vpop.f32.mrb[0].mxu0
      %v1057 = vadd.f32 %v733, %v1056
      %v1058 = vpop.f32.mrb[0].mxu0
      %1059 = vdwg.mxu0
      %v1060 = vld [vmem:[#allocation2 + $0x6] sm:$0xff]
      %v1061 = vld [vmem:[#allocation2 + $0xe] sm:$0xff]
      %v1062 = vld [vmem:[#allocation2 + $0x1e] sm:$0xff]
      %v1063 = vld [vmem:[#allocation2 + $0x26] sm:$0xff]
      %v1064 = vld [vmem:[#allocation2 + $0x36] sm:$0xff]
      %v1065 = vld [vmem:[#allocation2 + $0x3e] sm:$0xff]
      %v1066 = vld [vmem:[#allocation2 + $0x4e] sm:$0xff]
      %v1067 = vld [vmem:[#allocation2 + $0x56] sm:$0xff]
      %v1068 = vld [vmem:[#allocation2 + $0x66] sm:$0xff]
      %v1069 = vld [vmem:[#allocation2 + $0x6e] sm:$0xff]
      %v1070 = vld [vmem:[#allocation2 + $0x7e] sm:$0xff]
      %v1071 = vld [vmem:[#allocation2 + $0x86] sm:$0xff]
      %v1072 = vld [vmem:[#allocation2 + $0x96] sm:$0xff]
      %v1073 = vld [vmem:[#allocation2 + $0x9e] sm:$0xff]
      %v1074 = vld [vmem:[#allocation2 + $0xae] sm:$0xff]
      %v1075 = vld [vmem:[#allocation2 + $0xb6] sm:$0xff]
      %v1076 = vld [vmem:[#allocation2 + $0xc6] sm:$0xff]
      %v1077 = vld [vmem:[#allocation2 + $0xce] sm:$0xff]
      %v1078 = vld [vmem:[#allocation2 + $0xde] sm:$0xff]
      %v1079 = vld [vmem:[#allocation2 + $0xe6] sm:$0xff]
      %v1080 = vld [vmem:[#allocation2 + $0xf6] sm:$0xff]
      %v1081 = vld [vmem:[#allocation2 + $0xfe] sm:$0xff]
      %v1082 = vld [vmem:[#allocation2 + $0x10e] sm:$0xff]
      %v1083 = vld [vmem:[#allocation2 + $0x116] sm:$0xff]
      %v1084 = vld [vmem:[#allocation2 + $0x126] sm:$0xff]
      %v1085 = vld [vmem:[#allocation2 + $0x12e] sm:$0xff]
      %v1086 = vld [vmem:[#allocation2 + $0x13e] sm:$0xff]
      %v1087 = vld [vmem:[#allocation2 + $0x146] sm:$0xff]
      %v1088 = vld [vmem:[#allocation2 + $0x156] sm:$0xff]
      %v1089 = vld [vmem:[#allocation2 + $0x15e] sm:$0xff]
      %v1090 = vld [vmem:[#allocation2 + $0x16e] sm:$0xff]
      %v1091 = vld [vmem:[#allocation2 + $0x176] sm:$0xff]
      %s1092 = scalar_lea.vmem %s1, 8
      %v1093 = vld [vmem:[%s1092] sm:$0xf]
      %v1095 = vsel %vm225, %v1060, 0
      %v1098 = vsel %vm225, %v1061, 0
      %v1101 = vsel %vm225, %v1062, 0
      %v1104 = vsel %vm225, %v1063, 0
      %v1107 = vsel %vm225, %v1064, 0
      %v1110 = vsel %vm225, %v1065, 0
      %v1113 = vsel %vm225, %v1066, 0
      %v1116 = vsel %vm225, %v1067, 0
      %v1119 = vsel %vm225, %v1068, 0
      %v1122 = vsel %vm225, %v1069, 0
      %v1125 = vsel %vm225, %v1070, 0
      %v1128 = vsel %vm225, %v1071, 0
      %v1131 = vsel %vm225, %v1072, 0
      %v1134 = vsel %vm225, %v1073, 0
      %v1137 = vsel %vm225, %v1074, 0
      %v1140 = vsel %vm225, %v1075, 0
      %v1143 = vsel %vm225, %v1076, 0
      %v1146 = vsel %vm225, %v1077, 0
      %v1149 = vsel %vm225, %v1078, 0
      %v1152 = vsel %vm225, %v1079, 0
      %v1155 = vsel %vm225, %v1080, 0
      %v1158 = vsel %vm225, %v1081, 0
      %v1161 = vsel %vm225, %v1082, 0
      %v1164 = vsel %vm225, %v1083, 0
      %v1167 = vsel %vm225, %v1084, 0
      %v1170 = vsel %vm225, %v1085, 0
      %v1173 = vsel %vm225, %v1086, 0
      %v1176 = vsel %vm225, %v1087, 0
      %v1179 = vsel %vm225, %v1088, 0
      %v1182 = vsel %vm225, %v1089, 0
      %v1185 = vsel %vm225, %v1090, 0
      %v1188 = vsel %vm225, %v1091, 0
      %v1191 = vsel %vm507, %v1093, 0
      %1193 = vmatprep.subr.mxu0 0.0
      %1194 = vmatpush1.msra.mxu0 %v1191
      %1195 = vmatprep.subr.mxu0 0.0
      %1196 = vmatpush1.msra.mxu0 0.0
      %1197 = vmatprep.subr.mxu0 0.0
      %1198 = vmatpush1.msra.mxu0 0.0
      %1199 = vmatprep.subr.mxu0 0.0
      %1200 = vmatpush1.msra.mxu0 0.0
      %1201 = vmatprep.subr.mxu0 0.0
      %1202 = vmatpush1.msra.mxu0 0.0
      %1203 = vmatprep.subr.mxu0 0.0
      %1204 = vmatpush1.msra.mxu0 0.0
      %1205 = vmatprep.subr.mxu0 0.0
      %1206 = vmatpush1.msra.mxu0 0.0
      %1207 = vmatprep.subr.mxu0 0.0
      %1208 = vmatpush1.msra.mxu0 0.0
      %1209 = vmatprep.subr.mxu0 0.0
      %1210 = vmatpush1.msra.mxu0 0.0
      %1211 = vmatprep.subr.mxu0 0.0
      %1212 = vmatpush1.msra.mxu0 0.0
      %1213 = vmatprep.subr.mxu0 0.0
      %1214 = vmatpush1.msra.mxu0 0.0
      %1215 = vmatprep.subr.mxu0 0.0
      %1216 = vmatpush1.msra.mxu0 0.0
      %1217 = vmatprep.subr.mxu0 0.0
      %1218 = vmatpush1.msra.mxu0 0.0
      %1219 = vmatprep.subr.mxu0 0.0
      %1220 = vmatpush1.msra.mxu0 0.0
      %1221 = vmatprep.subr.mxu0 0.0
      %1222 = vmatpush1.msra.mxu0 0.0
      %1223 = vmatprep.subr.mxu0 0.0
      %1224 = vmatpush1.msra.mxu0 0.0
      %1225 = vmatprep.subr.mxu0 0.0
      %1226 = vmatpush1.msra.mxu0 0.0
      %1227 = vmatprep.subr.mxu0 0.0
      %1228 = vmatpush1.msra.mxu0 0.0
      %1229 = vmatprep.subr.mxu0 0.0
      %1230 = vmatpush1.msra.mxu0 0.0
      %1231 = vmatprep.subr.mxu0 0.0
      %1232 = vmatpush1.msra.mxu0 0.0
      %1233 = vmatprep.subr.mxu0 0.0
      %1234 = vmatpush1.msra.mxu0 0.0
      %1235 = vmatprep.subr.mxu0 0.0
      %1236 = vmatpush1.msra.mxu0 0.0
      %1237 = vmatprep.subr.mxu0 0.0
      %1238 = vmatpush1.msra.mxu0 0.0
      %1239 = vmatprep.subr.mxu0 0.0
      %1240 = vmatpush1.msra.mxu0 0.0
      %1241 = vmatprep.subr.mxu0 0.0
      %1242 = vmatpush1.msra.mxu0 0.0
      %1243 = vmatprep.subr.mxu0 0.0
      %1244 = vmatpush1.msra.mxu0 0.0
      %1245 = vmatprep.subr.mxu0 0.0
      %1246 = vmatpush1.msra.mxu0 0.0
      %1247 = vmatprep.subr.mxu0 0.0
      %1248 = vmatpush1.msra.mxu0 0.0
      %1249 = vmatprep.subr.mxu0 0.0
      %1250 = vmatpush1.msra.mxu0 0.0
      %1251 = vmatprep.subr.mxu0 0.0
      %1252 = vmatpush1.msra.mxu0 0.0
      %1253 = vmatprep.subr.mxu0 0.0
      %1254 = vmatpush1.msra.mxu0 0.0
      %1255 = vmatprep.subr.mxu0 0.0
      %1256 = vmatpush1.msra.mxu0 0.0
      %1257 = vmatprep.mubr.f32.mxu0 0.0
      %1258 = vmatmul.mubr.f32.gmra.mrb[0].mxu0 %v1095
      %v1259 = vpop.f32.mrb[0].mxu0
      %v1260 = vadd.f32 0.0, %v1259
      %v1261 = vpop.f32.mrb[0].mxu0
      %1262 = vmatprep.mubr.f32.mxu0 0.0
      %1263 = vmatmul.mubr.f32.gmra.mrb[0].mxu0 %v1098
      %v1264 = vpop.f32.mrb[0].mxu0
      %v1265 = vadd.f32 0.0, %v1264
      %v1266 = vpop.f32.mrb[0].mxu0
      %1267 = vmatprep.mubr.f32.mxu0 0.0
      %1268 = vmatmul.mubr.f32.gmra.mrb[0].mxu0 %v1101
      %v1269 = vpop.f32.mrb[0].mxu0
      %v1270 = vadd.f32 0.0, %v1269
      %v1271 = vpop.f32.mrb[0].mxu0
      %1272 = vmatprep.mubr.f32.mxu0 0.0
      %1273 = vmatmul.mubr.f32.gmra.mrb[0].mxu0 %v1104
      %v1274 = vpop.f32.mrb[0].mxu0
      %v1275 = vadd.f32 0.0, %v1274
      %v1276 = vpop.f32.mrb[0].mxu0
      %1277 = vmatprep.mubr.f32.mxu0 0.0
      %1278 = vmatmul.mubr.f32.gmra.mrb[0].mxu0 %v1107
      %v1279 = vpop.f32.mrb[0].mxu0
      %v1280 = vadd.f32 0.0, %v1279
      %v1281 = vpop.f32.mrb[0].mxu0
      %1282 = vmatprep.mubr.f32.mxu0 0.0
      %1283 = vmatmul.mubr.f32.gmra.mrb[0].mxu0 %v1110
      %v1284 = vpop.f32.mrb[0].mxu0
      %v1285 = vadd.f32 0.0, %v1284
      %v1286 = vpop.f32.mrb[0].mxu0
      %1287 = vmatprep.mubr.f32.mxu0 0.0
      %1288 = vmatmul.mubr.f32.gmra.mrb[0].mxu0 %v1113
      %v1289 = vpop.f32.mrb[0].mxu0
      %v1290 = vadd.f32 0.0, %v1289
      %v1291 = vpop.f32.mrb[0].mxu0
      %1292 = vmatprep.mubr.f32.mxu0 0.0
      %1293 = vmatmul.mubr.f32.gmra.mrb[0].mxu0 %v1116
      %v1294 = vpop.f32.mrb[0].mxu0
      %v1295 = vadd.f32 0.0, %v1294
      %v1296 = vpop.f32.mrb[0].mxu0
      %1297 = vmatprep.mubr.f32.mxu0 0.0
      %1298 = vmatmul.mubr.f32.gmra.mrb[0].mxu0 %v1119
      %v1299 = vpop.f32.mrb[0].mxu0
      %v1300 = vadd.f32 0.0, %v1299
      %v1301 = vpop.f32.mrb[0].mxu0
      %1302 = vmatprep.mubr.f32.mxu0 0.0
      %1303 = vmatmul.mubr.f32.gmra.mrb[0].mxu0 %v1122
      %v1304 = vpop.f32.mrb[0].mxu0
      %v1305 = vadd.f32 0.0, %v1304
      %v1306 = vpop.f32.mrb[0].mxu0
      %1307 = vmatprep.mubr.f32.mxu0 0.0
      %1308 = vmatmul.mubr.f32.gmra.mrb[0].mxu0 %v1125
      %v1309 = vpop.f32.mrb[0].mxu0
      %v1310 = vadd.f32 0.0, %v1309
      %v1311 = vpop.f32.mrb[0].mxu0
      %1312 = vmatprep.mubr.f32.mxu0 0.0
      %1313 = vmatmul.mubr.f32.gmra.mrb[0].mxu0 %v1128
      %v1314 = vpop.f32.mrb[0].mxu0
      %v1315 = vadd.f32 0.0, %v1314
      %v1316 = vpop.f32.mrb[0].mxu0
      %1317 = vmatprep.mubr.f32.mxu0 0.0
      %1318 = vmatmul.mubr.f32.gmra.mrb[0].mxu0 %v1131
      %v1319 = vpop.f32.mrb[0].mxu0
      %v1320 = vadd.f32 0.0, %v1319
      %v1321 = vpop.f32.mrb[0].mxu0
      %1322 = vmatprep.mubr.f32.mxu0 0.0
      %1323 = vmatmul.mubr.f32.gmra.mrb[0].mxu0 %v1134
      %v1324 = vpop.f32.mrb[0].mxu0
      %v1325 = vadd.f32 0.0, %v1324
      %v1326 = vpop.f32.mrb[0].mxu0
      %1327 = vmatprep.mubr.f32.mxu0 0.0
      %1328 = vmatmul.mubr.f32.gmra.mrb[0].mxu0 %v1137
      %v1329 = vpop.f32.mrb[0].mxu0
      %v1330 = vadd.f32 0.0, %v1329
      %v1331 = vpop.f32.mrb[0].mxu0
      %1332 = vmatprep.mubr.f32.mxu0 0.0
      %1333 = vmatmul.mubr.f32.gmra.mrb[0].mxu0 %v1140
      %v1334 = vpop.f32.mrb[0].mxu0
      %v1335 = vadd.f32 0.0, %v1334
      %v1336 = vpop.f32.mrb[0].mxu0
      %1337 = vmatprep.mubr.f32.mxu0 0.0
      %1338 = vmatmul.mubr.f32.gmra.mrb[0].mxu0 %v1143
      %v1339 = vpop.f32.mrb[0].mxu0
      %v1340 = vadd.f32 0.0, %v1339
      %v1341 = vpop.f32.mrb[0].mxu0
      %1342 = vmatprep.mubr.f32.mxu0 0.0
      %1343 = vmatmul.mubr.f32.gmra.mrb[0].mxu0 %v1146
      %v1344 = vpop.f32.mrb[0].mxu0
      %v1345 = vadd.f32 0.0, %v1344
      %v1346 = vpop.f32.mrb[0].mxu0
      %1347 = vmatprep.mubr.f32.mxu0 0.0
      %1348 = vmatmul.mubr.f32.gmra.mrb[0].mxu0 %v1149
      %v1349 = vpop.f32.mrb[0].mxu0
      %v1350 = vadd.f32 0.0, %v1349
      %v1351 = vpop.f32.mrb[0].mxu0
      %1352 = vmatprep.mubr.f32.mxu0 0.0
      %1353 = vmatmul.mubr.f32.gmra.mrb[0].mxu0 %v1152
      %v1354 = vpop.f32.mrb[0].mxu0
      %v1355 = vadd.f32 0.0, %v1354
      %v1356 = vpop.f32.mrb[0].mxu0
      %1357 = vmatprep.mubr.f32.mxu0 0.0
      %1358 = vmatmul.mubr.f32.gmra.mrb[0].mxu0 %v1155
      %v1359 = vpop.f32.mrb[0].mxu0
      %v1360 = vadd.f32 0.0, %v1359
      %v1361 = vpop.f32.mrb[0].mxu0
      %1362 = vmatprep.mubr.f32.mxu0 0.0
      %1363 = vmatmul.mubr.f32.gmra.mrb[0].mxu0 %v1158
      %v1364 = vpop.f32.mrb[0].mxu0
      %v1365 = vadd.f32 0.0, %v1364
      %v1366 = vpop.f32.mrb[0].mxu0
      %1367 = vmatprep.mubr.f32.mxu0 0.0
      %1368 = vmatmul.mubr.f32.gmra.mrb[0].mxu0 %v1161
      %v1369 = vpop.f32.mrb[0].mxu0
      %v1370 = vadd.f32 0.0, %v1369
      %v1371 = vpop.f32.mrb[0].mxu0
      %1372 = vmatprep.mubr.f32.mxu0 0.0
      %1373 = vmatmul.mubr.f32.gmra.mrb[0].mxu0 %v1164
      %v1374 = vpop.f32.mrb[0].mxu0
      %v1375 = vadd.f32 0.0, %v1374
      %v1376 = vpop.f32.mrb[0].mxu0
      %1377 = vmatprep.mubr.f32.mxu0 0.0
      %1378 = vmatmul.mubr.f32.gmra.mrb[0].mxu0 %v1167
      %v1379 = vpop.f32.mrb[0].mxu0
      %v1380 = vadd.f32 0.0, %v1379
      %v1381 = vpop.f32.mrb[0].mxu0
      %1382 = vmatprep.mubr.f32.mxu0 0.0
      %1383 = vmatmul.mubr.f32.gmra.mrb[0].mxu0 %v1170
      %v1384 = vpop.f32.mrb[0].mxu0
      %v1385 = vadd.f32 0.0, %v1384
      %v1386 = vpop.f32.mrb[0].mxu0
      %1387 = vmatprep.mubr.f32.mxu0 0.0
      %1388 = vmatmul.mubr.f32.gmra.mrb[0].mxu0 %v1173
      %v1389 = vpop.f32.mrb[0].mxu0
      %v1390 = vadd.f32 0.0, %v1389
      %v1391 = vpop.f32.mrb[0].mxu0
      %1392 = vmatprep.mubr.f32.mxu0 0.0
      %1393 = vmatmul.mubr.f32.gmra.mrb[0].mxu0 %v1176
      %v1394 = vpop.f32.mrb[0].mxu0
      %v1395 = vadd.f32 0.0, %v1394
      %v1396 = vpop.f32.mrb[0].mxu0
      %1397 = vmatprep.mubr.f32.mxu0 0.0
      %1398 = vmatmul.mubr.f32.gmra.mrb[0].mxu0 %v1179
      %v1399 = vpop.f32.mrb[0].mxu0
      %v1400 = vadd.f32 0.0, %v1399
      %v1401 = vpop.f32.mrb[0].mxu0
      %1402 = vmatprep.mubr.f32.mxu0 0.0
      %1403 = vmatmul.mubr.f32.gmra.mrb[0].mxu0 %v1182
      %v1404 = vpop.f32.mrb[0].mxu0
      %v1405 = vadd.f32 0.0, %v1404
      %v1406 = vpop.f32.mrb[0].mxu0
      %1407 = vmatprep.mubr.f32.mxu0 0.0
      %1408 = vmatmul.mubr.f32.gmra.mrb[0].mxu0 %v1185
      %v1409 = vpop.f32.mrb[0].mxu0
      %v1410 = vadd.f32 0.0, %v1409
      %v1411 = vpop.f32.mrb[0].mxu0
      %1412 = vmatprep.mubr.f32.mxu0 0.0
      %1413 = vmatmul.mubr.f32.gmra.mrb[0].mxu0 %v1188
      %v1414 = vpop.f32.mrb[0].mxu0
      %v1415 = vadd.f32 0.0, %v1414
      %v1416 = vpop.f32.mrb[0].mxu0
      %1417 = vdwg.mxu0
      %v1418 = vadd.f32 %v902, %v1260
      %v1419 = vadd.f32 %v907, %v1265
      %v1420 = vadd.f32 %v912, %v1270
      %v1421 = vadd.f32 %v917, %v1275
      %v1422 = vadd.f32 %v922, %v1280
      %v1423 = vadd.f32 %v927, %v1285
      %v1424 = vadd.f32 %v932, %v1290
      %v1425 = vadd.f32 %v937, %v1295
      %v1426 = vadd.f32 %v942, %v1300
      %v1427 = vadd.f32 %v947, %v1305
      %v1428 = vadd.f32 %v952, %v1310
      %v1429 = vadd.f32 %v957, %v1315
      %v1430 = vadd.f32 %v962, %v1320
      %v1431 = vadd.f32 %v967, %v1325
      %v1432 = vadd.f32 %v972, %v1330
      %v1433 = vadd.f32 %v977, %v1335
      %v1434 = vadd.f32 %v982, %v1340
      %v1435 = vadd.f32 %v987, %v1345
      %v1436 = vadd.f32 %v992, %v1350
      %v1437 = vadd.f32 %v997, %v1355
      %v1438 = vadd.f32 %v1002, %v1360
      %v1439 = vadd.f32 %v1007, %v1365
      %v1440 = vadd.f32 %v1012, %v1370
      %v1441 = vadd.f32 %v1017, %v1375
      %v1442 = vadd.f32 %v1022, %v1380
      %v1443 = vadd.f32 %v1027, %v1385
      %v1444 = vadd.f32 %v1032, %v1390
      %v1445 = vadd.f32 %v1037, %v1395
      %v1446 = vadd.f32 %v1042, %v1400
      %v1447 = vadd.f32 %v1047, %v1405
      %v1448 = vadd.f32 %v1052, %v1410
      %v1449 = vadd.f32 %v1057, %v1415
      %v1450 = vld [vmem:[%s246] sm:$0xff]
      %v1451 = vld [vmem:[%s246 + $0x8] sm:$0xff]
      %v1452 = vld [vmem:[%s246 + $0x18] sm:$0xff]
      %v1453 = vld [vmem:[%s246 + $0x20] sm:$0xff]
      %v1454 = vld [vmem:[%s246 + $0x30] sm:$0xff]
      %v1455 = vld [vmem:[%s246 + $0x38] sm:$0xff]
      %v1456 = vld [vmem:[%s246 + $0x48] sm:$0xff]
      %v1457 = vld [vmem:[%s246 + $0x50] sm:$0xff]
      %v1458 = vld [vmem:[%s246 + $0x60] sm:$0xff]
      %v1459 = vld [vmem:[%s246 + $0x68] sm:$0xff]
      %v1460 = vld [vmem:[%s246 + $0x78] sm:$0xff]
      %v1461 = vld [vmem:[%s246 + $0x80] sm:$0xff]
      %v1462 = vld [vmem:[%s246 + $0x90] sm:$0xff]
      %v1463 = vld [vmem:[%s246 + $0x98] sm:$0xff]
      %v1464 = vld [vmem:[%s246 + $0xa8] sm:$0xff]
      %v1465 = vld [vmem:[%s246 + $0xb0] sm:$0xff]
      %v1466 = vld [vmem:[%s246 + $0xc0] sm:$0xff]
      %v1467 = vld [vmem:[%s246 + $0xc8] sm:$0xff]
      %v1468 = vld [vmem:[%s246 + $0xd8] sm:$0xff]
      %v1469 = vld [vmem:[%s246 + $0xe0] sm:$0xff]
      %v1470 = vld [vmem:[%s246 + $0xf0] sm:$0xff]
      %v1471 = vld [vmem:[%s246 + $0xf8] sm:$0xff]
      %v1472 = vld [vmem:[%s246 + $0x108] sm:$0xff]
      %v1473 = vld [vmem:[%s246 + $0x110] sm:$0xff]
      %v1474 = vld [vmem:[%s246 + $0x120] sm:$0xff]
      %v1475 = vld [vmem:[%s246 + $0x128] sm:$0xff]
      %v1476 = vld [vmem:[%s246 + $0x138] sm:$0xff]
      %v1477 = vld [vmem:[%s246 + $0x140] sm:$0xff]
      %v1478 = vld [vmem:[%s246 + $0x150] sm:$0xff]
      %v1479 = vld [vmem:[%s246 + $0x158] sm:$0xff]
      %v1480 = vld [vmem:[%s246 + $0x168] sm:$0xff]
      %v1481 = vld [vmem:[%s246 + $0x170] sm:$0xff]
      %s1482 = scalar_lea.vmem %s1, 12
      %v1483 = vld [vmem:[%s1482] sm:$0xf]
      %v1485 = vsel %vm225, %v1450, 0
      %v1488 = vsel %vm225, %v1451, 0
      %v1491 = vsel %vm225, %v1452, 0
      %v1494 = vsel %vm225, %v1453, 0
      %v1497 = vsel %vm225, %v1454, 0
      %v1500 = vsel %vm225, %v1455, 0
      %v1503 = vsel %vm225, %v1456, 0
      %v1506 = vsel %vm225, %v1457, 0
      %v1509 = vsel %vm225, %v1458, 0
      %v1512 = vsel %vm225, %v1459, 0
      %v1515 = vsel %vm225, %v1460, 0
      %v1518 = vsel %vm225, %v1461, 0
      %v1521 = vsel %vm225, %v1462, 0
      %v1524 = vsel %vm225, %v1463, 0
      %v1527 = vsel %vm225, %v1464, 0
      %v1530 = vsel %vm225, %v1465, 0
      %v1533 = vsel %vm225, %v1466, 0
      %v1536 = vsel %vm225, %v1467, 0
      %v1539 = vsel %vm225, %v1468, 0
      %v1542 = vsel %vm225, %v1469, 0
      %v1545 = vsel %vm225, %v1470, 0
      %v1548 = vsel %vm225, %v1471, 0
      %v1551 = vsel %vm225, %v1472, 0
      %v1554 = vsel %vm225, %v1473, 0
      %v1557 = vsel %vm225, %v1474, 0
      %v1560 = vsel %vm225, %v1475, 0
      %v1563 = vsel %vm225, %v1476, 0
      %v1566 = vsel %vm225, %v1477, 0
      %v1569 = vsel %vm225, %v1478, 0
      %v1572 = vsel %vm225, %v1479, 0
      %v1575 = vsel %vm225, %v1480, 0
      %v1578 = vsel %vm225, %v1481, 0
      %v1581 = vsel %vm507, %v1483, 0
      %1583 = vmatprep.subr.mxu0 0.0
      %1584 = vmatpush1.msra.mxu0 %v1581
      %1585 = vmatprep.subr.mxu0 0.0
      %1586 = vmatpush1.msra.mxu0 0.0
      %1587 = vmatprep.subr.mxu0 0.0
      %1588 = vmatpush1.msra.mxu0 0.0
      %1589 = vmatprep.subr.mxu0 0.0
      %1590 = vmatpush1.msra.mxu0 0.0
      %1591 = vmatprep.subr.mxu0 0.0
      %1592 = vmatpush1.msra.mxu0 0.0
      %1593 = vmatprep.subr.mxu0 0.0
      %1594 = vmatpush1.msra.mxu0 0.0
      %1595 = vmatprep.subr.mxu0 0.0
      %1596 = vmatpush1.msra.mxu0 0.0
      %1597 = vmatprep.subr.mxu0 0.0
      %1598 = vmatpush1.msra.mxu0 0.0
      %1599 = vmatprep.subr.mxu0 0.0
      %1600 = vmatpush1.msra.mxu0 0.0
      %1601 = vmatprep.subr.mxu0 0.0
      %1602 = vmatpush1.msra.mxu0 0.0
      %1603 = vmatprep.subr.mxu0 0.0
      %1604 = vmatpush1.msra.mxu0 0.0
      %1605 = vmatprep.subr.mxu0 0.0
      %1606 = vmatpush1.msra.mxu0 0.0
      %1607 = vmatprep.subr.mxu0 0.0
      %1608 = vmatpush1.msra.mxu0 0.0
      %1609 = vmatprep.subr.mxu0 0.0
      %1610 = vmatpush1.msra.mxu0 0.0
      %1611 = vmatprep.subr.mxu0 0.0
      %1612 = vmatpush1.msra.mxu0 0.0
      %1613 = vmatprep.subr.mxu0 0.0
      %1614 = vmatpush1.msra.mxu0 0.0
      %1615 = vmatprep.subr.mxu0 0.0
      %1616 = vmatpush1.msra.mxu0 0.0
      %1617 = vmatprep.subr.mxu0 0.0
      %1618 = vmatpush1.msra.mxu0 0.0
      %1619 = vmatprep.subr.mxu0 0.0
      %1620 = vmatpush1.msra.mxu0 0.0
      %1621 = vmatprep.subr.mxu0 0.0
      %1622 = vmatpush1.msra.mxu0 0.0
      %1623 = vmatprep.subr.mxu0 0.0
      %1624 = vmatpush1.msra.mxu0 0.0
      %1625 = vmatprep.subr.mxu0 0.0
      %1626 = vmatpush1.msra.mxu0 0.0
      %1627 = vmatprep.subr.mxu0 0.0
      %1628 = vmatpush1.msra.mxu0 0.0
      %1629 = vmatprep.subr.mxu0 0.0
      %1630 = vmatpush1.msra.mxu0 0.0
      %1631 = vmatprep.subr.mxu0 0.0
      %1632 = vmatpush1.msra.mxu0 0.0
      %1633 = vmatprep.subr.mxu0 0.0
      %1634 = vmatpush1.msra.mxu0 0.0
      %1635 = vmatprep.subr.mxu0 0.0
      %1636 = vmatpush1.msra.mxu0 0.0
      %1637 = vmatprep.subr.mxu0 0.0
      %1638 = vmatpush1.msra.mxu0 0.0
      %1639 = vmatprep.subr.mxu0 0.0
      %1640 = vmatpush1.msra.mxu0 0.0
      %1641 = vmatprep.subr.mxu0 0.0
      %1642 = vmatpush1.msra.mxu0 0.0
      %1643 = vmatprep.subr.mxu0 0.0
      %1644 = vmatpush1.msra.mxu0 0.0
      %1645 = vmatprep.subr.mxu0 0.0
      %1646 = vmatpush1.msra.mxu0 0.0
      %1647 = vmatprep.mubr.f32.mxu0 0.0
      %1648 = vmatmul.mubr.f32.gmra.mrb[0].mxu0 %v1485
      %v1649 = vpop.f32.mrb[0].mxu0
      %v1650 = vadd.f32 0.0, %v1649
      %v1651 = vpop.f32.mrb[0].mxu0
      %1652 = vmatprep.mubr.f32.mxu0 0.0
      %1653 = vmatmul.mubr.f32.gmra.mrb[0].mxu0 %v1488
      %v1654 = vpop.f32.mrb[0].mxu0
      %v1655 = vadd.f32 0.0, %v1654
      %v1656 = vpop.f32.mrb[0].mxu0
      %1657 = vmatprep.mubr.f32.mxu0 0.0
      %1658 = vmatmul.mubr.f32.gmra.mrb[0].mxu0 %v1491
      %v1659 = vpop.f32.mrb[0].mxu0
      %v1660 = vadd.f32 0.0, %v1659
      %v1661 = vpop.f32.mrb[0].mxu0
      %1662 = vmatprep.mubr.f32.mxu0 0.0
      %1663 = vmatmul.mubr.f32.gmra.mrb[0].mxu0 %v1494
      %v1664 = vpop.f32.mrb[0].mxu0
      %v1665 = vadd.f32 0.0, %v1664
      %v1666 = vpop.f32.mrb[0].mxu0
      %1667 = vmatprep.mubr.f32.mxu0 0.0
      %1668 = vmatmul.mubr.f32.gmra.mrb[0].mxu0 %v1497
      %v1669 = vpop.f32.mrb[0].mxu0
      %v1670 = vadd.f32 0.0, %v1669
      %v1671 = vpop.f32.mrb[0].mxu0
      %1672 = vmatprep.mubr.f32.mxu0 0.0
      %1673 = vmatmul.mubr.f32.gmra.mrb[0].mxu0 %v1500
      %v1674 = vpop.f32.mrb[0].mxu0
      %v1675 = vadd.f32 0.0, %v1674
      %v1676 = vpop.f32.mrb[0].mxu0
      %1677 = vmatprep.mubr.f32.mxu0 0.0
      %1678 = vmatmul.mubr.f32.gmra.mrb[0].mxu0 %v1503
      %v1679 = vpop.f32.mrb[0].mxu0
      %v1680 = vadd.f32 0.0, %v1679
      %v1681 = vpop.f32.mrb[0].mxu0
      %1682 = vmatprep.mubr.f32.mxu0 0.0
      %1683 = vmatmul.mubr.f32.gmra.mrb[0].mxu0 %v1506
      %v1684 = vpop.f32.mrb[0].mxu0
      %v1685 = vadd.f32 0.0, %v1684
      %v1686 = vpop.f32.mrb[0].mxu0
      %1687 = vmatprep.mubr.f32.mxu0 0.0
      %1688 = vmatmul.mubr.f32.gmra.mrb[0].mxu0 %v1509
      %v1689 = vpop.f32.mrb[0].mxu0
      %v1690 = vadd.f32 0.0, %v1689
      %v1691 = vpop.f32.mrb[0].mxu0
      %1692 = vmatprep.mubr.f32.mxu0 0.0
      %1693 = vmatmul.mubr.f32.gmra.mrb[0].mxu0 %v1512
      %v1694 = vpop.f32.mrb[0].mxu0
      %v1695 = vadd.f32 0.0, %v1694
      %v1696 = vpop.f32.mrb[0].mxu0
      %1697 = vmatprep.mubr.f32.mxu0 0.0
      %1698 = vmatmul.mubr.f32.gmra.mrb[0].mxu0 %v1515
      %v1699 = vpop.f32.mrb[0].mxu0
      %v1700 = vadd.f32 0.0, %v1699
      %v1701 = vpop.f32.mrb[0].mxu0
      %1702 = vmatprep.mubr.f32.mxu0 0.0
      %1703 = vmatmul.mubr.f32.gmra.mrb[0].mxu0 %v1518
      %v1704 = vpop.f32.mrb[0].mxu0
      %v1705 = vadd.f32 0.0, %v1704
      %v1706 = vpop.f32.mrb[0].mxu0
      %1707 = vmatprep.mubr.f32.mxu0 0.0
      %1708 = vmatmul.mubr.f32.gmra.mrb[0].mxu0 %v1521
      %v1709 = vpop.f32.mrb[0].mxu0
      %v1710 = vadd.f32 0.0, %v1709
      %v1711 = vpop.f32.mrb[0].mxu0
      %1712 = vmatprep.mubr.f32.mxu0 0.0
      %1713 = vmatmul.mubr.f32.gmra.mrb[0].mxu0 %v1524
      %v1714 = vpop.f32.mrb[0].mxu0
      %v1715 = vadd.f32 0.0, %v1714
      %v1716 = vpop.f32.mrb[0].mxu0
      %1717 = vmatprep.mubr.f32.mxu0 0.0
      %1718 = vmatmul.mubr.f32.gmra.mrb[0].mxu0 %v1527
      %v1719 = vpop.f32.mrb[0].mxu0
      %v1720 = vadd.f32 0.0, %v1719
      %v1721 = vpop.f32.mrb[0].mxu0
      %1722 = vmatprep.mubr.f32.mxu0 0.0
      %1723 = vmatmul.mubr.f32.gmra.mrb[0].mxu0 %v1530
      %v1724 = vpop.f32.mrb[0].mxu0
      %v1725 = vadd.f32 0.0, %v1724
      %v1726 = vpop.f32.mrb[0].mxu0
      %1727 = vmatprep.mubr.f32.mxu0 0.0
      %1728 = vmatmul.mubr.f32.gmra.mrb[0].mxu0 %v1533
      %v1729 = vpop.f32.mrb[0].mxu0
      %v1730 = vadd.f32 0.0, %v1729
      %v1731 = vpop.f32.mrb[0].mxu0
      %1732 = vmatprep.mubr.f32.mxu0 0.0
      %1733 = vmatmul.mubr.f32.gmra.mrb[0].mxu0 %v1536
      %v1734 = vpop.f32.mrb[0].mxu0
      %v1735 = vadd.f32 0.0, %v1734
      %v1736 = vpop.f32.mrb[0].mxu0
      %1737 = vmatprep.mubr.f32.mxu0 0.0
      %1738 = vmatmul.mubr.f32.gmra.mrb[0].mxu0 %v1539
      %v1739 = vpop.f32.mrb[0].mxu0
      %v1740 = vadd.f32 0.0, %v1739
      %v1741 = vpop.f32.mrb[0].mxu0
      %1742 = vmatprep.mubr.f32.mxu0 0.0
      %1743 = vmatmul.mubr.f32.gmra.mrb[0].mxu0 %v1542
      %v1744 = vpop.f32.mrb[0].mxu0
      %v1745 = vadd.f32 0.0, %v1744
      %v1746 = vpop.f32.mrb[0].mxu0
      %1747 = vmatprep.mubr.f32.mxu0 0.0
      %1748 = vmatmul.mubr.f32.gmra.mrb[0].mxu0 %v1545
      %v1749 = vpop.f32.mrb[0].mxu0
      %v1750 = vadd.f32 0.0, %v1749
      %v1751 = vpop.f32.mrb[0].mxu0
      %1752 = vmatprep.mubr.f32.mxu0 0.0
      %1753 = vmatmul.mubr.f32.gmra.mrb[0].mxu0 %v1548
      %v1754 = vpop.f32.mrb[0].mxu0
      %v1755 = vadd.f32 0.0, %v1754
      %v1756 = vpop.f32.mrb[0].mxu0
      %1757 = vmatprep.mubr.f32.mxu0 0.0
      %1758 = vmatmul.mubr.f32.gmra.mrb[0].mxu0 %v1551
      %v1759 = vpop.f32.mrb[0].mxu0
      %v1760 = vadd.f32 0.0, %v1759
      %v1761 = vpop.f32.mrb[0].mxu0
      %1762 = vmatprep.mubr.f32.mxu0 0.0
      %1763 = vmatmul.mubr.f32.gmra.mrb[0].mxu0 %v1554
      %v1764 = vpop.f32.mrb[0].mxu0
      %v1765 = vadd.f32 0.0, %v1764
      %v1766 = vpop.f32.mrb[0].mxu0
      %1767 = vmatprep.mubr.f32.mxu0 0.0
      %1768 = vmatmul.mubr.f32.gmra.mrb[0].mxu0 %v1557
      %v1769 = vpop.f32.mrb[0].mxu0
      %v1770 = vadd.f32 0.0, %v1769
      %v1771 = vpop.f32.mrb[0].mxu0
      %1772 = vmatprep.mubr.f32.mxu0 0.0
      %1773 = vmatmul.mubr.f32.gmra.mrb[0].mxu0 %v1560
      %v1774 = vpop.f32.mrb[0].mxu0
      %v1775 = vadd.f32 0.0, %v1774
      %v1776 = vpop.f32.mrb[0].mxu0
      %1777 = vmatprep.mubr.f32.mxu0 0.0
      %1778 = vmatmul.mubr.f32.gmra.mrb[0].mxu0 %v1563
      %v1779 = vpop.f32.mrb[0].mxu0
      %v1780 = vadd.f32 0.0, %v1779
      %v1781 = vpop.f32.mrb[0].mxu0
      %1782 = vmatprep.mubr.f32.mxu0 0.0
      %1783 = vmatmul.mubr.f32.gmra.mrb[0].mxu0 %v1566
      %v1784 = vpop.f32.mrb[0].mxu0
      %v1785 = vadd.f32 0.0, %v1784
      %v1786 = vpop.f32.mrb[0].mxu0
      %1787 = vmatprep.mubr.f32.mxu0 0.0
      %1788 = vmatmul.mubr.f32.gmra.mrb[0].mxu0 %v1569
      %v1789 = vpop.f32.mrb[0].mxu0
      %v1790 = vadd.f32 0.0, %v1789
      %v1791 = vpop.f32.mrb[0].mxu0
      %1792 = vmatprep.mubr.f32.mxu0 0.0
      %1793 = vmatmul.mubr.f32.gmra.mrb[0].mxu0 %v1572
      %v1794 = vpop.f32.mrb[0].mxu0
      %v1795 = vadd.f32 0.0, %v1794
      %v1796 = vpop.f32.mrb[0].mxu0
      %1797 = vmatprep.mubr.f32.mxu0 0.0
      %1798 = vmatmul.mubr.f32.gmra.mrb[0].mxu0 %v1575
      %v1799 = vpop.f32.mrb[0].mxu0
      %v1800 = vadd.f32 0.0, %v1799
      %v1801 = vpop.f32.mrb[0].mxu0
      %1802 = vmatprep.mubr.f32.mxu0 0.0
      %1803 = vmatmul.mubr.f32.gmra.mrb[0].mxu0 %v1578
      %v1804 = vpop.f32.mrb[0].mxu0
      %v1805 = vadd.f32 0.0, %v1804
      %v1806 = vpop.f32.mrb[0].mxu0
      %1807 = vdwg.mxu0
      %v1808 = vadd.f32 %v1418, %v1650
      %v1809 = vadd.f32 %v1419, %v1655
      %v1810 = vadd.f32 %v1420, %v1660
      %v1811 = vadd.f32 %v1421, %v1665
      %v1812 = vadd.f32 %v1422, %v1670
      %v1813 = vadd.f32 %v1423, %v1675
      %v1814 = vadd.f32 %v1424, %v1680
      %v1815 = vadd.f32 %v1425, %v1685
      %v1816 = vadd.f32 %v1426, %v1690
      %v1817 = vadd.f32 %v1427, %v1695
      %v1818 = vadd.f32 %v1428, %v1700
      %v1819 = vadd.f32 %v1429, %v1705
      %v1820 = vadd.f32 %v1430, %v1710
      %v1821 = vadd.f32 %v1431, %v1715
      %v1822 = vadd.f32 %v1432, %v1720
      %v1823 = vadd.f32 %v1433, %v1725
      %v1824 = vadd.f32 %v1434, %v1730
      %v1825 = vadd.f32 %v1435, %v1735
      %v1826 = vadd.f32 %v1436, %v1740
      %v1827 = vadd.f32 %v1437, %v1745
      %v1828 = vadd.f32 %v1438, %v1750
      %v1829 = vadd.f32 %v1439, %v1755
      %v1830 = vadd.f32 %v1440, %v1760
      %v1831 = vadd.f32 %v1441, %v1765
      %v1832 = vadd.f32 %v1442, %v1770
      %v1833 = vadd.f32 %v1443, %v1775
      %v1834 = vadd.f32 %v1444, %v1780
      %v1835 = vadd.f32 %v1445, %v1785
      %v1836 = vadd.f32 %v1446, %v1790
      %v1837 = vadd.f32 %v1447, %v1795
      %v1838 = vadd.f32 %v1448, %v1800
      %v1839 = vadd.f32 %v1449, %v1805
      %v1840 = vld [vmem:[%s246 + $0x3] sm:$0xff]
      %v1841 = vld [vmem:[%s246 + $0xb] sm:$0xff]
      %v1842 = vld [vmem:[%s246 + $0x1b] sm:$0xff]
      %v1843 = vld [vmem:[%s246 + $0x23] sm:$0xff]
      %v1844 = vld [vmem:[%s246 + $0x33] sm:$0xff]
      %v1845 = vld [vmem:[%s246 + $0x3b] sm:$0xff]
      %v1846 = vld [vmem:[%s246 + $0x4b] sm:$0xff]
      %v1847 = vld [vmem:[%s246 + $0x53] sm:$0xff]
      %v1848 = vld [vmem:[%s246 + $0x63] sm:$0xff]
      %v1849 = vld [vmem:[%s246 + $0x6b] sm:$0xff]
      %v1850 = vld [vmem:[%s246 + $0x7b] sm:$0xff]
      %v1851 = vld [vmem:[%s246 + $0x83] sm:$0xff]
      %v1852 = vld [vmem:[%s246 + $0x93] sm:$0xff]
      %v1853 = vld [vmem:[%s246 + $0x9b] sm:$0xff]
      %v1854 = vld [vmem:[%s246 + $0xab] sm:$0xff]
      %v1855 = vld [vmem:[%s246 + $0xb3] sm:$0xff]
      %v1856 = vld [vmem:[%s246 + $0xc3] sm:$0xff]
      %v1857 = vld [vmem:[%s246 + $0xcb] sm:$0xff]
      %v1858 = vld [vmem:[%s246 + $0xdb] sm:$0xff]
      %v1859 = vld [vmem:[%s246 + $0xe3] sm:$0xff]
      %v1860 = vld [vmem:[%s246 + $0xf3] sm:$0xff]
      %v1861 = vld [vmem:[%s246 + $0xfb] sm:$0xff]
      %v1862 = vld [vmem:[%s246 + $0x10b] sm:$0xff]
      %v1863 = vld [vmem:[%s246 + $0x113] sm:$0xff]
      %v1864 = vld [vmem:[%s246 + $0x123] sm:$0xff]
      %v1865 = vld [vmem:[%s246 + $0x12b] sm:$0xff]
      %v1866 = vld [vmem:[%s246 + $0x13b] sm:$0xff]
      %v1867 = vld [vmem:[%s246 + $0x143] sm:$0xff]
      %v1868 = vld [vmem:[%s246 + $0x153] sm:$0xff]
      %v1869 = vld [vmem:[%s246 + $0x15b] sm:$0xff]
      %v1870 = vld [vmem:[%s246 + $0x16b] sm:$0xff]
      %v1871 = vld [vmem:[%s246 + $0x173] sm:$0xff]
      %s1872 = scalar_lea.vmem %s1, 16
      %v1873 = vld [vmem:[%s1872] sm:$0xf]
      %v1875 = vsel %vm225, %v1840, 0
      %v1878 = vsel %vm225, %v1841, 0
      %v1881 = vsel %vm225, %v1842, 0
      %v1884 = vsel %vm225, %v1843, 0
      %v1887 = vsel %vm225, %v1844, 0
      %v1890 = vsel %vm225, %v1845, 0
      %v1893 = vsel %vm225, %v1846, 0
      %v1896 = vsel %vm225, %v1847, 0
      %v1899 = vsel %vm225, %v1848, 0
      %v1902 = vsel %vm225, %v1849, 0
      %v1905 = vsel %vm225, %v1850, 0
      %v1908 = vsel %vm225, %v1851, 0
      %v1911 = vsel %vm225, %v1852, 0
      %v1914 = vsel %vm225, %v1853, 0
      %v1917 = vsel %vm225, %v1854, 0
      %v1920 = vsel %vm225, %v1855, 0
      %v1923 = vsel %vm225, %v1856, 0
      %v1926 = vsel %vm225, %v1857, 0
      %v1929 = vsel %vm225, %v1858, 0
      %v1932 = vsel %vm225, %v1859, 0
      %v1935 = vsel %vm225, %v1860, 0
      %v1938 = vsel %vm225, %v1861, 0
      %v1941 = vsel %vm225, %v1862, 0
      %v1944 = vsel %vm225, %v1863, 0
      %v1947 = vsel %vm225, %v1864, 0
      %v1950 = vsel %vm225, %v1865, 0
      %v1953 = vsel %vm225, %v1866, 0
      %v1956 = vsel %vm225, %v1867, 0
      %v1959 = vsel %vm225, %v1868, 0
      %v1962 = vsel %vm225, %v1869, 0
      %v1965 = vsel %vm225, %v1870, 0
      %v1968 = vsel %vm225, %v1871, 0
      %v1971 = vsel %vm507, %v1873, 0
      %1973 = vmatprep.subr.mxu0 0.0
      %1974 = vmatpush1.msra.mxu0 %v1971
      %1975 = vmatprep.subr.mxu0 0.0
      %1976 = vmatpush1.msra.mxu0 0.0
      %1977 = vmatprep.subr.mxu0 0.0
      %1978 = vmatpush1.msra.mxu0 0.0
      %1979 = vmatprep.subr.mxu0 0.0
      %1980 = vmatpush1.msra.mxu0 0.0
      %1981 = vmatprep.subr.mxu0 0.0
      %1982 = vmatpush1.msra.mxu0 0.0
      %1983 = vmatprep.subr.mxu0 0.0
      %1984 = vmatpush1.msra.mxu0 0.0
      %1985 = vmatprep.subr.mxu0 0.0
      %1986 = vmatpush1.msra.mxu0 0.0
      %1987 = vmatprep.subr.mxu0 0.0
      %1988 = vmatpush1.msra.mxu0 0.0
      %1989 = vmatprep.subr.mxu0 0.0
      %1990 = vmatpush1.msra.mxu0 0.0
      %1991 = vmatprep.subr.mxu0 0.0
      %1992 = vmatpush1.msra.mxu0 0.0
      %1993 = vmatprep.subr.mxu0 0.0
      %1994 = vmatpush1.msra.mxu0 0.0
      %1995 = vmatprep.subr.mxu0 0.0
      %1996 = vmatpush1.msra.mxu0 0.0
      %1997 = vmatprep.subr.mxu0 0.0
      %1998 = vmatpush1.msra.mxu0 0.0
      %1999 = vmatprep.subr.mxu0 0.0
      %2000 = vmatpush1.msra.mxu0 0.0
      %2001 = vmatprep.subr.mxu0 0.0
      %2002 = vmatpush1.msra.mxu0 0.0
      %2003 = vmatprep.subr.mxu0 0.0
      %2004 = vmatpush1.msra.mxu0 0.0
      %2005 = vmatprep.subr.mxu0 0.0
      %2006 = vmatpush1.msra.mxu0 0.0
      %2007 = vmatprep.subr.mxu0 0.0
      %2008 = vmatpush1.msra.mxu0 0.0
      %2009 = vmatprep.subr.mxu0 0.0
      %2010 = vmatpush1.msra.mxu0 0.0
      %2011 = vmatprep.subr.mxu0 0.0
      %2012 = vmatpush1.msra.mxu0 0.0
      %2013 = vmatprep.subr.mxu0 0.0
      %2014 = vmatpush1.msra.mxu0 0.0
      %2015 = vmatprep.subr.mxu0 0.0
      %2016 = vmatpush1.msra.mxu0 0.0
      %2017 = vmatprep.subr.mxu0 0.0
      %2018 = vmatpush1.msra.mxu0 0.0
      %2019 = vmatprep.subr.mxu0 0.0
      %2020 = vmatpush1.msra.mxu0 0.0
      %2021 = vmatprep.subr.mxu0 0.0
      %2022 = vmatpush1.msra.mxu0 0.0
      %2023 = vmatprep.subr.mxu0 0.0
      %2024 = vmatpush1.msra.mxu0 0.0
      %2025 = vmatprep.subr.mxu0 0.0
      %2026 = vmatpush1.msra.mxu0 0.0
      %2027 = vmatprep.subr.mxu0 0.0
      %2028 = vmatpush1.msra.mxu0 0.0
      %2029 = vmatprep.subr.mxu0 0.0
      %2030 = vmatpush1.msra.mxu0 0.0
      %2031 = vmatprep.subr.mxu0 0.0
      %2032 = vmatpush1.msra.mxu0 0.0
      %2033 = vmatprep.subr.mxu0 0.0
      %2034 = vmatpush1.msra.mxu0 0.0
      %2035 = vmatprep.subr.mxu0 0.0
      %2036 = vmatpush1.msra.mxu0 0.0
      %2037 = vmatprep.mubr.f32.mxu0 0.0
      %2038 = vmatmul.mubr.f32.gmra.mrb[0].mxu0 %v1875
      %v2039 = vpop.f32.mrb[0].mxu0
      %v2040 = vadd.f32 0.0, %v2039
      %v2041 = vpop.f32.mrb[0].mxu0
      %2042 = vmatprep.mubr.f32.mxu0 0.0
      %2043 = vmatmul.mubr.f32.gmra.mrb[0].mxu0 %v1878
      %v2044 = vpop.f32.mrb[0].mxu0
      %v2045 = vadd.f32 0.0, %v2044
      %v2046 = vpop.f32.mrb[0].mxu0
      %2047 = vmatprep.mubr.f32.mxu0 0.0
      %2048 = vmatmul.mubr.f32.gmra.mrb[0].mxu0 %v1881
      %v2049 = vpop.f32.mrb[0].mxu0
      %v2050 = vadd.f32 0.0, %v2049
      %v2051 = vpop.f32.mrb[0].mxu0
      %2052 = vmatprep.mubr.f32.mxu0 0.0
      %2053 = vmatmul.mubr.f32.gmra.mrb[0].mxu0 %v1884
      %v2054 = vpop.f32.mrb[0].mxu0
      %v2055 = vadd.f32 0.0, %v2054
      %v2056 = vpop.f32.mrb[0].mxu0
      %2057 = vmatprep.mubr.f32.mxu0 0.0
      %2058 = vmatmul.mubr.f32.gmra.mrb[0].mxu0 %v1887
      %v2059 = vpop.f32.mrb[0].mxu0
      %v2060 = vadd.f32 0.0, %v2059
      %v2061 = vpop.f32.mrb[0].mxu0
      %2062 = vmatprep.mubr.f32.mxu0 0.0
      %2063 = vmatmul.mubr.f32.gmra.mrb[0].mxu0 %v1890
      %v2064 = vpop.f32.mrb[0].mxu0
      %v2065 = vadd.f32 0.0, %v2064
      %v2066 = vpop.f32.mrb[0].mxu0
      %2067 = vmatprep.mubr.f32.mxu0 0.0
      %2068 = vmatmul.mubr.f32.gmra.mrb[0].mxu0 %v1893
      %v2069 = vpop.f32.mrb[0].mxu0
      %v2070 = vadd.f32 0.0, %v2069
      %v2071 = vpop.f32.mrb[0].mxu0
      %2072 = vmatprep.mubr.f32.mxu0 0.0
      %2073 = vmatmul.mubr.f32.gmra.mrb[0].mxu0 %v1896
      %v2074 = vpop.f32.mrb[0].mxu0
      %v2075 = vadd.f32 0.0, %v2074
      %v2076 = vpop.f32.mrb[0].mxu0
      %2077 = vmatprep.mubr.f32.mxu0 0.0
      %2078 = vmatmul.mubr.f32.gmra.mrb[0].mxu0 %v1899
      %v2079 = vpop.f32.mrb[0].mxu0
      %v2080 = vadd.f32 0.0, %v2079
      %v2081 = vpop.f32.mrb[0].mxu0
      %2082 = vmatprep.mubr.f32.mxu0 0.0
      %2083 = vmatmul.mubr.f32.gmra.mrb[0].mxu0 %v1902
      %v2084 = vpop.f32.mrb[0].mxu0
      %v2085 = vadd.f32 0.0, %v2084
      %v2086 = vpop.f32.mrb[0].mxu0
      %2087 = vmatprep.mubr.f32.mxu0 0.0
      %2088 = vmatmul.mubr.f32.gmra.mrb[0].mxu0 %v1905
      %v2089 = vpop.f32.mrb[0].mxu0
      %v2090 = vadd.f32 0.0, %v2089
      %v2091 = vpop.f32.mrb[0].mxu0
      %2092 = vmatprep.mubr.f32.mxu0 0.0
      %2093 = vmatmul.mubr.f32.gmra.mrb[0].mxu0 %v1908
      %v2094 = vpop.f32.mrb[0].mxu0
      %v2095 = vadd.f32 0.0, %v2094
      %v2096 = vpop.f32.mrb[0].mxu0
      %2097 = vmatprep.mubr.f32.mxu0 0.0
      %2098 = vmatmul.mubr.f32.gmra.mrb[0].mxu0 %v1911
      %v2099 = vpop.f32.mrb[0].mxu0
      %v2100 = vadd.f32 0.0, %v2099
      %v2101 = vpop.f32.mrb[0].mxu0
      %2102 = vmatprep.mubr.f32.mxu0 0.0
      %2103 = vmatmul.mubr.f32.gmra.mrb[0].mxu0 %v1914
      %v2104 = vpop.f32.mrb[0].mxu0
      %v2105 = vadd.f32 0.0, %v2104
      %v2106 = vpop.f32.mrb[0].mxu0
      %2107 = vmatprep.mubr.f32.mxu0 0.0
      %2108 = vmatmul.mubr.f32.gmra.mrb[0].mxu0 %v1917
      %v2109 = vpop.f32.mrb[0].mxu0
      %v2110 = vadd.f32 0.0, %v2109
      %v2111 = vpop.f32.mrb[0].mxu0
      %2112 = vmatprep.mubr.f32.mxu0 0.0
      %2113 = vmatmul.mubr.f32.gmra.mrb[0].mxu0 %v1920
      %v2114 = vpop.f32.mrb[0].mxu0
      %v2115 = vadd.f32 0.0, %v2114
      %v2116 = vpop.f32.mrb[0].mxu0
      %2117 = vmatprep.mubr.f32.mxu0 0.0
      %2118 = vmatmul.mubr.f32.gmra.mrb[0].mxu0 %v1923
      %v2119 = vpop.f32.mrb[0].mxu0
      %v2120 = vadd.f32 0.0, %v2119
      %v2121 = vpop.f32.mrb[0].mxu0
      %2122 = vmatprep.mubr.f32.mxu0 0.0
      %2123 = vmatmul.mubr.f32.gmra.mrb[0].mxu0 %v1926
      %v2124 = vpop.f32.mrb[0].mxu0
      %v2125 = vadd.f32 0.0, %v2124
      %v2126 = vpop.f32.mrb[0].mxu0
      %2127 = vmatprep.mubr.f32.mxu0 0.0
      %2128 = vmatmul.mubr.f32.gmra.mrb[0].mxu0 %v1929
      %v2129 = vpop.f32.mrb[0].mxu0
      %v2130 = vadd.f32 0.0, %v2129
      %v2131 = vpop.f32.mrb[0].mxu0
      %2132 = vmatprep.mubr.f32.mxu0 0.0
      %2133 = vmatmul.mubr.f32.gmra.mrb[0].mxu0 %v1932
      %v2134 = vpop.f32.mrb[0].mxu0
      %v2135 = vadd.f32 0.0, %v2134
      %v2136 = vpop.f32.mrb[0].mxu0
      %2137 = vmatprep.mubr.f32.mxu0 0.0
      %2138 = vmatmul.mubr.f32.gmra.mrb[0].mxu0 %v1935
      %v2139 = vpop.f32.mrb[0].mxu0
      %v2140 = vadd.f32 0.0, %v2139
      %v2141 = vpop.f32.mrb[0].mxu0
      %2142 = vmatprep.mubr.f32.mxu0 0.0
      %2143 = vmatmul.mubr.f32.gmra.mrb[0].mxu0 %v1938
      %v2144 = vpop.f32.mrb[0].mxu0
      %v2145 = vadd.f32 0.0, %v2144
      %v2146 = vpop.f32.mrb[0].mxu0
      %2147 = vmatprep.mubr.f32.mxu0 0.0
      %2148 = vmatmul.mubr.f32.gmra.mrb[0].mxu0 %v1941
      %v2149 = vpop.f32.mrb[0].mxu0
      %v2150 = vadd.f32 0.0, %v2149
      %v2151 = vpop.f32.mrb[0].mxu0
      %2152 = vmatprep.mubr.f32.mxu0 0.0
      %2153 = vmatmul.mubr.f32.gmra.mrb[0].mxu0 %v1944
      %v2154 = vpop.f32.mrb[0].mxu0
      %v2155 = vadd.f32 0.0, %v2154
      %v2156 = vpop.f32.mrb[0].mxu0
      %2157 = vmatprep.mubr.f32.mxu0 0.0
      %2158 = vmatmul.mubr.f32.gmra.mrb[0].mxu0 %v1947
      %v2159 = vpop.f32.mrb[0].mxu0
      %v2160 = vadd.f32 0.0, %v2159
      %v2161 = vpop.f32.mrb[0].mxu0
      %2162 = vmatprep.mubr.f32.mxu0 0.0
      %2163 = vmatmul.mubr.f32.gmra.mrb[0].mxu0 %v1950
      %v2164 = vpop.f32.mrb[0].mxu0
      %v2165 = vadd.f32 0.0, %v2164
      %v2166 = vpop.f32.mrb[0].mxu0
      %2167 = vmatprep.mubr.f32.mxu0 0.0
      %2168 = vmatmul.mubr.f32.gmra.mrb[0].mxu0 %v1953
      %v2169 = vpop.f32.mrb[0].mxu0
      %v2170 = vadd.f32 0.0, %v2169
      %v2171 = vpop.f32.mrb[0].mxu0
      %2172 = vmatprep.mubr.f32.mxu0 0.0
      %2173 = vmatmul.mubr.f32.gmra.mrb[0].mxu0 %v1956
      %v2174 = vpop.f32.mrb[0].mxu0
      %v2175 = vadd.f32 0.0, %v2174
      %v2176 = vpop.f32.mrb[0].mxu0
      %2177 = vmatprep.mubr.f32.mxu0 0.0
      %2178 = vmatmul.mubr.f32.gmra.mrb[0].mxu0 %v1959
      %v2179 = vpop.f32.mrb[0].mxu0
      %v2180 = vadd.f32 0.0, %v2179
      %v2181 = vpop.f32.mrb[0].mxu0
      %2182 = vmatprep.mubr.f32.mxu0 0.0
      %2183 = vmatmul.mubr.f32.gmra.mrb[0].mxu0 %v1962
      %v2184 = vpop.f32.mrb[0].mxu0
      %v2185 = vadd.f32 0.0, %v2184
      %v2186 = vpop.f32.mrb[0].mxu0
      %2187 = vmatprep.mubr.f32.mxu0 0.0
      %2188 = vmatmul.mubr.f32.gmra.mrb[0].mxu0 %v1965
      %v2189 = vpop.f32.mrb[0].mxu0
      %v2190 = vadd.f32 0.0, %v2189
      %v2191 = vpop.f32.mrb[0].mxu0
      %2192 = vmatprep.mubr.f32.mxu0 0.0
      %2193 = vmatmul.mubr.f32.gmra.mrb[0].mxu0 %v1968
      %v2194 = vpop.f32.mrb[0].mxu0
      %v2195 = vadd.f32 0.0, %v2194
      %v2196 = vpop.f32.mrb[0].mxu0
      %2197 = vdwg.mxu0
      %v2198 = vadd.f32 %v1808, %v2040
      %v2199 = vadd.f32 %v1809, %v2045
      %v2200 = vadd.f32 %v1810, %v2050
      %v2201 = vadd.f32 %v1811, %v2055
      %v2202 = vadd.f32 %v1812, %v2060
      %v2203 = vadd.f32 %v1813, %v2065
      %v2204 = vadd.f32 %v1814, %v2070
      %v2205 = vadd.f32 %v1815, %v2075
      %v2206 = vadd.f32 %v1816, %v2080
      %v2207 = vadd.f32 %v1817, %v2085
      %v2208 = vadd.f32 %v1818, %v2090
      %v2209 = vadd.f32 %v1819, %v2095
      %v2210 = vadd.f32 %v1820, %v2100
      %v2211 = vadd.f32 %v1821, %v2105
      %v2212 = vadd.f32 %v1822, %v2110
      %v2213 = vadd.f32 %v1823, %v2115
      %v2214 = vadd.f32 %v1824, %v2120
      %v2215 = vadd.f32 %v1825, %v2125
      %v2216 = vadd.f32 %v1826, %v2130
      %v2217 = vadd.f32 %v1827, %v2135
      %v2218 = vadd.f32 %v1828, %v2140
      %v2219 = vadd.f32 %v1829, %v2145
      %v2220 = vadd.f32 %v1830, %v2150
      %v2221 = vadd.f32 %v1831, %v2155
      %v2222 = vadd.f32 %v1832, %v2160
      %v2223 = vadd.f32 %v1833, %v2165
      %v2224 = vadd.f32 %v1834, %v2170
      %v2225 = vadd.f32 %v1835, %v2175
      %v2226 = vadd.f32 %v1836, %v2180
      %v2227 = vadd.f32 %v1837, %v2185
      %v2228 = vadd.f32 %v1838, %v2190
      %v2229 = vadd.f32 %v1839, %v2195
      %v2230 = vld [vmem:[%s246 + $0x6] sm:$0xff]
      %v2231 = vld [vmem:[%s246 + $0xe] sm:$0xff]
      %v2232 = vld [vmem:[%s246 + $0x1e] sm:$0xff]
      %v2233 = vld [vmem:[%s246 + $0x26] sm:$0xff]
      %v2234 = vld [vmem:[%s246 + $0x36] sm:$0xff]
      %v2235 = vld [vmem:[%s246 + $0x3e] sm:$0xff]
      %v2236 = vld [vmem:[%s246 + $0x4e] sm:$0xff]
      %v2237 = vld [vmem:[%s246 + $0x56] sm:$0xff]
      %v2238 = vld [vmem:[%s246 + $0x66] sm:$0xff]
      %v2239 = vld [vmem:[%s246 + $0x6e] sm:$0xff]
      %v2240 = vld [vmem:[%s246 + $0x7e] sm:$0xff]
      %v2241 = vld [vmem:[%s246 + $0x86] sm:$0xff]
      %v2242 = vld [vmem:[%s246 + $0x96] sm:$0xff]
      %v2243 = vld [vmem:[%s246 + $0x9e] sm:$0xff]
      %v2244 = vld [vmem:[%s246 + $0xae] sm:$0xff]
      %v2245 = vld [vmem:[%s246 + $0xb6] sm:$0xff]
      %v2246 = vld [vmem:[%s246 + $0xc6] sm:$0xff]
      %v2247 = vld [vmem:[%s246 + $0xce] sm:$0xff]
      %v2248 = vld [vmem:[%s246 + $0xde] sm:$0xff]
      %v2249 = vld [vmem:[%s246 + $0xe6] sm:$0xff]
      %v2250 = vld [vmem:[%s246 + $0xf6] sm:$0xff]
      %v2251 = vld [vmem:[%s246 + $0xfe] sm:$0xff]
      %v2252 = vld [vmem:[%s246 + $0x10e] sm:$0xff]
      %v2253 = vld [vmem:[%s246 + $0x116] sm:$0xff]
      %v2254 = vld [vmem:[%s246 + $0x126] sm:$0xff]
      %v2255 = vld [vmem:[%s246 + $0x12e] sm:$0xff]
      %v2256 = vld [vmem:[%s246 + $0x13e] sm:$0xff]
      %v2257 = vld [vmem:[%s246 + $0x146] sm:$0xff]
      %v2258 = vld [vmem:[%s246 + $0x156] sm:$0xff]
      %v2259 = vld [vmem:[%s246 + $0x15e] sm:$0xff]
      %v2260 = vld [vmem:[%s246 + $0x16e] sm:$0xff]
      %v2261 = vld [vmem:[%s246 + $0x176] sm:$0xff]
      %s2262 = scalar_lea.vmem %s1, 20
      %v2263 = vld [vmem:[%s2262] sm:$0xf]
      %v2265 = vsel %vm225, %v2230, 0
      %v2268 = vsel %vm225, %v2231, 0
      %v2271 = vsel %vm225, %v2232, 0
      %v2274 = vsel %vm225, %v2233, 0
      %v2277 = vsel %vm225, %v2234, 0
      %v2280 = vsel %vm225, %v2235, 0
      %v2283 = vsel %vm225, %v2236, 0
      %v2286 = vsel %vm225, %v2237, 0
      %v2289 = vsel %vm225, %v2238, 0
      %v2292 = vsel %vm225, %v2239, 0
      %v2295 = vsel %vm225, %v2240, 0
      %v2298 = vsel %vm225, %v2241, 0
      %v2301 = vsel %vm225, %v2242, 0
      %v2304 = vsel %vm225, %v2243, 0
      %v2307 = vsel %vm225, %v2244, 0
      %v2310 = vsel %vm225, %v2245, 0
      %v2313 = vsel %vm225, %v2246, 0
      %v2316 = vsel %vm225, %v2247, 0
      %v2319 = vsel %vm225, %v2248, 0
      %v2322 = vsel %vm225, %v2249, 0
      %v2325 = vsel %vm225, %v2250, 0
      %v2328 = vsel %vm225, %v2251, 0
      %v2331 = vsel %vm225, %v2252, 0
      %v2334 = vsel %vm225, %v2253, 0
      %v2337 = vsel %vm225, %v2254, 0
      %v2340 = vsel %vm225, %v2255, 0
      %v2343 = vsel %vm225, %v2256, 0
      %v2346 = vsel %vm225, %v2257, 0
      %v2349 = vsel %vm225, %v2258, 0
      %v2352 = vsel %vm225, %v2259, 0
      %v2355 = vsel %vm225, %v2260, 0
      %v2358 = vsel %vm225, %v2261, 0
      %v2361 = vsel %vm507, %v2263, 0
      %2363 = vmatprep.subr.mxu0 0.0
      %2364 = vmatpush1.msra.mxu0 %v2361
      %2365 = vmatprep.subr.mxu0 0.0
      %2366 = vmatpush1.msra.mxu0 0.0
      %2367 = vmatprep.subr.mxu0 0.0
      %2368 = vmatpush1.msra.mxu0 0.0
      %2369 = vmatprep.subr.mxu0 0.0
      %2370 = vmatpush1.msra.mxu0 0.0
      %2371 = vmatprep.subr.mxu0 0.0
      %2372 = vmatpush1.msra.mxu0 0.0
      %2373 = vmatprep.subr.mxu0 0.0
      %2374 = vmatpush1.msra.mxu0 0.0
      %2375 = vmatprep.subr.mxu0 0.0
      %2376 = vmatpush1.msra.mxu0 0.0
      %2377 = vmatprep.subr.mxu0 0.0
      %2378 = vmatpush1.msra.mxu0 0.0
      %2379 = vmatprep.subr.mxu0 0.0
      %2380 = vmatpush1.msra.mxu0 0.0
      %2381 = vmatprep.subr.mxu0 0.0
      %2382 = vmatpush1.msra.mxu0 0.0
      %2383 = vmatprep.subr.mxu0 0.0
      %2384 = vmatpush1.msra.mxu0 0.0
      %2385 = vmatprep.subr.mxu0 0.0
      %2386 = vmatpush1.msra.mxu0 0.0
      %2387 = vmatprep.subr.mxu0 0.0
      %2388 = vmatpush1.msra.mxu0 0.0
      %2389 = vmatprep.subr.mxu0 0.0
      %2390 = vmatpush1.msra.mxu0 0.0
      %2391 = vmatprep.subr.mxu0 0.0
      %2392 = vmatpush1.msra.mxu0 0.0
      %2393 = vmatprep.subr.mxu0 0.0
      %2394 = vmatpush1.msra.mxu0 0.0
      %2395 = vmatprep.subr.mxu0 0.0
      %2396 = vmatpush1.msra.mxu0 0.0
      %2397 = vmatprep.subr.mxu0 0.0
      %2398 = vmatpush1.msra.mxu0 0.0
      %2399 = vmatprep.subr.mxu0 0.0
      %2400 = vmatpush1.msra.mxu0 0.0
      %2401 = vmatprep.subr.mxu0 0.0
      %2402 = vmatpush1.msra.mxu0 0.0
      %2403 = vmatprep.subr.mxu0 0.0
      %2404 = vmatpush1.msra.mxu0 0.0
      %2405 = vmatprep.subr.mxu0 0.0
      %2406 = vmatpush1.msra.mxu0 0.0
      %2407 = vmatprep.subr.mxu0 0.0
      %2408 = vmatpush1.msra.mxu0 0.0
      %2409 = vmatprep.subr.mxu0 0.0
      %2410 = vmatpush1.msra.mxu0 0.0
      %2411 = vmatprep.subr.mxu0 0.0
      %2412 = vmatpush1.msra.mxu0 0.0
      %2413 = vmatprep.subr.mxu0 0.0
      %2414 = vmatpush1.msra.mxu0 0.0
      %2415 = vmatprep.subr.mxu0 0.0
      %2416 = vmatpush1.msra.mxu0 0.0
      %2417 = vmatprep.subr.mxu0 0.0
      %2418 = vmatpush1.msra.mxu0 0.0
      %2419 = vmatprep.subr.mxu0 0.0
      %2420 = vmatpush1.msra.mxu0 0.0
      %2421 = vmatprep.subr.mxu0 0.0
      %2422 = vmatpush1.msra.mxu0 0.0
      %2423 = vmatprep.subr.mxu0 0.0
      %2424 = vmatpush1.msra.mxu0 0.0
      %2425 = vmatprep.subr.mxu0 0.0
      %2426 = vmatpush1.msra.mxu0 0.0
      %2427 = vmatprep.mubr.f32.mxu0 0.0
      %2428 = vmatmul.mubr.f32.gmra.mrb[0].mxu0 %v2265
      %v2429 = vpop.f32.mrb[0].mxu0
      %v2430 = vadd.f32 0.0, %v2429
      %v2431 = vpop.f32.mrb[0].mxu0
      %2432 = vmatprep.mubr.f32.mxu0 0.0
      %2433 = vmatmul.mubr.f32.gmra.mrb[0].mxu0 %v2268
      %v2434 = vpop.f32.mrb[0].mxu0
      %v2435 = vadd.f32 0.0, %v2434
      %v2436 = vpop.f32.mrb[0].mxu0
      %2437 = vmatprep.mubr.f32.mxu0 0.0
      %2438 = vmatmul.mubr.f32.gmra.mrb[0].mxu0 %v2271
      %v2439 = vpop.f32.mrb[0].mxu0
      %v2440 = vadd.f32 0.0, %v2439
      %v2441 = vpop.f32.mrb[0].mxu0
      %2442 = vmatprep.mubr.f32.mxu0 0.0
      %2443 = vmatmul.mubr.f32.gmra.mrb[0].mxu0 %v2274
      %v2444 = vpop.f32.mrb[0].mxu0
      %v2445 = vadd.f32 0.0, %v2444
      %v2446 = vpop.f32.mrb[0].mxu0
      %2447 = vmatprep.mubr.f32.mxu0 0.0
      %2448 = vmatmul.mubr.f32.gmra.mrb[0].mxu0 %v2277
      %v2449 = vpop.f32.mrb[0].mxu0
      %v2450 = vadd.f32 0.0, %v2449
      %v2451 = vpop.f32.mrb[0].mxu0
      %2452 = vmatprep.mubr.f32.mxu0 0.0
      %2453 = vmatmul.mubr.f32.gmra.mrb[0].mxu0 %v2280
      %v2454 = vpop.f32.mrb[0].mxu0
      %v2455 = vadd.f32 0.0, %v2454
      %v2456 = vpop.f32.mrb[0].mxu0
      %2457 = vmatprep.mubr.f32.mxu0 0.0
      %2458 = vmatmul.mubr.f32.gmra.mrb[0].mxu0 %v2283
      %v2459 = vpop.f32.mrb[0].mxu0
      %v2460 = vadd.f32 0.0, %v2459
      %v2461 = vpop.f32.mrb[0].mxu0
      %2462 = vmatprep.mubr.f32.mxu0 0.0
      %2463 = vmatmul.mubr.f32.gmra.mrb[0].mxu0 %v2286
      %v2464 = vpop.f32.mrb[0].mxu0
      %v2465 = vadd.f32 0.0, %v2464
      %v2466 = vpop.f32.mrb[0].mxu0
      %2467 = vmatprep.mubr.f32.mxu0 0.0
      %2468 = vmatmul.mubr.f32.gmra.mrb[0].mxu0 %v2289
      %v2469 = vpop.f32.mrb[0].mxu0
      %v2470 = vadd.f32 0.0, %v2469
      %v2471 = vpop.f32.mrb[0].mxu0
      %2472 = vmatprep.mubr.f32.mxu0 0.0
      %2473 = vmatmul.mubr.f32.gmra.mrb[0].mxu0 %v2292
      %v2474 = vpop.f32.mrb[0].mxu0
      %v2475 = vadd.f32 0.0, %v2474
      %v2476 = vpop.f32.mrb[0].mxu0
      %2477 = vmatprep.mubr.f32.mxu0 0.0
      %2478 = vmatmul.mubr.f32.gmra.mrb[0].mxu0 %v2295
      %v2479 = vpop.f32.mrb[0].mxu0
      %v2480 = vadd.f32 0.0, %v2479
      %v2481 = vpop.f32.mrb[0].mxu0
      %2482 = vmatprep.mubr.f32.mxu0 0.0
      %2483 = vmatmul.mubr.f32.gmra.mrb[0].mxu0 %v2298
      %v2484 = vpop.f32.mrb[0].mxu0
      %v2485 = vadd.f32 0.0, %v2484
      %v2486 = vpop.f32.mrb[0].mxu0
      %2487 = vmatprep.mubr.f32.mxu0 0.0
      %2488 = vmatmul.mubr.f32.gmra.mrb[0].mxu0 %v2301
      %v2489 = vpop.f32.mrb[0].mxu0
      %v2490 = vadd.f32 0.0, %v2489
      %v2491 = vpop.f32.mrb[0].mxu0
      %2492 = vmatprep.mubr.f32.mxu0 0.0
      %2493 = vmatmul.mubr.f32.gmra.mrb[0].mxu0 %v2304
      %v2494 = vpop.f32.mrb[0].mxu0
      %v2495 = vadd.f32 0.0, %v2494
      %v2496 = vpop.f32.mrb[0].mxu0
      %2497 = vmatprep.mubr.f32.mxu0 0.0
      %2498 = vmatmul.mubr.f32.gmra.mrb[0].mxu0 %v2307
      %v2499 = vpop.f32.mrb[0].mxu0
      %v2500 = vadd.f32 0.0, %v2499
      %v2501 = vpop.f32.mrb[0].mxu0
      %2502 = vmatprep.mubr.f32.mxu0 0.0
      %2503 = vmatmul.mubr.f32.gmra.mrb[0].mxu0 %v2310
      %v2504 = vpop.f32.mrb[0].mxu0
      %v2505 = vadd.f32 0.0, %v2504
      %v2506 = vpop.f32.mrb[0].mxu0
      %2507 = vmatprep.mubr.f32.mxu0 0.0
      %2508 = vmatmul.mubr.f32.gmra.mrb[0].mxu0 %v2313
      %v2509 = vpop.f32.mrb[0].mxu0
      %v2510 = vadd.f32 0.0, %v2509
      %v2511 = vpop.f32.mrb[0].mxu0
      %2512 = vmatprep.mubr.f32.mxu0 0.0
      %2513 = vmatmul.mubr.f32.gmra.mrb[0].mxu0 %v2316
      %v2514 = vpop.f32.mrb[0].mxu0
      %v2515 = vadd.f32 0.0, %v2514
      %v2516 = vpop.f32.mrb[0].mxu0
      %2517 = vmatprep.mubr.f32.mxu0 0.0
      %2518 = vmatmul.mubr.f32.gmra.mrb[0].mxu0 %v2319
      %v2519 = vpop.f32.mrb[0].mxu0
      %v2520 = vadd.f32 0.0, %v2519
      %v2521 = vpop.f32.mrb[0].mxu0
      %2522 = vmatprep.mubr.f32.mxu0 0.0
      %2523 = vmatmul.mubr.f32.gmra.mrb[0].mxu0 %v2322
      %v2524 = vpop.f32.mrb[0].mxu0
      %v2525 = vadd.f32 0.0, %v2524
      %v2526 = vpop.f32.mrb[0].mxu0
      %2527 = vmatprep.mubr.f32.mxu0 0.0
      %2528 = vmatmul.mubr.f32.gmra.mrb[0].mxu0 %v2325
      %v2529 = vpop.f32.mrb[0].mxu0
      %v2530 = vadd.f32 0.0, %v2529
      %v2531 = vpop.f32.mrb[0].mxu0
      %2532 = vmatprep.mubr.f32.mxu0 0.0
      %2533 = vmatmul.mubr.f32.gmra.mrb[0].mxu0 %v2328
      %v2534 = vpop.f32.mrb[0].mxu0
      %v2535 = vadd.f32 0.0, %v2534
      %v2536 = vpop.f32.mrb[0].mxu0
      %2537 = vmatprep.mubr.f32.mxu0 0.0
      %2538 = vmatmul.mubr.f32.gmra.mrb[0].mxu0 %v2331
      %v2539 = vpop.f32.mrb[0].mxu0
      %v2540 = vadd.f32 0.0, %v2539
      %v2541 = vpop.f32.mrb[0].mxu0
      %2542 = vmatprep.mubr.f32.mxu0 0.0
      %2543 = vmatmul.mubr.f32.gmra.mrb[0].mxu0 %v2334
      %v2544 = vpop.f32.mrb[0].mxu0
      %v2545 = vadd.f32 0.0, %v2544
      %v2546 = vpop.f32.mrb[0].mxu0
      %2547 = vmatprep.mubr.f32.mxu0 0.0
      %2548 = vmatmul.mubr.f32.gmra.mrb[0].mxu0 %v2337
      %v2549 = vpop.f32.mrb[0].mxu0
      %v2550 = vadd.f32 0.0, %v2549
      %v2551 = vpop.f32.mrb[0].mxu0
      %2552 = vmatprep.mubr.f32.mxu0 0.0
      %2553 = vmatmul.mubr.f32.gmra.mrb[0].mxu0 %v2340
      %v2554 = vpop.f32.mrb[0].mxu0
      %v2555 = vadd.f32 0.0, %v2554
      %v2556 = vpop.f32.mrb[0].mxu0
      %2557 = vmatprep.mubr.f32.mxu0 0.0
      %2558 = vmatmul.mubr.f32.gmra.mrb[0].mxu0 %v2343
      %v2559 = vpop.f32.mrb[0].mxu0
      %v2560 = vadd.f32 0.0, %v2559
      %v2561 = vpop.f32.mrb[0].mxu0
      %2562 = vmatprep.mubr.f32.mxu0 0.0
      %2563 = vmatmul.mubr.f32.gmra.mrb[0].mxu0 %v2346
      %v2564 = vpop.f32.mrb[0].mxu0
      %v2565 = vadd.f32 0.0, %v2564
      %v2566 = vpop.f32.mrb[0].mxu0
      %2567 = vmatprep.mubr.f32.mxu0 0.0
      %2568 = vmatmul.mubr.f32.gmra.mrb[0].mxu0 %v2349
      %v2569 = vpop.f32.mrb[0].mxu0
      %v2570 = vadd.f32 0.0, %v2569
      %v2571 = vpop.f32.mrb[0].mxu0
      %2572 = vmatprep.mubr.f32.mxu0 0.0
      %2573 = vmatmul.mubr.f32.gmra.mrb[0].mxu0 %v2352
      %v2574 = vpop.f32.mrb[0].mxu0
      %v2575 = vadd.f32 0.0, %v2574
      %v2576 = vpop.f32.mrb[0].mxu0
      %2577 = vmatprep.mubr.f32.mxu0 0.0
      %2578 = vmatmul.mubr.f32.gmra.mrb[0].mxu0 %v2355
      %v2579 = vpop.f32.mrb[0].mxu0
      %v2580 = vadd.f32 0.0, %v2579
      %v2581 = vpop.f32.mrb[0].mxu0
      %2582 = vmatprep.mubr.f32.mxu0 0.0
      %2583 = vmatmul.mubr.f32.gmra.mrb[0].mxu0 %v2358
      %v2584 = vpop.f32.mrb[0].mxu0
      %v2585 = vadd.f32 0.0, %v2584
      %v2586 = vpop.f32.mrb[0].mxu0
      %2587 = vdwg.mxu0
      %v2588 = vadd.f32 %v2198, %v2430
      %v2589 = vadd.f32 %v2199, %v2435
      %v2590 = vadd.f32 %v2200, %v2440
      %v2591 = vadd.f32 %v2201, %v2445
      %v2592 = vadd.f32 %v2202, %v2450
      %v2593 = vadd.f32 %v2203, %v2455
      %v2594 = vadd.f32 %v2204, %v2460
      %v2595 = vadd.f32 %v2205, %v2465
      %v2596 = vadd.f32 %v2206, %v2470
      %v2597 = vadd.f32 %v2207, %v2475
      %v2598 = vadd.f32 %v2208, %v2480
      %v2599 = vadd.f32 %v2209, %v2485
      %v2600 = vadd.f32 %v2210, %v2490
      %v2601 = vadd.f32 %v2211, %v2495
      %v2602 = vadd.f32 %v2212, %v2500
      %v2603 = vadd.f32 %v2213, %v2505
      %v2604 = vadd.f32 %v2214, %v2510
      %v2605 = vadd.f32 %v2215, %v2515
      %v2606 = vadd.f32 %v2216, %v2520
      %v2607 = vadd.f32 %v2217, %v2525
      %v2608 = vadd.f32 %v2218, %v2530
      %v2609 = vadd.f32 %v2219, %v2535
      %v2610 = vadd.f32 %v2220, %v2540
      %v2611 = vadd.f32 %v2221, %v2545
      %v2612 = vadd.f32 %v2222, %v2550
      %v2613 = vadd.f32 %v2223, %v2555
      %v2614 = vadd.f32 %v2224, %v2560
      %v2615 = vadd.f32 %v2225, %v2565
      %v2616 = vadd.f32 %v2226, %v2570
      %v2617 = vadd.f32 %v2227, %v2575
      %v2618 = vadd.f32 %v2228, %v2580
      %v2619 = vadd.f32 %v2229, %v2585
      %s2620 = scalar_lea.vmem [#allocation2], 144
      %v2621 = vld [vmem:[%s2620] sm:$0xff]
      %v2622 = vld [vmem:[%s2620 + $0x8] sm:$0xff]
      %v2623 = vld [vmem:[%s2620 + $0x18] sm:$0xff]
      %v2624 = vld [vmem:[%s2620 + $0x20] sm:$0xff]
      %v2625 = vld [vmem:[%s2620 + $0x30] sm:$0xff]
      %v2626 = vld [vmem:[%s2620 + $0x38] sm:$0xff]
      %v2627 = vld [vmem:[%s2620 + $0x48] sm:$0xff]
      %v2628 = vld [vmem:[%s2620 + $0x50] sm:$0xff]
      %v2629 = vld [vmem:[%s2620 + $0x60] sm:$0xff]
      %v2630 = vld [vmem:[%s2620 + $0x68] sm:$0xff]
      %v2631 = vld [vmem:[%s2620 + $0x78] sm:$0xff]
      %v2632 = vld [vmem:[%s2620 + $0x80] sm:$0xff]
      %v2633 = vld [vmem:[%s2620 + $0x90] sm:$0xff]
      %v2634 = vld [vmem:[%s2620 + $0x98] sm:$0xff]
      %v2635 = vld [vmem:[%s2620 + $0xa8] sm:$0xff]
      %v2636 = vld [vmem:[%s2620 + $0xb0] sm:$0xff]
      %v2637 = vld [vmem:[%s2620 + $0xc0] sm:$0xff]
      %v2638 = vld [vmem:[%s2620 + $0xc8] sm:$0xff]
      %v2639 = vld [vmem:[%s2620 + $0xd8] sm:$0xff]
      %v2640 = vld [vmem:[%s2620 + $0xe0] sm:$0xff]
      %v2641 = vld [vmem:[%s2620 + $0xf0] sm:$0xff]
      %v2642 = vld [vmem:[%s2620 + $0xf8] sm:$0xff]
      %v2643 = vld [vmem:[%s2620 + $0x108] sm:$0xff]
      %v2644 = vld [vmem:[%s2620 + $0x110] sm:$0xff]
      %v2645 = vld [vmem:[%s2620 + $0x120] sm:$0xff]
      %v2646 = vld [vmem:[%s2620 + $0x128] sm:$0xff]
      %v2647 = vld [vmem:[%s2620 + $0x138] sm:$0xff]
      %v2648 = vld [vmem:[%s2620 + $0x140] sm:$0xff]
      %v2649 = vld [vmem:[%s2620 + $0x150] sm:$0xff]
      %v2650 = vld [vmem:[%s2620 + $0x158] sm:$0xff]
      %v2651 = vld [vmem:[%s2620 + $0x168] sm:$0xff]
      %v2652 = vld [vmem:[%s2620 + $0x170] sm:$0xff]
      %s2653 = scalar_lea.vmem %s1, 24
      %v2654 = vld [vmem:[%s2653] sm:$0xf]
      %v2656 = vsel %vm225, %v2621, 0
      %v2659 = vsel %vm225, %v2622, 0
      %v2662 = vsel %vm225, %v2623, 0
      %v2665 = vsel %vm225, %v2624, 0
      %v2668 = vsel %vm225, %v2625, 0
      %v2671 = vsel %vm225, %v2626, 0
      %v2674 = vsel %vm225, %v2627, 0
      %v2677 = vsel %vm225, %v2628, 0
      %v2680 = vsel %vm225, %v2629, 0
      %v2683 = vsel %vm225, %v2630, 0
      %v2686 = vsel %vm225, %v2631, 0
      %v2689 = vsel %vm225, %v2632, 0
      %v2692 = vsel %vm225, %v2633, 0
      %v2695 = vsel %vm225, %v2634, 0
      %v2698 = vsel %vm225, %v2635, 0
      %v2701 = vsel %vm225, %v2636, 0
      %v2704 = vsel %vm225, %v2637, 0
      %v2707 = vsel %vm225, %v2638, 0
      %v2710 = vsel %vm225, %v2639, 0
      %v2713 = vsel %vm225, %v2640, 0
      %v2716 = vsel %vm225, %v2641, 0
      %v2719 = vsel %vm225, %v2642, 0
      %v2722 = vsel %vm225, %v2643, 0
      %v2725 = vsel %vm225, %v2644, 0
      %v2728 = vsel %vm225, %v2645, 0
      %v2731 = vsel %vm225, %v2646, 0
      %v2734 = vsel %vm225, %v2647, 0
      %v2737 = vsel %vm225, %v2648, 0
      %v2740 = vsel %vm225, %v2649, 0
      %v2743 = vsel %vm225, %v2650, 0
      %v2746 = vsel %vm225, %v2651, 0
      %v2749 = vsel %vm225, %v2652, 0
      %v2752 = vsel %vm507, %v2654, 0
      %2754 = vmatprep.subr.mxu0 0.0
      %2755 = vmatpush1.msra.mxu0 %v2752
      %2756 = vmatprep.subr.mxu0 0.0
      %2757 = vmatpush1.msra.mxu0 0.0
      %2758 = vmatprep.subr.mxu0 0.0
      %2759 = vmatpush1.msra.mxu0 0.0
      %2760 = vmatprep.subr.mxu0 0.0
      %2761 = vmatpush1.msra.mxu0 0.0
      %2762 = vmatprep.subr.mxu0 0.0
      %2763 = vmatpush1.msra.mxu0 0.0
      %2764 = vmatprep.subr.mxu0 0.0
      %2765 = vmatpush1.msra.mxu0 0.0
      %2766 = vmatprep.subr.mxu0 0.0
      %2767 = vmatpush1.msra.mxu0 0.0
      %2768 = vmatprep.subr.mxu0 0.0
      %2769 = vmatpush1.msra.mxu0 0.0
      %2770 = vmatprep.subr.mxu0 0.0
      %2771 = vmatpush1.msra.mxu0 0.0
      %2772 = vmatprep.subr.mxu0 0.0
      %2773 = vmatpush1.msra.mxu0 0.0
      %2774 = vmatprep.subr.mxu0 0.0
      %2775 = vmatpush1.msra.mxu0 0.0
      %2776 = vmatprep.subr.mxu0 0.0
      %2777 = vmatpush1.msra.mxu0 0.0
      %2778 = vmatprep.subr.mxu0 0.0
      %2779 = vmatpush1.msra.mxu0 0.0
      %2780 = vmatprep.subr.mxu0 0.0
      %2781 = vmatpush1.msra.mxu0 0.0
      %2782 = vmatprep.subr.mxu0 0.0
      %2783 = vmatpush1.msra.mxu0 0.0
      %2784 = vmatprep.subr.mxu0 0.0
      %2785 = vmatpush1.msra.mxu0 0.0
      %2786 = vmatprep.subr.mxu0 0.0
      %2787 = vmatpush1.msra.mxu0 0.0
      %2788 = vmatprep.subr.mxu0 0.0
      %2789 = vmatpush1.msra.mxu0 0.0
      %2790 = vmatprep.subr.mxu0 0.0
      %2791 = vmatpush1.msra.mxu0 0.0
      %2792 = vmatprep.subr.mxu0 0.0
      %2793 = vmatpush1.msra.mxu0 0.0
      %2794 = vmatprep.subr.mxu0 0.0
      %2795 = vmatpush1.msra.mxu0 0.0
      %2796 = vmatprep.subr.mxu0 0.0
      %2797 = vmatpush1.msra.mxu0 0.0
      %2798 = vmatprep.subr.mxu0 0.0
      %2799 = vmatpush1.msra.mxu0 0.0
      %2800 = vmatprep.subr.mxu0 0.0
      %2801 = vmatpush1.msra.mxu0 0.0
      %2802 = vmatprep.subr.mxu0 0.0
      %2803 = vmatpush1.msra.mxu0 0.0
      %2804 = vmatprep.subr.mxu0 0.0
      %2805 = vmatpush1.msra.mxu0 0.0
      %2806 = vmatprep.subr.mxu0 0.0
      %2807 = vmatpush1.msra.mxu0 0.0
      %2808 = vmatprep.subr.mxu0 0.0
      %2809 = vmatpush1.msra.mxu0 0.0
      %2810 = vmatprep.subr.mxu0 0.0
      %2811 = vmatpush1.msra.mxu0 0.0
      %2812 = vmatprep.subr.mxu0 0.0
      %2813 = vmatpush1.msra.mxu0 0.0
      %2814 = vmatprep.subr.mxu0 0.0
      %2815 = vmatpush1.msra.mxu0 0.0
      %2816 = vmatprep.subr.mxu0 0.0
      %2817 = vmatpush1.msra.mxu0 0.0
      %2818 = vmatprep.mubr.f32.mxu0 0.0
      %2819 = vmatmul.mubr.f32.gmra.mrb[0].mxu0 %v2656
      %v2820 = vpop.f32.mrb[0].mxu0
      %v2821 = vadd.f32 0.0, %v2820
      %v2822 = vpop.f32.mrb[0].mxu0
      %2823 = vmatprep.mubr.f32.mxu0 0.0
      %2824 = vmatmul.mubr.f32.gmra.mrb[0].mxu0 %v2659
      %v2825 = vpop.f32.mrb[0].mxu0
      %v2826 = vadd.f32 0.0, %v2825
      %v2827 = vpop.f32.mrb[0].mxu0
      %2828 = vmatprep.mubr.f32.mxu0 0.0
      %2829 = vmatmul.mubr.f32.gmra.mrb[0].mxu0 %v2662
      %v2830 = vpop.f32.mrb[0].mxu0
      %v2831 = vadd.f32 0.0, %v2830
      %v2832 = vpop.f32.mrb[0].mxu0
      %2833 = vmatprep.mubr.f32.mxu0 0.0
      %2834 = vmatmul.mubr.f32.gmra.mrb[0].mxu0 %v2665
      %v2835 = vpop.f32.mrb[0].mxu0
      %v2836 = vadd.f32 0.0, %v2835
      %v2837 = vpop.f32.mrb[0].mxu0
      %2838 = vmatprep.mubr.f32.mxu0 0.0
      %2839 = vmatmul.mubr.f32.gmra.mrb[0].mxu0 %v2668
      %v2840 = vpop.f32.mrb[0].mxu0
      %v2841 = vadd.f32 0.0, %v2840
      %v2842 = vpop.f32.mrb[0].mxu0
      %2843 = vmatprep.mubr.f32.mxu0 0.0
      %2844 = vmatmul.mubr.f32.gmra.mrb[0].mxu0 %v2671
      %v2845 = vpop.f32.mrb[0].mxu0
      %v2846 = vadd.f32 0.0, %v2845
      %v2847 = vpop.f32.mrb[0].mxu0
      %2848 = vmatprep.mubr.f32.mxu0 0.0
      %2849 = vmatmul.mubr.f32.gmra.mrb[0].mxu0 %v2674
      %v2850 = vpop.f32.mrb[0].mxu0
      %v2851 = vadd.f32 0.0, %v2850
      %v2852 = vpop.f32.mrb[0].mxu0
      %2853 = vmatprep.mubr.f32.mxu0 0.0
      %2854 = vmatmul.mubr.f32.gmra.mrb[0].mxu0 %v2677
      %v2855 = vpop.f32.mrb[0].mxu0
      %v2856 = vadd.f32 0.0, %v2855
      %v2857 = vpop.f32.mrb[0].mxu0
      %2858 = vmatprep.mubr.f32.mxu0 0.0
      %2859 = vmatmul.mubr.f32.gmra.mrb[0].mxu0 %v2680
      %v2860 = vpop.f32.mrb[0].mxu0
      %v2861 = vadd.f32 0.0, %v2860
      %v2862 = vpop.f32.mrb[0].mxu0
      %2863 = vmatprep.mubr.f32.mxu0 0.0
      %2864 = vmatmul.mubr.f32.gmra.mrb[0].mxu0 %v2683
      %v2865 = vpop.f32.mrb[0].mxu0
      %v2866 = vadd.f32 0.0, %v2865
      %v2867 = vpop.f32.mrb[0].mxu0
      %2868 = vmatprep.mubr.f32.mxu0 0.0
      %2869 = vmatmul.mubr.f32.gmra.mrb[0].mxu0 %v2686
      %v2870 = vpop.f32.mrb[0].mxu0
      %v2871 = vadd.f32 0.0, %v2870
      %v2872 = vpop.f32.mrb[0].mxu0
      %2873 = vmatprep.mubr.f32.mxu0 0.0
      %2874 = vmatmul.mubr.f32.gmra.mrb[0].mxu0 %v2689
      %v2875 = vpop.f32.mrb[0].mxu0
      %v2876 = vadd.f32 0.0, %v2875
      %v2877 = vpop.f32.mrb[0].mxu0
      %2878 = vmatprep.mubr.f32.mxu0 0.0
      %2879 = vmatmul.mubr.f32.gmra.mrb[0].mxu0 %v2692
      %v2880 = vpop.f32.mrb[0].mxu0
      %v2881 = vadd.f32 0.0, %v2880
      %v2882 = vpop.f32.mrb[0].mxu0
      %2883 = vmatprep.mubr.f32.mxu0 0.0
      %2884 = vmatmul.mubr.f32.gmra.mrb[0].mxu0 %v2695
      %v2885 = vpop.f32.mrb[0].mxu0
      %v2886 = vadd.f32 0.0, %v2885
      %v2887 = vpop.f32.mrb[0].mxu0
      %2888 = vmatprep.mubr.f32.mxu0 0.0
      %2889 = vmatmul.mubr.f32.gmra.mrb[0].mxu0 %v2698
      %v2890 = vpop.f32.mrb[0].mxu0
      %v2891 = vadd.f32 0.0, %v2890
      %v2892 = vpop.f32.mrb[0].mxu0
      %2893 = vmatprep.mubr.f32.mxu0 0.0
      %2894 = vmatmul.mubr.f32.gmra.mrb[0].mxu0 %v2701
      %v2895 = vpop.f32.mrb[0].mxu0
      %v2896 = vadd.f32 0.0, %v2895
      %v2897 = vpop.f32.mrb[0].mxu0
      %2898 = vmatprep.mubr.f32.mxu0 0.0
      %2899 = vmatmul.mubr.f32.gmra.mrb[0].mxu0 %v2704
      %v2900 = vpop.f32.mrb[0].mxu0
      %v2901 = vadd.f32 0.0, %v2900
      %v2902 = vpop.f32.mrb[0].mxu0
      %2903 = vmatprep.mubr.f32.mxu0 0.0
      %2904 = vmatmul.mubr.f32.gmra.mrb[0].mxu0 %v2707
      %v2905 = vpop.f32.mrb[0].mxu0
      %v2906 = vadd.f32 0.0, %v2905
      %v2907 = vpop.f32.mrb[0].mxu0
      %2908 = vmatprep.mubr.f32.mxu0 0.0
      %2909 = vmatmul.mubr.f32.gmra.mrb[0].mxu0 %v2710
      %v2910 = vpop.f32.mrb[0].mxu0
      %v2911 = vadd.f32 0.0, %v2910
      %v2912 = vpop.f32.mrb[0].mxu0
      %2913 = vmatprep.mubr.f32.mxu0 0.0
      %2914 = vmatmul.mubr.f32.gmra.mrb[0].mxu0 %v2713
      %v2915 = vpop.f32.mrb[0].mxu0
      %v2916 = vadd.f32 0.0, %v2915
      %v2917 = vpop.f32.mrb[0].mxu0
      %2918 = vmatprep.mubr.f32.mxu0 0.0
      %2919 = vmatmul.mubr.f32.gmra.mrb[0].mxu0 %v2716
      %v2920 = vpop.f32.mrb[0].mxu0
      %v2921 = vadd.f32 0.0, %v2920
      %v2922 = vpop.f32.mrb[0].mxu0
      %2923 = vmatprep.mubr.f32.mxu0 0.0
      %2924 = vmatmul.mubr.f32.gmra.mrb[0].mxu0 %v2719
      %v2925 = vpop.f32.mrb[0].mxu0
      %v2926 = vadd.f32 0.0, %v2925
      %v2927 = vpop.f32.mrb[0].mxu0
      %2928 = vmatprep.mubr.f32.mxu0 0.0
      %2929 = vmatmul.mubr.f32.gmra.mrb[0].mxu0 %v2722
      %v2930 = vpop.f32.mrb[0].mxu0
      %v2931 = vadd.f32 0.0, %v2930
      %v2932 = vpop.f32.mrb[0].mxu0
      %2933 = vmatprep.mubr.f32.mxu0 0.0
      %2934 = vmatmul.mubr.f32.gmra.mrb[0].mxu0 %v2725
      %v2935 = vpop.f32.mrb[0].mxu0
      %v2936 = vadd.f32 0.0, %v2935
      %v2937 = vpop.f32.mrb[0].mxu0
      %2938 = vmatprep.mubr.f32.mxu0 0.0
      %2939 = vmatmul.mubr.f32.gmra.mrb[0].mxu0 %v2728
      %v2940 = vpop.f32.mrb[0].mxu0
      %v2941 = vadd.f32 0.0, %v2940
      %v2942 = vpop.f32.mrb[0].mxu0
      %2943 = vmatprep.mubr.f32.mxu0 0.0
      %2944 = vmatmul.mubr.f32.gmra.mrb[0].mxu0 %v2731
      %v2945 = vpop.f32.mrb[0].mxu0
      %v2946 = vadd.f32 0.0, %v2945
      %v2947 = vpop.f32.mrb[0].mxu0
      %2948 = vmatprep.mubr.f32.mxu0 0.0
      %2949 = vmatmul.mubr.f32.gmra.mrb[0].mxu0 %v2734
      %v2950 = vpop.f32.mrb[0].mxu0
      %v2951 = vadd.f32 0.0, %v2950
      %v2952 = vpop.f32.mrb[0].mxu0
      %2953 = vmatprep.mubr.f32.mxu0 0.0
      %2954 = vmatmul.mubr.f32.gmra.mrb[0].mxu0 %v2737
      %v2955 = vpop.f32.mrb[0].mxu0
      %v2956 = vadd.f32 0.0, %v2955
      %v2957 = vpop.f32.mrb[0].mxu0
      %2958 = vmatprep.mubr.f32.mxu0 0.0
      %2959 = vmatmul.mubr.f32.gmra.mrb[0].mxu0 %v2740
      %v2960 = vpop.f32.mrb[0].mxu0
      %v2961 = vadd.f32 0.0, %v2960
      %v2962 = vpop.f32.mrb[0].mxu0
      %2963 = vmatprep.mubr.f32.mxu0 0.0
      %2964 = vmatmul.mubr.f32.gmra.mrb[0].mxu0 %v2743
      %v2965 = vpop.f32.mrb[0].mxu0
      %v2966 = vadd.f32 0.0, %v2965
      %v2967 = vpop.f32.mrb[0].mxu0
      %2968 = vmatprep.mubr.f32.mxu0 0.0
      %2969 = vmatmul.mubr.f32.gmra.mrb[0].mxu0 %v2746
      %v2970 = vpop.f32.mrb[0].mxu0
      %v2971 = vadd.f32 0.0, %v2970
      %v2972 = vpop.f32.mrb[0].mxu0
      %2973 = vmatprep.mubr.f32.mxu0 0.0
      %2974 = vmatmul.mubr.f32.gmra.mrb[0].mxu0 %v2749
      %v2975 = vpop.f32.mrb[0].mxu0
      %v2976 = vadd.f32 0.0, %v2975
      %v2977 = vpop.f32.mrb[0].mxu0
      %2978 = vdwg.mxu0
      %v2979 = vadd.f32 %v2588, %v2821
      %v2980 = vadd.f32 %v2589, %v2826
      %v2981 = vadd.f32 %v2590, %v2831
      %v2982 = vadd.f32 %v2591, %v2836
      %v2983 = vadd.f32 %v2592, %v2841
      %v2984 = vadd.f32 %v2593, %v2846
      %v2985 = vadd.f32 %v2594, %v2851
      %v2986 = vadd.f32 %v2595, %v2856
      %v2987 = vadd.f32 %v2596, %v2861
      %v2988 = vadd.f32 %v2597, %v2866
      %v2989 = vadd.f32 %v2598, %v2871
      %v2990 = vadd.f32 %v2599, %v2876
      %v2991 = vadd.f32 %v2600, %v2881
      %v2992 = vadd.f32 %v2601, %v2886
      %v2993 = vadd.f32 %v2602, %v2891
      %v2994 = vadd.f32 %v2603, %v2896
      %v2995 = vadd.f32 %v2604, %v2901
      %v2996 = vadd.f32 %v2605, %v2906
      %v2997 = vadd.f32 %v2606, %v2911
      %v2998 = vadd.f32 %v2607, %v2916
      %v2999 = vadd.f32 %v2608, %v2921
      %v3000 = vadd.f32 %v2609, %v2926
      %v3001 = vadd.f32 %v2610, %v2931
      %v3002 = vadd.f32 %v2611, %v2936
      %v3003 = vadd.f32 %v2612, %v2941
      %v3004 = vadd.f32 %v2613, %v2946
      %v3005 = vadd.f32 %v2614, %v2951
      %v3006 = vadd.f32 %v2615, %v2956
      %v3007 = vadd.f32 %v2616, %v2961
      %v3008 = vadd.f32 %v2617, %v2966
      %v3009 = vadd.f32 %v2618, %v2971
      %v3010 = vadd.f32 %v2619, %v2976
      %v3011 = vld [vmem:[%s2620 + $0x3] sm:$0xff]
      %v3012 = vld [vmem:[%s2620 + $0xb] sm:$0xff]
      %v3013 = vld [vmem:[%s2620 + $0x1b] sm:$0xff]
      %v3014 = vld [vmem:[%s2620 + $0x23] sm:$0xff]
      %v3015 = vld [vmem:[%s2620 + $0x33] sm:$0xff]
      %v3016 = vld [vmem:[%s2620 + $0x3b] sm:$0xff]
      %v3017 = vld [vmem:[%s2620 + $0x4b] sm:$0xff]
      %v3018 = vld [vmem:[%s2620 + $0x53] sm:$0xff]
      %v3019 = vld [vmem:[%s2620 + $0x63] sm:$0xff]
      %v3020 = vld [vmem:[%s2620 + $0x6b] sm:$0xff]
      %v3021 = vld [vmem:[%s2620 + $0x7b] sm:$0xff]
      %v3022 = vld [vmem:[%s2620 + $0x83] sm:$0xff]
      %v3023 = vld [vmem:[%s2620 + $0x93] sm:$0xff]
      %v3024 = vld [vmem:[%s2620 + $0x9b] sm:$0xff]
      %v3025 = vld [vmem:[%s2620 + $0xab] sm:$0xff]
      %v3026 = vld [vmem:[%s2620 + $0xb3] sm:$0xff]
      %v3027 = vld [vmem:[%s2620 + $0xc3] sm:$0xff]
      %v3028 = vld [vmem:[%s2620 + $0xcb] sm:$0xff]
      %v3029 = vld [vmem:[%s2620 + $0xdb] sm:$0xff]
      %v3030 = vld [vmem:[%s2620 + $0xe3] sm:$0xff]
      %v3031 = vld [vmem:[%s2620 + $0xf3] sm:$0xff]
      %v3032 = vld [vmem:[%s2620 + $0xfb] sm:$0xff]
      %v3033 = vld [vmem:[%s2620 + $0x10b] sm:$0xff]
      %v3034 = vld [vmem:[%s2620 + $0x113] sm:$0xff]
      %v3035 = vld [vmem:[%s2620 + $0x123] sm:$0xff]
      %v3036 = vld [vmem:[%s2620 + $0x12b] sm:$0xff]
      %v3037 = vld [vmem:[%s2620 + $0x13b] sm:$0xff]
      %v3038 = vld [vmem:[%s2620 + $0x143] sm:$0xff]
      %v3039 = vld [vmem:[%s2620 + $0x153] sm:$0xff]
      %v3040 = vld [vmem:[%s2620 + $0x15b] sm:$0xff]
      %v3041 = vld [vmem:[%s2620 + $0x16b] sm:$0xff]
      %v3042 = vld [vmem:[%s2620 + $0x173] sm:$0xff]
      %s3043 = scalar_lea.vmem %s1, 28
      %v3044 = vld [vmem:[%s3043] sm:$0xf]
      %v3046 = vsel %vm225, %v3011, 0
      %v3049 = vsel %vm225, %v3012, 0
      %v3052 = vsel %vm225, %v3013, 0
      %v3055 = vsel %vm225, %v3014, 0
      %v3058 = vsel %vm225, %v3015, 0
      %v3061 = vsel %vm225, %v3016, 0
      %v3064 = vsel %vm225, %v3017, 0
      %v3067 = vsel %vm225, %v3018, 0
      %v3070 = vsel %vm225, %v3019, 0
      %v3073 = vsel %vm225, %v3020, 0
      %v3076 = vsel %vm225, %v3021, 0
      %v3079 = vsel %vm225, %v3022, 0
      %v3082 = vsel %vm225, %v3023, 0
      %v3085 = vsel %vm225, %v3024, 0
      %v3088 = vsel %vm225, %v3025, 0
      %v3091 = vsel %vm225, %v3026, 0
      %v3094 = vsel %vm225, %v3027, 0
      %v3097 = vsel %vm225, %v3028, 0
      %v3100 = vsel %vm225, %v3029, 0
      %v3103 = vsel %vm225, %v3030, 0
      %v3106 = vsel %vm225, %v3031, 0
      %v3109 = vsel %vm225, %v3032, 0
      %v3112 = vsel %vm225, %v3033, 0
      %v3115 = vsel %vm225, %v3034, 0
      %v3118 = vsel %vm225, %v3035, 0
      %v3121 = vsel %vm225, %v3036, 0
      %v3124 = vsel %vm225, %v3037, 0
      %v3127 = vsel %vm225, %v3038, 0
      %v3130 = vsel %vm225, %v3039, 0
      %v3133 = vsel %vm225, %v3040, 0
      %v3136 = vsel %vm225, %v3041, 0
      %v3139 = vsel %vm225, %v3042, 0
      %v3142 = vsel %vm507, %v3044, 0
      %3144 = vmatprep.subr.mxu0 0.0
      %3145 = vmatpush1.msra.mxu0 %v3142
      %3146 = vmatprep.subr.mxu0 0.0
      %3147 = vmatpush1.msra.mxu0 0.0
      %3148 = vmatprep.subr.mxu0 0.0
      %3149 = vmatpush1.msra.mxu0 0.0
      %3150 = vmatprep.subr.mxu0 0.0
      %3151 = vmatpush1.msra.mxu0 0.0
      %3152 = vmatprep.subr.mxu0 0.0
      %3153 = vmatpush1.msra.mxu0 0.0
      %3154 = vmatprep.subr.mxu0 0.0
      %3155 = vmatpush1.msra.mxu0 0.0
      %3156 = vmatprep.subr.mxu0 0.0
      %3157 = vmatpush1.msra.mxu0 0.0
      %3158 = vmatprep.subr.mxu0 0.0
      %3159 = vmatpush1.msra.mxu0 0.0
      %3160 = vmatprep.subr.mxu0 0.0
      %3161 = vmatpush1.msra.mxu0 0.0
      %3162 = vmatprep.subr.mxu0 0.0
      %3163 = vmatpush1.msra.mxu0 0.0
      %3164 = vmatprep.subr.mxu0 0.0
      %3165 = vmatpush1.msra.mxu0 0.0
      %3166 = vmatprep.subr.mxu0 0.0
      %3167 = vmatpush1.msra.mxu0 0.0
      %3168 = vmatprep.subr.mxu0 0.0
      %3169 = vmatpush1.msra.mxu0 0.0
      %3170 = vmatprep.subr.mxu0 0.0
      %3171 = vmatpush1.msra.mxu0 0.0
      %3172 = vmatprep.subr.mxu0 0.0
      %3173 = vmatpush1.msra.mxu0 0.0
      %3174 = vmatprep.subr.mxu0 0.0
      %3175 = vmatpush1.msra.mxu0 0.0
      %3176 = vmatprep.subr.mxu0 0.0
      %3177 = vmatpush1.msra.mxu0 0.0
      %3178 = vmatprep.subr.mxu0 0.0
      %3179 = vmatpush1.msra.mxu0 0.0
      %3180 = vmatprep.subr.mxu0 0.0
      %3181 = vmatpush1.msra.mxu0 0.0
      %3182 = vmatprep.subr.mxu0 0.0
      %3183 = vmatpush1.msra.mxu0 0.0
      %3184 = vmatprep.subr.mxu0 0.0
      %3185 = vmatpush1.msra.mxu0 0.0
      %3186 = vmatprep.subr.mxu0 0.0
      %3187 = vmatpush1.msra.mxu0 0.0
      %3188 = vmatprep.subr.mxu0 0.0
      %3189 = vmatpush1.msra.mxu0 0.0
      %3190 = vmatprep.subr.mxu0 0.0
      %3191 = vmatpush1.msra.mxu0 0.0
      %3192 = vmatprep.subr.mxu0 0.0
      %3193 = vmatpush1.msra.mxu0 0.0
      %3194 = vmatprep.subr.mxu0 0.0
      %3195 = vmatpush1.msra.mxu0 0.0
      %3196 = vmatprep.subr.mxu0 0.0
      %3197 = vmatpush1.msra.mxu0 0.0
      %3198 = vmatprep.subr.mxu0 0.0
      %3199 = vmatpush1.msra.mxu0 0.0
      %3200 = vmatprep.subr.mxu0 0.0
      %3201 = vmatpush1.msra.mxu0 0.0
      %3202 = vmatprep.subr.mxu0 0.0
      %3203 = vmatpush1.msra.mxu0 0.0
      %3204 = vmatprep.subr.mxu0 0.0
      %3205 = vmatpush1.msra.mxu0 0.0
      %3206 = vmatprep.subr.mxu0 0.0
      %3207 = vmatpush1.msra.mxu0 0.0
      %3208 = vmatprep.mubr.f32.mxu0 0.0
      %3209 = vmatmul.mubr.f32.gmra.mrb[0].mxu0 %v3046
      %v3210 = vpop.f32.mrb[0].mxu0
      %v3211 = vadd.f32 0.0, %v3210
      %v3212 = vpop.f32.mrb[0].mxu0
      %3213 = vmatprep.mubr.f32.mxu0 0.0
      %3214 = vmatmul.mubr.f32.gmra.mrb[0].mxu0 %v3049
      %v3215 = vpop.f32.mrb[0].mxu0
      %v3216 = vadd.f32 0.0, %v3215
      %v3217 = vpop.f32.mrb[0].mxu0
      %3218 = vmatprep.mubr.f32.mxu0 0.0
      %3219 = vmatmul.mubr.f32.gmra.mrb[0].mxu0 %v3052
      %v3220 = vpop.f32.mrb[0].mxu0
      %v3221 = vadd.f32 0.0, %v3220
      %v3222 = vpop.f32.mrb[0].mxu0
      %3223 = vmatprep.mubr.f32.mxu0 0.0
      %3224 = vmatmul.mubr.f32.gmra.mrb[0].mxu0 %v3055
      %v3225 = vpop.f32.mrb[0].mxu0
      %v3226 = vadd.f32 0.0, %v3225
      %v3227 = vpop.f32.mrb[0].mxu0
      %3228 = vmatprep.mubr.f32.mxu0 0.0
      %3229 = vmatmul.mubr.f32.gmra.mrb[0].mxu0 %v3058
      %v3230 = vpop.f32.mrb[0].mxu0
      %v3231 = vadd.f32 0.0, %v3230
      %v3232 = vpop.f32.mrb[0].mxu0
      %3233 = vmatprep.mubr.f32.mxu0 0.0
      %3234 = vmatmul.mubr.f32.gmra.mrb[0].mxu0 %v3061
      %v3235 = vpop.f32.mrb[0].mxu0
      %v3236 = vadd.f32 0.0, %v3235
      %v3237 = vpop.f32.mrb[0].mxu0
      %3238 = vmatprep.mubr.f32.mxu0 0.0
      %3239 = vmatmul.mubr.f32.gmra.mrb[0].mxu0 %v3064
      %v3240 = vpop.f32.mrb[0].mxu0
      %v3241 = vadd.f32 0.0, %v3240
      %v3242 = vpop.f32.mrb[0].mxu0
      %3243 = vmatprep.mubr.f32.mxu0 0.0
      %3244 = vmatmul.mubr.f32.gmra.mrb[0].mxu0 %v3067
      %v3245 = vpop.f32.mrb[0].mxu0
      %v3246 = vadd.f32 0.0, %v3245
      %v3247 = vpop.f32.mrb[0].mxu0
      %3248 = vmatprep.mubr.f32.mxu0 0.0
      %3249 = vmatmul.mubr.f32.gmra.mrb[0].mxu0 %v3070
      %v3250 = vpop.f32.mrb[0].mxu0
      %v3251 = vadd.f32 0.0, %v3250
      %v3252 = vpop.f32.mrb[0].mxu0
      %3253 = vmatprep.mubr.f32.mxu0 0.0
      %3254 = vmatmul.mubr.f32.gmra.mrb[0].mxu0 %v3073
      %v3255 = vpop.f32.mrb[0].mxu0
      %v3256 = vadd.f32 0.0, %v3255
      %v3257 = vpop.f32.mrb[0].mxu0
      %3258 = vmatprep.mubr.f32.mxu0 0.0
      %3259 = vmatmul.mubr.f32.gmra.mrb[0].mxu0 %v3076
      %v3260 = vpop.f32.mrb[0].mxu0
      %v3261 = vadd.f32 0.0, %v3260
      %v3262 = vpop.f32.mrb[0].mxu0
      %3263 = vmatprep.mubr.f32.mxu0 0.0
      %3264 = vmatmul.mubr.f32.gmra.mrb[0].mxu0 %v3079
      %v3265 = vpop.f32.mrb[0].mxu0
      %v3266 = vadd.f32 0.0, %v3265
      %v3267 = vpop.f32.mrb[0].mxu0
      %3268 = vmatprep.mubr.f32.mxu0 0.0
      %3269 = vmatmul.mubr.f32.gmra.mrb[0].mxu0 %v3082
      %v3270 = vpop.f32.mrb[0].mxu0
      %v3271 = vadd.f32 0.0, %v3270
      %v3272 = vpop.f32.mrb[0].mxu0
      %3273 = vmatprep.mubr.f32.mxu0 0.0
      %3274 = vmatmul.mubr.f32.gmra.mrb[0].mxu0 %v3085
      %v3275 = vpop.f32.mrb[0].mxu0
      %v3276 = vadd.f32 0.0, %v3275
      %v3277 = vpop.f32.mrb[0].mxu0
      %3278 = vmatprep.mubr.f32.mxu0 0.0
      %3279 = vmatmul.mubr.f32.gmra.mrb[0].mxu0 %v3088
      %v3280 = vpop.f32.mrb[0].mxu0
      %v3281 = vadd.f32 0.0, %v3280
      %v3282 = vpop.f32.mrb[0].mxu0
      %3283 = vmatprep.mubr.f32.mxu0 0.0
      %3284 = vmatmul.mubr.f32.gmra.mrb[0].mxu0 %v3091
      %v3285 = vpop.f32.mrb[0].mxu0
      %v3286 = vadd.f32 0.0, %v3285
      %v3287 = vpop.f32.mrb[0].mxu0
      %3288 = vmatprep.mubr.f32.mxu0 0.0
      %3289 = vmatmul.mubr.f32.gmra.mrb[0].mxu0 %v3094
      %v3290 = vpop.f32.mrb[0].mxu0
      %v3291 = vadd.f32 0.0, %v3290
      %v3292 = vpop.f32.mrb[0].mxu0
      %3293 = vmatprep.mubr.f32.mxu0 0.0
      %3294 = vmatmul.mubr.f32.gmra.mrb[0].mxu0 %v3097
      %v3295 = vpop.f32.mrb[0].mxu0
      %v3296 = vadd.f32 0.0, %v3295
      %v3297 = vpop.f32.mrb[0].mxu0
      %3298 = vmatprep.mubr.f32.mxu0 0.0
      %3299 = vmatmul.mubr.f32.gmra.mrb[0].mxu0 %v3100
      %v3300 = vpop.f32.mrb[0].mxu0
      %v3301 = vadd.f32 0.0, %v3300
      %v3302 = vpop.f32.mrb[0].mxu0
      %3303 = vmatprep.mubr.f32.mxu0 0.0
      %3304 = vmatmul.mubr.f32.gmra.mrb[0].mxu0 %v3103
      %v3305 = vpop.f32.mrb[0].mxu0
      %v3306 = vadd.f32 0.0, %v3305
      %v3307 = vpop.f32.mrb[0].mxu0
      %3308 = vmatprep.mubr.f32.mxu0 0.0
      %3309 = vmatmul.mubr.f32.gmra.mrb[0].mxu0 %v3106
      %v3310 = vpop.f32.mrb[0].mxu0
      %v3311 = vadd.f32 0.0, %v3310
      %v3312 = vpop.f32.mrb[0].mxu0
      %3313 = vmatprep.mubr.f32.mxu0 0.0
      %3314 = vmatmul.mubr.f32.gmra.mrb[0].mxu0 %v3109
      %v3315 = vpop.f32.mrb[0].mxu0
      %v3316 = vadd.f32 0.0, %v3315
      %v3317 = vpop.f32.mrb[0].mxu0
      %3318 = vmatprep.mubr.f32.mxu0 0.0
      %3319 = vmatmul.mubr.f32.gmra.mrb[0].mxu0 %v3112
      %v3320 = vpop.f32.mrb[0].mxu0
      %v3321 = vadd.f32 0.0, %v3320
      %v3322 = vpop.f32.mrb[0].mxu0
      %3323 = vmatprep.mubr.f32.mxu0 0.0
      %3324 = vmatmul.mubr.f32.gmra.mrb[0].mxu0 %v3115
      %v3325 = vpop.f32.mrb[0].mxu0
      %v3326 = vadd.f32 0.0, %v3325
      %v3327 = vpop.f32.mrb[0].mxu0
      %3328 = vmatprep.mubr.f32.mxu0 0.0
      %3329 = vmatmul.mubr.f32.gmra.mrb[0].mxu0 %v3118
      %v3330 = vpop.f32.mrb[0].mxu0
      %v3331 = vadd.f32 0.0, %v3330
      %v3332 = vpop.f32.mrb[0].mxu0
      %3333 = vmatprep.mubr.f32.mxu0 0.0
      %3334 = vmatmul.mubr.f32.gmra.mrb[0].mxu0 %v3121
      %v3335 = vpop.f32.mrb[0].mxu0
      %v3336 = vadd.f32 0.0, %v3335
      %v3337 = vpop.f32.mrb[0].mxu0
      %3338 = vmatprep.mubr.f32.mxu0 0.0
      %3339 = vmatmul.mubr.f32.gmra.mrb[0].mxu0 %v3124
      %v3340 = vpop.f32.mrb[0].mxu0
      %v3341 = vadd.f32 0.0, %v3340
      %v3342 = vpop.f32.mrb[0].mxu0
      %3343 = vmatprep.mubr.f32.mxu0 0.0
      %3344 = vmatmul.mubr.f32.gmra.mrb[0].mxu0 %v3127
      %v3345 = vpop.f32.mrb[0].mxu0
      %v3346 = vadd.f32 0.0, %v3345
      %v3347 = vpop.f32.mrb[0].mxu0
      %3348 = vmatprep.mubr.f32.mxu0 0.0
      %3349 = vmatmul.mubr.f32.gmra.mrb[0].mxu0 %v3130
      %v3350 = vpop.f32.mrb[0].mxu0
      %v3351 = vadd.f32 0.0, %v3350
      %v3352 = vpop.f32.mrb[0].mxu0
      %3353 = vmatprep.mubr.f32.mxu0 0.0
      %3354 = vmatmul.mubr.f32.gmra.mrb[0].mxu0 %v3133
      %v3355 = vpop.f32.mrb[0].mxu0
      %v3356 = vadd.f32 0.0, %v3355
      %v3357 = vpop.f32.mrb[0].mxu0
      %3358 = vmatprep.mubr.f32.mxu0 0.0
      %3359 = vmatmul.mubr.f32.gmra.mrb[0].mxu0 %v3136
      %v3360 = vpop.f32.mrb[0].mxu0
      %v3361 = vadd.f32 0.0, %v3360
      %v3362 = vpop.f32.mrb[0].mxu0
      %3363 = vmatprep.mubr.f32.mxu0 0.0
      %3364 = vmatmul.mubr.f32.gmra.mrb[0].mxu0 %v3139
      %v3365 = vpop.f32.mrb[0].mxu0
      %v3366 = vadd.f32 0.0, %v3365
      %v3367 = vpop.f32.mrb[0].mxu0
      %3368 = vdwg.mxu0
      %v3369 = vadd.f32 %v2979, %v3211
      %v3370 = vadd.f32 %v2980, %v3216
      %v3371 = vadd.f32 %v2981, %v3221
      %v3372 = vadd.f32 %v2982, %v3226
      %v3373 = vadd.f32 %v2983, %v3231
      %v3374 = vadd.f32 %v2984, %v3236
      %v3375 = vadd.f32 %v2985, %v3241
      %v3376 = vadd.f32 %v2986, %v3246
      %v3377 = vadd.f32 %v2987, %v3251
      %v3378 = vadd.f32 %v2988, %v3256
      %v3379 = vadd.f32 %v2989, %v3261
      %v3380 = vadd.f32 %v2990, %v3266
      %v3381 = vadd.f32 %v2991, %v3271
      %v3382 = vadd.f32 %v2992, %v3276
      %v3383 = vadd.f32 %v2993, %v3281
      %v3384 = vadd.f32 %v2994, %v3286
      %v3385 = vadd.f32 %v2995, %v3291
      %v3386 = vadd.f32 %v2996, %v3296
      %v3387 = vadd.f32 %v2997, %v3301
      %v3388 = vadd.f32 %v2998, %v3306
      %v3389 = vadd.f32 %v2999, %v3311
      %v3390 = vadd.f32 %v3000, %v3316
      %v3391 = vadd.f32 %v3001, %v3321
      %v3392 = vadd.f32 %v3002, %v3326
      %v3393 = vadd.f32 %v3003, %v3331
      %v3394 = vadd.f32 %v3004, %v3336
      %v3395 = vadd.f32 %v3005, %v3341
      %v3396 = vadd.f32 %v3006, %v3346
      %v3397 = vadd.f32 %v3007, %v3351
      %v3398 = vadd.f32 %v3008, %v3356
      %v3399 = vadd.f32 %v3009, %v3361
      %v3400 = vadd.f32 %v3010, %v3366
      %v3401 = vld [vmem:[%s2620 + $0x6] sm:$0xff]
      %v3402 = vld [vmem:[%s2620 + $0xe] sm:$0xff]
      %v3403 = vld [vmem:[%s2620 + $0x1e] sm:$0xff]
      %v3404 = vld [vmem:[%s2620 + $0x26] sm:$0xff]
      %v3405 = vld [vmem:[%s2620 + $0x36] sm:$0xff]
      %v3406 = vld [vmem:[%s2620 + $0x3e] sm:$0xff]
      %v3407 = vld [vmem:[%s2620 + $0x4e] sm:$0xff]
      %v3408 = vld [vmem:[%s2620 + $0x56] sm:$0xff]
      %v3409 = vld [vmem:[%s2620 + $0x66] sm:$0xff]
      %v3410 = vld [vmem:[%s2620 + $0x6e] sm:$0xff]
      %v3411 = vld [vmem:[%s2620 + $0x7e] sm:$0xff]
      %v3412 = vld [vmem:[%s2620 + $0x86] sm:$0xff]
      %v3413 = vld [vmem:[%s2620 + $0x96] sm:$0xff]
      %v3414 = vld [vmem:[%s2620 + $0x9e] sm:$0xff]
      %v3415 = vld [vmem:[%s2620 + $0xae] sm:$0xff]
      %v3416 = vld [vmem:[%s2620 + $0xb6] sm:$0xff]
      %v3417 = vld [vmem:[%s2620 + $0xc6] sm:$0xff]
      %v3418 = vld [vmem:[%s2620 + $0xce] sm:$0xff]
      %v3419 = vld [vmem:[%s2620 + $0xde] sm:$0xff]
      %v3420 = vld [vmem:[%s2620 + $0xe6] sm:$0xff]
      %v3421 = vld [vmem:[%s2620 + $0xf6] sm:$0xff]
      %v3422 = vld [vmem:[%s2620 + $0xfe] sm:$0xff]
      %v3423 = vld [vmem:[%s2620 + $0x10e] sm:$0xff]
      %v3424 = vld [vmem:[%s2620 + $0x116] sm:$0xff]
      %v3425 = vld [vmem:[%s2620 + $0x126] sm:$0xff]
      %v3426 = vld [vmem:[%s2620 + $0x12e] sm:$0xff]
      %v3427 = vld [vmem:[%s2620 + $0x13e] sm:$0xff]
      %v3428 = vld [vmem:[%s2620 + $0x146] sm:$0xff]
      %v3429 = vld [vmem:[%s2620 + $0x156] sm:$0xff]
      %v3430 = vld [vmem:[%s2620 + $0x15e] sm:$0xff]
      %v3431 = vld [vmem:[%s2620 + $0x16e] sm:$0xff]
      %v3432 = vld [vmem:[%s2620 + $0x176] sm:$0xff]
      %s3433 = scalar_lea.vmem %s1, 32
      %v3434 = vld [vmem:[%s3433] sm:$0xf]
      %v3436 = vsel %vm225, %v3401, 0
      %v3439 = vsel %vm225, %v3402, 0
      %v3442 = vsel %vm225, %v3403, 0
      %v3445 = vsel %vm225, %v3404, 0
      %v3448 = vsel %vm225, %v3405, 0
      %v3451 = vsel %vm225, %v3406, 0
      %v3454 = vsel %vm225, %v3407, 0
      %v3457 = vsel %vm225, %v3408, 0
      %v3460 = vsel %vm225, %v3409, 0
      %v3463 = vsel %vm225, %v3410, 0
      %v3466 = vsel %vm225, %v3411, 0
      %v3469 = vsel %vm225, %v3412, 0
      %v3472 = vsel %vm225, %v3413, 0
      %v3475 = vsel %vm225, %v3414, 0
      %v3478 = vsel %vm225, %v3415, 0
      %v3481 = vsel %vm225, %v3416, 0
      %v3484 = vsel %vm225, %v3417, 0
      %v3487 = vsel %vm225, %v3418, 0
      %v3490 = vsel %vm225, %v3419, 0
      %v3493 = vsel %vm225, %v3420, 0
      %v3496 = vsel %vm225, %v3421, 0
      %v3499 = vsel %vm225, %v3422, 0
      %v3502 = vsel %vm225, %v3423, 0
      %v3505 = vsel %vm225, %v3424, 0
      %v3508 = vsel %vm225, %v3425, 0
      %v3511 = vsel %vm225, %v3426, 0
      %v3514 = vsel %vm225, %v3427, 0
      %v3517 = vsel %vm225, %v3428, 0
      %v3520 = vsel %vm225, %v3429, 0
      %v3523 = vsel %vm225, %v3430, 0
      %v3526 = vsel %vm225, %v3431, 0
      %v3529 = vsel %vm225, %v3432, 0
      %v3532 = vsel %vm507, %v3434, 0
      %3534 = vmatprep.subr.mxu0 0.0
      %3535 = vmatpush1.msra.mxu0 %v3532
      %3536 = vmatprep.subr.mxu0 0.0
      %3537 = vmatpush1.msra.mxu0 0.0
      %3538 = vmatprep.subr.mxu0 0.0
      %3539 = vmatpush1.msra.mxu0 0.0
      %3540 = vmatprep.subr.mxu0 0.0
      %3541 = vmatpush1.msra.mxu0 0.0
      %3542 = vmatprep.subr.mxu0 0.0
      %3543 = vmatpush1.msra.mxu0 0.0
      %3544 = vmatprep.subr.mxu0 0.0
      %3545 = vmatpush1.msra.mxu0 0.0
      %3546 = vmatprep.subr.mxu0 0.0
      %3547 = vmatpush1.msra.mxu0 0.0
      %3548 = vmatprep.subr.mxu0 0.0
      %3549 = vmatpush1.msra.mxu0 0.0
      %3550 = vmatprep.subr.mxu0 0.0
      %3551 = vmatpush1.msra.mxu0 0.0
      %3552 = vmatprep.subr.mxu0 0.0
      %3553 = vmatpush1.msra.mxu0 0.0
      %3554 = vmatprep.subr.mxu0 0.0
      %3555 = vmatpush1.msra.mxu0 0.0
      %3556 = vmatprep.subr.mxu0 0.0
      %3557 = vmatpush1.msra.mxu0 0.0
      %3558 = vmatprep.subr.mxu0 0.0
      %3559 = vmatpush1.msra.mxu0 0.0
      %3560 = vmatprep.subr.mxu0 0.0
      %3561 = vmatpush1.msra.mxu0 0.0
      %3562 = vmatprep.subr.mxu0 0.0
      %3563 = vmatpush1.msra.mxu0 0.0
      %3564 = vmatprep.subr.mxu0 0.0
      %3565 = vmatpush1.msra.mxu0 0.0
      %3566 = vmatprep.subr.mxu0 0.0
      %3567 = vmatpush1.msra.mxu0 0.0
      %3568 = vmatprep.subr.mxu0 0.0
      %3569 = vmatpush1.msra.mxu0 0.0
      %3570 = vmatprep.subr.mxu0 0.0
      %3571 = vmatpush1.msra.mxu0 0.0
      %3572 = vmatprep.subr.mxu0 0.0
      %3573 = vmatpush1.msra.mxu0 0.0
      %3574 = vmatprep.subr.mxu0 0.0
      %3575 = vmatpush1.msra.mxu0 0.0
      %3576 = vmatprep.subr.mxu0 0.0
      %3577 = vmatpush1.msra.mxu0 0.0
      %3578 = vmatprep.subr.mxu0 0.0
      %3579 = vmatpush1.msra.mxu0 0.0
      %3580 = vmatprep.subr.mxu0 0.0
      %3581 = vmatpush1.msra.mxu0 0.0
      %3582 = vmatprep.subr.mxu0 0.0
      %3583 = vmatpush1.msra.mxu0 0.0
      %3584 = vmatprep.subr.mxu0 0.0
      %3585 = vmatpush1.msra.mxu0 0.0
      %3586 = vmatprep.subr.mxu0 0.0
      %3587 = vmatpush1.msra.mxu0 0.0
      %3588 = vmatprep.subr.mxu0 0.0
      %3589 = vmatpush1.msra.mxu0 0.0
      %3590 = vmatprep.subr.mxu0 0.0
      %3591 = vmatpush1.msra.mxu0 0.0
      %3592 = vmatprep.subr.mxu0 0.0
      %3593 = vmatpush1.msra.mxu0 0.0
      %3594 = vmatprep.subr.mxu0 0.0
      %3595 = vmatpush1.msra.mxu0 0.0
      %3596 = vmatprep.subr.mxu0 0.0
      %3597 = vmatpush1.msra.mxu0 0.0
      %3598 = vmatprep.mubr.f32.mxu0 0.0
      %3599 = vmatmul.mubr.f32.gmra.mrb[0].mxu0 %v3436
      %v3600 = vpop.f32.mrb[0].mxu0
      %v3601 = vadd.f32 0.0, %v3600
      %v3602 = vpop.f32.mrb[0].mxu0
      %3603 = vmatprep.mubr.f32.mxu0 0.0
      %3604 = vmatmul.mubr.f32.gmra.mrb[0].mxu0 %v3439
      %v3605 = vpop.f32.mrb[0].mxu0
      %v3606 = vadd.f32 0.0, %v3605
      %v3607 = vpop.f32.mrb[0].mxu0
      %3608 = vmatprep.mubr.f32.mxu0 0.0
      %3609 = vmatmul.mubr.f32.gmra.mrb[0].mxu0 %v3442
      %v3610 = vpop.f32.mrb[0].mxu0
      %v3611 = vadd.f32 0.0, %v3610
      %v3612 = vpop.f32.mrb[0].mxu0
      %3613 = vmatprep.mubr.f32.mxu0 0.0
      %3614 = vmatmul.mubr.f32.gmra.mrb[0].mxu0 %v3445
      %v3615 = vpop.f32.mrb[0].mxu0
      %v3616 = vadd.f32 0.0, %v3615
      %v3617 = vpop.f32.mrb[0].mxu0
      %3618 = vmatprep.mubr.f32.mxu0 0.0
      %3619 = vmatmul.mubr.f32.gmra.mrb[0].mxu0 %v3448
      %v3620 = vpop.f32.mrb[0].mxu0
      %v3621 = vadd.f32 0.0, %v3620
      %v3622 = vpop.f32.mrb[0].mxu0
      %3623 = vmatprep.mubr.f32.mxu0 0.0
      %3624 = vmatmul.mubr.f32.gmra.mrb[0].mxu0 %v3451
      %v3625 = vpop.f32.mrb[0].mxu0
      %v3626 = vadd.f32 0.0, %v3625
      %v3627 = vpop.f32.mrb[0].mxu0
      %3628 = vmatprep.mubr.f32.mxu0 0.0
      %3629 = vmatmul.mubr.f32.gmra.mrb[0].mxu0 %v3454
      %v3630 = vpop.f32.mrb[0].mxu0
      %v3631 = vadd.f32 0.0, %v3630
      %v3632 = vpop.f32.mrb[0].mxu0
      %3633 = vmatprep.mubr.f32.mxu0 0.0
      %3634 = vmatmul.mubr.f32.gmra.mrb[0].mxu0 %v3457
      %v3635 = vpop.f32.mrb[0].mxu0
      %v3636 = vadd.f32 0.0, %v3635
      %v3637 = vpop.f32.mrb[0].mxu0
      %3638 = vmatprep.mubr.f32.mxu0 0.0
      %3639 = vmatmul.mubr.f32.gmra.mrb[0].mxu0 %v3460
      %v3640 = vpop.f32.mrb[0].mxu0
      %v3641 = vadd.f32 0.0, %v3640
      %v3642 = vpop.f32.mrb[0].mxu0
      %3643 = vmatprep.mubr.f32.mxu0 0.0
      %3644 = vmatmul.mubr.f32.gmra.mrb[0].mxu0 %v3463
      %v3645 = vpop.f32.mrb[0].mxu0
      %v3646 = vadd.f32 0.0, %v3645
      %v3647 = vpop.f32.mrb[0].mxu0
      %3648 = vmatprep.mubr.f32.mxu0 0.0
      %3649 = vmatmul.mubr.f32.gmra.mrb[0].mxu0 %v3466
      %v3650 = vpop.f32.mrb[0].mxu0
      %v3651 = vadd.f32 0.0, %v3650
      %v3652 = vpop.f32.mrb[0].mxu0
      %3653 = vmatprep.mubr.f32.mxu0 0.0
      %3654 = vmatmul.mubr.f32.gmra.mrb[0].mxu0 %v3469
      %v3655 = vpop.f32.mrb[0].mxu0
      %v3656 = vadd.f32 0.0, %v3655
      %v3657 = vpop.f32.mrb[0].mxu0
      %3658 = vmatprep.mubr.f32.mxu0 0.0
      %3659 = vmatmul.mubr.f32.gmra.mrb[0].mxu0 %v3472
      %v3660 = vpop.f32.mrb[0].mxu0
      %v3661 = vadd.f32 0.0, %v3660
      %v3662 = vpop.f32.mrb[0].mxu0
      %3663 = vmatprep.mubr.f32.mxu0 0.0
      %3664 = vmatmul.mubr.f32.gmra.mrb[0].mxu0 %v3475
      %v3665 = vpop.f32.mrb[0].mxu0
      %v3666 = vadd.f32 0.0, %v3665
      %v3667 = vpop.f32.mrb[0].mxu0
      %3668 = vmatprep.mubr.f32.mxu0 0.0
      %3669 = vmatmul.mubr.f32.gmra.mrb[0].mxu0 %v3478
      %v3670 = vpop.f32.mrb[0].mxu0
      %v3671 = vadd.f32 0.0, %v3670
      %v3672 = vpop.f32.mrb[0].mxu0
      %3673 = vmatprep.mubr.f32.mxu0 0.0
      %3674 = vmatmul.mubr.f32.gmra.mrb[0].mxu0 %v3481
      %v3675 = vpop.f32.mrb[0].mxu0
      %v3676 = vadd.f32 0.0, %v3675
      %v3677 = vpop.f32.mrb[0].mxu0
      %3678 = vmatprep.mubr.f32.mxu0 0.0
      %3679 = vmatmul.mubr.f32.gmra.mrb[0].mxu0 %v3484
      %v3680 = vpop.f32.mrb[0].mxu0
      %v3681 = vadd.f32 0.0, %v3680
      %v3682 = vpop.f32.mrb[0].mxu0
      %3683 = vmatprep.mubr.f32.mxu0 0.0
      %3684 = vmatmul.mubr.f32.gmra.mrb[0].mxu0 %v3487
      %v3685 = vpop.f32.mrb[0].mxu0
      %v3686 = vadd.f32 0.0, %v3685
      %v3687 = vpop.f32.mrb[0].mxu0
      %3688 = vmatprep.mubr.f32.mxu0 0.0
      %3689 = vmatmul.mubr.f32.gmra.mrb[0].mxu0 %v3490
      %v3690 = vpop.f32.mrb[0].mxu0
      %v3691 = vadd.f32 0.0, %v3690
      %v3692 = vpop.f32.mrb[0].mxu0
      %3693 = vmatprep.mubr.f32.mxu0 0.0
      %3694 = vmatmul.mubr.f32.gmra.mrb[0].mxu0 %v3493
      %v3695 = vpop.f32.mrb[0].mxu0
      %v3696 = vadd.f32 0.0, %v3695
      %v3697 = vpop.f32.mrb[0].mxu0
      %3698 = vmatprep.mubr.f32.mxu0 0.0
      %3699 = vmatmul.mubr.f32.gmra.mrb[0].mxu0 %v3496
      %v3700 = vpop.f32.mrb[0].mxu0
      %v3701 = vadd.f32 0.0, %v3700
      %v3702 = vpop.f32.mrb[0].mxu0
      %3703 = vmatprep.mubr.f32.mxu0 0.0
      %3704 = vmatmul.mubr.f32.gmra.mrb[0].mxu0 %v3499
      %v3705 = vpop.f32.mrb[0].mxu0
      %v3706 = vadd.f32 0.0, %v3705
      %v3707 = vpop.f32.mrb[0].mxu0
      %3708 = vmatprep.mubr.f32.mxu0 0.0
      %3709 = vmatmul.mubr.f32.gmra.mrb[0].mxu0 %v3502
      %v3710 = vpop.f32.mrb[0].mxu0
      %v3711 = vadd.f32 0.0, %v3710
      %v3712 = vpop.f32.mrb[0].mxu0
      %3713 = vmatprep.mubr.f32.mxu0 0.0
      %3714 = vmatmul.mubr.f32.gmra.mrb[0].mxu0 %v3505
      %v3715 = vpop.f32.mrb[0].mxu0
      %v3716 = vadd.f32 0.0, %v3715
      %v3717 = vpop.f32.mrb[0].mxu0
      %3718 = vmatprep.mubr.f32.mxu0 0.0
      %3719 = vmatmul.mubr.f32.gmra.mrb[0].mxu0 %v3508
      %v3720 = vpop.f32.mrb[0].mxu0
      %v3721 = vadd.f32 0.0, %v3720
      %v3722 = vpop.f32.mrb[0].mxu0
      %3723 = vmatprep.mubr.f32.mxu0 0.0
      %3724 = vmatmul.mubr.f32.gmra.mrb[0].mxu0 %v3511
      %v3725 = vpop.f32.mrb[0].mxu0
      %v3726 = vadd.f32 0.0, %v3725
      %v3727 = vpop.f32.mrb[0].mxu0
      %3728 = vmatprep.mubr.f32.mxu0 0.0
      %3729 = vmatmul.mubr.f32.gmra.mrb[0].mxu0 %v3514
      %v3730 = vpop.f32.mrb[0].mxu0
      %v3731 = vadd.f32 0.0, %v3730
      %v3732 = vpop.f32.mrb[0].mxu0
      %3733 = vmatprep.mubr.f32.mxu0 0.0
      %3734 = vmatmul.mubr.f32.gmra.mrb[0].mxu0 %v3517
      %v3735 = vpop.f32.mrb[0].mxu0
      %v3736 = vadd.f32 0.0, %v3735
      %v3737 = vpop.f32.mrb[0].mxu0
      %3738 = vmatprep.mubr.f32.mxu0 0.0
      %3739 = vmatmul.mubr.f32.gmra.mrb[0].mxu0 %v3520
      %v3740 = vpop.f32.mrb[0].mxu0
      %v3741 = vadd.f32 0.0, %v3740
      %v3742 = vpop.f32.mrb[0].mxu0
      %3743 = vmatprep.mubr.f32.mxu0 0.0
      %3744 = vmatmul.mubr.f32.gmra.mrb[0].mxu0 %v3523
      %v3745 = vpop.f32.mrb[0].mxu0
      %v3746 = vadd.f32 0.0, %v3745
      %v3747 = vpop.f32.mrb[0].mxu0
      %3748 = vmatprep.mubr.f32.mxu0 0.0
      %3749 = vmatmul.mubr.f32.gmra.mrb[0].mxu0 %v3526
      %v3750 = vpop.f32.mrb[0].mxu0
      %v3751 = vadd.f32 0.0, %v3750
      %v3752 = vpop.f32.mrb[0].mxu0
      %3753 = vmatprep.mubr.f32.mxu0 0.0
      %3754 = vmatmul.mubr.f32.gmra.mrb[0].mxu0 %v3529
      %v3755 = vpop.f32.mrb[0].mxu0
      %v3756 = vadd.f32 0.0, %v3755
      %v3757 = vpop.f32.mrb[0].mxu0
      %3758 = vdwg.mxu0
      %v3759 = vadd.f32 %v3369, %v3601
      %v3760 = vadd.f32 %v3370, %v3606
      %v3761 = vadd.f32 %v3371, %v3611
      %v3762 = vadd.f32 %v3372, %v3616
      %v3763 = vadd.f32 %v3373, %v3621
      %v3764 = vadd.f32 %v3374, %v3626
      %v3765 = vadd.f32 %v3375, %v3631
      %v3766 = vadd.f32 %v3376, %v3636
      %v3767 = vadd.f32 %v3377, %v3641
      %v3768 = vadd.f32 %v3378, %v3646
      %v3769 = vadd.f32 %v3379, %v3651
      %v3770 = vadd.f32 %v3380, %v3656
      %v3771 = vadd.f32 %v3381, %v3661
      %v3772 = vadd.f32 %v3382, %v3666
      %v3773 = vadd.f32 %v3383, %v3671
      %v3774 = vadd.f32 %v3384, %v3676
      %v3775 = vadd.f32 %v3385, %v3681
      %v3776 = vadd.f32 %v3386, %v3686
      %v3777 = vadd.f32 %v3387, %v3691
      %v3778 = vadd.f32 %v3388, %v3696
      %v3779 = vadd.f32 %v3389, %v3701
      %v3780 = vadd.f32 %v3390, %v3706
      %v3781 = vadd.f32 %v3391, %v3711
      %v3782 = vadd.f32 %v3392, %v3716
      %v3783 = vadd.f32 %v3393, %v3721
      %v3784 = vadd.f32 %v3394, %v3726
      %v3785 = vadd.f32 %v3395, %v3731
      %v3786 = vadd.f32 %v3396, %v3736
      %v3787 = vadd.f32 %v3397, %v3741
      %v3788 = vadd.f32 %v3398, %v3746
      %v3789 = vadd.f32 %v3399, %v3751
      %v3790 = vadd.f32 %v3400, %v3756
      %v3791 = vld [vmem:[%s2] sm:$0x1]
      %v3793 = vlaneseq
      %v3794 = vshrl.u32 %v3793, 7
      %v3795 = vsub.s32 0, %v3794
      %v3796 = vrot.slane %v3791, %v3795
      %v3798 = vadd.f32 %v3759, %v3796
      %v3799 = vadd.f32 %v3760, %v3796
      %v3800 = vadd.f32 %v3761, %v3796
      %v3801 = vadd.f32 %v3762, %v3796
      %v3802 = vadd.f32 %v3763, %v3796
      %v3803 = vadd.f32 %v3764, %v3796
      %v3804 = vadd.f32 %v3765, %v3796
      %v3805 = vadd.f32 %v3766, %v3796
      %v3806 = vadd.f32 %v3767, %v3796
      %v3807 = vadd.f32 %v3768, %v3796
      %v3808 = vadd.f32 %v3769, %v3796
      %v3809 = vadd.f32 %v3770, %v3796
      %v3810 = vadd.f32 %v3771, %v3796
      %v3811 = vadd.f32 %v3772, %v3796
      %v3812 = vadd.f32 %v3773, %v3796
      %v3813 = vadd.f32 %v3774, %v3796
      %v3814 = vadd.f32 %v3775, %v3796
      %v3815 = vadd.f32 %v3776, %v3796
      %v3816 = vadd.f32 %v3777, %v3796
      %v3817 = vadd.f32 %v3778, %v3796
      %v3818 = vadd.f32 %v3779, %v3796
      %v3819 = vadd.f32 %v3780, %v3796
      %v3820 = vadd.f32 %v3781, %v3796
      %v3821 = vadd.f32 %v3782, %v3796
      %v3822 = vadd.f32 %v3783, %v3796
      %v3823 = vadd.f32 %v3784, %v3796
      %v3824 = vadd.f32 %v3785, %v3796
      %v3825 = vadd.f32 %v3786, %v3796
      %v3826 = vadd.f32 %v3787, %v3796
      %v3827 = vadd.f32 %v3788, %v3796
      %v3828 = vadd.f32 %v3789, %v3796
      %v3829 = vadd.f32 %v3790, %v3796
      %v3830 = vmax.f32 %v3798, 0.0
      %v3831 = vmax.f32 %v3799, 0.0
      %v3832 = vmax.f32 %v3800, 0.0
      %v3833 = vmax.f32 %v3801, 0.0
      %v3834 = vmax.f32 %v3802, 0.0
      %v3835 = vmax.f32 %v3803, 0.0
      %v3836 = vmax.f32 %v3804, 0.0
      %v3837 = vmax.f32 %v3805, 0.0
      %v3838 = vmax.f32 %v3806, 0.0
      %v3839 = vmax.f32 %v3807, 0.0
      %v3840 = vmax.f32 %v3808, 0.0
      %v3841 = vmax.f32 %v3809, 0.0
      %v3842 = vmax.f32 %v3810, 0.0
      %v3843 = vmax.f32 %v3811, 0.0
      %v3844 = vmax.f32 %v3812, 0.0
      %v3845 = vmax.f32 %v3813, 0.0
      %v3846 = vmax.f32 %v3814, 0.0
      %v3847 = vmax.f32 %v3815, 0.0
      %v3848 = vmax.f32 %v3816, 0.0
      %v3849 = vmax.f32 %v3817, 0.0
      %v3850 = vmax.f32 %v3818, 0.0
      %v3851 = vmax.f32 %v3819, 0.0
      %v3852 = vmax.f32 %v3820, 0.0
      %v3853 = vmax.f32 %v3821, 0.0
      %v3854 = vmax.f32 %v3822, 0.0
      %v3855 = vmax.f32 %v3823, 0.0
      %v3856 = vmax.f32 %v3824, 0.0
      %v3857 = vmax.f32 %v3825, 0.0
      %v3858 = vmax.f32 %v3826, 0.0
      %v3859 = vmax.f32 %v3827, 0.0
      %v3860 = vmax.f32 %v3828, 0.0
      %v3861 = vmax.f32 %v3829, 0.0
      %3862 = vst [vmem:[#allocation3] sm:$0xff] 0.0
      %3863 = vst [vmem:[#allocation3 + $0x8] sm:$0xff] 0.0
      %3864 = vst [vmem:[#allocation3 + $0x10] sm:$0x3f] 0.0
      %3865 = vst [vmem:[#allocation3 + $0x18] sm:$0xff] 0.0
      %3866 = vst [vmem:[#allocation3 + $0x20] sm:$0xff] 0.0
      %3867 = vst [vmem:[#allocation3 + $0x28] sm:$0x3f] 0.0
      %3868 = vst [vmem:[#allocation3 + $0x30] sm:$0xff] 0.0
      %3869 = vst [vmem:[#allocation3 + $0x38] sm:$0xff] 0.0
      %3870 = vst [vmem:[#allocation3 + $0x40] sm:$0x3f] 0.0
      %s3871 = scalar_lea.vmem [#allocation3], 456
      %3872 = vst [vmem:[%s3871] sm:$0xff] 0.0
      %3873 = vst [vmem:[%s3871 + $0x8] sm:$0xff] 0.0
      %3874 = vst [vmem:[%s3871 + $0x10] sm:$0x3f] 0.0
      %3875 = vst [vmem:[%s3871 + $0x18] sm:$0xff] 0.0
      %3876 = vst [vmem:[%s3871 + $0x20] sm:$0xff] 0.0
      %3877 = vst [vmem:[%s3871 + $0x28] sm:$0x3f] 0.0
      %3878 = vst [vmem:[%s3871 + $0x30] sm:$0xff] 0.0
      %3879 = vst [vmem:[%s3871 + $0x38] sm:$0xff] 0.0
      %3880 = vst [vmem:[%s3871 + $0x40] sm:$0x3f] 0.0
      %s3881 = scalar_lea.vmem [#allocation3], 72
      %3882 = vst [vmem:[%s3881] sm:$0x7] 0.0
      %3883 = vst [vmem:[%s3881 + $0x18] sm:$0x7] 0.0
      %3884 = vst [vmem:[%s3881 + $0x30] sm:$0x7] 0.0
      %3885 = vst [vmem:[%s3881 + $0x48] sm:$0x7] 0.0
      %3886 = vst [vmem:[%s3881 + $0x60] sm:$0x7] 0.0
      %3887 = vst [vmem:[%s3881 + $0x78] sm:$0x7] 0.0
      %3888 = vst [vmem:[%s3881 + $0x90] sm:$0x7] 0.0
      %3889 = vst [vmem:[%s3881 + $0xa8] sm:$0x7] 0.0
      %3890 = vst [vmem:[%s3881 + $0xc0] sm:$0x7] 0.0
      %3891 = vst [vmem:[%s3881 + $0xd8] sm:$0x7] 0.0
      %3892 = vst [vmem:[%s3881 + $0xf0] sm:$0x7] 0.0
      %3893 = vst [vmem:[%s3881 + $0x108] sm:$0x7] 0.0
      %3894 = vst [vmem:[%s3881 + $0x120] sm:$0x7] 0.0
      %3895 = vst [vmem:[%s3881 + $0x138] sm:$0x7] 0.0
      %3896 = vst [vmem:[%s3881 + $0x150] sm:$0x7] 0.0
      %3897 = vst [vmem:[%s3881 + $0x168] sm:$0x7] 0.0
      %3898 = vst [vmem:[%s3881 + $0x13] sm:$0x7] 0.0
      %3899 = vst [vmem:[%s3881 + $0x2b] sm:$0x7] 0.0
      %3900 = vst [vmem:[%s3881 + $0x43] sm:$0x7] 0.0
      %3901 = vst [vmem:[%s3881 + $0x5b] sm:$0x7] 0.0
      %3902 = vst [vmem:[%s3881 + $0x73] sm:$0x7] 0.0
      %3903 = vst [vmem:[%s3881 + $0x8b] sm:$0x7] 0.0
      %3904 = vst [vmem:[%s3881 + $0xa3] sm:$0x7] 0.0
      %3905 = vst [vmem:[%s3881 + $0xbb] sm:$0x7] 0.0
      %3906 = vst [vmem:[%s3881 + $0xd3] sm:$0x7] 0.0
      %3907 = vst [vmem:[%s3881 + $0xeb] sm:$0x7] 0.0
      %3908 = vst [vmem:[%s3881 + $0x103] sm:$0x7] 0.0
      %3909 = vst [vmem:[%s3881 + $0x11b] sm:$0x7] 0.0
      %3910 = vst [vmem:[%s3881 + $0x133] sm:$0x7] 0.0
      %3911 = vst [vmem:[%s3881 + $0x14b] sm:$0x7] 0.0
      %3912 = vst [vmem:[%s3881 + $0x163] sm:$0x7] 0.0
      %3913 = vst [vmem:[%s3881 + $0x17b] sm:$0x7] 0.0
      %3914 = vst [vmem:[%s3881 + $0x3] sm:$0xff] %v3830
      %3915 = vst [vmem:[%s3881 + $0xb] sm:$0xff] %v3831
      %3916 = vst [vmem:[%s3881 + $0x1b] sm:$0xff] %v3832
      %3917 = vst [vmem:[%s3881 + $0x23] sm:$0xff] %v3833
      %3918 = vst [vmem:[%s3881 + $0x33] sm:$0xff] %v3834
      %3919 = vst [vmem:[%s3881 + $0x3b] sm:$0xff] %v3835
      %3920 = vst [vmem:[%s3881 + $0x4b] sm:$0xff] %v3836
      %3921 = vst [vmem:[%s3881 + $0x53] sm:$0xff] %v3837
      %3922 = vst [vmem:[%s3881 + $0x63] sm:$0xff] %v3838
      %3923 = vst [vmem:[%s3881 + $0x6b] sm:$0xff] %v3839
      %3924 = vst [vmem:[%s3881 + $0x7b] sm:$0xff] %v3840
      %3925 = vst [vmem:[%s3881 + $0x83] sm:$0xff] %v3841
      %3926 = vst [vmem:[%s3881 + $0x93] sm:$0xff] %v3842
      %3927 = vst [vmem:[%s3881 + $0x9b] sm:$0xff] %v3843
      %3928 = vst [vmem:[%s3881 + $0xab] sm:$0xff] %v3844
      %3929 = vst [vmem:[%s3881 + $0xb3] sm:$0xff] %v3845
      %3930 = vst [vmem:[%s3881 + $0xc3] sm:$0xff] %v3846
      %3931 = vst [vmem:[%s3881 + $0xcb] sm:$0xff] %v3847
      %3932 = vst [vmem:[%s3881 + $0xdb] sm:$0xff] %v3848
      %3933 = vst [vmem:[%s3881 + $0xe3] sm:$0xff] %v3849
      %3934 = vst [vmem:[%s3881 + $0xf3] sm:$0xff] %v3850
      %3935 = vst [vmem:[%s3881 + $0xfb] sm:$0xff] %v3851
      %3936 = vst [vmem:[%s3881 + $0x10b] sm:$0xff] %v3852
      %3937 = vst [vmem:[%s3881 + $0x113] sm:$0xff] %v3853
      %3938 = vst [vmem:[%s3881 + $0x123] sm:$0xff] %v3854
      %3939 = vst [vmem:[%s3881 + $0x12b] sm:$0xff] %v3855
      %3940 = vst [vmem:[%s3881 + $0x13b] sm:$0xff] %v3856
      %3941 = vst [vmem:[%s3881 + $0x143] sm:$0xff] %v3857
      %3942 = vst [vmem:[%s3881 + $0x153] sm:$0xff] %v3858
      %3943 = vst [vmem:[%s3881 + $0x15b] sm:$0xff] %v3859
      %3944 = vst [vmem:[%s3881 + $0x16b] sm:$0xff] %v3860
      %3945 = vst [vmem:[%s3881 + $0x173] sm:$0xff] %v3861
      %v3946 = vld [vmem:[#allocation3] sm:$0xff]
      %v3947 = vld [vmem:[#allocation3 + $0x8] sm:$0xff]
      %v3948 = vld [vmem:[#allocation3 + $0x18] sm:$0xff]
      %v3949 = vld [vmem:[#allocation3 + $0x20] sm:$0xff]
      %v3950 = vld [vmem:[#allocation3 + $0x30] sm:$0xff]
      %v3951 = vld [vmem:[#allocation3 + $0x38] sm:$0xff]
      %v3952 = vld [vmem:[#allocation3 + $0x48] sm:$0xff]
      %v3953 = vld [vmem:[#allocation3 + $0x50] sm:$0xff]
      %v3954 = vld [vmem:[#allocation3 + $0x60] sm:$0xff]
      %v3955 = vld [vmem:[#allocation3 + $0x68] sm:$0xff]
      %v3956 = vld [vmem:[#allocation3 + $0x78] sm:$0xff]
      %v3957 = vld [vmem:[#allocation3 + $0x80] sm:$0xff]
      %v3958 = vld [vmem:[#allocation3 + $0x90] sm:$0xff]
      %v3959 = vld [vmem:[#allocation3 + $0x98] sm:$0xff]
      %v3960 = vld [vmem:[#allocation3 + $0xa8] sm:$0xff]
      %v3961 = vld [vmem:[#allocation3 + $0xb0] sm:$0xff]
      %v3962 = vld [vmem:[#allocation3 + $0xc0] sm:$0xff]
      %v3963 = vld [vmem:[#allocation3 + $0xc8] sm:$0xff]
      %v3964 = vld [vmem:[#allocation3 + $0xd8] sm:$0xff]
      %v3965 = vld [vmem:[#allocation3 + $0xe0] sm:$0xff]
      %v3966 = vld [vmem:[#allocation3 + $0xf0] sm:$0xff]
      %v3967 = vld [vmem:[#allocation3 + $0xf8] sm:$0xff]
      %v3968 = vld [vmem:[#allocation3 + $0x108] sm:$0xff]
      %v3969 = vld [vmem:[#allocation3 + $0x110] sm:$0xff]
      %v3970 = vld [vmem:[#allocation3 + $0x120] sm:$0xff]
      %v3971 = vld [vmem:[#allocation3 + $0x128] sm:$0xff]
      %v3972 = vld [vmem:[#allocation3 + $0x138] sm:$0xff]
      %v3973 = vld [vmem:[#allocation3 + $0x140] sm:$0xff]
      %v3974 = vld [vmem:[#allocation3 + $0x150] sm:$0xff]
      %v3975 = vld [vmem:[#allocation3 + $0x158] sm:$0xff]
      %v3976 = vld [vmem:[#allocation3 + $0x168] sm:$0xff]
      %v3977 = vld [vmem:[#allocation3 + $0x170] sm:$0xff]
      %v3978 = vld [vmem:[%s3] sm:$0xff]
      %v3979 = vld [vmem:[%s3 + $0x8] sm:$0xff]
      %v3980 = vld [vmem:[%s3 + $0x10] sm:$0xff]
      %v3981 = vld [vmem:[%s3 + $0x18] sm:$0xff]
      %v3982 = vld [vmem:[%s3 + $0x20] sm:$0xff]
      %v3983 = vld [vmem:[%s3 + $0x28] sm:$0xff]
      %v3984 = vld [vmem:[%s3 + $0x30] sm:$0xff]
      %v3985 = vld [vmem:[%s3 + $0x38] sm:$0xff]
      %v3986 = vld [vmem:[%s3 + $0x40] sm:$0xff]
      %v3987 = vld [vmem:[%s3 + $0x48] sm:$0xff]
      %v3988 = vld [vmem:[%s3 + $0x50] sm:$0xff]
      %v3989 = vld [vmem:[%s3 + $0x58] sm:$0xff]
      %v3990 = vld [vmem:[%s3 + $0x60] sm:$0xff]
      %v3991 = vld [vmem:[%s3 + $0x68] sm:$0xff]
      %v3992 = vld [vmem:[%s3 + $0x70] sm:$0xff]
      %v3993 = vld [vmem:[%s3 + $0x78] sm:$0xff]
      %v3994 = vld [vmem:[#allocation3 + $0x3] sm:$0xff]
      %v3995 = vld [vmem:[#allocation3 + $0xb] sm:$0xff]
      %v3996 = vld [vmem:[#allocation3 + $0x1b] sm:$0xff]
      %v3997 = vld [vmem:[#allocation3 + $0x23] sm:$0xff]
      %v3998 = vld [vmem:[#allocation3 + $0x33] sm:$0xff]
      %v3999 = vld [vmem:[#allocation3 + $0x3b] sm:$0xff]
      %v4000 = vld [vmem:[#allocation3 + $0x4b] sm:$0xff]
      %v4001 = vld [vmem:[#allocation3 + $0x53] sm:$0xff]
      %v4002 = vld [vmem:[#allocation3 + $0x63] sm:$0xff]
      %v4003 = vld [vmem:[#allocation3 + $0x6b] sm:$0xff]
      %v4004 = vld [vmem:[#allocation3 + $0x7b] sm:$0xff]
      %v4005 = vld [vmem:[#allocation3 + $0x83] sm:$0xff]
      %v4006 = vld [vmem:[#allocation3 + $0x93] sm:$0xff]
      %v4007 = vld [vmem:[#allocation3 + $0x9b] sm:$0xff]
      %v4008 = vld [vmem:[#allocation3 + $0xab] sm:$0xff]
      %v4009 = vld [vmem:[#allocation3 + $0xb3] sm:$0xff]
      %v4010 = vld [vmem:[#allocation3 + $0xc3] sm:$0xff]
      %v4011 = vld [vmem:[#allocation3 + $0xcb] sm:$0xff]
      %v4012 = vld [vmem:[#allocation3 + $0xdb] sm:$0xff]
      %v4013 = vld [vmem:[#allocation3 + $0xe3] sm:$0xff]
      %v4014 = vld [vmem:[#allocation3 + $0xf3] sm:$0xff]
      %v4015 = vld [vmem:[#allocation3 + $0xfb] sm:$0xff]
      %v4016 = vld [vmem:[#allocation3 + $0x10b] sm:$0xff]
      %v4017 = vld [vmem:[#allocation3 + $0x113] sm:$0xff]
      %v4018 = vld [vmem:[#allocation3 + $0x123] sm:$0xff]
      %v4019 = vld [vmem:[#allocation3 + $0x12b] sm:$0xff]
      %v4020 = vld [vmem:[#allocation3 + $0x13b] sm:$0xff]
      %v4021 = vld [vmem:[#allocation3 + $0x143] sm:$0xff]
      %v4022 = vld [vmem:[#allocation3 + $0x153] sm:$0xff]
      %v4023 = vld [vmem:[#allocation3 + $0x15b] sm:$0xff]
      %v4024 = vld [vmem:[#allocation3 + $0x16b] sm:$0xff]
      %v4025 = vld [vmem:[#allocation3 + $0x173] sm:$0xff]
      %s4026 = scalar_lea.vmem %s3, 128
      %v4027 = vld [vmem:[%s4026] sm:$0xff]
      %v4028 = vld [vmem:[%s4026 + $0x8] sm:$0xff]
      %v4029 = vld [vmem:[%s4026 + $0x10] sm:$0xff]
      %v4030 = vld [vmem:[%s4026 + $0x18] sm:$0xff]
      %v4031 = vld [vmem:[%s4026 + $0x20] sm:$0xff]
      %v4032 = vld [vmem:[%s4026 + $0x28] sm:$0xff]
      %v4033 = vld [vmem:[%s4026 + $0x30] sm:$0xff]
      %v4034 = vld [vmem:[%s4026 + $0x38] sm:$0xff]
      %v4035 = vld [vmem:[%s4026 + $0x40] sm:$0xff]
      %v4036 = vld [vmem:[%s4026 + $0x48] sm:$0xff]
      %v4037 = vld [vmem:[%s4026 + $0x50] sm:$0xff]
      %v4038 = vld [vmem:[%s4026 + $0x58] sm:$0xff]
      %v4039 = vld [vmem:[%s4026 + $0x60] sm:$0xff]
      %v4040 = vld [vmem:[%s4026 + $0x68] sm:$0xff]
      %v4041 = vld [vmem:[%s4026 + $0x70] sm:$0xff]
      %v4042 = vld [vmem:[%s4026 + $0x78] sm:$0xff]
      %4043 = vmatprep.subr.mxu0 0.0
      %4044 = vmatpush1.msra.mxu0 %v4027
      %4045 = vmatprep.subr.mxu0 0.0
      %4046 = vmatpush1.msra.mxu0 %v4028
      %4047 = vmatprep.subr.mxu0 0.0
      %4048 = vmatpush1.msra.mxu0 %v4029
      %4049 = vmatprep.subr.mxu0 0.0
      %4050 = vmatpush1.msra.mxu0 %v4030
      %4051 = vmatprep.subr.mxu0 0.0
      %4052 = vmatpush1.msra.mxu0 %v4031
      %4053 = vmatprep.subr.mxu0 0.0
      %4054 = vmatpush1.msra.mxu0 %v4032
      %4055 = vmatprep.subr.mxu0 0.0
      %4056 = vmatpush1.msra.mxu0 %v4033
      %4057 = vmatprep.subr.mxu0 0.0
      %4058 = vmatpush1.msra.mxu0 %v4034
      %4059 = vmatprep.subr.mxu0 0.0
      %4060 = vmatpush1.msra.mxu0 %v4035
      %4061 = vmatprep.subr.mxu0 0.0
      %4062 = vmatpush1.msra.mxu0 %v4036
      %4063 = vmatprep.subr.mxu0 0.0
      %4064 = vmatpush1.msra.mxu0 %v4037
      %4065 = vmatprep.subr.mxu0 0.0
      %4066 = vmatpush1.msra.mxu0 %v4038
      %4067 = vmatprep.subr.mxu0 0.0
      %4068 = vmatpush1.msra.mxu0 %v4039
      %4069 = vmatprep.subr.mxu0 0.0
      %4070 = vmatpush1.msra.mxu0 %v4040
      %4071 = vmatprep.subr.mxu0 0.0
      %4072 = vmatpush1.msra.mxu0 %v4041
      %4073 = vmatprep.subr.mxu0 0.0
      %4074 = vmatpush1.msra.mxu0 %v4042
      %4075 = vmatprep.subr.mxu0 0.0
      %4076 = vmatpush1.msra.mxu0 0.0
      %4077 = vmatprep.subr.mxu0 0.0
      %4078 = vmatpush1.msra.mxu0 0.0
      %4079 = vmatprep.subr.mxu0 0.0
      %4080 = vmatpush1.msra.mxu0 0.0
      %4081 = vmatprep.subr.mxu0 0.0
      %4082 = vmatpush1.msra.mxu0 0.0
      %4083 = vmatprep.subr.mxu0 0.0
      %4084 = vmatpush1.msra.mxu0 0.0
      %4085 = vmatprep.subr.mxu0 0.0
      %4086 = vmatpush1.msra.mxu0 0.0
      %4087 = vmatprep.subr.mxu0 0.0
      %4088 = vmatpush1.msra.mxu0 0.0
      %4089 = vmatprep.subr.mxu0 0.0
      %4090 = vmatpush1.msra.mxu0 0.0
      %4091 = vmatprep.subr.mxu0 0.0
      %4092 = vmatpush1.msra.mxu0 0.0
      %4093 = vmatprep.subr.mxu0 0.0
      %4094 = vmatpush1.msra.mxu0 0.0
      %4095 = vmatprep.subr.mxu0 0.0
      %4096 = vmatpush1.msra.mxu0 0.0
      %4097 = vmatprep.subr.mxu0 0.0
      %4098 = vmatpush1.msra.mxu0 0.0
      %4099 = vmatprep.subr.mxu0 0.0
      %4100 = vmatpush1.msra.mxu0 0.0
      %4101 = vmatprep.subr.mxu0 0.0
      %4102 = vmatpush1.msra.mxu0 0.0
      %4103 = vmatprep.subr.mxu0 0.0
      %4104 = vmatpush1.msra.mxu0 0.0
      %4105 = vmatprep.subr.mxu0 0.0
      %4106 = vmatpush1.msra.mxu0 0.0
      %4107 = vmatprep.mubr.f32.mxu0 0.0
      %4108 = vmatmul.mubr.f32.gmra.mrb[0].mxu0 %v3994
      %v4109 = vpop.f32.mrb[0].mxu0
      %v4110 = vadd.f32 0.0, %v4109
      %v4111 = vpop.f32.mrb[0].mxu0
      %4112 = vmatprep.mubr.f32.mxu0 0.0
      %4113 = vmatmul.mubr.f32.gmra.mrb[0].mxu0 %v3995
      %v4114 = vpop.f32.mrb[0].mxu0
      %v4115 = vadd.f32 0.0, %v4114
      %v4116 = vpop.f32.mrb[0].mxu0
      %4117 = vmatprep.mubr.f32.mxu0 0.0
      %4118 = vmatmul.mubr.f32.gmra.mrb[0].mxu0 %v3996
      %v4119 = vpop.f32.mrb[0].mxu0
      %v4120 = vadd.f32 0.0, %v4119
      %v4121 = vpop.f32.mrb[0].mxu0
      %4122 = vmatprep.mubr.f32.mxu0 0.0
      %4123 = vmatmul.mubr.f32.gmra.mrb[0].mxu0 %v3997
      %v4124 = vpop.f32.mrb[0].mxu0
      %v4125 = vadd.f32 0.0, %v4124
      %v4126 = vpop.f32.mrb[0].mxu0
      %4127 = vmatprep.mubr.f32.mxu0 0.0
      %4128 = vmatmul.mubr.f32.gmra.mrb[0].mxu0 %v3998
      %v4129 = vpop.f32.mrb[0].mxu0
      %v4130 = vadd.f32 0.0, %v4129
      %v4131 = vpop.f32.mrb[0].mxu0
      %4132 = vmatprep.mubr.f32.mxu0 0.0
      %4133 = vmatmul.mubr.f32.gmra.mrb[0].mxu0 %v3999
      %v4134 = vpop.f32.mrb[0].mxu0
      %v4135 = vadd.f32 0.0, %v4134
      %v4136 = vpop.f32.mrb[0].mxu0
      %4137 = vmatprep.mubr.f32.mxu0 0.0
      %4138 = vmatmul.mubr.f32.gmra.mrb[0].mxu0 %v4000
      %v4139 = vpop.f32.mrb[0].mxu0
      %v4140 = vadd.f32 0.0, %v4139
      %v4141 = vpop.f32.mrb[0].mxu0
      %4142 = vmatprep.mubr.f32.mxu0 0.0
      %4143 = vmatmul.mubr.f32.gmra.mrb[0].mxu0 %v4001
      %v4144 = vpop.f32.mrb[0].mxu0
      %v4145 = vadd.f32 0.0, %v4144
      %v4146 = vpop.f32.mrb[0].mxu0
      %4147 = vmatprep.mubr.f32.mxu0 0.0
      %4148 = vmatmul.mubr.f32.gmra.mrb[0].mxu0 %v4002
      %v4149 = vpop.f32.mrb[0].mxu0
      %v4150 = vadd.f32 0.0, %v4149
      %v4151 = vpop.f32.mrb[0].mxu0
      %4152 = vmatprep.mubr.f32.mxu0 0.0
      %4153 = vmatmul.mubr.f32.gmra.mrb[0].mxu0 %v4003
      %v4154 = vpop.f32.mrb[0].mxu0
      %v4155 = vadd.f32 0.0, %v4154
      %v4156 = vpop.f32.mrb[0].mxu0
      %4157 = vmatprep.mubr.f32.mxu0 0.0
      %4158 = vmatmul.mubr.f32.gmra.mrb[0].mxu0 %v4004
      %v4159 = vpop.f32.mrb[0].mxu0
      %v4160 = vadd.f32 0.0, %v4159
      %v4161 = vpop.f32.mrb[0].mxu0
      %4162 = vmatprep.mubr.f32.mxu0 0.0
      %4163 = vmatmul.mubr.f32.gmra.mrb[0].mxu0 %v4005
      %v4164 = vpop.f32.mrb[0].mxu0
      %v4165 = vadd.f32 0.0, %v4164
      %v4166 = vpop.f32.mrb[0].mxu0
      %4167 = vmatprep.mubr.f32.mxu0 0.0
      %4168 = vmatmul.mubr.f32.gmra.mrb[0].mxu0 %v4006
      %v4169 = vpop.f32.mrb[0].mxu0
      %v4170 = vadd.f32 0.0, %v4169
      %v4171 = vpop.f32.mrb[0].mxu0
      %4172 = vmatprep.mubr.f32.mxu0 0.0
      %4173 = vmatmul.mubr.f32.gmra.mrb[0].mxu0 %v4007
      %v4174 = vpop.f32.mrb[0].mxu0
      %v4175 = vadd.f32 0.0, %v4174
      %v4176 = vpop.f32.mrb[0].mxu0
      %4177 = vmatprep.mubr.f32.mxu0 0.0
      %4178 = vmatmul.mubr.f32.gmra.mrb[0].mxu0 %v4008
      %v4179 = vpop.f32.mrb[0].mxu0
      %v4180 = vadd.f32 0.0, %v4179
      %v4181 = vpop.f32.mrb[0].mxu0
      %4182 = vmatprep.mubr.f32.mxu0 0.0
      %4183 = vmatmul.mubr.f32.gmra.mrb[0].mxu0 %v4009
      %v4184 = vpop.f32.mrb[0].mxu0
      %v4185 = vadd.f32 0.0, %v4184
      %v4186 = vpop.f32.mrb[0].mxu0
      %4187 = vmatprep.mubr.f32.mxu0 0.0
      %4188 = vmatmul.mubr.f32.gmra.mrb[0].mxu0 %v4010
      %v4189 = vpop.f32.mrb[0].mxu0
      %v4190 = vadd.f32 0.0, %v4189
      %v4191 = vpop.f32.mrb[0].mxu0
      %4192 = vmatprep.mubr.f32.mxu0 0.0
      %4193 = vmatmul.mubr.f32.gmra.mrb[0].mxu0 %v4011
      %v4194 = vpop.f32.mrb[0].mxu0
      %v4195 = vadd.f32 0.0, %v4194
      %v4196 = vpop.f32.mrb[0].mxu0
      %4197 = vmatprep.mubr.f32.mxu0 0.0
      %4198 = vmatmul.mubr.f32.gmra.mrb[0].mxu0 %v4012
      %v4199 = vpop.f32.mrb[0].mxu0
      %v4200 = vadd.f32 0.0, %v4199
      %v4201 = vpop.f32.mrb[0].mxu0
      %4202 = vmatprep.mubr.f32.mxu0 0.0
      %4203 = vmatmul.mubr.f32.gmra.mrb[0].mxu0 %v4013
      %v4204 = vpop.f32.mrb[0].mxu0
      %v4205 = vadd.f32 0.0, %v4204
      %v4206 = vpop.f32.mrb[0].mxu0
      %4207 = vmatprep.mubr.f32.mxu0 0.0
      %4208 = vmatmul.mubr.f32.gmra.mrb[0].mxu0 %v4014
      %v4209 = vpop.f32.mrb[0].mxu0
      %v4210 = vadd.f32 0.0, %v4209
      %v4211 = vpop.f32.mrb[0].mxu0
      %4212 = vmatprep.mubr.f32.mxu0 0.0
      %4213 = vmatmul.mubr.f32.gmra.mrb[0].mxu0 %v4015
      %v4214 = vpop.f32.mrb[0].mxu0
      %v4215 = vadd.f32 0.0, %v4214
      %v4216 = vpop.f32.mrb[0].mxu0
      %4217 = vmatprep.mubr.f32.mxu0 0.0
      %4218 = vmatmul.mubr.f32.gmra.mrb[0].mxu0 %v4016
      %v4219 = vpop.f32.mrb[0].mxu0
      %v4220 = vadd.f32 0.0, %v4219
      %v4221 = vpop.f32.mrb[0].mxu0
      %4222 = vmatprep.mubr.f32.mxu0 0.0
      %4223 = vmatmul.mubr.f32.gmra.mrb[0].mxu0 %v4017
      %v4224 = vpop.f32.mrb[0].mxu0
      %v4225 = vadd.f32 0.0, %v4224
      %v4226 = vpop.f32.mrb[0].mxu0
      %4227 = vmatprep.mubr.f32.mxu0 0.0
      %4228 = vmatmul.mubr.f32.gmra.mrb[0].mxu0 %v4018
      %v4229 = vpop.f32.mrb[0].mxu0
      %v4230 = vadd.f32 0.0, %v4229
      %v4231 = vpop.f32.mrb[0].mxu0
      %4232 = vmatprep.mubr.f32.mxu0 0.0
      %4233 = vmatmul.mubr.f32.gmra.mrb[0].mxu0 %v4019
      %v4234 = vpop.f32.mrb[0].mxu0
      %v4235 = vadd.f32 0.0, %v4234
      %v4236 = vpop.f32.mrb[0].mxu0
      %4237 = vmatprep.mubr.f32.mxu0 0.0
      %4238 = vmatmul.mubr.f32.gmra.mrb[0].mxu0 %v4020
      %v4239 = vpop.f32.mrb[0].mxu0
      %v4240 = vadd.f32 0.0, %v4239
      %v4241 = vpop.f32.mrb[0].mxu0
      %4242 = vmatprep.mubr.f32.mxu0 0.0
      %4243 = vmatmul.mubr.f32.gmra.mrb[0].mxu0 %v4021
      %v4244 = vpop.f32.mrb[0].mxu0
      %v4245 = vadd.f32 0.0, %v4244
      %v4246 = vpop.f32.mrb[0].mxu0
      %4247 = vmatprep.mubr.f32.mxu0 0.0
      %4248 = vmatmul.mubr.f32.gmra.mrb[0].mxu0 %v4022
      %v4249 = vpop.f32.mrb[0].mxu0
      %v4250 = vadd.f32 0.0, %v4249
      %v4251 = vpop.f32.mrb[0].mxu0
      %4252 = vmatprep.mubr.f32.mxu0 0.0
      %4253 = vmatmul.mubr.f32.gmra.mrb[0].mxu0 %v4023
      %v4254 = vpop.f32.mrb[0].mxu0
      %v4255 = vadd.f32 0.0, %v4254
      %v4256 = vpop.f32.mrb[0].mxu0
      %4257 = vmatprep.mubr.f32.mxu0 0.0
      %4258 = vmatmul.mubr.f32.gmra.mrb[0].mxu0 %v4024
      %v4259 = vpop.f32.mrb[0].mxu0
      %v4260 = vadd.f32 0.0, %v4259
      %v4261 = vpop.f32.mrb[0].mxu0
      %4262 = vmatprep.mubr.f32.mxu0 0.0
      %4263 = vmatmul.mubr.f32.gmra.mrb[0].mxu0 %v4025
      %v4264 = vpop.f32.mrb[0].mxu0
      %v4265 = vadd.f32 0.0, %v4264
      %v4266 = vpop.f32.mrb[0].mxu0
      %4267 = vdwg.mxu0
      %4268 = vmatprep.subr.mxu0 0.0
      %4269 = vmatpush1.msra.mxu0 %v3978
      %4270 = vmatprep.subr.mxu0 0.0
      %4271 = vmatpush1.msra.mxu0 %v3979
      %4272 = vmatprep.subr.mxu0 0.0
      %4273 = vmatpush1.msra.mxu0 %v3980
      %4274 = vmatprep.subr.mxu0 0.0
      %4275 = vmatpush1.msra.mxu0 %v3981
      %4276 = vmatprep.subr.mxu0 0.0
      %4277 = vmatpush1.msra.mxu0 %v3982
      %4278 = vmatprep.subr.mxu0 0.0
      %4279 = vmatpush1.msra.mxu0 %v3983
      %4280 = vmatprep.subr.mxu0 0.0
      %4281 = vmatpush1.msra.mxu0 %v3984
      %4282 = vmatprep.subr.mxu0 0.0
      %4283 = vmatpush1.msra.mxu0 %v3985
      %4284 = vmatprep.subr.mxu0 0.0
      %4285 = vmatpush1.msra.mxu0 %v3986
      %4286 = vmatprep.subr.mxu0 0.0
      %4287 = vmatpush1.msra.mxu0 %v3987
      %4288 = vmatprep.subr.mxu0 0.0
      %4289 = vmatpush1.msra.mxu0 %v3988
      %4290 = vmatprep.subr.mxu0 0.0
      %4291 = vmatpush1.msra.mxu0 %v3989
      %4292 = vmatprep.subr.mxu0 0.0
      %4293 = vmatpush1.msra.mxu0 %v3990
      %4294 = vmatprep.subr.mxu0 0.0
      %4295 = vmatpush1.msra.mxu0 %v3991
      %4296 = vmatprep.subr.mxu0 0.0
      %4297 = vmatpush1.msra.mxu0 %v3992
      %4298 = vmatprep.subr.mxu0 0.0
      %4299 = vmatpush1.msra.mxu0 %v3993
      %4300 = vmatprep.subr.mxu0 0.0
      %4301 = vmatpush1.msra.mxu0 0.0
      %4302 = vmatprep.subr.mxu0 0.0
      %4303 = vmatpush1.msra.mxu0 0.0
      %4304 = vmatprep.subr.mxu0 0.0
      %4305 = vmatpush1.msra.mxu0 0.0
      %4306 = vmatprep.subr.mxu0 0.0
      %4307 = vmatpush1.msra.mxu0 0.0
      %4308 = vmatprep.subr.mxu0 0.0
      %4309 = vmatpush1.msra.mxu0 0.0
      %4310 = vmatprep.subr.mxu0 0.0
      %4311 = vmatpush1.msra.mxu0 0.0
      %4312 = vmatprep.subr.mxu0 0.0
      %4313 = vmatpush1.msra.mxu0 0.0
      %4314 = vmatprep.subr.mxu0 0.0
      %4315 = vmatpush1.msra.mxu0 0.0
      %4316 = vmatprep.subr.mxu0 0.0
      %4317 = vmatpush1.msra.mxu0 0.0
      %4318 = vmatprep.subr.mxu0 0.0
      %4319 = vmatpush1.msra.mxu0 0.0
      %4320 = vmatprep.subr.mxu0 0.0
      %4321 = vmatpush1.msra.mxu0 0.0
      %4322 = vmatprep.subr.mxu0 0.0
      %4323 = vmatpush1.msra.mxu0 0.0
      %4324 = vmatprep.subr.mxu0 0.0
      %4325 = vmatpush1.msra.mxu0 0.0
      %4326 = vmatprep.subr.mxu0 0.0
      %4327 = vmatpush1.msra.mxu0 0.0
      %4328 = vmatprep.subr.mxu0 0.0
      %4329 = vmatpush1.msra.mxu0 0.0
      %4330 = vmatprep.subr.mxu0 0.0
      %4331 = vmatpush1.msra.mxu0 0.0
      %4332 = vmatprep.mubr.f32.mxu0 0.0
      %4333 = vmatmul.mubr.f32.gmra.mrb[0].mxu0 %v3946
      %v4334 = vpop.f32.mrb[0].mxu0
      %v4335 = vadd.f32 %v4110, %v4334
      %v4336 = vpop.f32.mrb[0].mxu0
      %4337 = vmatprep.mubr.f32.mxu0 0.0
      %4338 = vmatmul.mubr.f32.gmra.mrb[0].mxu0 %v3947
      %v4339 = vpop.f32.mrb[0].mxu0
      %v4340 = vadd.f32 %v4115, %v4339
      %v4341 = vpop.f32.mrb[0].mxu0
      %4342 = vmatprep.mubr.f32.mxu0 0.0
      %4343 = vmatmul.mubr.f32.gmra.mrb[0].mxu0 %v3948
      %v4344 = vpop.f32.mrb[0].mxu0
      %v4345 = vadd.f32 %v4120, %v4344
      %v4346 = vpop.f32.mrb[0].mxu0
      %4347 = vmatprep.mubr.f32.mxu0 0.0
      %4348 = vmatmul.mubr.f32.gmra.mrb[0].mxu0 %v3949
      %v4349 = vpop.f32.mrb[0].mxu0
      %v4350 = vadd.f32 %v4125, %v4349
      %v4351 = vpop.f32.mrb[0].mxu0
      %4352 = vmatprep.mubr.f32.mxu0 0.0
      %4353 = vmatmul.mubr.f32.gmra.mrb[0].mxu0 %v3950
      %v4354 = vpop.f32.mrb[0].mxu0
      %v4355 = vadd.f32 %v4130, %v4354
      %v4356 = vpop.f32.mrb[0].mxu0
      %4357 = vmatprep.mubr.f32.mxu0 0.0
      %4358 = vmatmul.mubr.f32.gmra.mrb[0].mxu0 %v3951
      %v4359 = vpop.f32.mrb[0].mxu0
      %v4360 = vadd.f32 %v4135, %v4359
      %v4361 = vpop.f32.mrb[0].mxu0
      %4362 = vmatprep.mubr.f32.mxu0 0.0
      %4363 = vmatmul.mubr.f32.gmra.mrb[0].mxu0 %v3952
      %v4364 = vpop.f32.mrb[0].mxu0
      %v4365 = vadd.f32 %v4140, %v4364
      %v4366 = vpop.f32.mrb[0].mxu0
      %4367 = vmatprep.mubr.f32.mxu0 0.0
      %4368 = vmatmul.mubr.f32.gmra.mrb[0].mxu0 %v3953
      %v4369 = vpop.f32.mrb[0].mxu0
      %v4370 = vadd.f32 %v4145, %v4369
      %v4371 = vpop.f32.mrb[0].mxu0
      %4372 = vmatprep.mubr.f32.mxu0 0.0
      %4373 = vmatmul.mubr.f32.gmra.mrb[0].mxu0 %v3954
      %v4374 = vpop.f32.mrb[0].mxu0
      %v4375 = vadd.f32 %v4150, %v4374
      %v4376 = vpop.f32.mrb[0].mxu0
      %4377 = vmatprep.mubr.f32.mxu0 0.0
      %4378 = vmatmul.mubr.f32.gmra.mrb[0].mxu0 %v3955
      %v4379 = vpop.f32.mrb[0].mxu0
      %v4380 = vadd.f32 %v4155, %v4379
      %v4381 = vpop.f32.mrb[0].mxu0
      %4382 = vmatprep.mubr.f32.mxu0 0.0
      %4383 = vmatmul.mubr.f32.gmra.mrb[0].mxu0 %v3956
      %v4384 = vpop.f32.mrb[0].mxu0
      %v4385 = vadd.f32 %v4160, %v4384
      %v4386 = vpop.f32.mrb[0].mxu0
      %4387 = vmatprep.mubr.f32.mxu0 0.0
      %4388 = vmatmul.mubr.f32.gmra.mrb[0].mxu0 %v3957
      %v4389 = vpop.f32.mrb[0].mxu0
      %v4390 = vadd.f32 %v4165, %v4389
      %v4391 = vpop.f32.mrb[0].mxu0
      %4392 = vmatprep.mubr.f32.mxu0 0.0
      %4393 = vmatmul.mubr.f32.gmra.mrb[0].mxu0 %v3958
      %v4394 = vpop.f32.mrb[0].mxu0
      %v4395 = vadd.f32 %v4170, %v4394
      %v4396 = vpop.f32.mrb[0].mxu0
      %4397 = vmatprep.mubr.f32.mxu0 0.0
      %4398 = vmatmul.mubr.f32.gmra.mrb[0].mxu0 %v3959
      %v4399 = vpop.f32.mrb[0].mxu0
      %v4400 = vadd.f32 %v4175, %v4399
      %v4401 = vpop.f32.mrb[0].mxu0
      %4402 = vmatprep.mubr.f32.mxu0 0.0
      %4403 = vmatmul.mubr.f32.gmra.mrb[0].mxu0 %v3960
      %v4404 = vpop.f32.mrb[0].mxu0
      %v4405 = vadd.f32 %v4180, %v4404
      %v4406 = vpop.f32.mrb[0].mxu0
      %4407 = vmatprep.mubr.f32.mxu0 0.0
      %4408 = vmatmul.mubr.f32.gmra.mrb[0].mxu0 %v3961
      %v4409 = vpop.f32.mrb[0].mxu0
      %v4410 = vadd.f32 %v4185, %v4409
      %v4411 = vpop.f32.mrb[0].mxu0
      %4412 = vmatprep.mubr.f32.mxu0 0.0
      %4413 = vmatmul.mubr.f32.gmra.mrb[0].mxu0 %v3962
      %v4414 = vpop.f32.mrb[0].mxu0
      %v4415 = vadd.f32 %v4190, %v4414
      %v4416 = vpop.f32.mrb[0].mxu0
      %4417 = vmatprep.mubr.f32.mxu0 0.0
      %4418 = vmatmul.mubr.f32.gmra.mrb[0].mxu0 %v3963
      %v4419 = vpop.f32.mrb[0].mxu0
      %v4420 = vadd.f32 %v4195, %v4419
      %v4421 = vpop.f32.mrb[0].mxu0
      %4422 = vmatprep.mubr.f32.mxu0 0.0
      %4423 = vmatmul.mubr.f32.gmra.mrb[0].mxu0 %v3964
      %v4424 = vpop.f32.mrb[0].mxu0
      %v4425 = vadd.f32 %v4200, %v4424
      %v4426 = vpop.f32.mrb[0].mxu0
      %4427 = vmatprep.mubr.f32.mxu0 0.0
      %4428 = vmatmul.mubr.f32.gmra.mrb[0].mxu0 %v3965
      %v4429 = vpop.f32.mrb[0].mxu0
      %v4430 = vadd.f32 %v4205, %v4429
      %v4431 = vpop.f32.mrb[0].mxu0
      %4432 = vmatprep.mubr.f32.mxu0 0.0
      %4433 = vmatmul.mubr.f32.gmra.mrb[0].mxu0 %v3966
      %v4434 = vpop.f32.mrb[0].mxu0
      %v4435 = vadd.f32 %v4210, %v4434
      %v4436 = vpop.f32.mrb[0].mxu0
      %4437 = vmatprep.mubr.f32.mxu0 0.0
      %4438 = vmatmul.mubr.f32.gmra.mrb[0].mxu0 %v3967
      %v4439 = vpop.f32.mrb[0].mxu0
      %v4440 = vadd.f32 %v4215, %v4439
      %v4441 = vpop.f32.mrb[0].mxu0
      %4442 = vmatprep.mubr.f32.mxu0 0.0
      %4443 = vmatmul.mubr.f32.gmra.mrb[0].mxu0 %v3968
      %v4444 = vpop.f32.mrb[0].mxu0
      %v4445 = vadd.f32 %v4220, %v4444
      %v4446 = vpop.f32.mrb[0].mxu0
      %4447 = vmatprep.mubr.f32.mxu0 0.0
      %4448 = vmatmul.mubr.f32.gmra.mrb[0].mxu0 %v3969
      %v4449 = vpop.f32.mrb[0].mxu0
      %v4450 = vadd.f32 %v4225, %v4449
      %v4451 = vpop.f32.mrb[0].mxu0
      %4452 = vmatprep.mubr.f32.mxu0 0.0
      %4453 = vmatmul.mubr.f32.gmra.mrb[0].mxu0 %v3970
      %v4454 = vpop.f32.mrb[0].mxu0
      %v4455 = vadd.f32 %v4230, %v4454
      %v4456 = vpop.f32.mrb[0].mxu0
      %4457 = vmatprep.mubr.f32.mxu0 0.0
      %4458 = vmatmul.mubr.f32.gmra.mrb[0].mxu0 %v3971
      %v4459 = vpop.f32.mrb[0].mxu0
      %v4460 = vadd.f32 %v4235, %v4459
      %v4461 = vpop.f32.mrb[0].mxu0
      %4462 = vmatprep.mubr.f32.mxu0 0.0
      %4463 = vmatmul.mubr.f32.gmra.mrb[0].mxu0 %v3972
      %v4464 = vpop.f32.mrb[0].mxu0
      %v4465 = vadd.f32 %v4240, %v4464
      %v4466 = vpop.f32.mrb[0].mxu0
      %4467 = vmatprep.mubr.f32.mxu0 0.0
      %4468 = vmatmul.mubr.f32.gmra.mrb[0].mxu0 %v3973
      %v4469 = vpop.f32.mrb[0].mxu0
      %v4470 = vadd.f32 %v4245, %v4469
      %v4471 = vpop.f32.mrb[0].mxu0
      %4472 = vmatprep.mubr.f32.mxu0 0.0
      %4473 = vmatmul.mubr.f32.gmra.mrb[0].mxu0 %v3974
      %v4474 = vpop.f32.mrb[0].mxu0
      %v4475 = vadd.f32 %v4250, %v4474
      %v4476 = vpop.f32.mrb[0].mxu0
      %4477 = vmatprep.mubr.f32.mxu0 0.0
      %4478 = vmatmul.mubr.f32.gmra.mrb[0].mxu0 %v3975
      %v4479 = vpop.f32.mrb[0].mxu0
      %v4480 = vadd.f32 %v4255, %v4479
      %v4481 = vpop.f32.mrb[0].mxu0
      %4482 = vmatprep.mubr.f32.mxu0 0.0
      %4483 = vmatmul.mubr.f32.gmra.mrb[0].mxu0 %v3976
      %v4484 = vpop.f32.mrb[0].mxu0
      %v4485 = vadd.f32 %v4260, %v4484
      %v4486 = vpop.f32.mrb[0].mxu0
      %4487 = vmatprep.mubr.f32.mxu0 0.0
      %4488 = vmatmul.mubr.f32.gmra.mrb[0].mxu0 %v3977
      %v4489 = vpop.f32.mrb[0].mxu0
      %v4490 = vadd.f32 %v4265, %v4489
      %v4491 = vpop.f32.mrb[0].mxu0
      %4492 = vdwg.mxu0
      %v4493 = vld [vmem:[#allocation3 + $0x6] sm:$0xff]
      %v4494 = vld [vmem:[#allocation3 + $0xe] sm:$0xff]
      %v4495 = vld [vmem:[#allocation3 + $0x1e] sm:$0xff]
      %v4496 = vld [vmem:[#allocation3 + $0x26] sm:$0xff]
      %v4497 = vld [vmem:[#allocation3 + $0x36] sm:$0xff]
      %v4498 = vld [vmem:[#allocation3 + $0x3e] sm:$0xff]
      %v4499 = vld [vmem:[#allocation3 + $0x4e] sm:$0xff]
      %v4500 = vld [vmem:[#allocation3 + $0x56] sm:$0xff]
      %v4501 = vld [vmem:[#allocation3 + $0x66] sm:$0xff]
      %v4502 = vld [vmem:[#allocation3 + $0x6e] sm:$0xff]
      %v4503 = vld [vmem:[#allocation3 + $0x7e] sm:$0xff]
      %v4504 = vld [vmem:[#allocation3 + $0x86] sm:$0xff]
      %v4505 = vld [vmem:[#allocation3 + $0x96] sm:$0xff]
      %v4506 = vld [vmem:[#allocation3 + $0x9e] sm:$0xff]
      %v4507 = vld [vmem:[#allocation3 + $0xae] sm:$0xff]
      %v4508 = vld [vmem:[#allocation3 + $0xb6] sm:$0xff]
      %v4509 = vld [vmem:[#allocation3 + $0xc6] sm:$0xff]
      %v4510 = vld [vmem:[#allocation3 + $0xce] sm:$0xff]
      %v4511 = vld [vmem:[#allocation3 + $0xde] sm:$0xff]
      %v4512 = vld [vmem:[#allocation3 + $0xe6] sm:$0xff]
      %v4513 = vld [vmem:[#allocation3 + $0xf6] sm:$0xff]
      %v4514 = vld [vmem:[#allocation3 + $0xfe] sm:$0xff]
      %v4515 = vld [vmem:[#allocation3 + $0x10e] sm:$0xff]
      %v4516 = vld [vmem:[#allocation3 + $0x116] sm:$0xff]
      %v4517 = vld [vmem:[#allocation3 + $0x126] sm:$0xff]
      %v4518 = vld [vmem:[#allocation3 + $0x12e] sm:$0xff]
      %v4519 = vld [vmem:[#allocation3 + $0x13e] sm:$0xff]
      %v4520 = vld [vmem:[#allocation3 + $0x146] sm:$0xff]
      %v4521 = vld [vmem:[#allocation3 + $0x156] sm:$0xff]
      %v4522 = vld [vmem:[#allocation3 + $0x15e] sm:$0xff]
      %v4523 = vld [vmem:[#allocation3 + $0x16e] sm:$0xff]
      %v4524 = vld [vmem:[#allocation3 + $0x176] sm:$0xff]
      %s4525 = scalar_lea.vmem %s3, 256
      %v4526 = vld [vmem:[%s4525] sm:$0xff]
      %v4527 = vld [vmem:[%s4525 + $0x8] sm:$0xff]
      %v4528 = vld [vmem:[%s4525 + $0x10] sm:$0xff]
      %v4529 = vld [vmem:[%s4525 + $0x18] sm:$0xff]
      %v4530 = vld [vmem:[%s4525 + $0x20] sm:$0xff]
      %v4531 = vld [vmem:[%s4525 + $0x28] sm:$0xff]
      %v4532 = vld [vmem:[%s4525 + $0x30] sm:$0xff]
      %v4533 = vld [vmem:[%s4525 + $0x38] sm:$0xff]
      %v4534 = vld [vmem:[%s4525 + $0x40] sm:$0xff]
      %v4535 = vld [vmem:[%s4525 + $0x48] sm:$0xff]
      %v4536 = vld [vmem:[%s4525 + $0x50] sm:$0xff]
      %v4537 = vld [vmem:[%s4525 + $0x58] sm:$0xff]
      %v4538 = vld [vmem:[%s4525 + $0x60] sm:$0xff]
      %v4539 = vld [vmem:[%s4525 + $0x68] sm:$0xff]
      %v4540 = vld [vmem:[%s4525 + $0x70] sm:$0xff]
      %v4541 = vld [vmem:[%s4525 + $0x78] sm:$0xff]
      %4542 = vmatprep.subr.mxu0 0.0
      %4543 = vmatpush1.msra.mxu0 %v4526
      %4544 = vmatprep.subr.mxu0 0.0
      %4545 = vmatpush1.msra.mxu0 %v4527
      %4546 = vmatprep.subr.mxu0 0.0
      %4547 = vmatpush1.msra.mxu0 %v4528
      %4548 = vmatprep.subr.mxu0 0.0
      %4549 = vmatpush1.msra.mxu0 %v4529
      %4550 = vmatprep.subr.mxu0 0.0
      %4551 = vmatpush1.msra.mxu0 %v4530
      %4552 = vmatprep.subr.mxu0 0.0
      %4553 = vmatpush1.msra.mxu0 %v4531
      %4554 = vmatprep.subr.mxu0 0.0
      %4555 = vmatpush1.msra.mxu0 %v4532
      %4556 = vmatprep.subr.mxu0 0.0
      %4557 = vmatpush1.msra.mxu0 %v4533
      %4558 = vmatprep.subr.mxu0 0.0
      %4559 = vmatpush1.msra.mxu0 %v4534
      %4560 = vmatprep.subr.mxu0 0.0
      %4561 = vmatpush1.msra.mxu0 %v4535
      %4562 = vmatprep.subr.mxu0 0.0
      %4563 = vmatpush1.msra.mxu0 %v4536
      %4564 = vmatprep.subr.mxu0 0.0
      %4565 = vmatpush1.msra.mxu0 %v4537
      %4566 = vmatprep.subr.mxu0 0.0
      %4567 = vmatpush1.msra.mxu0 %v4538
      %4568 = vmatprep.subr.mxu0 0.0
      %4569 = vmatpush1.msra.mxu0 %v4539
      %4570 = vmatprep.subr.mxu0 0.0
      %4571 = vmatpush1.msra.mxu0 %v4540
      %4572 = vmatprep.subr.mxu0 0.0
      %4573 = vmatpush1.msra.mxu0 %v4541
      %4574 = vmatprep.subr.mxu0 0.0
      %4575 = vmatpush1.msra.mxu0 0.0
      %4576 = vmatprep.subr.mxu0 0.0
      %4577 = vmatpush1.msra.mxu0 0.0
      %4578 = vmatprep.subr.mxu0 0.0
      %4579 = vmatpush1.msra.mxu0 0.0
      %4580 = vmatprep.subr.mxu0 0.0
      %4581 = vmatpush1.msra.mxu0 0.0
      %4582 = vmatprep.subr.mxu0 0.0
      %4583 = vmatpush1.msra.mxu0 0.0
      %4584 = vmatprep.subr.mxu0 0.0
      %4585 = vmatpush1.msra.mxu0 0.0
      %4586 = vmatprep.subr.mxu0 0.0
      %4587 = vmatpush1.msra.mxu0 0.0
      %4588 = vmatprep.subr.mxu0 0.0
      %4589 = vmatpush1.msra.mxu0 0.0
      %4590 = vmatprep.subr.mxu0 0.0
      %4591 = vmatpush1.msra.mxu0 0.0
      %4592 = vmatprep.subr.mxu0 0.0
      %4593 = vmatpush1.msra.mxu0 0.0
      %4594 = vmatprep.subr.mxu0 0.0
      %4595 = vmatpush1.msra.mxu0 0.0
      %4596 = vmatprep.subr.mxu0 0.0
      %4597 = vmatpush1.msra.mxu0 0.0
      %4598 = vmatprep.subr.mxu0 0.0
      %4599 = vmatpush1.msra.mxu0 0.0
      %4600 = vmatprep.subr.mxu0 0.0
      %4601 = vmatpush1.msra.mxu0 0.0
      %4602 = vmatprep.subr.mxu0 0.0
      %4603 = vmatpush1.msra.mxu0 0.0
      %4604 = vmatprep.subr.mxu0 0.0
      %4605 = vmatpush1.msra.mxu0 0.0
      %4606 = vmatprep.mubr.f32.mxu0 0.0
      %4607 = vmatmul.mubr.f32.gmra.mrb[0].mxu0 %v4493
      %v4608 = vpop.f32.mrb[0].mxu0
      %v4609 = vadd.f32 0.0, %v4608
      %v4610 = vpop.f32.mrb[0].mxu0
      %4611 = vmatprep.mubr.f32.mxu0 0.0
      %4612 = vmatmul.mubr.f32.gmra.mrb[0].mxu0 %v4494
      %v4613 = vpop.f32.mrb[0].mxu0
      %v4614 = vadd.f32 0.0, %v4613
      %v4615 = vpop.f32.mrb[0].mxu0
      %4616 = vmatprep.mubr.f32.mxu0 0.0
      %4617 = vmatmul.mubr.f32.gmra.mrb[0].mxu0 %v4495
      %v4618 = vpop.f32.mrb[0].mxu0
      %v4619 = vadd.f32 0.0, %v4618
      %v4620 = vpop.f32.mrb[0].mxu0
      %4621 = vmatprep.mubr.f32.mxu0 0.0
      %4622 = vmatmul.mubr.f32.gmra.mrb[0].mxu0 %v4496
      %v4623 = vpop.f32.mrb[0].mxu0
      %v4624 = vadd.f32 0.0, %v4623
      %v4625 = vpop.f32.mrb[0].mxu0
      %4626 = vmatprep.mubr.f32.mxu0 0.0
      %4627 = vmatmul.mubr.f32.gmra.mrb[0].mxu0 %v4497
      %v4628 = vpop.f32.mrb[0].mxu0
      %v4629 = vadd.f32 0.0, %v4628
      %v4630 = vpop.f32.mrb[0].mxu0
      %4631 = vmatprep.mubr.f32.mxu0 0.0
      %4632 = vmatmul.mubr.f32.gmra.mrb[0].mxu0 %v4498
      %v4633 = vpop.f32.mrb[0].mxu0
      %v4634 = vadd.f32 0.0, %v4633
      %v4635 = vpop.f32.mrb[0].mxu0
      %4636 = vmatprep.mubr.f32.mxu0 0.0
      %4637 = vmatmul.mubr.f32.gmra.mrb[0].mxu0 %v4499
      %v4638 = vpop.f32.mrb[0].mxu0
      %v4639 = vadd.f32 0.0, %v4638
      %v4640 = vpop.f32.mrb[0].mxu0
      %4641 = vmatprep.mubr.f32.mxu0 0.0
      %4642 = vmatmul.mubr.f32.gmra.mrb[0].mxu0 %v4500
      %v4643 = vpop.f32.mrb[0].mxu0
      %v4644 = vadd.f32 0.0, %v4643
      %v4645 = vpop.f32.mrb[0].mxu0
      %4646 = vmatprep.mubr.f32.mxu0 0.0
      %4647 = vmatmul.mubr.f32.gmra.mrb[0].mxu0 %v4501
      %v4648 = vpop.f32.mrb[0].mxu0
      %v4649 = vadd.f32 0.0, %v4648
      %v4650 = vpop.f32.mrb[0].mxu0
      %4651 = vmatprep.mubr.f32.mxu0 0.0
      %4652 = vmatmul.mubr.f32.gmra.mrb[0].mxu0 %v4502
      %v4653 = vpop.f32.mrb[0].mxu0
      %v4654 = vadd.f32 0.0, %v4653
      %v4655 = vpop.f32.mrb[0].mxu0
      %4656 = vmatprep.mubr.f32.mxu0 0.0
      %4657 = vmatmul.mubr.f32.gmra.mrb[0].mxu0 %v4503
      %v4658 = vpop.f32.mrb[0].mxu0
      %v4659 = vadd.f32 0.0, %v4658
      %v4660 = vpop.f32.mrb[0].mxu0
      %4661 = vmatprep.mubr.f32.mxu0 0.0
      %4662 = vmatmul.mubr.f32.gmra.mrb[0].mxu0 %v4504
      %v4663 = vpop.f32.mrb[0].mxu0
      %v4664 = vadd.f32 0.0, %v4663
      %v4665 = vpop.f32.mrb[0].mxu0
      %4666 = vmatprep.mubr.f32.mxu0 0.0
      %4667 = vmatmul.mubr.f32.gmra.mrb[0].mxu0 %v4505
      %v4668 = vpop.f32.mrb[0].mxu0
      %v4669 = vadd.f32 0.0, %v4668
      %v4670 = vpop.f32.mrb[0].mxu0
      %4671 = vmatprep.mubr.f32.mxu0 0.0
      %4672 = vmatmul.mubr.f32.gmra.mrb[0].mxu0 %v4506
      %v4673 = vpop.f32.mrb[0].mxu0
      %v4674 = vadd.f32 0.0, %v4673
      %v4675 = vpop.f32.mrb[0].mxu0
      %4676 = vmatprep.mubr.f32.mxu0 0.0
      %4677 = vmatmul.mubr.f32.gmra.mrb[0].mxu0 %v4507
      %v4678 = vpop.f32.mrb[0].mxu0
      %v4679 = vadd.f32 0.0, %v4678
      %v4680 = vpop.f32.mrb[0].mxu0
      %4681 = vmatprep.mubr.f32.mxu0 0.0
      %4682 = vmatmul.mubr.f32.gmra.mrb[0].mxu0 %v4508
      %v4683 = vpop.f32.mrb[0].mxu0
      %v4684 = vadd.f32 0.0, %v4683
      %v4685 = vpop.f32.mrb[0].mxu0
      %4686 = vmatprep.mubr.f32.mxu0 0.0
      %4687 = vmatmul.mubr.f32.gmra.mrb[0].mxu0 %v4509
      %v4688 = vpop.f32.mrb[0].mxu0
      %v4689 = vadd.f32 0.0, %v4688
      %v4690 = vpop.f32.mrb[0].mxu0
      %4691 = vmatprep.mubr.f32.mxu0 0.0
      %4692 = vmatmul.mubr.f32.gmra.mrb[0].mxu0 %v4510
      %v4693 = vpop.f32.mrb[0].mxu0
      %v4694 = vadd.f32 0.0, %v4693
      %v4695 = vpop.f32.mrb[0].mxu0
      %4696 = vmatprep.mubr.f32.mxu0 0.0
      %4697 = vmatmul.mubr.f32.gmra.mrb[0].mxu0 %v4511
      %v4698 = vpop.f32.mrb[0].mxu0
      %v4699 = vadd.f32 0.0, %v4698
      %v4700 = vpop.f32.mrb[0].mxu0
      %4701 = vmatprep.mubr.f32.mxu0 0.0
      %4702 = vmatmul.mubr.f32.gmra.mrb[0].mxu0 %v4512
      %v4703 = vpop.f32.mrb[0].mxu0
      %v4704 = vadd.f32 0.0, %v4703
      %v4705 = vpop.f32.mrb[0].mxu0
      %4706 = vmatprep.mubr.f32.mxu0 0.0
      %4707 = vmatmul.mubr.f32.gmra.mrb[0].mxu0 %v4513
      %v4708 = vpop.f32.mrb[0].mxu0
      %v4709 = vadd.f32 0.0, %v4708
      %v4710 = vpop.f32.mrb[0].mxu0
      %4711 = vmatprep.mubr.f32.mxu0 0.0
      %4712 = vmatmul.mubr.f32.gmra.mrb[0].mxu0 %v4514
      %v4713 = vpop.f32.mrb[0].mxu0
      %v4714 = vadd.f32 0.0, %v4713
      %v4715 = vpop.f32.mrb[0].mxu0
      %4716 = vmatprep.mubr.f32.mxu0 0.0
      %4717 = vmatmul.mubr.f32.gmra.mrb[0].mxu0 %v4515
      %v4718 = vpop.f32.mrb[0].mxu0
      %v4719 = vadd.f32 0.0, %v4718
      %v4720 = vpop.f32.mrb[0].mxu0
      %4721 = vmatprep.mubr.f32.mxu0 0.0
      %4722 = vmatmul.mubr.f32.gmra.mrb[0].mxu0 %v4516
      %v4723 = vpop.f32.mrb[0].mxu0
      %v4724 = vadd.f32 0.0, %v4723
      %v4725 = vpop.f32.mrb[0].mxu0
      %4726 = vmatprep.mubr.f32.mxu0 0.0
      %4727 = vmatmul.mubr.f32.gmra.mrb[0].mxu0 %v4517
      %v4728 = vpop.f32.mrb[0].mxu0
      %v4729 = vadd.f32 0.0, %v4728
      %v4730 = vpop.f32.mrb[0].mxu0
      %4731 = vmatprep.mubr.f32.mxu0 0.0
      %4732 = vmatmul.mubr.f32.gmra.mrb[0].mxu0 %v4518
      %v4733 = vpop.f32.mrb[0].mxu0
      %v4734 = vadd.f32 0.0, %v4733
      %v4735 = vpop.f32.mrb[0].mxu0
      %4736 = vmatprep.mubr.f32.mxu0 0.0
      %4737 = vmatmul.mubr.f32.gmra.mrb[0].mxu0 %v4519
      %v4738 = vpop.f32.mrb[0].mxu0
      %v4739 = vadd.f32 0.0, %v4738
      %v4740 = vpop.f32.mrb[0].mxu0
      %4741 = vmatprep.mubr.f32.mxu0 0.0
      %4742 = vmatmul.mubr.f32.gmra.mrb[0].mxu0 %v4520
      %v4743 = vpop.f32.mrb[0].mxu0
      %v4744 = vadd.f32 0.0, %v4743
      %v4745 = vpop.f32.mrb[0].mxu0
      %4746 = vmatprep.mubr.f32.mxu0 0.0
      %4747 = vmatmul.mubr.f32.gmra.mrb[0].mxu0 %v4521
      %v4748 = vpop.f32.mrb[0].mxu0
      %v4749 = vadd.f32 0.0, %v4748
      %v4750 = vpop.f32.mrb[0].mxu0
      %4751 = vmatprep.mubr.f32.mxu0 0.0
      %4752 = vmatmul.mubr.f32.gmra.mrb[0].mxu0 %v4522
      %v4753 = vpop.f32.mrb[0].mxu0
      %v4754 = vadd.f32 0.0, %v4753
      %v4755 = vpop.f32.mrb[0].mxu0
      %4756 = vmatprep.mubr.f32.mxu0 0.0
      %4757 = vmatmul.mubr.f32.gmra.mrb[0].mxu0 %v4523
      %v4758 = vpop.f32.mrb[0].mxu0
      %v4759 = vadd.f32 0.0, %v4758
      %v4760 = vpop.f32.mrb[0].mxu0
      %4761 = vmatprep.mubr.f32.mxu0 0.0
      %4762 = vmatmul.mubr.f32.gmra.mrb[0].mxu0 %v4524
      %v4763 = vpop.f32.mrb[0].mxu0
      %v4764 = vadd.f32 0.0, %v4763
      %v4765 = vpop.f32.mrb[0].mxu0
      %4766 = vdwg.mxu0
      %v4767 = vadd.f32 %v4335, %v4609
      %v4768 = vadd.f32 %v4340, %v4614
      %v4769 = vadd.f32 %v4345, %v4619
      %v4770 = vadd.f32 %v4350, %v4624
      %v4771 = vadd.f32 %v4355, %v4629
      %v4772 = vadd.f32 %v4360, %v4634
      %v4773 = vadd.f32 %v4365, %v4639
      %v4774 = vadd.f32 %v4370, %v4644
      %v4775 = vadd.f32 %v4375, %v4649
      %v4776 = vadd.f32 %v4380, %v4654
      %v4777 = vadd.f32 %v4385, %v4659
      %v4778 = vadd.f32 %v4390, %v4664
      %v4779 = vadd.f32 %v4395, %v4669
      %v4780 = vadd.f32 %v4400, %v4674
      %v4781 = vadd.f32 %v4405, %v4679
      %v4782 = vadd.f32 %v4410, %v4684
      %v4783 = vadd.f32 %v4415, %v4689
      %v4784 = vadd.f32 %v4420, %v4694
      %v4785 = vadd.f32 %v4425, %v4699
      %v4786 = vadd.f32 %v4430, %v4704
      %v4787 = vadd.f32 %v4435, %v4709
      %v4788 = vadd.f32 %v4440, %v4714
      %v4789 = vadd.f32 %v4445, %v4719
      %v4790 = vadd.f32 %v4450, %v4724
      %v4791 = vadd.f32 %v4455, %v4729
      %v4792 = vadd.f32 %v4460, %v4734
      %v4793 = vadd.f32 %v4465, %v4739
      %v4794 = vadd.f32 %v4470, %v4744
      %v4795 = vadd.f32 %v4475, %v4749
      %v4796 = vadd.f32 %v4480, %v4754
      %v4797 = vadd.f32 %v4485, %v4759
      %v4798 = vadd.f32 %v4490, %v4764
      %v4799 = vld [vmem:[%s3881] sm:$0xff]
      %v4800 = vld [vmem:[%s3881 + $0x8] sm:$0xff]
      %v4801 = vld [vmem:[%s3881 + $0x18] sm:$0xff]
      %v4802 = vld [vmem:[%s3881 + $0x20] sm:$0xff]
      %v4803 = vld [vmem:[%s3881 + $0x30] sm:$0xff]
      %v4804 = vld [vmem:[%s3881 + $0x38] sm:$0xff]
      %v4805 = vld [vmem:[%s3881 + $0x48] sm:$0xff]
      %v4806 = vld [vmem:[%s3881 + $0x50] sm:$0xff]
      %v4807 = vld [vmem:[%s3881 + $0x60] sm:$0xff]
      %v4808 = vld [vmem:[%s3881 + $0x68] sm:$0xff]
      %v4809 = vld [vmem:[%s3881 + $0x78] sm:$0xff]
      %v4810 = vld [vmem:[%s3881 + $0x80] sm:$0xff]
      %v4811 = vld [vmem:[%s3881 + $0x90] sm:$0xff]
      %v4812 = vld [vmem:[%s3881 + $0x98] sm:$0xff]
      %v4813 = vld [vmem:[%s3881 + $0xa8] sm:$0xff]
      %v4814 = vld [vmem:[%s3881 + $0xb0] sm:$0xff]
      %v4815 = vld [vmem:[%s3881 + $0xc0] sm:$0xff]
      %v4816 = vld [vmem:[%s3881 + $0xc8] sm:$0xff]
      %v4817 = vld [vmem:[%s3881 + $0xd8] sm:$0xff]
      %v4818 = vld [vmem:[%s3881 + $0xe0] sm:$0xff]
      %v4819 = vld [vmem:[%s3881 + $0xf0] sm:$0xff]
      %v4820 = vld [vmem:[%s3881 + $0xf8] sm:$0xff]
      %v4821 = vld [vmem:[%s3881 + $0x108] sm:$0xff]
      %v4822 = vld [vmem:[%s3881 + $0x110] sm:$0xff]
      %v4823 = vld [vmem:[%s3881 + $0x120] sm:$0xff]
      %v4824 = vld [vmem:[%s3881 + $0x128] sm:$0xff]
      %v4825 = vld [vmem:[%s3881 + $0x138] sm:$0xff]
      %v4826 = vld [vmem:[%s3881 + $0x140] sm:$0xff]
      %v4827 = vld [vmem:[%s3881 + $0x150] sm:$0xff]
      %v4828 = vld [vmem:[%s3881 + $0x158] sm:$0xff]
      %v4829 = vld [vmem:[%s3881 + $0x168] sm:$0xff]
      %v4830 = vld [vmem:[%s3881 + $0x170] sm:$0xff]
      %s4831 = scalar_lea.vmem %s3, 384
      %v4832 = vld [vmem:[%s4831] sm:$0xff]
      %v4833 = vld [vmem:[%s4831 + $0x8] sm:$0xff]
      %v4834 = vld [vmem:[%s4831 + $0x10] sm:$0xff]
      %v4835 = vld [vmem:[%s4831 + $0x18] sm:$0xff]
      %v4836 = vld [vmem:[%s4831 + $0x20] sm:$0xff]
      %v4837 = vld [vmem:[%s4831 + $0x28] sm:$0xff]
      %v4838 = vld [vmem:[%s4831 + $0x30] sm:$0xff]
      %v4839 = vld [vmem:[%s4831 + $0x38] sm:$0xff]
      %v4840 = vld [vmem:[%s4831 + $0x40] sm:$0xff]
      %v4841 = vld [vmem:[%s4831 + $0x48] sm:$0xff]
      %v4842 = vld [vmem:[%s4831 + $0x50] sm:$0xff]
      %v4843 = vld [vmem:[%s4831 + $0x58] sm:$0xff]
      %v4844 = vld [vmem:[%s4831 + $0x60] sm:$0xff]
      %v4845 = vld [vmem:[%s4831 + $0x68] sm:$0xff]
      %v4846 = vld [vmem:[%s4831 + $0x70] sm:$0xff]
      %v4847 = vld [vmem:[%s4831 + $0x78] sm:$0xff]
      %4848 = vmatprep.subr.mxu0 0.0
      %4849 = vmatpush1.msra.mxu0 %v4832
      %4850 = vmatprep.subr.mxu0 0.0
      %4851 = vmatpush1.msra.mxu0 %v4833
      %4852 = vmatprep.subr.mxu0 0.0
      %4853 = vmatpush1.msra.mxu0 %v4834
      %4854 = vmatprep.subr.mxu0 0.0
      %4855 = vmatpush1.msra.mxu0 %v4835
      %4856 = vmatprep.subr.mxu0 0.0
      %4857 = vmatpush1.msra.mxu0 %v4836
      %4858 = vmatprep.subr.mxu0 0.0
      %4859 = vmatpush1.msra.mxu0 %v4837
      %4860 = vmatprep.subr.mxu0 0.0
      %4861 = vmatpush1.msra.mxu0 %v4838
      %4862 = vmatprep.subr.mxu0 0.0
      %4863 = vmatpush1.msra.mxu0 %v4839
      %4864 = vmatprep.subr.mxu0 0.0
      %4865 = vmatpush1.msra.mxu0 %v4840
      %4866 = vmatprep.subr.mxu0 0.0
      %4867 = vmatpush1.msra.mxu0 %v4841
      %4868 = vmatprep.subr.mxu0 0.0
      %4869 = vmatpush1.msra.mxu0 %v4842
      %4870 = vmatprep.subr.mxu0 0.0
      %4871 = vmatpush1.msra.mxu0 %v4843
      %4872 = vmatprep.subr.mxu0 0.0
      %4873 = vmatpush1.msra.mxu0 %v4844
      %4874 = vmatprep.subr.mxu0 0.0
      %4875 = vmatpush1.msra.mxu0 %v4845
      %4876 = vmatprep.subr.mxu0 0.0
      %4877 = vmatpush1.msra.mxu0 %v4846
      %4878 = vmatprep.subr.mxu0 0.0
      %4879 = vmatpush1.msra.mxu0 %v4847
      %4880 = vmatprep.subr.mxu0 0.0
      %4881 = vmatpush1.msra.mxu0 0.0
      %4882 = vmatprep.subr.mxu0 0.0
      %4883 = vmatpush1.msra.mxu0 0.0
      %4884 = vmatprep.subr.mxu0 0.0
      %4885 = vmatpush1.msra.mxu0 0.0
      %4886 = vmatprep.subr.mxu0 0.0
      %4887 = vmatpush1.msra.mxu0 0.0
      %4888 = vmatprep.subr.mxu0 0.0
      %4889 = vmatpush1.msra.mxu0 0.0
      %4890 = vmatprep.subr.mxu0 0.0
      %4891 = vmatpush1.msra.mxu0 0.0
      %4892 = vmatprep.subr.mxu0 0.0
      %4893 = vmatpush1.msra.mxu0 0.0
      %4894 = vmatprep.subr.mxu0 0.0
      %4895 = vmatpush1.msra.mxu0 0.0
      %4896 = vmatprep.subr.mxu0 0.0
      %4897 = vmatpush1.msra.mxu0 0.0
      %4898 = vmatprep.subr.mxu0 0.0
      %4899 = vmatpush1.msra.mxu0 0.0
      %4900 = vmatprep.subr.mxu0 0.0
      %4901 = vmatpush1.msra.mxu0 0.0
      %4902 = vmatprep.subr.mxu0 0.0
      %4903 = vmatpush1.msra.mxu0 0.0
      %4904 = vmatprep.subr.mxu0 0.0
      %4905 = vmatpush1.msra.mxu0 0.0
      %4906 = vmatprep.subr.mxu0 0.0
      %4907 = vmatpush1.msra.mxu0 0.0
      %4908 = vmatprep.subr.mxu0 0.0
      %4909 = vmatpush1.msra.mxu0 0.0
      %4910 = vmatprep.subr.mxu0 0.0
      %4911 = vmatpush1.msra.mxu0 0.0
      %4912 = vmatprep.mubr.f32.mxu0 0.0
      %4913 = vmatmul.mubr.f32.gmra.mrb[0].mxu0 %v4799
      %v4914 = vpop.f32.mrb[0].mxu0
      %v4915 = vadd.f32 0.0, %v4914
      %v4916 = vpop.f32.mrb[0].mxu0
      %4917 = vmatprep.mubr.f32.mxu0 0.0
      %4918 = vmatmul.mubr.f32.gmra.mrb[0].mxu0 %v4800
      %v4919 = vpop.f32.mrb[0].mxu0
      %v4920 = vadd.f32 0.0, %v4919
      %v4921 = vpop.f32.mrb[0].mxu0
      %4922 = vmatprep.mubr.f32.mxu0 0.0
      %4923 = vmatmul.mubr.f32.gmra.mrb[0].mxu0 %v4801
      %v4924 = vpop.f32.mrb[0].mxu0
      %v4925 = vadd.f32 0.0, %v4924
      %v4926 = vpop.f32.mrb[0].mxu0
      %4927 = vmatprep.mubr.f32.mxu0 0.0
      %4928 = vmatmul.mubr.f32.gmra.mrb[0].mxu0 %v4802
      %v4929 = vpop.f32.mrb[0].mxu0
      %v4930 = vadd.f32 0.0, %v4929
      %v4931 = vpop.f32.mrb[0].mxu0
      %4932 = vmatprep.mubr.f32.mxu0 0.0
      %4933 = vmatmul.mubr.f32.gmra.mrb[0].mxu0 %v4803
      %v4934 = vpop.f32.mrb[0].mxu0
      %v4935 = vadd.f32 0.0, %v4934
      %v4936 = vpop.f32.mrb[0].mxu0
      %4937 = vmatprep.mubr.f32.mxu0 0.0
      %4938 = vmatmul.mubr.f32.gmra.mrb[0].mxu0 %v4804
      %v4939 = vpop.f32.mrb[0].mxu0
      %v4940 = vadd.f32 0.0, %v4939
      %v4941 = vpop.f32.mrb[0].mxu0
      %4942 = vmatprep.mubr.f32.mxu0 0.0
      %4943 = vmatmul.mubr.f32.gmra.mrb[0].mxu0 %v4805
      %v4944 = vpop.f32.mrb[0].mxu0
      %v4945 = vadd.f32 0.0, %v4944
      %v4946 = vpop.f32.mrb[0].mxu0
      %4947 = vmatprep.mubr.f32.mxu0 0.0
      %4948 = vmatmul.mubr.f32.gmra.mrb[0].mxu0 %v4806
      %v4949 = vpop.f32.mrb[0].mxu0
      %v4950 = vadd.f32 0.0, %v4949
      %v4951 = vpop.f32.mrb[0].mxu0
      %4952 = vmatprep.mubr.f32.mxu0 0.0
      %4953 = vmatmul.mubr.f32.gmra.mrb[0].mxu0 %v4807
      %v4954 = vpop.f32.mrb[0].mxu0
      %v4955 = vadd.f32 0.0, %v4954
      %v4956 = vpop.f32.mrb[0].mxu0
      %4957 = vmatprep.mubr.f32.mxu0 0.0
      %4958 = vmatmul.mubr.f32.gmra.mrb[0].mxu0 %v4808
      %v4959 = vpop.f32.mrb[0].mxu0
      %v4960 = vadd.f32 0.0, %v4959
      %v4961 = vpop.f32.mrb[0].mxu0
      %4962 = vmatprep.mubr.f32.mxu0 0.0
      %4963 = vmatmul.mubr.f32.gmra.mrb[0].mxu0 %v4809
      %v4964 = vpop.f32.mrb[0].mxu0
      %v4965 = vadd.f32 0.0, %v4964
      %v4966 = vpop.f32.mrb[0].mxu0
      %4967 = vmatprep.mubr.f32.mxu0 0.0
      %4968 = vmatmul.mubr.f32.gmra.mrb[0].mxu0 %v4810
      %v4969 = vpop.f32.mrb[0].mxu0
      %v4970 = vadd.f32 0.0, %v4969
      %v4971 = vpop.f32.mrb[0].mxu0
      %4972 = vmatprep.mubr.f32.mxu0 0.0
      %4973 = vmatmul.mubr.f32.gmra.mrb[0].mxu0 %v4811
      %v4974 = vpop.f32.mrb[0].mxu0
      %v4975 = vadd.f32 0.0, %v4974
      %v4976 = vpop.f32.mrb[0].mxu0
      %4977 = vmatprep.mubr.f32.mxu0 0.0
      %4978 = vmatmul.mubr.f32.gmra.mrb[0].mxu0 %v4812
      %v4979 = vpop.f32.mrb[0].mxu0
      %v4980 = vadd.f32 0.0, %v4979
      %v4981 = vpop.f32.mrb[0].mxu0
      %4982 = vmatprep.mubr.f32.mxu0 0.0
      %4983 = vmatmul.mubr.f32.gmra.mrb[0].mxu0 %v4813
      %v4984 = vpop.f32.mrb[0].mxu0
      %v4985 = vadd.f32 0.0, %v4984
      %v4986 = vpop.f32.mrb[0].mxu0
      %4987 = vmatprep.mubr.f32.mxu0 0.0
      %4988 = vmatmul.mubr.f32.gmra.mrb[0].mxu0 %v4814
      %v4989 = vpop.f32.mrb[0].mxu0
      %v4990 = vadd.f32 0.0, %v4989
      %v4991 = vpop.f32.mrb[0].mxu0
      %4992 = vmatprep.mubr.f32.mxu0 0.0
      %4993 = vmatmul.mubr.f32.gmra.mrb[0].mxu0 %v4815
      %v4994 = vpop.f32.mrb[0].mxu0
      %v4995 = vadd.f32 0.0, %v4994
      %v4996 = vpop.f32.mrb[0].mxu0
      %4997 = vmatprep.mubr.f32.mxu0 0.0
      %4998 = vmatmul.mubr.f32.gmra.mrb[0].mxu0 %v4816
      %v4999 = vpop.f32.mrb[0].mxu0
      %v5000 = vadd.f32 0.0, %v4999
      %v5001 = vpop.f32.mrb[0].mxu0
      %5002 = vmatprep.mubr.f32.mxu0 0.0
      %5003 = vmatmul.mubr.f32.gmra.mrb[0].mxu0 %v4817
      %v5004 = vpop.f32.mrb[0].mxu0
      %v5005 = vadd.f32 0.0, %v5004
      %v5006 = vpop.f32.mrb[0].mxu0
      %5007 = vmatprep.mubr.f32.mxu0 0.0
      %5008 = vmatmul.mubr.f32.gmra.mrb[0].mxu0 %v4818
      %v5009 = vpop.f32.mrb[0].mxu0
      %v5010 = vadd.f32 0.0, %v5009
      %v5011 = vpop.f32.mrb[0].mxu0
      %5012 = vmatprep.mubr.f32.mxu0 0.0
      %5013 = vmatmul.mubr.f32.gmra.mrb[0].mxu0 %v4819
      %v5014 = vpop.f32.mrb[0].mxu0
      %v5015 = vadd.f32 0.0, %v5014
      %v5016 = vpop.f32.mrb[0].mxu0
      %5017 = vmatprep.mubr.f32.mxu0 0.0
      %5018 = vmatmul.mubr.f32.gmra.mrb[0].mxu0 %v4820
      %v5019 = vpop.f32.mrb[0].mxu0
      %v5020 = vadd.f32 0.0, %v5019
      %v5021 = vpop.f32.mrb[0].mxu0
      %5022 = vmatprep.mubr.f32.mxu0 0.0
      %5023 = vmatmul.mubr.f32.gmra.mrb[0].mxu0 %v4821
      %v5024 = vpop.f32.mrb[0].mxu0
      %v5025 = vadd.f32 0.0, %v5024
      %v5026 = vpop.f32.mrb[0].mxu0
      %5027 = vmatprep.mubr.f32.mxu0 0.0
      %5028 = vmatmul.mubr.f32.gmra.mrb[0].mxu0 %v4822
      %v5029 = vpop.f32.mrb[0].mxu0
      %v5030 = vadd.f32 0.0, %v5029
      %v5031 = vpop.f32.mrb[0].mxu0
      %5032 = vmatprep.mubr.f32.mxu0 0.0
      %5033 = vmatmul.mubr.f32.gmra.mrb[0].mxu0 %v4823
      %v5034 = vpop.f32.mrb[0].mxu0
      %v5035 = vadd.f32 0.0, %v5034
      %v5036 = vpop.f32.mrb[0].mxu0
      %5037 = vmatprep.mubr.f32.mxu0 0.0
      %5038 = vmatmul.mubr.f32.gmra.mrb[0].mxu0 %v4824
      %v5039 = vpop.f32.mrb[0].mxu0
      %v5040 = vadd.f32 0.0, %v5039
      %v5041 = vpop.f32.mrb[0].mxu0
      %5042 = vmatprep.mubr.f32.mxu0 0.0
      %5043 = vmatmul.mubr.f32.gmra.mrb[0].mxu0 %v4825
      %v5044 = vpop.f32.mrb[0].mxu0
      %v5045 = vadd.f32 0.0, %v5044
      %v5046 = vpop.f32.mrb[0].mxu0
      %5047 = vmatprep.mubr.f32.mxu0 0.0
      %5048 = vmatmul.mubr.f32.gmra.mrb[0].mxu0 %v4826
      %v5049 = vpop.f32.mrb[0].mxu0
      %v5050 = vadd.f32 0.0, %v5049
      %v5051 = vpop.f32.mrb[0].mxu0
      %5052 = vmatprep.mubr.f32.mxu0 0.0
      %5053 = vmatmul.mubr.f32.gmra.mrb[0].mxu0 %v4827
      %v5054 = vpop.f32.mrb[0].mxu0
      %v5055 = vadd.f32 0.0, %v5054
      %v5056 = vpop.f32.mrb[0].mxu0
      %5057 = vmatprep.mubr.f32.mxu0 0.0
      %5058 = vmatmul.mubr.f32.gmra.mrb[0].mxu0 %v4828
      %v5059 = vpop.f32.mrb[0].mxu0
      %v5060 = vadd.f32 0.0, %v5059
      %v5061 = vpop.f32.mrb[0].mxu0
      %5062 = vmatprep.mubr.f32.mxu0 0.0
      %5063 = vmatmul.mubr.f32.gmra.mrb[0].mxu0 %v4829
      %v5064 = vpop.f32.mrb[0].mxu0
      %v5065 = vadd.f32 0.0, %v5064
      %v5066 = vpop.f32.mrb[0].mxu0
      %5067 = vmatprep.mubr.f32.mxu0 0.0
      %5068 = vmatmul.mubr.f32.gmra.mrb[0].mxu0 %v4830
      %v5069 = vpop.f32.mrb[0].mxu0
      %v5070 = vadd.f32 0.0, %v5069
      %v5071 = vpop.f32.mrb[0].mxu0
      %5072 = vdwg.mxu0
      %v5073 = vadd.f32 %v4767, %v4915
      %v5074 = vadd.f32 %v4768, %v4920
      %v5075 = vadd.f32 %v4769, %v4925
      %v5076 = vadd.f32 %v4770, %v4930
      %v5077 = vadd.f32 %v4771, %v4935
      %v5078 = vadd.f32 %v4772, %v4940
      %v5079 = vadd.f32 %v4773, %v4945
      %v5080 = vadd.f32 %v4774, %v4950
      %v5081 = vadd.f32 %v4775, %v4955
      %v5082 = vadd.f32 %v4776, %v4960
      %v5083 = vadd.f32 %v4777, %v4965
      %v5084 = vadd.f32 %v4778, %v4970
      %v5085 = vadd.f32 %v4779, %v4975
      %v5086 = vadd.f32 %v4780, %v4980
      %v5087 = vadd.f32 %v4781, %v4985
      %v5088 = vadd.f32 %v4782, %v4990
      %v5089 = vadd.f32 %v4783, %v4995
      %v5090 = vadd.f32 %v4784, %v5000
      %v5091 = vadd.f32 %v4785, %v5005
      %v5092 = vadd.f32 %v4786, %v5010
      %v5093 = vadd.f32 %v4787, %v5015
      %v5094 = vadd.f32 %v4788, %v5020
      %v5095 = vadd.f32 %v4789, %v5025
      %v5096 = vadd.f32 %v4790, %v5030
      %v5097 = vadd.f32 %v4791, %v5035
      %v5098 = vadd.f32 %v4792, %v5040
      %v5099 = vadd.f32 %v4793, %v5045
      %v5100 = vadd.f32 %v4794, %v5050
      %v5101 = vadd.f32 %v4795, %v5055
      %v5102 = vadd.f32 %v4796, %v5060
      %v5103 = vadd.f32 %v4797, %v5065
      %v5104 = vadd.f32 %v4798, %v5070
      %v5105 = vld [vmem:[%s3881 + $0x3] sm:$0xff]
      %v5106 = vld [vmem:[%s3881 + $0xb] sm:$0xff]
      %v5107 = vld [vmem:[%s3881 + $0x1b] sm:$0xff]
      %v5108 = vld [vmem:[%s3881 + $0x23] sm:$0xff]
      %v5109 = vld [vmem:[%s3881 + $0x33] sm:$0xff]
      %v5110 = vld [vmem:[%s3881 + $0x3b] sm:$0xff]
      %v5111 = vld [vmem:[%s3881 + $0x4b] sm:$0xff]
      %v5112 = vld [vmem:[%s3881 + $0x53] sm:$0xff]
      %v5113 = vld [vmem:[%s3881 + $0x63] sm:$0xff]
      %v5114 = vld [vmem:[%s3881 + $0x6b] sm:$0xff]
      %v5115 = vld [vmem:[%s3881 + $0x7b] sm:$0xff]
      %v5116 = vld [vmem:[%s3881 + $0x83] sm:$0xff]
      %v5117 = vld [vmem:[%s3881 + $0x93] sm:$0xff]
      %v5118 = vld [vmem:[%s3881 + $0x9b] sm:$0xff]
      %v5119 = vld [vmem:[%s3881 + $0xab] sm:$0xff]
      %v5120 = vld [vmem:[%s3881 + $0xb3] sm:$0xff]
      %v5121 = vld [vmem:[%s3881 + $0xc3] sm:$0xff]
      %v5122 = vld [vmem:[%s3881 + $0xcb] sm:$0xff]
      %v5123 = vld [vmem:[%s3881 + $0xdb] sm:$0xff]
      %v5124 = vld [vmem:[%s3881 + $0xe3] sm:$0xff]
      %v5125 = vld [vmem:[%s3881 + $0xf3] sm:$0xff]
      %v5126 = vld [vmem:[%s3881 + $0xfb] sm:$0xff]
      %v5127 = vld [vmem:[%s3881 + $0x10b] sm:$0xff]
      %v5128 = vld [vmem:[%s3881 + $0x113] sm:$0xff]
      %v5129 = vld [vmem:[%s3881 + $0x123] sm:$0xff]
      %v5130 = vld [vmem:[%s3881 + $0x12b] sm:$0xff]
      %v5131 = vld [vmem:[%s3881 + $0x13b] sm:$0xff]
      %v5132 = vld [vmem:[%s3881 + $0x143] sm:$0xff]
      %v5133 = vld [vmem:[%s3881 + $0x153] sm:$0xff]
      %v5134 = vld [vmem:[%s3881 + $0x15b] sm:$0xff]
      %v5135 = vld [vmem:[%s3881 + $0x16b] sm:$0xff]
      %v5136 = vld [vmem:[%s3881 + $0x173] sm:$0xff]
      %s5137 = scalar_lea.vmem %s3, 512
      %v5138 = vld [vmem:[%s5137] sm:$0xff]
      %v5139 = vld [vmem:[%s5137 + $0x8] sm:$0xff]
      %v5140 = vld [vmem:[%s5137 + $0x10] sm:$0xff]
      %v5141 = vld [vmem:[%s5137 + $0x18] sm:$0xff]
      %v5142 = vld [vmem:[%s5137 + $0x20] sm:$0xff]
      %v5143 = vld [vmem:[%s5137 + $0x28] sm:$0xff]
      %v5144 = vld [vmem:[%s5137 + $0x30] sm:$0xff]
      %v5145 = vld [vmem:[%s5137 + $0x38] sm:$0xff]
      %v5146 = vld [vmem:[%s5137 + $0x40] sm:$0xff]
      %v5147 = vld [vmem:[%s5137 + $0x48] sm:$0xff]
      %v5148 = vld [vmem:[%s5137 + $0x50] sm:$0xff]
      %v5149 = vld [vmem:[%s5137 + $0x58] sm:$0xff]
      %v5150 = vld [vmem:[%s5137 + $0x60] sm:$0xff]
      %v5151 = vld [vmem:[%s5137 + $0x68] sm:$0xff]
      %v5152 = vld [vmem:[%s5137 + $0x70] sm:$0xff]
      %v5153 = vld [vmem:[%s5137 + $0x78] sm:$0xff]
      %5154 = vmatprep.subr.mxu0 0.0
      %5155 = vmatpush1.msra.mxu0 %v5138
      %5156 = vmatprep.subr.mxu0 0.0
      %5157 = vmatpush1.msra.mxu0 %v5139
      %5158 = vmatprep.subr.mxu0 0.0
      %5159 = vmatpush1.msra.mxu0 %v5140
      %5160 = vmatprep.subr.mxu0 0.0
      %5161 = vmatpush1.msra.mxu0 %v5141
      %5162 = vmatprep.subr.mxu0 0.0
      %5163 = vmatpush1.msra.mxu0 %v5142
      %5164 = vmatprep.subr.mxu0 0.0
      %5165 = vmatpush1.msra.mxu0 %v5143
      %5166 = vmatprep.subr.mxu0 0.0
      %5167 = vmatpush1.msra.mxu0 %v5144
      %5168 = vmatprep.subr.mxu0 0.0
      %5169 = vmatpush1.msra.mxu0 %v5145
      %5170 = vmatprep.subr.mxu0 0.0
      %5171 = vmatpush1.msra.mxu0 %v5146
      %5172 = vmatprep.subr.mxu0 0.0
      %5173 = vmatpush1.msra.mxu0 %v5147
      %5174 = vmatprep.subr.mxu0 0.0
      %5175 = vmatpush1.msra.mxu0 %v5148
      %5176 = vmatprep.subr.mxu0 0.0
      %5177 = vmatpush1.msra.mxu0 %v5149
      %5178 = vmatprep.subr.mxu0 0.0
      %5179 = vmatpush1.msra.mxu0 %v5150
      %5180 = vmatprep.subr.mxu0 0.0
      %5181 = vmatpush1.msra.mxu0 %v5151
      %5182 = vmatprep.subr.mxu0 0.0
      %5183 = vmatpush1.msra.mxu0 %v5152
      %5184 = vmatprep.subr.mxu0 0.0
      %5185 = vmatpush1.msra.mxu0 %v5153
      %5186 = vmatprep.subr.mxu0 0.0
      %5187 = vmatpush1.msra.mxu0 0.0
      %5188 = vmatprep.subr.mxu0 0.0
      %5189 = vmatpush1.msra.mxu0 0.0
      %5190 = vmatprep.subr.mxu0 0.0
      %5191 = vmatpush1.msra.mxu0 0.0
      %5192 = vmatprep.subr.mxu0 0.0
      %5193 = vmatpush1.msra.mxu0 0.0
      %5194 = vmatprep.subr.mxu0 0.0
      %5195 = vmatpush1.msra.mxu0 0.0
      %5196 = vmatprep.subr.mxu0 0.0
      %5197 = vmatpush1.msra.mxu0 0.0
      %5198 = vmatprep.subr.mxu0 0.0
      %5199 = vmatpush1.msra.mxu0 0.0
      %5200 = vmatprep.subr.mxu0 0.0
      %5201 = vmatpush1.msra.mxu0 0.0
      %5202 = vmatprep.subr.mxu0 0.0
      %5203 = vmatpush1.msra.mxu0 0.0
      %5204 = vmatprep.subr.mxu0 0.0
      %5205 = vmatpush1.msra.mxu0 0.0
      %5206 = vmatprep.subr.mxu0 0.0
      %5207 = vmatpush1.msra.mxu0 0.0
      %5208 = vmatprep.subr.mxu0 0.0
      %5209 = vmatpush1.msra.mxu0 0.0
      %5210 = vmatprep.subr.mxu0 0.0
      %5211 = vmatpush1.msra.mxu0 0.0
      %5212 = vmatprep.subr.mxu0 0.0
      %5213 = vmatpush1.msra.mxu0 0.0
      %5214 = vmatprep.subr.mxu0 0.0
      %5215 = vmatpush1.msra.mxu0 0.0
      %5216 = vmatprep.subr.mxu0 0.0
      %5217 = vmatpush1.msra.mxu0 0.0
      %5218 = vmatprep.mubr.f32.mxu0 0.0
      %5219 = vmatmul.mubr.f32.gmra.mrb[0].mxu0 %v5105
      %v5220 = vpop.f32.mrb[0].mxu0
      %v5221 = vadd.f32 0.0, %v5220
      %v5222 = vpop.f32.mrb[0].mxu0
      %5223 = vmatprep.mubr.f32.mxu0 0.0
      %5224 = vmatmul.mubr.f32.gmra.mrb[0].mxu0 %v5106
      %v5225 = vpop.f32.mrb[0].mxu0
      %v5226 = vadd.f32 0.0, %v5225
      %v5227 = vpop.f32.mrb[0].mxu0
      %5228 = vmatprep.mubr.f32.mxu0 0.0
      %5229 = vmatmul.mubr.f32.gmra.mrb[0].mxu0 %v5107
      %v5230 = vpop.f32.mrb[0].mxu0
      %v5231 = vadd.f32 0.0, %v5230
      %v5232 = vpop.f32.mrb[0].mxu0
      %5233 = vmatprep.mubr.f32.mxu0 0.0
      %5234 = vmatmul.mubr.f32.gmra.mrb[0].mxu0 %v5108
      %v5235 = vpop.f32.mrb[0].mxu0
      %v5236 = vadd.f32 0.0, %v5235
      %v5237 = vpop.f32.mrb[0].mxu0
      %5238 = vmatprep.mubr.f32.mxu0 0.0
      %5239 = vmatmul.mubr.f32.gmra.mrb[0].mxu0 %v5109
      %v5240 = vpop.f32.mrb[0].mxu0
      %v5241 = vadd.f32 0.0, %v5240
      %v5242 = vpop.f32.mrb[0].mxu0
      %5243 = vmatprep.mubr.f32.mxu0 0.0
      %5244 = vmatmul.mubr.f32.gmra.mrb[0].mxu0 %v5110
      %v5245 = vpop.f32.mrb[0].mxu0
      %v5246 = vadd.f32 0.0, %v5245
      %v5247 = vpop.f32.mrb[0].mxu0
      %5248 = vmatprep.mubr.f32.mxu0 0.0
      %5249 = vmatmul.mubr.f32.gmra.mrb[0].mxu0 %v5111
      %v5250 = vpop.f32.mrb[0].mxu0
      %v5251 = vadd.f32 0.0, %v5250
      %v5252 = vpop.f32.mrb[0].mxu0
      %5253 = vmatprep.mubr.f32.mxu0 0.0
      %5254 = vmatmul.mubr.f32.gmra.mrb[0].mxu0 %v5112
      %v5255 = vpop.f32.mrb[0].mxu0
      %v5256 = vadd.f32 0.0, %v5255
      %v5257 = vpop.f32.mrb[0].mxu0
      %5258 = vmatprep.mubr.f32.mxu0 0.0
      %5259 = vmatmul.mubr.f32.gmra.mrb[0].mxu0 %v5113
      %v5260 = vpop.f32.mrb[0].mxu0
      %v5261 = vadd.f32 0.0, %v5260
      %v5262 = vpop.f32.mrb[0].mxu0
      %5263 = vmatprep.mubr.f32.mxu0 0.0
      %5264 = vmatmul.mubr.f32.gmra.mrb[0].mxu0 %v5114
      %v5265 = vpop.f32.mrb[0].mxu0
      %v5266 = vadd.f32 0.0, %v5265
      %v5267 = vpop.f32.mrb[0].mxu0
      %5268 = vmatprep.mubr.f32.mxu0 0.0
      %5269 = vmatmul.mubr.f32.gmra.mrb[0].mxu0 %v5115
      %v5270 = vpop.f32.mrb[0].mxu0
      %v5271 = vadd.f32 0.0, %v5270
      %v5272 = vpop.f32.mrb[0].mxu0
      %5273 = vmatprep.mubr.f32.mxu0 0.0
      %5274 = vmatmul.mubr.f32.gmra.mrb[0].mxu0 %v5116
      %v5275 = vpop.f32.mrb[0].mxu0
      %v5276 = vadd.f32 0.0, %v5275
      %v5277 = vpop.f32.mrb[0].mxu0
      %5278 = vmatprep.mubr.f32.mxu0 0.0
      %5279 = vmatmul.mubr.f32.gmra.mrb[0].mxu0 %v5117
      %v5280 = vpop.f32.mrb[0].mxu0
      %v5281 = vadd.f32 0.0, %v5280
      %v5282 = vpop.f32.mrb[0].mxu0
      %5283 = vmatprep.mubr.f32.mxu0 0.0
      %5284 = vmatmul.mubr.f32.gmra.mrb[0].mxu0 %v5118
      %v5285 = vpop.f32.mrb[0].mxu0
      %v5286 = vadd.f32 0.0, %v5285
      %v5287 = vpop.f32.mrb[0].mxu0
      %5288 = vmatprep.mubr.f32.mxu0 0.0
      %5289 = vmatmul.mubr.f32.gmra.mrb[0].mxu0 %v5119
      %v5290 = vpop.f32.mrb[0].mxu0
      %v5291 = vadd.f32 0.0, %v5290
      %v5292 = vpop.f32.mrb[0].mxu0
      %5293 = vmatprep.mubr.f32.mxu0 0.0
      %5294 = vmatmul.mubr.f32.gmra.mrb[0].mxu0 %v5120
      %v5295 = vpop.f32.mrb[0].mxu0
      %v5296 = vadd.f32 0.0, %v5295
      %v5297 = vpop.f32.mrb[0].mxu0
      %5298 = vmatprep.mubr.f32.mxu0 0.0
      %5299 = vmatmul.mubr.f32.gmra.mrb[0].mxu0 %v5121
      %v5300 = vpop.f32.mrb[0].mxu0
      %v5301 = vadd.f32 0.0, %v5300
      %v5302 = vpop.f32.mrb[0].mxu0
      %5303 = vmatprep.mubr.f32.mxu0 0.0
      %5304 = vmatmul.mubr.f32.gmra.mrb[0].mxu0 %v5122
      %v5305 = vpop.f32.mrb[0].mxu0
      %v5306 = vadd.f32 0.0, %v5305
      %v5307 = vpop.f32.mrb[0].mxu0
      %5308 = vmatprep.mubr.f32.mxu0 0.0
      %5309 = vmatmul.mubr.f32.gmra.mrb[0].mxu0 %v5123
      %v5310 = vpop.f32.mrb[0].mxu0
      %v5311 = vadd.f32 0.0, %v5310
      %v5312 = vpop.f32.mrb[0].mxu0
      %5313 = vmatprep.mubr.f32.mxu0 0.0
      %5314 = vmatmul.mubr.f32.gmra.mrb[0].mxu0 %v5124
      %v5315 = vpop.f32.mrb[0].mxu0
      %v5316 = vadd.f32 0.0, %v5315
      %v5317 = vpop.f32.mrb[0].mxu0
      %5318 = vmatprep.mubr.f32.mxu0 0.0
      %5319 = vmatmul.mubr.f32.gmra.mrb[0].mxu0 %v5125
      %v5320 = vpop.f32.mrb[0].mxu0
      %v5321 = vadd.f32 0.0, %v5320
      %v5322 = vpop.f32.mrb[0].mxu0
      %5323 = vmatprep.mubr.f32.mxu0 0.0
      %5324 = vmatmul.mubr.f32.gmra.mrb[0].mxu0 %v5126
      %v5325 = vpop.f32.mrb[0].mxu0
      %v5326 = vadd.f32 0.0, %v5325
      %v5327 = vpop.f32.mrb[0].mxu0
      %5328 = vmatprep.mubr.f32.mxu0 0.0
      %5329 = vmatmul.mubr.f32.gmra.mrb[0].mxu0 %v5127
      %v5330 = vpop.f32.mrb[0].mxu0
      %v5331 = vadd.f32 0.0, %v5330
      %v5332 = vpop.f32.mrb[0].mxu0
      %5333 = vmatprep.mubr.f32.mxu0 0.0
      %5334 = vmatmul.mubr.f32.gmra.mrb[0].mxu0 %v5128
      %v5335 = vpop.f32.mrb[0].mxu0
      %v5336 = vadd.f32 0.0, %v5335
      %v5337 = vpop.f32.mrb[0].mxu0
      %5338 = vmatprep.mubr.f32.mxu0 0.0
      %5339 = vmatmul.mubr.f32.gmra.mrb[0].mxu0 %v5129
      %v5340 = vpop.f32.mrb[0].mxu0
      %v5341 = vadd.f32 0.0, %v5340
      %v5342 = vpop.f32.mrb[0].mxu0
      %5343 = vmatprep.mubr.f32.mxu0 0.0
      %5344 = vmatmul.mubr.f32.gmra.mrb[0].mxu0 %v5130
      %v5345 = vpop.f32.mrb[0].mxu0
      %v5346 = vadd.f32 0.0, %v5345
      %v5347 = vpop.f32.mrb[0].mxu0
      %5348 = vmatprep.mubr.f32.mxu0 0.0
      %5349 = vmatmul.mubr.f32.gmra.mrb[0].mxu0 %v5131
      %v5350 = vpop.f32.mrb[0].mxu0
      %v5351 = vadd.f32 0.0, %v5350
      %v5352 = vpop.f32.mrb[0].mxu0
      %5353 = vmatprep.mubr.f32.mxu0 0.0
      %5354 = vmatmul.mubr.f32.gmra.mrb[0].mxu0 %v5132
      %v5355 = vpop.f32.mrb[0].mxu0
      %v5356 = vadd.f32 0.0, %v5355
      %v5357 = vpop.f32.mrb[0].mxu0
      %5358 = vmatprep.mubr.f32.mxu0 0.0
      %5359 = vmatmul.mubr.f32.gmra.mrb[0].mxu0 %v5133
      %v5360 = vpop.f32.mrb[0].mxu0
      %v5361 = vadd.f32 0.0, %v5360
      %v5362 = vpop.f32.mrb[0].mxu0
      %5363 = vmatprep.mubr.f32.mxu0 0.0
      %5364 = vmatmul.mubr.f32.gmra.mrb[0].mxu0 %v5134
      %v5365 = vpop.f32.mrb[0].mxu0
      %v5366 = vadd.f32 0.0, %v5365
      %v5367 = vpop.f32.mrb[0].mxu0
      %5368 = vmatprep.mubr.f32.mxu0 0.0
      %5369 = vmatmul.mubr.f32.gmra.mrb[0].mxu0 %v5135
      %v5370 = vpop.f32.mrb[0].mxu0
      %v5371 = vadd.f32 0.0, %v5370
      %v5372 = vpop.f32.mrb[0].mxu0
      %5373 = vmatprep.mubr.f32.mxu0 0.0
      %5374 = vmatmul.mubr.f32.gmra.mrb[0].mxu0 %v5136
      %v5375 = vpop.f32.mrb[0].mxu0
      %v5376 = vadd.f32 0.0, %v5375
      %v5377 = vpop.f32.mrb[0].mxu0
      %5378 = vdwg.mxu0
      %v5379 = vadd.f32 %v5073, %v5221
      %v5380 = vadd.f32 %v5074, %v5226
      %v5381 = vadd.f32 %v5075, %v5231
      %v5382 = vadd.f32 %v5076, %v5236
      %v5383 = vadd.f32 %v5077, %v5241
      %v5384 = vadd.f32 %v5078, %v5246
      %v5385 = vadd.f32 %v5079, %v5251
      %v5386 = vadd.f32 %v5080, %v5256
      %v5387 = vadd.f32 %v5081, %v5261
      %v5388 = vadd.f32 %v5082, %v5266
      %v5389 = vadd.f32 %v5083, %v5271
      %v5390 = vadd.f32 %v5084, %v5276
      %v5391 = vadd.f32 %v5085, %v5281
      %v5392 = vadd.f32 %v5086, %v5286
      %v5393 = vadd.f32 %v5087, %v5291
      %v5394 = vadd.f32 %v5088, %v5296
      %v5395 = vadd.f32 %v5089, %v5301
      %v5396 = vadd.f32 %v5090, %v5306
      %v5397 = vadd.f32 %v5091, %v5311
      %v5398 = vadd.f32 %v5092, %v5316
      %v5399 = vadd.f32 %v5093, %v5321
      %v5400 = vadd.f32 %v5094, %v5326
      %v5401 = vadd.f32 %v5095, %v5331
      %v5402 = vadd.f32 %v5096, %v5336
      %v5403 = vadd.f32 %v5097, %v5341
      %v5404 = vadd.f32 %v5098, %v5346
      %v5405 = vadd.f32 %v5099, %v5351
      %v5406 = vadd.f32 %v5100, %v5356
      %v5407 = vadd.f32 %v5101, %v5361
      %v5408 = vadd.f32 %v5102, %v5366
      %v5409 = vadd.f32 %v5103, %v5371
      %v5410 = vadd.f32 %v5104, %v5376
      %v5411 = vld [vmem:[%s3881 + $0x6] sm:$0xff]
      %v5412 = vld [vmem:[%s3881 + $0xe] sm:$0xff]
      %v5413 = vld [vmem:[%s3881 + $0x1e] sm:$0xff]
      %v5414 = vld [vmem:[%s3881 + $0x26] sm:$0xff]
      %v5415 = vld [vmem:[%s3881 + $0x36] sm:$0xff]
      %v5416 = vld [vmem:[%s3881 + $0x3e] sm:$0xff]
      %v5417 = vld [vmem:[%s3881 + $0x4e] sm:$0xff]
      %v5418 = vld [vmem:[%s3881 + $0x56] sm:$0xff]
      %v5419 = vld [vmem:[%s3881 + $0x66] sm:$0xff]
      %v5420 = vld [vmem:[%s3881 + $0x6e] sm:$0xff]
      %v5421 = vld [vmem:[%s3881 + $0x7e] sm:$0xff]
      %v5422 = vld [vmem:[%s3881 + $0x86] sm:$0xff]
      %v5423 = vld [vmem:[%s3881 + $0x96] sm:$0xff]
      %v5424 = vld [vmem:[%s3881 + $0x9e] sm:$0xff]
      %v5425 = vld [vmem:[%s3881 + $0xae] sm:$0xff]
      %v5426 = vld [vmem:[%s3881 + $0xb6] sm:$0xff]
      %v5427 = vld [vmem:[%s3881 + $0xc6] sm:$0xff]
      %v5428 = vld [vmem:[%s3881 + $0xce] sm:$0xff]
      %v5429 = vld [vmem:[%s3881 + $0xde] sm:$0xff]
      %v5430 = vld [vmem:[%s3881 + $0xe6] sm:$0xff]
      %v5431 = vld [vmem:[%s3881 + $0xf6] sm:$0xff]
      %v5432 = vld [vmem:[%s3881 + $0xfe] sm:$0xff]
      %v5433 = vld [vmem:[%s3881 + $0x10e] sm:$0xff]
      %v5434 = vld [vmem:[%s3881 + $0x116] sm:$0xff]
      %v5435 = vld [vmem:[%s3881 + $0x126] sm:$0xff]
      %v5436 = vld [vmem:[%s3881 + $0x12e] sm:$0xff]
      %v5437 = vld [vmem:[%s3881 + $0x13e] sm:$0xff]
      %v5438 = vld [vmem:[%s3881 + $0x146] sm:$0xff]
      %v5439 = vld [vmem:[%s3881 + $0x156] sm:$0xff]
      %v5440 = vld [vmem:[%s3881 + $0x15e] sm:$0xff]
      %v5441 = vld [vmem:[%s3881 + $0x16e] sm:$0xff]
      %v5442 = vld [vmem:[%s3881 + $0x176] sm:$0xff]
      %s5443 = scalar_lea.vmem %s3, 640
      %v5444 = vld [vmem:[%s5443] sm:$0xff]
      %v5445 = vld [vmem:[%s5443 + $0x8] sm:$0xff]
      %v5446 = vld [vmem:[%s5443 + $0x10] sm:$0xff]
      %v5447 = vld [vmem:[%s5443 + $0x18] sm:$0xff]
      %v5448 = vld [vmem:[%s5443 + $0x20] sm:$0xff]
      %v5449 = vld [vmem:[%s5443 + $0x28] sm:$0xff]
      %v5450 = vld [vmem:[%s5443 + $0x30] sm:$0xff]
      %v5451 = vld [vmem:[%s5443 + $0x38] sm:$0xff]
      %v5452 = vld [vmem:[%s5443 + $0x40] sm:$0xff]
      %v5453 = vld [vmem:[%s5443 + $0x48] sm:$0xff]
      %v5454 = vld [vmem:[%s5443 + $0x50] sm:$0xff]
      %v5455 = vld [vmem:[%s5443 + $0x58] sm:$0xff]
      %v5456 = vld [vmem:[%s5443 + $0x60] sm:$0xff]
      %v5457 = vld [vmem:[%s5443 + $0x68] sm:$0xff]
      %v5458 = vld [vmem:[%s5443 + $0x70] sm:$0xff]
      %v5459 = vld [vmem:[%s5443 + $0x78] sm:$0xff]
      %5460 = vmatprep.subr.mxu0 0.0
      %5461 = vmatpush1.msra.mxu0 %v5444
      %5462 = vmatprep.subr.mxu0 0.0
      %5463 = vmatpush1.msra.mxu0 %v5445
      %5464 = vmatprep.subr.mxu0 0.0
      %5465 = vmatpush1.msra.mxu0 %v5446
      %5466 = vmatprep.subr.mxu0 0.0
      %5467 = vmatpush1.msra.mxu0 %v5447
      %5468 = vmatprep.subr.mxu0 0.0
      %5469 = vmatpush1.msra.mxu0 %v5448
      %5470 = vmatprep.subr.mxu0 0.0
      %5471 = vmatpush1.msra.mxu0 %v5449
      %5472 = vmatprep.subr.mxu0 0.0
      %5473 = vmatpush1.msra.mxu0 %v5450
      %5474 = vmatprep.subr.mxu0 0.0
      %5475 = vmatpush1.msra.mxu0 %v5451
      %5476 = vmatprep.subr.mxu0 0.0
      %5477 = vmatpush1.msra.mxu0 %v5452
      %5478 = vmatprep.subr.mxu0 0.0
      %5479 = vmatpush1.msra.mxu0 %v5453
      %5480 = vmatprep.subr.mxu0 0.0
      %5481 = vmatpush1.msra.mxu0 %v5454
      %5482 = vmatprep.subr.mxu0 0.0
      %5483 = vmatpush1.msra.mxu0 %v5455
      %5484 = vmatprep.subr.mxu0 0.0
      %5485 = vmatpush1.msra.mxu0 %v5456
      %5486 = vmatprep.subr.mxu0 0.0
      %5487 = vmatpush1.msra.mxu0 %v5457
      %5488 = vmatprep.subr.mxu0 0.0
      %5489 = vmatpush1.msra.mxu0 %v5458
      %5490 = vmatprep.subr.mxu0 0.0
      %5491 = vmatpush1.msra.mxu0 %v5459
      %5492 = vmatprep.subr.mxu0 0.0
      %5493 = vmatpush1.msra.mxu0 0.0
      %5494 = vmatprep.subr.mxu0 0.0
      %5495 = vmatpush1.msra.mxu0 0.0
      %5496 = vmatprep.subr.mxu0 0.0
      %5497 = vmatpush1.msra.mxu0 0.0
      %5498 = vmatprep.subr.mxu0 0.0
      %5499 = vmatpush1.msra.mxu0 0.0
      %5500 = vmatprep.subr.mxu0 0.0
      %5501 = vmatpush1.msra.mxu0 0.0
      %5502 = vmatprep.subr.mxu0 0.0
      %5503 = vmatpush1.msra.mxu0 0.0
      %5504 = vmatprep.subr.mxu0 0.0
      %5505 = vmatpush1.msra.mxu0 0.0
      %5506 = vmatprep.subr.mxu0 0.0
      %5507 = vmatpush1.msra.mxu0 0.0
      %5508 = vmatprep.subr.mxu0 0.0
      %5509 = vmatpush1.msra.mxu0 0.0
      %5510 = vmatprep.subr.mxu0 0.0
      %5511 = vmatpush1.msra.mxu0 0.0
      %5512 = vmatprep.subr.mxu0 0.0
      %5513 = vmatpush1.msra.mxu0 0.0
      %5514 = vmatprep.subr.mxu0 0.0
      %5515 = vmatpush1.msra.mxu0 0.0
      %5516 = vmatprep.subr.mxu0 0.0
      %5517 = vmatpush1.msra.mxu0 0.0
      %5518 = vmatprep.subr.mxu0 0.0
      %5519 = vmatpush1.msra.mxu0 0.0
      %5520 = vmatprep.subr.mxu0 0.0
      %5521 = vmatpush1.msra.mxu0 0.0
      %5522 = vmatprep.subr.mxu0 0.0
      %5523 = vmatpush1.msra.mxu0 0.0
      %5524 = vmatprep.mubr.f32.mxu0 0.0
      %5525 = vmatmul.mubr.f32.gmra.mrb[0].mxu0 %v5411
      %v5526 = vpop.f32.mrb[0].mxu0
      %v5527 = vadd.f32 0.0, %v5526
      %v5528 = vpop.f32.mrb[0].mxu0
      %5529 = vmatprep.mubr.f32.mxu0 0.0
      %5530 = vmatmul.mubr.f32.gmra.mrb[0].mxu0 %v5412
      %v5531 = vpop.f32.mrb[0].mxu0
      %v5532 = vadd.f32 0.0, %v5531
      %v5533 = vpop.f32.mrb[0].mxu0
      %5534 = vmatprep.mubr.f32.mxu0 0.0
      %5535 = vmatmul.mubr.f32.gmra.mrb[0].mxu0 %v5413
      %v5536 = vpop.f32.mrb[0].mxu0
      %v5537 = vadd.f32 0.0, %v5536
      %v5538 = vpop.f32.mrb[0].mxu0
      %5539 = vmatprep.mubr.f32.mxu0 0.0
      %5540 = vmatmul.mubr.f32.gmra.mrb[0].mxu0 %v5414
      %v5541 = vpop.f32.mrb[0].mxu0
      %v5542 = vadd.f32 0.0, %v5541
      %v5543 = vpop.f32.mrb[0].mxu0
      %5544 = vmatprep.mubr.f32.mxu0 0.0
      %5545 = vmatmul.mubr.f32.gmra.mrb[0].mxu0 %v5415
      %v5546 = vpop.f32.mrb[0].mxu0
      %v5547 = vadd.f32 0.0, %v5546
      %v5548 = vpop.f32.mrb[0].mxu0
      %5549 = vmatprep.mubr.f32.mxu0 0.0
      %5550 = vmatmul.mubr.f32.gmra.mrb[0].mxu0 %v5416
      %v5551 = vpop.f32.mrb[0].mxu0
      %v5552 = vadd.f32 0.0, %v5551
      %v5553 = vpop.f32.mrb[0].mxu0
      %5554 = vmatprep.mubr.f32.mxu0 0.0
      %5555 = vmatmul.mubr.f32.gmra.mrb[0].mxu0 %v5417
      %v5556 = vpop.f32.mrb[0].mxu0
      %v5557 = vadd.f32 0.0, %v5556
      %v5558 = vpop.f32.mrb[0].mxu0
      %5559 = vmatprep.mubr.f32.mxu0 0.0
      %5560 = vmatmul.mubr.f32.gmra.mrb[0].mxu0 %v5418
      %v5561 = vpop.f32.mrb[0].mxu0
      %v5562 = vadd.f32 0.0, %v5561
      %v5563 = vpop.f32.mrb[0].mxu0
      %5564 = vmatprep.mubr.f32.mxu0 0.0
      %5565 = vmatmul.mubr.f32.gmra.mrb[0].mxu0 %v5419
      %v5566 = vpop.f32.mrb[0].mxu0
      %v5567 = vadd.f32 0.0, %v5566
      %v5568 = vpop.f32.mrb[0].mxu0
      %5569 = vmatprep.mubr.f32.mxu0 0.0
      %5570 = vmatmul.mubr.f32.gmra.mrb[0].mxu0 %v5420
      %v5571 = vpop.f32.mrb[0].mxu0
      %v5572 = vadd.f32 0.0, %v5571
      %v5573 = vpop.f32.mrb[0].mxu0
      %5574 = vmatprep.mubr.f32.mxu0 0.0
      %5575 = vmatmul.mubr.f32.gmra.mrb[0].mxu0 %v5421
      %v5576 = vpop.f32.mrb[0].mxu0
      %v5577 = vadd.f32 0.0, %v5576
      %v5578 = vpop.f32.mrb[0].mxu0
      %5579 = vmatprep.mubr.f32.mxu0 0.0
      %5580 = vmatmul.mubr.f32.gmra.mrb[0].mxu0 %v5422
      %v5581 = vpop.f32.mrb[0].mxu0
      %v5582 = vadd.f32 0.0, %v5581
      %v5583 = vpop.f32.mrb[0].mxu0
      %5584 = vmatprep.mubr.f32.mxu0 0.0
      %5585 = vmatmul.mubr.f32.gmra.mrb[0].mxu0 %v5423
      %v5586 = vpop.f32.mrb[0].mxu0
      %v5587 = vadd.f32 0.0, %v5586
      %v5588 = vpop.f32.mrb[0].mxu0
      %5589 = vmatprep.mubr.f32.mxu0 0.0
      %5590 = vmatmul.mubr.f32.gmra.mrb[0].mxu0 %v5424
      %v5591 = vpop.f32.mrb[0].mxu0
      %v5592 = vadd.f32 0.0, %v5591
      %v5593 = vpop.f32.mrb[0].mxu0
      %5594 = vmatprep.mubr.f32.mxu0 0.0
      %5595 = vmatmul.mubr.f32.gmra.mrb[0].mxu0 %v5425
      %v5596 = vpop.f32.mrb[0].mxu0
      %v5597 = vadd.f32 0.0, %v5596
      %v5598 = vpop.f32.mrb[0].mxu0
      %5599 = vmatprep.mubr.f32.mxu0 0.0
      %5600 = vmatmul.mubr.f32.gmra.mrb[0].mxu0 %v5426
      %v5601 = vpop.f32.mrb[0].mxu0
      %v5602 = vadd.f32 0.0, %v5601
      %v5603 = vpop.f32.mrb[0].mxu0
      %5604 = vmatprep.mubr.f32.mxu0 0.0
      %5605 = vmatmul.mubr.f32.gmra.mrb[0].mxu0 %v5427
      %v5606 = vpop.f32.mrb[0].mxu0
      %v5607 = vadd.f32 0.0, %v5606
      %v5608 = vpop.f32.mrb[0].mxu0
      %5609 = vmatprep.mubr.f32.mxu0 0.0
      %5610 = vmatmul.mubr.f32.gmra.mrb[0].mxu0 %v5428
      %v5611 = vpop.f32.mrb[0].mxu0
      %v5612 = vadd.f32 0.0, %v5611
      %v5613 = vpop.f32.mrb[0].mxu0
      %5614 = vmatprep.mubr.f32.mxu0 0.0
      %5615 = vmatmul.mubr.f32.gmra.mrb[0].mxu0 %v5429
      %v5616 = vpop.f32.mrb[0].mxu0
      %v5617 = vadd.f32 0.0, %v5616
      %v5618 = vpop.f32.mrb[0].mxu0
      %5619 = vmatprep.mubr.f32.mxu0 0.0
      %5620 = vmatmul.mubr.f32.gmra.mrb[0].mxu0 %v5430
      %v5621 = vpop.f32.mrb[0].mxu0
      %v5622 = vadd.f32 0.0, %v5621
      %v5623 = vpop.f32.mrb[0].mxu0
      %5624 = vmatprep.mubr.f32.mxu0 0.0
      %5625 = vmatmul.mubr.f32.gmra.mrb[0].mxu0 %v5431
      %v5626 = vpop.f32.mrb[0].mxu0
      %v5627 = vadd.f32 0.0, %v5626
      %v5628 = vpop.f32.mrb[0].mxu0
      %5629 = vmatprep.mubr.f32.mxu0 0.0
      %5630 = vmatmul.mubr.f32.gmra.mrb[0].mxu0 %v5432
      %v5631 = vpop.f32.mrb[0].mxu0
      %v5632 = vadd.f32 0.0, %v5631
      %v5633 = vpop.f32.mrb[0].mxu0
      %5634 = vmatprep.mubr.f32.mxu0 0.0
      %5635 = vmatmul.mubr.f32.gmra.mrb[0].mxu0 %v5433
      %v5636 = vpop.f32.mrb[0].mxu0
      %v5637 = vadd.f32 0.0, %v5636
      %v5638 = vpop.f32.mrb[0].mxu0
      %5639 = vmatprep.mubr.f32.mxu0 0.0
      %5640 = vmatmul.mubr.f32.gmra.mrb[0].mxu0 %v5434
      %v5641 = vpop.f32.mrb[0].mxu0
      %v5642 = vadd.f32 0.0, %v5641
      %v5643 = vpop.f32.mrb[0].mxu0
      %5644 = vmatprep.mubr.f32.mxu0 0.0
      %5645 = vmatmul.mubr.f32.gmra.mrb[0].mxu0 %v5435
      %v5646 = vpop.f32.mrb[0].mxu0
      %v5647 = vadd.f32 0.0, %v5646
      %v5648 = vpop.f32.mrb[0].mxu0
      %5649 = vmatprep.mubr.f32.mxu0 0.0
      %5650 = vmatmul.mubr.f32.gmra.mrb[0].mxu0 %v5436
      %v5651 = vpop.f32.mrb[0].mxu0
      %v5652 = vadd.f32 0.0, %v5651
      %v5653 = vpop.f32.mrb[0].mxu0
      %5654 = vmatprep.mubr.f32.mxu0 0.0
      %5655 = vmatmul.mubr.f32.gmra.mrb[0].mxu0 %v5437
      %v5656 = vpop.f32.mrb[0].mxu0
      %v5657 = vadd.f32 0.0, %v5656
      %v5658 = vpop.f32.mrb[0].mxu0
      %5659 = vmatprep.mubr.f32.mxu0 0.0
      %5660 = vmatmul.mubr.f32.gmra.mrb[0].mxu0 %v5438
      %v5661 = vpop.f32.mrb[0].mxu0
      %v5662 = vadd.f32 0.0, %v5661
      %v5663 = vpop.f32.mrb[0].mxu0
      %5664 = vmatprep.mubr.f32.mxu0 0.0
      %5665 = vmatmul.mubr.f32.gmra.mrb[0].mxu0 %v5439
      %v5666 = vpop.f32.mrb[0].mxu0
      %v5667 = vadd.f32 0.0, %v5666
      %v5668 = vpop.f32.mrb[0].mxu0
      %5669 = vmatprep.mubr.f32.mxu0 0.0
      %5670 = vmatmul.mubr.f32.gmra.mrb[0].mxu0 %v5440
      %v5671 = vpop.f32.mrb[0].mxu0
      %v5672 = vadd.f32 0.0, %v5671
      %v5673 = vpop.f32.mrb[0].mxu0
      %5674 = vmatprep.mubr.f32.mxu0 0.0
      %5675 = vmatmul.mubr.f32.gmra.mrb[0].mxu0 %v5441
      %v5676 = vpop.f32.mrb[0].mxu0
      %v5677 = vadd.f32 0.0, %v5676
      %v5678 = vpop.f32.mrb[0].mxu0
      %5679 = vmatprep.mubr.f32.mxu0 0.0
      %5680 = vmatmul.mubr.f32.gmra.mrb[0].mxu0 %v5442
      %v5681 = vpop.f32.mrb[0].mxu0
      %v5682 = vadd.f32 0.0, %v5681
      %v5683 = vpop.f32.mrb[0].mxu0
      %5684 = vdwg.mxu0
      %v5685 = vadd.f32 %v5379, %v5527
      %v5686 = vadd.f32 %v5380, %v5532
      %v5687 = vadd.f32 %v5381, %v5537
      %v5688 = vadd.f32 %v5382, %v5542
      %v5689 = vadd.f32 %v5383, %v5547
      %v5690 = vadd.f32 %v5384, %v5552
      %v5691 = vadd.f32 %v5385, %v5557
      %v5692 = vadd.f32 %v5386, %v5562
      %v5693 = vadd.f32 %v5387, %v5567
      %v5694 = vadd.f32 %v5388, %v5572
      %v5695 = vadd.f32 %v5389, %v5577
      %v5696 = vadd.f32 %v5390, %v5582
      %v5697 = vadd.f32 %v5391, %v5587
      %v5698 = vadd.f32 %v5392, %v5592
      %v5699 = vadd.f32 %v5393, %v5597
      %v5700 = vadd.f32 %v5394, %v5602
      %v5701 = vadd.f32 %v5395, %v5607
      %v5702 = vadd.f32 %v5396, %v5612
      %v5703 = vadd.f32 %v5397, %v5617
      %v5704 = vadd.f32 %v5398, %v5622
      %v5705 = vadd.f32 %v5399, %v5627
      %v5706 = vadd.f32 %v5400, %v5632
      %v5707 = vadd.f32 %v5401, %v5637
      %v5708 = vadd.f32 %v5402, %v5642
      %v5709 = vadd.f32 %v5403, %v5647
      %v5710 = vadd.f32 %v5404, %v5652
      %v5711 = vadd.f32 %v5405, %v5657
      %v5712 = vadd.f32 %v5406, %v5662
      %v5713 = vadd.f32 %v5407, %v5667
      %v5714 = vadd.f32 %v5408, %v5672
      %v5715 = vadd.f32 %v5409, %v5677
      %v5716 = vadd.f32 %v5410, %v5682
      %s5717 = scalar_lea.vmem [#allocation3], 144
      %v5718 = vld [vmem:[%s5717] sm:$0xff]
      %v5719 = vld [vmem:[%s5717 + $0x8] sm:$0xff]
      %v5720 = vld [vmem:[%s5717 + $0x18] sm:$0xff]
      %v5721 = vld [vmem:[%s5717 + $0x20] sm:$0xff]
      %v5722 = vld [vmem:[%s5717 + $0x30] sm:$0xff]
      %v5723 = vld [vmem:[%s5717 + $0x38] sm:$0xff]
      %v5724 = vld [vmem:[%s5717 + $0x48] sm:$0xff]
      %v5725 = vld [vmem:[%s5717 + $0x50] sm:$0xff]
      %v5726 = vld [vmem:[%s5717 + $0x60] sm:$0xff]
      %v5727 = vld [vmem:[%s5717 + $0x68] sm:$0xff]
      %v5728 = vld [vmem:[%s5717 + $0x78] sm:$0xff]
      %v5729 = vld [vmem:[%s5717 + $0x80] sm:$0xff]
      %v5730 = vld [vmem:[%s5717 + $0x90] sm:$0xff]
      %v5731 = vld [vmem:[%s5717 + $0x98] sm:$0xff]
      %v5732 = vld [vmem:[%s5717 + $0xa8] sm:$0xff]
      %v5733 = vld [vmem:[%s5717 + $0xb0] sm:$0xff]
      %v5734 = vld [vmem:[%s5717 + $0xc0] sm:$0xff]
      %v5735 = vld [vmem:[%s5717 + $0xc8] sm:$0xff]
      %v5736 = vld [vmem:[%s5717 + $0xd8] sm:$0xff]
      %v5737 = vld [vmem:[%s5717 + $0xe0] sm:$0xff]
      %v5738 = vld [vmem:[%s5717 + $0xf0] sm:$0xff]
      %v5739 = vld [vmem:[%s5717 + $0xf8] sm:$0xff]
      %v5740 = vld [vmem:[%s5717 + $0x108] sm:$0xff]
      %v5741 = vld [vmem:[%s5717 + $0x110] sm:$0xff]
      %v5742 = vld [vmem:[%s5717 + $0x120] sm:$0xff]
      %v5743 = vld [vmem:[%s5717 + $0x128] sm:$0xff]
      %v5744 = vld [vmem:[%s5717 + $0x138] sm:$0xff]
      %v5745 = vld [vmem:[%s5717 + $0x140] sm:$0xff]
      %v5746 = vld [vmem:[%s5717 + $0x150] sm:$0xff]
      %v5747 = vld [vmem:[%s5717 + $0x158] sm:$0xff]
      %v5748 = vld [vmem:[%s5717 + $0x168] sm:$0xff]
      %v5749 = vld [vmem:[%s5717 + $0x170] sm:$0xff]
      %s5750 = scalar_lea.vmem %s3, 768
      %v5751 = vld [vmem:[%s5750] sm:$0xff]
      %v5752 = vld [vmem:[%s5750 + $0x8] sm:$0xff]
      %v5753 = vld [vmem:[%s5750 + $0x10] sm:$0xff]
      %v5754 = vld [vmem:[%s5750 + $0x18] sm:$0xff]
      %v5755 = vld [vmem:[%s5750 + $0x20] sm:$0xff]
      %v5756 = vld [vmem:[%s5750 + $0x28] sm:$0xff]
      %v5757 = vld [vmem:[%s5750 + $0x30] sm:$0xff]
      %v5758 = vld [vmem:[%s5750 + $0x38] sm:$0xff]
      %v5759 = vld [vmem:[%s5750 + $0x40] sm:$0xff]
      %v5760 = vld [vmem:[%s5750 + $0x48] sm:$0xff]
      %v5761 = vld [vmem:[%s5750 + $0x50] sm:$0xff]
      %v5762 = vld [vmem:[%s5750 + $0x58] sm:$0xff]
      %v5763 = vld [vmem:[%s5750 + $0x60] sm:$0xff]
      %v5764 = vld [vmem:[%s5750 + $0x68] sm:$0xff]
      %v5765 = vld [vmem:[%s5750 + $0x70] sm:$0xff]
      %v5766 = vld [vmem:[%s5750 + $0x78] sm:$0xff]
      %5767 = vmatprep.subr.mxu0 0.0
      %5768 = vmatpush1.msra.mxu0 %v5751
      %5769 = vmatprep.subr.mxu0 0.0
      %5770 = vmatpush1.msra.mxu0 %v5752
      %5771 = vmatprep.subr.mxu0 0.0
      %5772 = vmatpush1.msra.mxu0 %v5753
      %5773 = vmatprep.subr.mxu0 0.0
      %5774 = vmatpush1.msra.mxu0 %v5754
      %5775 = vmatprep.subr.mxu0 0.0
      %5776 = vmatpush1.msra.mxu0 %v5755
      %5777 = vmatprep.subr.mxu0 0.0
      %5778 = vmatpush1.msra.mxu0 %v5756
      %5779 = vmatprep.subr.mxu0 0.0
      %5780 = vmatpush1.msra.mxu0 %v5757
      %5781 = vmatprep.subr.mxu0 0.0
      %5782 = vmatpush1.msra.mxu0 %v5758
      %5783 = vmatprep.subr.mxu0 0.0
      %5784 = vmatpush1.msra.mxu0 %v5759
      %5785 = vmatprep.subr.mxu0 0.0
      %5786 = vmatpush1.msra.mxu0 %v5760
      %5787 = vmatprep.subr.mxu0 0.0
      %5788 = vmatpush1.msra.mxu0 %v5761
      %5789 = vmatprep.subr.mxu0 0.0
      %5790 = vmatpush1.msra.mxu0 %v5762
      %5791 = vmatprep.subr.mxu0 0.0
      %5792 = vmatpush1.msra.mxu0 %v5763
      %5793 = vmatprep.subr.mxu0 0.0
      %5794 = vmatpush1.msra.mxu0 %v5764
      %5795 = vmatprep.subr.mxu0 0.0
      %5796 = vmatpush1.msra.mxu0 %v5765
      %5797 = vmatprep.subr.mxu0 0.0
      %5798 = vmatpush1.msra.mxu0 %v5766
      %5799 = vmatprep.subr.mxu0 0.0
      %5800 = vmatpush1.msra.mxu0 0.0
      %5801 = vmatprep.subr.mxu0 0.0
      %5802 = vmatpush1.msra.mxu0 0.0
      %5803 = vmatprep.subr.mxu0 0.0
      %5804 = vmatpush1.msra.mxu0 0.0
      %5805 = vmatprep.subr.mxu0 0.0
      %5806 = vmatpush1.msra.mxu0 0.0
      %5807 = vmatprep.subr.mxu0 0.0
      %5808 = vmatpush1.msra.mxu0 0.0
      %5809 = vmatprep.subr.mxu0 0.0
      %5810 = vmatpush1.msra.mxu0 0.0
      %5811 = vmatprep.subr.mxu0 0.0
      %5812 = vmatpush1.msra.mxu0 0.0
      %5813 = vmatprep.subr.mxu0 0.0
      %5814 = vmatpush1.msra.mxu0 0.0
      %5815 = vmatprep.subr.mxu0 0.0
      %5816 = vmatpush1.msra.mxu0 0.0
      %5817 = vmatprep.subr.mxu0 0.0
      %5818 = vmatpush1.msra.mxu0 0.0
      %5819 = vmatprep.subr.mxu0 0.0
      %5820 = vmatpush1.msra.mxu0 0.0
      %5821 = vmatprep.subr.mxu0 0.0
      %5822 = vmatpush1.msra.mxu0 0.0
      %5823 = vmatprep.subr.mxu0 0.0
      %5824 = vmatpush1.msra.mxu0 0.0
      %5825 = vmatprep.subr.mxu0 0.0
      %5826 = vmatpush1.msra.mxu0 0.0
      %5827 = vmatprep.subr.mxu0 0.0
      %5828 = vmatpush1.msra.mxu0 0.0
      %5829 = vmatprep.subr.mxu0 0.0
      %5830 = vmatpush1.msra.mxu0 0.0
      %5831 = vmatprep.mubr.f32.mxu0 0.0
      %5832 = vmatmul.mubr.f32.gmra.mrb[0].mxu0 %v5718
      %v5833 = vpop.f32.mrb[0].mxu0
      %v5834 = vadd.f32 0.0, %v5833
      %v5835 = vpop.f32.mrb[0].mxu0
      %5836 = vmatprep.mubr.f32.mxu0 0.0
      %5837 = vmatmul.mubr.f32.gmra.mrb[0].mxu0 %v5719
      %v5838 = vpop.f32.mrb[0].mxu0
      %v5839 = vadd.f32 0.0, %v5838
      %v5840 = vpop.f32.mrb[0].mxu0
      %5841 = vmatprep.mubr.f32.mxu0 0.0
      %5842 = vmatmul.mubr.f32.gmra.mrb[0].mxu0 %v5720
      %v5843 = vpop.f32.mrb[0].mxu0
      %v5844 = vadd.f32 0.0, %v5843
      %v5845 = vpop.f32.mrb[0].mxu0
      %5846 = vmatprep.mubr.f32.mxu0 0.0
      %5847 = vmatmul.mubr.f32.gmra.mrb[0].mxu0 %v5721
      %v5848 = vpop.f32.mrb[0].mxu0
      %v5849 = vadd.f32 0.0, %v5848
      %v5850 = vpop.f32.mrb[0].mxu0
      %5851 = vmatprep.mubr.f32.mxu0 0.0
      %5852 = vmatmul.mubr.f32.gmra.mrb[0].mxu0 %v5722
      %v5853 = vpop.f32.mrb[0].mxu0
      %v5854 = vadd.f32 0.0, %v5853
      %v5855 = vpop.f32.mrb[0].mxu0
      %5856 = vmatprep.mubr.f32.mxu0 0.0
      %5857 = vmatmul.mubr.f32.gmra.mrb[0].mxu0 %v5723
      %v5858 = vpop.f32.mrb[0].mxu0
      %v5859 = vadd.f32 0.0, %v5858
      %v5860 = vpop.f32.mrb[0].mxu0
      %5861 = vmatprep.mubr.f32.mxu0 0.0
      %5862 = vmatmul.mubr.f32.gmra.mrb[0].mxu0 %v5724
      %v5863 = vpop.f32.mrb[0].mxu0
      %v5864 = vadd.f32 0.0, %v5863
      %v5865 = vpop.f32.mrb[0].mxu0
      %5866 = vmatprep.mubr.f32.mxu0 0.0
      %5867 = vmatmul.mubr.f32.gmra.mrb[0].mxu0 %v5725
      %v5868 = vpop.f32.mrb[0].mxu0
      %v5869 = vadd.f32 0.0, %v5868
      %v5870 = vpop.f32.mrb[0].mxu0
      %5871 = vmatprep.mubr.f32.mxu0 0.0
      %5872 = vmatmul.mubr.f32.gmra.mrb[0].mxu0 %v5726
      %v5873 = vpop.f32.mrb[0].mxu0
      %v5874 = vadd.f32 0.0, %v5873
      %v5875 = vpop.f32.mrb[0].mxu0
      %5876 = vmatprep.mubr.f32.mxu0 0.0
      %5877 = vmatmul.mubr.f32.gmra.mrb[0].mxu0 %v5727
      %v5878 = vpop.f32.mrb[0].mxu0
      %v5879 = vadd.f32 0.0, %v5878
      %v5880 = vpop.f32.mrb[0].mxu0
      %5881 = vmatprep.mubr.f32.mxu0 0.0
      %5882 = vmatmul.mubr.f32.gmra.mrb[0].mxu0 %v5728
      %v5883 = vpop.f32.mrb[0].mxu0
      %v5884 = vadd.f32 0.0, %v5883
      %v5885 = vpop.f32.mrb[0].mxu0
      %5886 = vmatprep.mubr.f32.mxu0 0.0
      %5887 = vmatmul.mubr.f32.gmra.mrb[0].mxu0 %v5729
      %v5888 = vpop.f32.mrb[0].mxu0
      %v5889 = vadd.f32 0.0, %v5888
      %v5890 = vpop.f32.mrb[0].mxu0
      %5891 = vmatprep.mubr.f32.mxu0 0.0
      %5892 = vmatmul.mubr.f32.gmra.mrb[0].mxu0 %v5730
      %v5893 = vpop.f32.mrb[0].mxu0
      %v5894 = vadd.f32 0.0, %v5893
      %v5895 = vpop.f32.mrb[0].mxu0
      %5896 = vmatprep.mubr.f32.mxu0 0.0
      %5897 = vmatmul.mubr.f32.gmra.mrb[0].mxu0 %v5731
      %v5898 = vpop.f32.mrb[0].mxu0
      %v5899 = vadd.f32 0.0, %v5898
      %v5900 = vpop.f32.mrb[0].mxu0
      %5901 = vmatprep.mubr.f32.mxu0 0.0
      %5902 = vmatmul.mubr.f32.gmra.mrb[0].mxu0 %v5732
      %v5903 = vpop.f32.mrb[0].mxu0
      %v5904 = vadd.f32 0.0, %v5903
      %v5905 = vpop.f32.mrb[0].mxu0
      %5906 = vmatprep.mubr.f32.mxu0 0.0
      %5907 = vmatmul.mubr.f32.gmra.mrb[0].mxu0 %v5733
      %v5908 = vpop.f32.mrb[0].mxu0
      %v5909 = vadd.f32 0.0, %v5908
      %v5910 = vpop.f32.mrb[0].mxu0
      %5911 = vmatprep.mubr.f32.mxu0 0.0
      %5912 = vmatmul.mubr.f32.gmra.mrb[0].mxu0 %v5734
      %v5913 = vpop.f32.mrb[0].mxu0
      %v5914 = vadd.f32 0.0, %v5913
      %v5915 = vpop.f32.mrb[0].mxu0
      %5916 = vmatprep.mubr.f32.mxu0 0.0
      %5917 = vmatmul.mubr.f32.gmra.mrb[0].mxu0 %v5735
      %v5918 = vpop.f32.mrb[0].mxu0
      %v5919 = vadd.f32 0.0, %v5918
      %v5920 = vpop.f32.mrb[0].mxu0
      %5921 = vmatprep.mubr.f32.mxu0 0.0
      %5922 = vmatmul.mubr.f32.gmra.mrb[0].mxu0 %v5736
      %v5923 = vpop.f32.mrb[0].mxu0
      %v5924 = vadd.f32 0.0, %v5923
      %v5925 = vpop.f32.mrb[0].mxu0
      %5926 = vmatprep.mubr.f32.mxu0 0.0
      %5927 = vmatmul.mubr.f32.gmra.mrb[0].mxu0 %v5737
      %v5928 = vpop.f32.mrb[0].mxu0
      %v5929 = vadd.f32 0.0, %v5928
      %v5930 = vpop.f32.mrb[0].mxu0
      %5931 = vmatprep.mubr.f32.mxu0 0.0
      %5932 = vmatmul.mubr.f32.gmra.mrb[0].mxu0 %v5738
      %v5933 = vpop.f32.mrb[0].mxu0
      %v5934 = vadd.f32 0.0, %v5933
      %v5935 = vpop.f32.mrb[0].mxu0
      %5936 = vmatprep.mubr.f32.mxu0 0.0
      %5937 = vmatmul.mubr.f32.gmra.mrb[0].mxu0 %v5739
      %v5938 = vpop.f32.mrb[0].mxu0
      %v5939 = vadd.f32 0.0, %v5938
      %v5940 = vpop.f32.mrb[0].mxu0
      %5941 = vmatprep.mubr.f32.mxu0 0.0
      %5942 = vmatmul.mubr.f32.gmra.mrb[0].mxu0 %v5740
      %v5943 = vpop.f32.mrb[0].mxu0
      %v5944 = vadd.f32 0.0, %v5943
      %v5945 = vpop.f32.mrb[0].mxu0
      %5946 = vmatprep.mubr.f32.mxu0 0.0
      %5947 = vmatmul.mubr.f32.gmra.mrb[0].mxu0 %v5741
      %v5948 = vpop.f32.mrb[0].mxu0
      %v5949 = vadd.f32 0.0, %v5948
      %v5950 = vpop.f32.mrb[0].mxu0
      %5951 = vmatprep.mubr.f32.mxu0 0.0
      %5952 = vmatmul.mubr.f32.gmra.mrb[0].mxu0 %v5742
      %v5953 = vpop.f32.mrb[0].mxu0
      %v5954 = vadd.f32 0.0, %v5953
      %v5955 = vpop.f32.mrb[0].mxu0
      %5956 = vmatprep.mubr.f32.mxu0 0.0
      %5957 = vmatmul.mubr.f32.gmra.mrb[0].mxu0 %v5743
      %v5958 = vpop.f32.mrb[0].mxu0
      %v5959 = vadd.f32 0.0, %v5958
      %v5960 = vpop.f32.mrb[0].mxu0
      %5961 = vmatprep.mubr.f32.mxu0 0.0
      %5962 = vmatmul.mubr.f32.gmra.mrb[0].mxu0 %v5744
      %v5963 = vpop.f32.mrb[0].mxu0
      %v5964 = vadd.f32 0.0, %v5963
      %v5965 = vpop.f32.mrb[0].mxu0
      %5966 = vmatprep.mubr.f32.mxu0 0.0
      %5967 = vmatmul.mubr.f32.gmra.mrb[0].mxu0 %v5745
      %v5968 = vpop.f32.mrb[0].mxu0
      %v5969 = vadd.f32 0.0, %v5968
      %v5970 = vpop.f32.mrb[0].mxu0
      %5971 = vmatprep.mubr.f32.mxu0 0.0
      %5972 = vmatmul.mubr.f32.gmra.mrb[0].mxu0 %v5746
      %v5973 = vpop.f32.mrb[0].mxu0
      %v5974 = vadd.f32 0.0, %v5973
      %v5975 = vpop.f32.mrb[0].mxu0
      %5976 = vmatprep.mubr.f32.mxu0 0.0
      %5977 = vmatmul.mubr.f32.gmra.mrb[0].mxu0 %v5747
      %v5978 = vpop.f32.mrb[0].mxu0
      %v5979 = vadd.f32 0.0, %v5978
      %v5980 = vpop.f32.mrb[0].mxu0
      %5981 = vmatprep.mubr.f32.mxu0 0.0
      %5982 = vmatmul.mubr.f32.gmra.mrb[0].mxu0 %v5748
      %v5983 = vpop.f32.mrb[0].mxu0
      %v5984 = vadd.f32 0.0, %v5983
      %v5985 = vpop.f32.mrb[0].mxu0
      %5986 = vmatprep.mubr.f32.mxu0 0.0
      %5987 = vmatmul.mubr.f32.gmra.mrb[0].mxu0 %v5749
      %v5988 = vpop.f32.mrb[0].mxu0
      %v5989 = vadd.f32 0.0, %v5988
      %v5990 = vpop.f32.mrb[0].mxu0
      %5991 = vdwg.mxu0
      %v5992 = vadd.f32 %v5685, %v5834
      %v5993 = vadd.f32 %v5686, %v5839
      %v5994 = vadd.f32 %v5687, %v5844
      %v5995 = vadd.f32 %v5688, %v5849
      %v5996 = vadd.f32 %v5689, %v5854
      %v5997 = vadd.f32 %v5690, %v5859
      %v5998 = vadd.f32 %v5691, %v5864
      %v5999 = vadd.f32 %v5692, %v5869
      %v6000 = vadd.f32 %v5693, %v5874
      %v6001 = vadd.f32 %v5694, %v5879
      %v6002 = vadd.f32 %v5695, %v5884
      %v6003 = vadd.f32 %v5696, %v5889
      %v6004 = vadd.f32 %v5697, %v5894
      %v6005 = vadd.f32 %v5698, %v5899
      %v6006 = vadd.f32 %v5699, %v5904
      %v6007 = vadd.f32 %v5700, %v5909
      %v6008 = vadd.f32 %v5701, %v5914
      %v6009 = vadd.f32 %v5702, %v5919
      %v6010 = vadd.f32 %v5703, %v5924
      %v6011 = vadd.f32 %v5704, %v5929
      %v6012 = vadd.f32 %v5705, %v5934
      %v6013 = vadd.f32 %v5706, %v5939
      %v6014 = vadd.f32 %v5707, %v5944
      %v6015 = vadd.f32 %v5708, %v5949
      %v6016 = vadd.f32 %v5709, %v5954
      %v6017 = vadd.f32 %v5710, %v5959
      %v6018 = vadd.f32 %v5711, %v5964
      %v6019 = vadd.f32 %v5712, %v5969
      %v6020 = vadd.f32 %v5713, %v5974
      %v6021 = vadd.f32 %v5714, %v5979
      %v6022 = vadd.f32 %v5715, %v5984
      %v6023 = vadd.f32 %v5716, %v5989
      %v6024 = vld [vmem:[%s5717 + $0x3] sm:$0xff]
      %v6025 = vld [vmem:[%s5717 + $0xb] sm:$0xff]
      %v6026 = vld [vmem:[%s5717 + $0x1b] sm:$0xff]
      %v6027 = vld [vmem:[%s5717 + $0x23] sm:$0xff]
      %v6028 = vld [vmem:[%s5717 + $0x33] sm:$0xff]
      %v6029 = vld [vmem:[%s5717 + $0x3b] sm:$0xff]
      %v6030 = vld [vmem:[%s5717 + $0x4b] sm:$0xff]
      %v6031 = vld [vmem:[%s5717 + $0x53] sm:$0xff]
      %v6032 = vld [vmem:[%s5717 + $0x63] sm:$0xff]
      %v6033 = vld [vmem:[%s5717 + $0x6b] sm:$0xff]
      %v6034 = vld [vmem:[%s5717 + $0x7b] sm:$0xff]
      %v6035 = vld [vmem:[%s5717 + $0x83] sm:$0xff]
      %v6036 = vld [vmem:[%s5717 + $0x93] sm:$0xff]
      %v6037 = vld [vmem:[%s5717 + $0x9b] sm:$0xff]
      %v6038 = vld [vmem:[%s5717 + $0xab] sm:$0xff]
      %v6039 = vld [vmem:[%s5717 + $0xb3] sm:$0xff]
      %v6040 = vld [vmem:[%s5717 + $0xc3] sm:$0xff]
      %v6041 = vld [vmem:[%s5717 + $0xcb] sm:$0xff]
      %v6042 = vld [vmem:[%s5717 + $0xdb] sm:$0xff]
      %v6043 = vld [vmem:[%s5717 + $0xe3] sm:$0xff]
      %v6044 = vld [vmem:[%s5717 + $0xf3] sm:$0xff]
      %v6045 = vld [vmem:[%s5717 + $0xfb] sm:$0xff]
      %v6046 = vld [vmem:[%s5717 + $0x10b] sm:$0xff]
      %v6047 = vld [vmem:[%s5717 + $0x113] sm:$0xff]
      %v6048 = vld [vmem:[%s5717 + $0x123] sm:$0xff]
      %v6049 = vld [vmem:[%s5717 + $0x12b] sm:$0xff]
      %v6050 = vld [vmem:[%s5717 + $0x13b] sm:$0xff]
      %v6051 = vld [vmem:[%s5717 + $0x143] sm:$0xff]
      %v6052 = vld [vmem:[%s5717 + $0x153] sm:$0xff]
      %v6053 = vld [vmem:[%s5717 + $0x15b] sm:$0xff]
      %v6054 = vld [vmem:[%s5717 + $0x16b] sm:$0xff]
      %v6055 = vld [vmem:[%s5717 + $0x173] sm:$0xff]
      %s6056 = scalar_lea.vmem %s3, 896
      %v6057 = vld [vmem:[%s6056] sm:$0xff]
      %v6058 = vld [vmem:[%s6056 + $0x8] sm:$0xff]
      %v6059 = vld [vmem:[%s6056 + $0x10] sm:$0xff]
      %v6060 = vld [vmem:[%s6056 + $0x18] sm:$0xff]
      %v6061 = vld [vmem:[%s6056 + $0x20] sm:$0xff]
      %v6062 = vld [vmem:[%s6056 + $0x28] sm:$0xff]
      %v6063 = vld [vmem:[%s6056 + $0x30] sm:$0xff]
      %v6064 = vld [vmem:[%s6056 + $0x38] sm:$0xff]
      %v6065 = vld [vmem:[%s6056 + $0x40] sm:$0xff]
      %v6066 = vld [vmem:[%s6056 + $0x48] sm:$0xff]
      %v6067 = vld [vmem:[%s6056 + $0x50] sm:$0xff]
      %v6068 = vld [vmem:[%s6056 + $0x58] sm:$0xff]
      %v6069 = vld [vmem:[%s6056 + $0x60] sm:$0xff]
      %v6070 = vld [vmem:[%s6056 + $0x68] sm:$0xff]
      %v6071 = vld [vmem:[%s6056 + $0x70] sm:$0xff]
      %v6072 = vld [vmem:[%s6056 + $0x78] sm:$0xff]
      %6073 = vmatprep.subr.mxu0 0.0
      %6074 = vmatpush1.msra.mxu0 %v6057
      %6075 = vmatprep.subr.mxu0 0.0
      %6076 = vmatpush1.msra.mxu0 %v6058
      %6077 = vmatprep.subr.mxu0 0.0
      %6078 = vmatpush1.msra.mxu0 %v6059
      %6079 = vmatprep.subr.mxu0 0.0
      %6080 = vmatpush1.msra.mxu0 %v6060
      %6081 = vmatprep.subr.mxu0 0.0
      %6082 = vmatpush1.msra.mxu0 %v6061
      %6083 = vmatprep.subr.mxu0 0.0
      %6084 = vmatpush1.msra.mxu0 %v6062
      %6085 = vmatprep.subr.mxu0 0.0
      %6086 = vmatpush1.msra.mxu0 %v6063
      %6087 = vmatprep.subr.mxu0 0.0
      %6088 = vmatpush1.msra.mxu0 %v6064
      %6089 = vmatprep.subr.mxu0 0.0
      %6090 = vmatpush1.msra.mxu0 %v6065
      %6091 = vmatprep.subr.mxu0 0.0
      %6092 = vmatpush1.msra.mxu0 %v6066
      %6093 = vmatprep.subr.mxu0 0.0
      %6094 = vmatpush1.msra.mxu0 %v6067
      %6095 = vmatprep.subr.mxu0 0.0
      %6096 = vmatpush1.msra.mxu0 %v6068
      %6097 = vmatprep.subr.mxu0 0.0
      %6098 = vmatpush1.msra.mxu0 %v6069
      %6099 = vmatprep.subr.mxu0 0.0
      %6100 = vmatpush1.msra.mxu0 %v6070
      %6101 = vmatprep.subr.mxu0 0.0
      %6102 = vmatpush1.msra.mxu0 %v6071
      %6103 = vmatprep.subr.mxu0 0.0
      %6104 = vmatpush1.msra.mxu0 %v6072
      %6105 = vmatprep.subr.mxu0 0.0
      %6106 = vmatpush1.msra.mxu0 0.0
      %6107 = vmatprep.subr.mxu0 0.0
      %6108 = vmatpush1.msra.mxu0 0.0
      %6109 = vmatprep.subr.mxu0 0.0
      %6110 = vmatpush1.msra.mxu0 0.0
      %6111 = vmatprep.subr.mxu0 0.0
      %6112 = vmatpush1.msra.mxu0 0.0
      %6113 = vmatprep.subr.mxu0 0.0
      %6114 = vmatpush1.msra.mxu0 0.0
      %6115 = vmatprep.subr.mxu0 0.0
      %6116 = vmatpush1.msra.mxu0 0.0
      %6117 = vmatprep.subr.mxu0 0.0
      %6118 = vmatpush1.msra.mxu0 0.0
      %6119 = vmatprep.subr.mxu0 0.0
      %6120 = vmatpush1.msra.mxu0 0.0
      %6121 = vmatprep.subr.mxu0 0.0
      %6122 = vmatpush1.msra.mxu0 0.0
      %6123 = vmatprep.subr.mxu0 0.0
      %6124 = vmatpush1.msra.mxu0 0.0
      %6125 = vmatprep.subr.mxu0 0.0
      %6126 = vmatpush1.msra.mxu0 0.0
      %6127 = vmatprep.subr.mxu0 0.0
      %6128 = vmatpush1.msra.mxu0 0.0
      %6129 = vmatprep.subr.mxu0 0.0
      %6130 = vmatpush1.msra.mxu0 0.0
      %6131 = vmatprep.subr.mxu0 0.0
      %6132 = vmatpush1.msra.mxu0 0.0
      %6133 = vmatprep.subr.mxu0 0.0
      %6134 = vmatpush1.msra.mxu0 0.0
      %6135 = vmatprep.subr.mxu0 0.0
      %6136 = vmatpush1.msra.mxu0 0.0
      %6137 = vmatprep.mubr.f32.mxu0 0.0
      %6138 = vmatmul.mubr.f32.gmra.mrb[0].mxu0 %v6024
      %v6139 = vpop.f32.mrb[0].mxu0
      %v6140 = vadd.f32 0.0, %v6139
      %v6141 = vpop.f32.mrb[0].mxu0
      %6142 = vmatprep.mubr.f32.mxu0 0.0
      %6143 = vmatmul.mubr.f32.gmra.mrb[0].mxu0 %v6025
      %v6144 = vpop.f32.mrb[0].mxu0
      %v6145 = vadd.f32 0.0, %v6144
      %v6146 = vpop.f32.mrb[0].mxu0
      %6147 = vmatprep.mubr.f32.mxu0 0.0
      %6148 = vmatmul.mubr.f32.gmra.mrb[0].mxu0 %v6026
      %v6149 = vpop.f32.mrb[0].mxu0
      %v6150 = vadd.f32 0.0, %v6149
      %v6151 = vpop.f32.mrb[0].mxu0
      %6152 = vmatprep.mubr.f32.mxu0 0.0
      %6153 = vmatmul.mubr.f32.gmra.mrb[0].mxu0 %v6027
      %v6154 = vpop.f32.mrb[0].mxu0
      %v6155 = vadd.f32 0.0, %v6154
      %v6156 = vpop.f32.mrb[0].mxu0
      %6157 = vmatprep.mubr.f32.mxu0 0.0
      %6158 = vmatmul.mubr.f32.gmra.mrb[0].mxu0 %v6028
      %v6159 = vpop.f32.mrb[0].mxu0
      %v6160 = vadd.f32 0.0, %v6159
      %v6161 = vpop.f32.mrb[0].mxu0
      %6162 = vmatprep.mubr.f32.mxu0 0.0
      %6163 = vmatmul.mubr.f32.gmra.mrb[0].mxu0 %v6029
      %v6164 = vpop.f32.mrb[0].mxu0
      %v6165 = vadd.f32 0.0, %v6164
      %v6166 = vpop.f32.mrb[0].mxu0
      %6167 = vmatprep.mubr.f32.mxu0 0.0
      %6168 = vmatmul.mubr.f32.gmra.mrb[0].mxu0 %v6030
      %v6169 = vpop.f32.mrb[0].mxu0
      %v6170 = vadd.f32 0.0, %v6169
      %v6171 = vpop.f32.mrb[0].mxu0
      %6172 = vmatprep.mubr.f32.mxu0 0.0
      %6173 = vmatmul.mubr.f32.gmra.mrb[0].mxu0 %v6031
      %v6174 = vpop.f32.mrb[0].mxu0
      %v6175 = vadd.f32 0.0, %v6174
      %v6176 = vpop.f32.mrb[0].mxu0
      %6177 = vmatprep.mubr.f32.mxu0 0.0
      %6178 = vmatmul.mubr.f32.gmra.mrb[0].mxu0 %v6032
      %v6179 = vpop.f32.mrb[0].mxu0
      %v6180 = vadd.f32 0.0, %v6179
      %v6181 = vpop.f32.mrb[0].mxu0
      %6182 = vmatprep.mubr.f32.mxu0 0.0
      %6183 = vmatmul.mubr.f32.gmra.mrb[0].mxu0 %v6033
      %v6184 = vpop.f32.mrb[0].mxu0
      %v6185 = vadd.f32 0.0, %v6184
      %v6186 = vpop.f32.mrb[0].mxu0
      %6187 = vmatprep.mubr.f32.mxu0 0.0
      %6188 = vmatmul.mubr.f32.gmra.mrb[0].mxu0 %v6034
      %v6189 = vpop.f32.mrb[0].mxu0
      %v6190 = vadd.f32 0.0, %v6189
      %v6191 = vpop.f32.mrb[0].mxu0
      %6192 = vmatprep.mubr.f32.mxu0 0.0
      %6193 = vmatmul.mubr.f32.gmra.mrb[0].mxu0 %v6035
      %v6194 = vpop.f32.mrb[0].mxu0
      %v6195 = vadd.f32 0.0, %v6194
      %v6196 = vpop.f32.mrb[0].mxu0
      %6197 = vmatprep.mubr.f32.mxu0 0.0
      %6198 = vmatmul.mubr.f32.gmra.mrb[0].mxu0 %v6036
      %v6199 = vpop.f32.mrb[0].mxu0
      %v6200 = vadd.f32 0.0, %v6199
      %v6201 = vpop.f32.mrb[0].mxu0
      %6202 = vmatprep.mubr.f32.mxu0 0.0
      %6203 = vmatmul.mubr.f32.gmra.mrb[0].mxu0 %v6037
      %v6204 = vpop.f32.mrb[0].mxu0
      %v6205 = vadd.f32 0.0, %v6204
      %v6206 = vpop.f32.mrb[0].mxu0
      %6207 = vmatprep.mubr.f32.mxu0 0.0
      %6208 = vmatmul.mubr.f32.gmra.mrb[0].mxu0 %v6038
      %v6209 = vpop.f32.mrb[0].mxu0
      %v6210 = vadd.f32 0.0, %v6209
      %v6211 = vpop.f32.mrb[0].mxu0
      %6212 = vmatprep.mubr.f32.mxu0 0.0
      %6213 = vmatmul.mubr.f32.gmra.mrb[0].mxu0 %v6039
      %v6214 = vpop.f32.mrb[0].mxu0
      %v6215 = vadd.f32 0.0, %v6214
      %v6216 = vpop.f32.mrb[0].mxu0
      %6217 = vmatprep.mubr.f32.mxu0 0.0
      %6218 = vmatmul.mubr.f32.gmra.mrb[0].mxu0 %v6040
      %v6219 = vpop.f32.mrb[0].mxu0
      %v6220 = vadd.f32 0.0, %v6219
      %v6221 = vpop.f32.mrb[0].mxu0
      %6222 = vmatprep.mubr.f32.mxu0 0.0
      %6223 = vmatmul.mubr.f32.gmra.mrb[0].mxu0 %v6041
      %v6224 = vpop.f32.mrb[0].mxu0
      %v6225 = vadd.f32 0.0, %v6224
      %v6226 = vpop.f32.mrb[0].mxu0
      %6227 = vmatprep.mubr.f32.mxu0 0.0
      %6228 = vmatmul.mubr.f32.gmra.mrb[0].mxu0 %v6042
      %v6229 = vpop.f32.mrb[0].mxu0
      %v6230 = vadd.f32 0.0, %v6229
      %v6231 = vpop.f32.mrb[0].mxu0
      %6232 = vmatprep.mubr.f32.mxu0 0.0
      %6233 = vmatmul.mubr.f32.gmra.mrb[0].mxu0 %v6043
      %v6234 = vpop.f32.mrb[0].mxu0
      %v6235 = vadd.f32 0.0, %v6234
      %v6236 = vpop.f32.mrb[0].mxu0
      %6237 = vmatprep.mubr.f32.mxu0 0.0
      %6238 = vmatmul.mubr.f32.gmra.mrb[0].mxu0 %v6044
      %v6239 = vpop.f32.mrb[0].mxu0
      %v6240 = vadd.f32 0.0, %v6239
      %v6241 = vpop.f32.mrb[0].mxu0
      %6242 = vmatprep.mubr.f32.mxu0 0.0
      %6243 = vmatmul.mubr.f32.gmra.mrb[0].mxu0 %v6045
      %v6244 = vpop.f32.mrb[0].mxu0
      %v6245 = vadd.f32 0.0, %v6244
      %v6246 = vpop.f32.mrb[0].mxu0
      %6247 = vmatprep.mubr.f32.mxu0 0.0
      %6248 = vmatmul.mubr.f32.gmra.mrb[0].mxu0 %v6046
      %v6249 = vpop.f32.mrb[0].mxu0
      %v6250 = vadd.f32 0.0, %v6249
      %v6251 = vpop.f32.mrb[0].mxu0
      %6252 = vmatprep.mubr.f32.mxu0 0.0
      %6253 = vmatmul.mubr.f32.gmra.mrb[0].mxu0 %v6047
      %v6254 = vpop.f32.mrb[0].mxu0
      %v6255 = vadd.f32 0.0, %v6254
      %v6256 = vpop.f32.mrb[0].mxu0
      %6257 = vmatprep.mubr.f32.mxu0 0.0
      %6258 = vmatmul.mubr.f32.gmra.mrb[0].mxu0 %v6048
      %v6259 = vpop.f32.mrb[0].mxu0
      %v6260 = vadd.f32 0.0, %v6259
      %v6261 = vpop.f32.mrb[0].mxu0
      %6262 = vmatprep.mubr.f32.mxu0 0.0
      %6263 = vmatmul.mubr.f32.gmra.mrb[0].mxu0 %v6049
      %v6264 = vpop.f32.mrb[0].mxu0
      %v6265 = vadd.f32 0.0, %v6264
      %v6266 = vpop.f32.mrb[0].mxu0
      %6267 = vmatprep.mubr.f32.mxu0 0.0
      %6268 = vmatmul.mubr.f32.gmra.mrb[0].mxu0 %v6050
      %v6269 = vpop.f32.mrb[0].mxu0
      %v6270 = vadd.f32 0.0, %v6269
      %v6271 = vpop.f32.mrb[0].mxu0
      %6272 = vmatprep.mubr.f32.mxu0 0.0
      %6273 = vmatmul.mubr.f32.gmra.mrb[0].mxu0 %v6051
      %v6274 = vpop.f32.mrb[0].mxu0
      %v6275 = vadd.f32 0.0, %v6274
      %v6276 = vpop.f32.mrb[0].mxu0
      %6277 = vmatprep.mubr.f32.mxu0 0.0
      %6278 = vmatmul.mubr.f32.gmra.mrb[0].mxu0 %v6052
      %v6279 = vpop.f32.mrb[0].mxu0
      %v6280 = vadd.f32 0.0, %v6279
      %v6281 = vpop.f32.mrb[0].mxu0
      %6282 = vmatprep.mubr.f32.mxu0 0.0
      %6283 = vmatmul.mubr.f32.gmra.mrb[0].mxu0 %v6053
      %v6284 = vpop.f32.mrb[0].mxu0
      %v6285 = vadd.f32 0.0, %v6284
      %v6286 = vpop.f32.mrb[0].mxu0
      %6287 = vmatprep.mubr.f32.mxu0 0.0
      %6288 = vmatmul.mubr.f32.gmra.mrb[0].mxu0 %v6054
      %v6289 = vpop.f32.mrb[0].mxu0
      %v6290 = vadd.f32 0.0, %v6289
      %v6291 = vpop.f32.mrb[0].mxu0
      %6292 = vmatprep.mubr.f32.mxu0 0.0
      %6293 = vmatmul.mubr.f32.gmra.mrb[0].mxu0 %v6055
      %v6294 = vpop.f32.mrb[0].mxu0
      %v6295 = vadd.f32 0.0, %v6294
      %v6296 = vpop.f32.mrb[0].mxu0
      %6297 = vdwg.mxu0
      %v6298 = vadd.f32 %v5992, %v6140
      %v6299 = vadd.f32 %v5993, %v6145
      %v6300 = vadd.f32 %v5994, %v6150
      %v6301 = vadd.f32 %v5995, %v6155
      %v6302 = vadd.f32 %v5996, %v6160
      %v6303 = vadd.f32 %v5997, %v6165
      %v6304 = vadd.f32 %v5998, %v6170
      %v6305 = vadd.f32 %v5999, %v6175
      %v6306 = vadd.f32 %v6000, %v6180
      %v6307 = vadd.f32 %v6001, %v6185
      %v6308 = vadd.f32 %v6002, %v6190
      %v6309 = vadd.f32 %v6003, %v6195
      %v6310 = vadd.f32 %v6004, %v6200
      %v6311 = vadd.f32 %v6005, %v6205
      %v6312 = vadd.f32 %v6006, %v6210
      %v6313 = vadd.f32 %v6007, %v6215
      %v6314 = vadd.f32 %v6008, %v6220
      %v6315 = vadd.f32 %v6009, %v6225
      %v6316 = vadd.f32 %v6010, %v6230
      %v6317 = vadd.f32 %v6011, %v6235
      %v6318 = vadd.f32 %v6012, %v6240
      %v6319 = vadd.f32 %v6013, %v6245
      %v6320 = vadd.f32 %v6014, %v6250
      %v6321 = vadd.f32 %v6015, %v6255
      %v6322 = vadd.f32 %v6016, %v6260
      %v6323 = vadd.f32 %v6017, %v6265
      %v6324 = vadd.f32 %v6018, %v6270
      %v6325 = vadd.f32 %v6019, %v6275
      %v6326 = vadd.f32 %v6020, %v6280
      %v6327 = vadd.f32 %v6021, %v6285
      %v6328 = vadd.f32 %v6022, %v6290
      %v6329 = vadd.f32 %v6023, %v6295
      %v6330 = vld [vmem:[%s5717 + $0x6] sm:$0xff]
      %v6331 = vld [vmem:[%s5717 + $0xe] sm:$0xff]
      %v6332 = vld [vmem:[%s5717 + $0x1e] sm:$0xff]
      %v6333 = vld [vmem:[%s5717 + $0x26] sm:$0xff]
      %v6334 = vld [vmem:[%s5717 + $0x36] sm:$0xff]
      %v6335 = vld [vmem:[%s5717 + $0x3e] sm:$0xff]
      %v6336 = vld [vmem:[%s5717 + $0x4e] sm:$0xff]
      %v6337 = vld [vmem:[%s5717 + $0x56] sm:$0xff]
      %v6338 = vld [vmem:[%s5717 + $0x66] sm:$0xff]
      %v6339 = vld [vmem:[%s5717 + $0x6e] sm:$0xff]
      %v6340 = vld [vmem:[%s5717 + $0x7e] sm:$0xff]
      %v6341 = vld [vmem:[%s5717 + $0x86] sm:$0xff]
      %v6342 = vld [vmem:[%s5717 + $0x96] sm:$0xff]
      %v6343 = vld [vmem:[%s5717 + $0x9e] sm:$0xff]
      %v6344 = vld [vmem:[%s5717 + $0xae] sm:$0xff]
      %v6345 = vld [vmem:[%s5717 + $0xb6] sm:$0xff]
      %v6346 = vld [vmem:[%s5717 + $0xc6] sm:$0xff]
      %v6347 = vld [vmem:[%s5717 + $0xce] sm:$0xff]
      %v6348 = vld [vmem:[%s5717 + $0xde] sm:$0xff]
      %v6349 = vld [vmem:[%s5717 + $0xe6] sm:$0xff]
      %v6350 = vld [vmem:[%s5717 + $0xf6] sm:$0xff]
      %v6351 = vld [vmem:[%s5717 + $0xfe] sm:$0xff]
      %v6352 = vld [vmem:[%s5717 + $0x10e] sm:$0xff]
      %v6353 = vld [vmem:[%s5717 + $0x116] sm:$0xff]
      %v6354 = vld [vmem:[%s5717 + $0x126] sm:$0xff]
      %v6355 = vld [vmem:[%s5717 + $0x12e] sm:$0xff]
      %v6356 = vld [vmem:[%s5717 + $0x13e] sm:$0xff]
      %v6357 = vld [vmem:[%s5717 + $0x146] sm:$0xff]
      %v6358 = vld [vmem:[%s5717 + $0x156] sm:$0xff]
      %v6359 = vld [vmem:[%s5717 + $0x15e] sm:$0xff]
      %v6360 = vld [vmem:[%s5717 + $0x16e] sm:$0xff]
      %v6361 = vld [vmem:[%s5717 + $0x176] sm:$0xff]
      %s6362 = scalar_lea.vmem %s3, 1024
      %v6363 = vld [vmem:[%s6362] sm:$0xff]
      %v6364 = vld [vmem:[%s6362 + $0x8] sm:$0xff]
      %v6365 = vld [vmem:[%s6362 + $0x10] sm:$0xff]
      %v6366 = vld [vmem:[%s6362 + $0x18] sm:$0xff]
      %v6367 = vld [vmem:[%s6362 + $0x20] sm:$0xff]
      %v6368 = vld [vmem:[%s6362 + $0x28] sm:$0xff]
      %v6369 = vld [vmem:[%s6362 + $0x30] sm:$0xff]
      %v6370 = vld [vmem:[%s6362 + $0x38] sm:$0xff]
      %v6371 = vld [vmem:[%s6362 + $0x40] sm:$0xff]
      %v6372 = vld [vmem:[%s6362 + $0x48] sm:$0xff]
      %v6373 = vld [vmem:[%s6362 + $0x50] sm:$0xff]
      %v6374 = vld [vmem:[%s6362 + $0x58] sm:$0xff]
      %v6375 = vld [vmem:[%s6362 + $0x60] sm:$0xff]
      %v6376 = vld [vmem:[%s6362 + $0x68] sm:$0xff]
      %v6377 = vld [vmem:[%s6362 + $0x70] sm:$0xff]
      %v6378 = vld [vmem:[%s6362 + $0x78] sm:$0xff]
      %6379 = vmatprep.subr.mxu0 0.0
      %6380 = vmatpush1.msra.mxu0 %v6363
      %6381 = vmatprep.subr.mxu0 0.0
      %6382 = vmatpush1.msra.mxu0 %v6364
      %6383 = vmatprep.subr.mxu0 0.0
      %6384 = vmatpush1.msra.mxu0 %v6365
      %6385 = vmatprep.subr.mxu0 0.0
      %6386 = vmatpush1.msra.mxu0 %v6366
      %6387 = vmatprep.subr.mxu0 0.0
      %6388 = vmatpush1.msra.mxu0 %v6367
      %6389 = vmatprep.subr.mxu0 0.0
      %6390 = vmatpush1.msra.mxu0 %v6368
      %6391 = vmatprep.subr.mxu0 0.0
      %6392 = vmatpush1.msra.mxu0 %v6369
      %6393 = vmatprep.subr.mxu0 0.0
      %6394 = vmatpush1.msra.mxu0 %v6370
      %6395 = vmatprep.subr.mxu0 0.0
      %6396 = vmatpush1.msra.mxu0 %v6371
      %6397 = vmatprep.subr.mxu0 0.0
      %6398 = vmatpush1.msra.mxu0 %v6372
      %6399 = vmatprep.subr.mxu0 0.0
      %6400 = vmatpush1.msra.mxu0 %v6373
      %6401 = vmatprep.subr.mxu0 0.0
      %6402 = vmatpush1.msra.mxu0 %v6374
      %6403 = vmatprep.subr.mxu0 0.0
      %6404 = vmatpush1.msra.mxu0 %v6375
      %6405 = vmatprep.subr.mxu0 0.0
      %6406 = vmatpush1.msra.mxu0 %v6376
      %6407 = vmatprep.subr.mxu0 0.0
      %6408 = vmatpush1.msra.mxu0 %v6377
      %6409 = vmatprep.subr.mxu0 0.0
      %6410 = vmatpush1.msra.mxu0 %v6378
      %6411 = vmatprep.subr.mxu0 0.0
      %6412 = vmatpush1.msra.mxu0 0.0
      %6413 = vmatprep.subr.mxu0 0.0
      %6414 = vmatpush1.msra.mxu0 0.0
      %6415 = vmatprep.subr.mxu0 0.0
      %6416 = vmatpush1.msra.mxu0 0.0
      %6417 = vmatprep.subr.mxu0 0.0
      %6418 = vmatpush1.msra.mxu0 0.0
      %6419 = vmatprep.subr.mxu0 0.0
      %6420 = vmatpush1.msra.mxu0 0.0
      %6421 = vmatprep.subr.mxu0 0.0
      %6422 = vmatpush1.msra.mxu0 0.0
      %6423 = vmatprep.subr.mxu0 0.0
      %6424 = vmatpush1.msra.mxu0 0.0
      %6425 = vmatprep.subr.mxu0 0.0
      %6426 = vmatpush1.msra.mxu0 0.0
      %6427 = vmatprep.subr.mxu0 0.0
      %6428 = vmatpush1.msra.mxu0 0.0
      %6429 = vmatprep.subr.mxu0 0.0
      %6430 = vmatpush1.msra.mxu0 0.0
      %6431 = vmatprep.subr.mxu0 0.0
      %6432 = vmatpush1.msra.mxu0 0.0
      %6433 = vmatprep.subr.mxu0 0.0
      %6434 = vmatpush1.msra.mxu0 0.0
      %6435 = vmatprep.subr.mxu0 0.0
      %6436 = vmatpush1.msra.mxu0 0.0
      %6437 = vmatprep.subr.mxu0 0.0
      %6438 = vmatpush1.msra.mxu0 0.0
      %6439 = vmatprep.subr.mxu0 0.0
      %6440 = vmatpush1.msra.mxu0 0.0
      %6441 = vmatprep.subr.mxu0 0.0
      %6442 = vmatpush1.msra.mxu0 0.0
      %6443 = vmatprep.mubr.f32.mxu0 0.0
      %6444 = vmatmul.mubr.f32.gmra.mrb[0].mxu0 %v6330
      %v6445 = vpop.f32.mrb[0].mxu0
      %v6446 = vadd.f32 0.0, %v6445
      %v6447 = vpop.f32.mrb[0].mxu0
      %6448 = vmatprep.mubr.f32.mxu0 0.0
      %6449 = vmatmul.mubr.f32.gmra.mrb[0].mxu0 %v6331
      %v6450 = vpop.f32.mrb[0].mxu0
      %v6451 = vadd.f32 0.0, %v6450
      %v6452 = vpop.f32.mrb[0].mxu0
      %6453 = vmatprep.mubr.f32.mxu0 0.0
      %6454 = vmatmul.mubr.f32.gmra.mrb[0].mxu0 %v6332
      %v6455 = vpop.f32.mrb[0].mxu0
      %v6456 = vadd.f32 0.0, %v6455
      %v6457 = vpop.f32.mrb[0].mxu0
      %6458 = vmatprep.mubr.f32.mxu0 0.0
      %6459 = vmatmul.mubr.f32.gmra.mrb[0].mxu0 %v6333
      %v6460 = vpop.f32.mrb[0].mxu0
      %v6461 = vadd.f32 0.0, %v6460
      %v6462 = vpop.f32.mrb[0].mxu0
      %6463 = vmatprep.mubr.f32.mxu0 0.0
      %6464 = vmatmul.mubr.f32.gmra.mrb[0].mxu0 %v6334
      %v6465 = vpop.f32.mrb[0].mxu0
      %v6466 = vadd.f32 0.0, %v6465
      %v6467 = vpop.f32.mrb[0].mxu0
      %6468 = vmatprep.mubr.f32.mxu0 0.0
      %6469 = vmatmul.mubr.f32.gmra.mrb[0].mxu0 %v6335
      %v6470 = vpop.f32.mrb[0].mxu0
      %v6471 = vadd.f32 0.0, %v6470
      %v6472 = vpop.f32.mrb[0].mxu0
      %6473 = vmatprep.mubr.f32.mxu0 0.0
      %6474 = vmatmul.mubr.f32.gmra.mrb[0].mxu0 %v6336
      %v6475 = vpop.f32.mrb[0].mxu0
      %v6476 = vadd.f32 0.0, %v6475
      %v6477 = vpop.f32.mrb[0].mxu0
      %6478 = vmatprep.mubr.f32.mxu0 0.0
      %6479 = vmatmul.mubr.f32.gmra.mrb[0].mxu0 %v6337
      %v6480 = vpop.f32.mrb[0].mxu0
      %v6481 = vadd.f32 0.0, %v6480
      %v6482 = vpop.f32.mrb[0].mxu0
      %6483 = vmatprep.mubr.f32.mxu0 0.0
      %6484 = vmatmul.mubr.f32.gmra.mrb[0].mxu0 %v6338
      %v6485 = vpop.f32.mrb[0].mxu0
      %v6486 = vadd.f32 0.0, %v6485
      %v6487 = vpop.f32.mrb[0].mxu0
      %6488 = vmatprep.mubr.f32.mxu0 0.0
      %6489 = vmatmul.mubr.f32.gmra.mrb[0].mxu0 %v6339
      %v6490 = vpop.f32.mrb[0].mxu0
      %v6491 = vadd.f32 0.0, %v6490
      %v6492 = vpop.f32.mrb[0].mxu0
      %6493 = vmatprep.mubr.f32.mxu0 0.0
      %6494 = vmatmul.mubr.f32.gmra.mrb[0].mxu0 %v6340
      %v6495 = vpop.f32.mrb[0].mxu0
      %v6496 = vadd.f32 0.0, %v6495
      %v6497 = vpop.f32.mrb[0].mxu0
      %6498 = vmatprep.mubr.f32.mxu0 0.0
      %6499 = vmatmul.mubr.f32.gmra.mrb[0].mxu0 %v6341
      %v6500 = vpop.f32.mrb[0].mxu0
      %v6501 = vadd.f32 0.0, %v6500
      %v6502 = vpop.f32.mrb[0].mxu0
      %6503 = vmatprep.mubr.f32.mxu0 0.0
      %6504 = vmatmul.mubr.f32.gmra.mrb[0].mxu0 %v6342
      %v6505 = vpop.f32.mrb[0].mxu0
      %v6506 = vadd.f32 0.0, %v6505
      %v6507 = vpop.f32.mrb[0].mxu0
      %6508 = vmatprep.mubr.f32.mxu0 0.0
      %6509 = vmatmul.mubr.f32.gmra.mrb[0].mxu0 %v6343
      %v6510 = vpop.f32.mrb[0].mxu0
      %v6511 = vadd.f32 0.0, %v6510
      %v6512 = vpop.f32.mrb[0].mxu0
      %6513 = vmatprep.mubr.f32.mxu0 0.0
      %6514 = vmatmul.mubr.f32.gmra.mrb[0].mxu0 %v6344
      %v6515 = vpop.f32.mrb[0].mxu0
      %v6516 = vadd.f32 0.0, %v6515
      %v6517 = vpop.f32.mrb[0].mxu0
      %6518 = vmatprep.mubr.f32.mxu0 0.0
      %6519 = vmatmul.mubr.f32.gmra.mrb[0].mxu0 %v6345
      %v6520 = vpop.f32.mrb[0].mxu0
      %v6521 = vadd.f32 0.0, %v6520
      %v6522 = vpop.f32.mrb[0].mxu0
      %6523 = vmatprep.mubr.f32.mxu0 0.0
      %6524 = vmatmul.mubr.f32.gmra.mrb[0].mxu0 %v6346
      %v6525 = vpop.f32.mrb[0].mxu0
      %v6526 = vadd.f32 0.0, %v6525
      %v6527 = vpop.f32.mrb[0].mxu0
      %6528 = vmatprep.mubr.f32.mxu0 0.0
      %6529 = vmatmul.mubr.f32.gmra.mrb[0].mxu0 %v6347
      %v6530 = vpop.f32.mrb[0].mxu0
      %v6531 = vadd.f32 0.0, %v6530
      %v6532 = vpop.f32.mrb[0].mxu0
      %6533 = vmatprep.mubr.f32.mxu0 0.0
      %6534 = vmatmul.mubr.f32.gmra.mrb[0].mxu0 %v6348
      %v6535 = vpop.f32.mrb[0].mxu0
      %v6536 = vadd.f32 0.0, %v6535
      %v6537 = vpop.f32.mrb[0].mxu0
      %6538 = vmatprep.mubr.f32.mxu0 0.0
      %6539 = vmatmul.mubr.f32.gmra.mrb[0].mxu0 %v6349
      %v6540 = vpop.f32.mrb[0].mxu0
      %v6541 = vadd.f32 0.0, %v6540
      %v6542 = vpop.f32.mrb[0].mxu0
      %6543 = vmatprep.mubr.f32.mxu0 0.0
      %6544 = vmatmul.mubr.f32.gmra.mrb[0].mxu0 %v6350
      %v6545 = vpop.f32.mrb[0].mxu0
      %v6546 = vadd.f32 0.0, %v6545
      %v6547 = vpop.f32.mrb[0].mxu0
      %6548 = vmatprep.mubr.f32.mxu0 0.0
      %6549 = vmatmul.mubr.f32.gmra.mrb[0].mxu0 %v6351
      %v6550 = vpop.f32.mrb[0].mxu0
      %v6551 = vadd.f32 0.0, %v6550
      %v6552 = vpop.f32.mrb[0].mxu0
      %6553 = vmatprep.mubr.f32.mxu0 0.0
      %6554 = vmatmul.mubr.f32.gmra.mrb[0].mxu0 %v6352
      %v6555 = vpop.f32.mrb[0].mxu0
      %v6556 = vadd.f32 0.0, %v6555
      %v6557 = vpop.f32.mrb[0].mxu0
      %6558 = vmatprep.mubr.f32.mxu0 0.0
      %6559 = vmatmul.mubr.f32.gmra.mrb[0].mxu0 %v6353
      %v6560 = vpop.f32.mrb[0].mxu0
      %v6561 = vadd.f32 0.0, %v6560
      %v6562 = vpop.f32.mrb[0].mxu0
      %6563 = vmatprep.mubr.f32.mxu0 0.0
      %6564 = vmatmul.mubr.f32.gmra.mrb[0].mxu0 %v6354
      %v6565 = vpop.f32.mrb[0].mxu0
      %v6566 = vadd.f32 0.0, %v6565
      %v6567 = vpop.f32.mrb[0].mxu0
      %6568 = vmatprep.mubr.f32.mxu0 0.0
      %6569 = vmatmul.mubr.f32.gmra.mrb[0].mxu0 %v6355
      %v6570 = vpop.f32.mrb[0].mxu0
      %v6571 = vadd.f32 0.0, %v6570
      %v6572 = vpop.f32.mrb[0].mxu0
      %6573 = vmatprep.mubr.f32.mxu0 0.0
      %6574 = vmatmul.mubr.f32.gmra.mrb[0].mxu0 %v6356
      %v6575 = vpop.f32.mrb[0].mxu0
      %v6576 = vadd.f32 0.0, %v6575
      %v6577 = vpop.f32.mrb[0].mxu0
      %6578 = vmatprep.mubr.f32.mxu0 0.0
      %6579 = vmatmul.mubr.f32.gmra.mrb[0].mxu0 %v6357
      %v6580 = vpop.f32.mrb[0].mxu0
      %v6581 = vadd.f32 0.0, %v6580
      %v6582 = vpop.f32.mrb[0].mxu0
      %6583 = vmatprep.mubr.f32.mxu0 0.0
      %6584 = vmatmul.mubr.f32.gmra.mrb[0].mxu0 %v6358
      %v6585 = vpop.f32.mrb[0].mxu0
      %v6586 = vadd.f32 0.0, %v6585
      %v6587 = vpop.f32.mrb[0].mxu0
      %6588 = vmatprep.mubr.f32.mxu0 0.0
      %6589 = vmatmul.mubr.f32.gmra.mrb[0].mxu0 %v6359
      %v6590 = vpop.f32.mrb[0].mxu0
      %v6591 = vadd.f32 0.0, %v6590
      %v6592 = vpop.f32.mrb[0].mxu0
      %6593 = vmatprep.mubr.f32.mxu0 0.0
      %6594 = vmatmul.mubr.f32.gmra.mrb[0].mxu0 %v6360
      %v6595 = vpop.f32.mrb[0].mxu0
      %v6596 = vadd.f32 0.0, %v6595
      %v6597 = vpop.f32.mrb[0].mxu0
      %6598 = vmatprep.mubr.f32.mxu0 0.0
      %6599 = vmatmul.mubr.f32.gmra.mrb[0].mxu0 %v6361
      %v6600 = vpop.f32.mrb[0].mxu0
      %v6601 = vadd.f32 0.0, %v6600
      %v6602 = vpop.f32.mrb[0].mxu0
      %6603 = vdwg.mxu0
      %v6604 = vadd.f32 %v6298, %v6446
      %v6605 = vadd.f32 %v6299, %v6451
      %v6606 = vadd.f32 %v6300, %v6456
      %v6607 = vadd.f32 %v6301, %v6461
      %v6608 = vadd.f32 %v6302, %v6466
      %v6609 = vadd.f32 %v6303, %v6471
      %v6610 = vadd.f32 %v6304, %v6476
      %v6611 = vadd.f32 %v6305, %v6481
      %v6612 = vadd.f32 %v6306, %v6486
      %v6613 = vadd.f32 %v6307, %v6491
      %v6614 = vadd.f32 %v6308, %v6496
      %v6615 = vadd.f32 %v6309, %v6501
      %v6616 = vadd.f32 %v6310, %v6506
      %v6617 = vadd.f32 %v6311, %v6511
      %v6618 = vadd.f32 %v6312, %v6516
      %v6619 = vadd.f32 %v6313, %v6521
      %v6620 = vadd.f32 %v6314, %v6526
      %v6621 = vadd.f32 %v6315, %v6531
      %v6622 = vadd.f32 %v6316, %v6536
      %v6623 = vadd.f32 %v6317, %v6541
      %v6624 = vadd.f32 %v6318, %v6546
      %v6625 = vadd.f32 %v6319, %v6551
      %v6626 = vadd.f32 %v6320, %v6556
      %v6627 = vadd.f32 %v6321, %v6561
      %v6628 = vadd.f32 %v6322, %v6566
      %v6629 = vadd.f32 %v6323, %v6571
      %v6630 = vadd.f32 %v6324, %v6576
      %v6631 = vadd.f32 %v6325, %v6581
      %v6632 = vadd.f32 %v6326, %v6586
      %v6633 = vadd.f32 %v6327, %v6591
      %v6634 = vadd.f32 %v6328, %v6596
      %v6635 = vadd.f32 %v6329, %v6601
      %v6636 = vld [vmem:[%s4] sm:$0x1]
      %v6638 = vlaneseq
      %v6639 = vshrl.u32 %v6638, 7
      %v6640 = vsub.s32 0, %v6639
      %v6641 = vrot.slane %v6636, %v6640
      %v6643 = vadd.f32 %v6604, %v6641
      %v6644 = vadd.f32 %v6605, %v6641
      %v6645 = vadd.f32 %v6606, %v6641
      %v6646 = vadd.f32 %v6607, %v6641
      %v6647 = vadd.f32 %v6608, %v6641
      %v6648 = vadd.f32 %v6609, %v6641
      %v6649 = vadd.f32 %v6610, %v6641
      %v6650 = vadd.f32 %v6611, %v6641
      %v6651 = vadd.f32 %v6612, %v6641
      %v6652 = vadd.f32 %v6613, %v6641
      %v6653 = vadd.f32 %v6614, %v6641
      %v6654 = vadd.f32 %v6615, %v6641
      %v6655 = vadd.f32 %v6616, %v6641
      %v6656 = vadd.f32 %v6617, %v6641
      %v6657 = vadd.f32 %v6618, %v6641
      %v6658 = vadd.f32 %v6619, %v6641
      %v6659 = vadd.f32 %v6620, %v6641
      %v6660 = vadd.f32 %v6621, %v6641
      %v6661 = vadd.f32 %v6622, %v6641
      %v6662 = vadd.f32 %v6623, %v6641
      %v6663 = vadd.f32 %v6624, %v6641
      %v6664 = vadd.f32 %v6625, %v6641
      %v6665 = vadd.f32 %v6626, %v6641
      %v6666 = vadd.f32 %v6627, %v6641
      %v6667 = vadd.f32 %v6628, %v6641
      %v6668 = vadd.f32 %v6629, %v6641
      %v6669 = vadd.f32 %v6630, %v6641
      %v6670 = vadd.f32 %v6631, %v6641
      %v6671 = vadd.f32 %v6632, %v6641
      %v6672 = vadd.f32 %v6633, %v6641
      %v6673 = vadd.f32 %v6634, %v6641
      %v6674 = vadd.f32 %v6635, %v6641
      %v6675 = vmax.f32 %v6643, 0.0
      %v6676 = vmax.f32 %v6644, 0.0
      %v6677 = vmax.f32 %v6645, 0.0
      %v6678 = vmax.f32 %v6646, 0.0
      %v6679 = vmax.f32 %v6647, 0.0
      %v6680 = vmax.f32 %v6648, 0.0
      %v6681 = vmax.f32 %v6649, 0.0
      %v6682 = vmax.f32 %v6650, 0.0
      %v6683 = vmax.f32 %v6651, 0.0
      %v6684 = vmax.f32 %v6652, 0.0
      %v6685 = vmax.f32 %v6653, 0.0
      %v6686 = vmax.f32 %v6654, 0.0
      %v6687 = vmax.f32 %v6655, 0.0
      %v6688 = vmax.f32 %v6656, 0.0
      %v6689 = vmax.f32 %v6657, 0.0
      %v6690 = vmax.f32 %v6658, 0.0
      %v6691 = vmax.f32 %v6659, 0.0
      %v6692 = vmax.f32 %v6660, 0.0
      %v6693 = vmax.f32 %v6661, 0.0
      %v6694 = vmax.f32 %v6662, 0.0
      %v6695 = vmax.f32 %v6663, 0.0
      %v6696 = vmax.f32 %v6664, 0.0
      %v6697 = vmax.f32 %v6665, 0.0
      %v6698 = vmax.f32 %v6666, 0.0
      %v6699 = vmax.f32 %v6667, 0.0
      %v6700 = vmax.f32 %v6668, 0.0
      %v6701 = vmax.f32 %v6669, 0.0
      %v6702 = vmax.f32 %v6670, 0.0
      %v6703 = vmax.f32 %v6671, 0.0
      %v6704 = vmax.f32 %v6672, 0.0
      %v6705 = vmax.f32 %v6673, 0.0
      %v6706 = vmax.f32 %v6674, 0.0
      %6707 = vst [vmem:[%s224] sm:$0xff] %v6675
      %6708 = vst [vmem:[%s224 + $0x8] sm:$0xff] %v6676
      %6709 = vst [vmem:[%s224 + $0x10] sm:$0xff] %v6677
      %6710 = vst [vmem:[%s224 + $0x18] sm:$0xff] %v6678
      %6711 = vst [vmem:[%s224 + $0x20] sm:$0xff] %v6679
      %6712 = vst [vmem:[%s224 + $0x28] sm:$0xff] %v6680
      %6713 = vst [vmem:[%s224 + $0x30] sm:$0xff] %v6681
      %6714 = vst [vmem:[%s224 + $0x38] sm:$0xff] %v6682
      %6715 = vst [vmem:[%s224 + $0x40] sm:$0xff] %v6683
      %6716 = vst [vmem:[%s224 + $0x48] sm:$0xff] %v6684
      %6717 = vst [vmem:[%s224 + $0x50] sm:$0xff] %v6685
      %6718 = vst [vmem:[%s224 + $0x58] sm:$0xff] %v6686
      %6719 = vst [vmem:[%s224 + $0x60] sm:$0xff] %v6687
      %6720 = vst [vmem:[%s224 + $0x68] sm:$0xff] %v6688
      %6721 = vst [vmem:[%s224 + $0x70] sm:$0xff] %v6689
      %6722 = vst [vmem:[%s224 + $0x78] sm:$0xff] %v6690
      %6723 = vst [vmem:[%s224 + $0x80] sm:$0xff] %v6691
      %6724 = vst [vmem:[%s224 + $0x88] sm:$0xff] %v6692
      %6725 = vst [vmem:[%s224 + $0x90] sm:$0xff] %v6693
      %6726 = vst [vmem:[%s224 + $0x98] sm:$0xff] %v6694
      %6727 = vst [vmem:[%s224 + $0xa0] sm:$0xff] %v6695
      %6728 = vst [vmem:[%s224 + $0xa8] sm:$0xff] %v6696
      %6729 = vst [vmem:[%s224 + $0xb0] sm:$0xff] %v6697
      %6730 = vst [vmem:[%s224 + $0xb8] sm:$0xff] %v6698
      %6731 = vst [vmem:[%s224 + $0xc0] sm:$0xff] %v6699
      %6732 = vst [vmem:[%s224 + $0xc8] sm:$0xff] %v6700
      %6733 = vst [vmem:[%s224 + $0xd0] sm:$0xff] %v6701
      %6734 = vst [vmem:[%s224 + $0xd8] sm:$0xff] %v6702
      %6735 = vst [vmem:[%s224 + $0xe0] sm:$0xff] %v6703
      %6736 = vst [vmem:[%s224 + $0xe8] sm:$0xff] %v6704
      %6737 = vst [vmem:[%s224 + $0xf0] sm:$0xff] %v6705
      %6738 = vst [vmem:[%s224 + $0xf8] sm:$0xff] %v6706
      %p6739 = scmp.lt.s32.totalorder %s16, 1
      %s6740 = scalar_select %p6739, %s16, 1
      %s6741 = smul.addr %s6740, 32
      %s6742 = smul.addr %s6741, 8
      %s6743 = scalar_lea.vmem %s5, %s6742
      // Predicated region
      $region41: #{vgg_block.1} parent=39 // pred_check
        %p6744 = pneg %p144
      $region42: #{vgg_block.1} parent=39 // pred_check_branch
        %6746 = sbr.rel (%p6744) target = $region44
      $region43: #{vgg_block.1} parent=39 // pred_region
        _
      $region44: #{vgg_block.1} parent=39 // pred_fallthru
        _
    $region40: #{vgg_block.1} parent=5 // pred_fallthru
      _
    %p6747 = scmp.le.s32.totalorder 2, %s11
    // Predicated region
    $region45: #{vgg_block.1} parent=5 // pred_check
      %p6748 = pneg %p6747
    $region46: #{vgg_block.1} parent=5 // pred_check_branch
      %6750 = sbr.rel (%p6748) target = $region48
    $region47: #{vgg_block.1} parent=5 // pred_region
      %s6751 = ssub.s32 %s11, 2
      // Predicated region
      $region49: #{vgg_block.1} parent=47 // pred_check
        %p6752 = pneg %p150
      $region50: #{vgg_block.1} parent=47 // pred_check_branch
        %6754 = sbr.rel (%p6752) target = $region52
      $region51: #{vgg_block.1} parent=47 // pred_region
        %p6755 = scmp.lt.s32.totalorder %s17, 1
        %s6756 = scalar_select %p6755, %s17, 1
        %s6757 = smul.addr %s6756, 32
        %s6758 = smul.addr %s6757, 8
        %s6759 = scalar_lea.vmem %s5, %s6758
      $region52: #{vgg_block.1} parent=47 // pred_fallthru
        _
    $region48: #{vgg_block.1} parent=5 // pred_fallthru
      _
  $region6: #{vgg_block.1} parent=0 // loop_footer
    %s15 = sadd.s32 1, %s11
  $region7: #{vgg_block.1} parent=0 // loop_footer_branch
    %10 = sbr.rel target = $region3
  $region8: #{vgg_block.1} parent=0 // loop_exit
    _

</llo_original>
